<compile_context>
chip_gen: v7x
topology: tpu7x:2x2x1
jax: 0.10.0
libtpu: 0.0.40
codegen_flags: <defaults>
</compile_context>

<pallas_src>
import functools
import math

import jax
import jax.numpy as jnp
from jax.experimental import pallas as pl
from jax.experimental.pallas import tpu as pltpu


# ----------------------------- positional encoding ----------------------------
def positional_encoding_2d(d_model, height, width):
    """Port of the PyTorch reference; returns (d_model, height, width) f32."""
    if d_model % 4 != 0:
        raise ValueError(f"d_model must be divisible by 4, got {d_model}")
    dm = d_model // 2
    div_term = jnp.exp(jnp.arange(0.0, dm, 2.0) * -(math.log(10000.0) / dm))
    pos_w = jnp.arange(0.0, width)[:, None]      # (W, 1)
    pos_h = jnp.arange(0.0, height)[:, None]     # (H, 1)
    sw = jnp.broadcast_to(jnp.sin(pos_w * div_term).T[:, None, :], (dm // 2, height, width))
    cw = jnp.broadcast_to(jnp.cos(pos_w * div_term).T[:, None, :], (dm // 2, height, width))
    sh = jnp.broadcast_to(jnp.sin(pos_h * div_term).T[:, :, None], (dm // 2, height, width))
    ch = jnp.broadcast_to(jnp.cos(pos_h * div_term).T[:, :, None], (dm // 2, height, width))
    pe = jnp.zeros((d_model, height, width), jnp.float32)
    pe = pe.at[0:dm:2].set(sw)
    pe = pe.at[1:dm:2].set(cw)
    pe = pe.at[dm::2].set(sh)
    pe = pe.at[dm + 1::2].set(ch)
    return pe


# ----------------------------------- kernel -----------------------------------
def mhsa_kernel(x_ref, pe_ref, wqkv_ref, bqkv_ref, wo_ref, bo_ref, o_ref,
                *, heads, d_k, q_tile):
    C, S = pe_ref.shape

    # Positional encoding fused with the load; everything stays (channels, seq).
    x2 = x_ref[0] + pe_ref[...]                                           # (C, S) f32

    # One fused Q/K/V projection: (3C, C) x (C, S) MXU matmul, bf16 operands,
    # f32 accumulation.  The 1/sqrt(d_k) attention scale is pre-folded into the
    # Q rows of w_qkv / b_qkv by the wrapper.
    qkv = (jnp.dot(wqkv_ref[...].astype(jnp.bfloat16),
                   x2.astype(jnp.bfloat16),
                   preferred_element_type=jnp.float32)
           + bqkv_ref[...]).astype(jnp.bfloat16)                          # (3C, S)

    # Head-batched views; d_k (=16) rows are sublane-tile aligned => layout-free.
    q = qkv[0:C].reshape(heads, d_k, S)
    k = qkv[C:2 * C].reshape(heads, d_k, S)
    v = qkv[2 * C:3 * C].reshape(heads, d_k, S)

    wo_b = wo_ref[...].astype(jnp.bfloat16)                               # hoisted
    bo_c = bo_ref[...]                                                    # (C, 1)

    n_tiles = S // q_tile
    for c in range(n_tiles):                          # static query tiling
        q_c = q[:, :, c * q_tile:(c + 1) * q_tile]                        # (h, d_k, TQ)

        # scores^T[h, t, s] = sum_d k[h, d, t] * q[h, d, s]  (scale already folded)
        s_t = jax.lax.dot_general(
            k, q_c, (((1,), (1,)), ((0,), (0,))),
            preferred_element_type=jnp.float32)                           # (h, S, TQ)

        # Softmax over the key axis (axis 1 in this transposed layout);
        # normalization deferred to the small PV result.
        # TODO(synk): exp could run in bf16 on v6e/v7x (EUP bf16); kept f32 for v5e.
        p_t = jnp.exp(s_t - jnp.max(s_t, axis=1, keepdims=True))          # (h, S, TQ)
        denom = jnp.sum(p_t, axis=1, keepdims=True)                       # (h, 1, TQ)

        # out_h^T (unnormalized) = V_h^T @ p^T  — bf16 operands, f32 accumulate.
        pv = jax.lax.dot_general(
            v, p_t.astype(jnp.bfloat16), (((2,), (1,)), ((0,), (0,))),
            preferred_element_type=jnp.float32)                           # (h, d_k, TQ)

        # Deferred normalization on the (h, d_k, TQ) slab (16x fewer elements
        # than the (h, S, TQ) score slab); approx reciprocal -> EUP slot.
        concat = (pv * pl.reciprocal(denom, approx=True)).reshape(C, q_tile)

        # Output projection; lane-dense, 128-aligned store of this query tile.
        o_ref[0, :, pl.ds(c * q_tile, q_tile)] = (
            jnp.dot(wo_b, concat.astype(jnp.bfloat16),
                    preferred_element_type=jnp.float32)
            + bo_c).astype(o_ref.dtype)
    # TODO(synk): attention dropout (p > 0) is not modeled; the module default
    # p = 0.0 makes nn.Dropout an identity, so forward output is identical.


# ----------------------------------- wrapper ----------------------------------
def mhsa_block_forward(x, params, heads, pos_enc=True):
    """x: (B, C, H, W) f32.  params: (wq, bq, wk, bk, wv, bv, wo, bo) in PyTorch
    nn.Linear convention (W: (out, in), y = x @ W.T + b)."""
    B, C, H, W = x.shape
    S = H * W
    d_k = C // heads
    wq, bq, wk, bk, wv, bv, wo, bo = params

    pe = (positional_encoding_2d(C, H, W) if pos_enc
          else jnp.zeros((C, H, W), jnp.float32)).reshape(C, S)

    x_cs = x.reshape(B, C, S)                                  # free reshape (NCHW)

    # Fold the 1/sqrt(d_k) attention scale into the Q projection (exact rewrite).
    scale = 1.0 / math.sqrt(d_k)
    w_qkv = jnp.concatenate([wq * scale, wk, wv], axis=0)      # (3C, C), torch layout
    b_qkv = jnp.concatenate([bq * scale, bk, bv], axis=0)[:, None]   # (3C, 1)
    bo_col = bo[:, None]                                       # (C, 1)

    q_tile = 128 if (S % 128 == 0 and S > 128) else S

    kernel = functools.partial(mhsa_kernel, heads=heads, d_k=d_k, q_tile=q_tile)

    out_cs = pl.pallas_call(
        kernel,
        out_shape=jax.ShapeDtypeStruct((B, C, S), jnp.float32),
        grid=(B,),
        in_specs=[
            pl.BlockSpec((1, C, S), lambda b: (b, 0, 0)),      # x (one batch element)
            pl.BlockSpec((C, S), lambda b: (0, 0)),            # positional encoding
            pl.BlockSpec((3 * C, C), lambda b: (0, 0)),        # fused W_q/k/v (Q pre-scaled)
            pl.BlockSpec((3 * C, 1), lambda b: (0, 0)),        # fused b_q/k/v
            pl.BlockSpec((C, C), lambda b: (0, 0)),            # W_out
            pl.BlockSpec((C, 1), lambda b: (0, 0)),            # b_out
        ],
        out_specs=pl.BlockSpec((1, C, S), lambda b: (b, 0, 0)),
        compiler_params=pltpu.CompilerParams(
            dimension_semantics=("parallel",),   # batch over TCs (v7x megacore, B>=2)
            # ~3 MiB live intermediates at this size; stays well under v7x's 64 MiB
            # physical VMEM.  Revisit with flash-style key blocking if S grows.
            vmem_limit_bytes=32 * 1024 * 1024),
    )(x_cs, pe, w_qkv, b_qkv, wo, bo_col)

    return out_cs.reshape(B, C, H, W)                          # free reshape back


# ------------------------------ pure-JAX reference -----------------------------
def mhsa_ref(x, params, heads, pos_enc=True):
    B, C, H, W = x.shape
    S = H * W
    d_k = C // heads
    wq, bq, wk, bk, wv, bv, wo, bo = params
    x2 = x
    if pos_enc:
        x2 = x2 + positional_encoding_2d(C, H, W)[None]
    x2 = x2.reshape(B, C, S).transpose(0, 2, 1)                # (B, S, C)
    q = x2 @ wq.T + bq
    k = x2 @ wk.T + bk
    v = x2 @ wv.T + bv

    def split(t):
        return t.reshape(B, S, heads, d_k).transpose(0, 2, 1, 3)

    q, k, v = split(q), split(k), split(v)
    scores = jnp.einsum('bhsd,bhtd->bhst', q, k) / math.sqrt(d_k)
    p = jax.nn.softmax(scores, axis=-1)
    o = jnp.einsum('bhst,bhtd->bhsd', p, v)
    concat = o.transpose(0, 2, 1, 3).reshape(B, S, C)
    out = concat @ wo.T + bo
    return out.transpose(0, 2, 1).reshape(B, C, H, W)


# ------------------------------------- main -------------------------------------
if __name__ == "__main__":
    B, C, H, W = 2, 128, 16, 16     # d_model = 128 (lane-dense), S = 256
    heads = 8                        # d_k = 16

    key = jax.random.PRNGKey(0)
    ks = jax.random.split(key, 9)

    x = jax.random.normal(ks[0], (B, C, H, W), jnp.float32)

    def linear_params(kw, kb):
        w = jax.random.normal(kw, (C, C), jnp.float32) / jnp.sqrt(float(C))
        b = 0.1 * jax.random.normal(kb, (C,), jnp.float32)
        return w, b

    wq, bq = linear_params(ks[1], ks[2])
    wk, bk = linear_params(ks[3], ks[4])
    wv, bv = linear_params(ks[5], ks[6])
    wo, bo = linear_params(ks[7], ks[8])
    params = (wq, bq, wk, bk, wv, bv, wo, bo)

    y = jax.block_until_ready(mhsa_block_forward(x, params, heads))
    y_ref = jax.block_until_ready(mhsa_ref(x, params, heads))

    max_err = float(jnp.max(jnp.abs(y - y_ref)))
    # bf16 MXU operands + approx softmax reciprocal => relaxed tolerance vs pure f32.
    assert max_err < 3e-2, f"Pallas/JAX mismatch, max abs err = {max_err}"
    print("KERNEL_OK")
</pallas_src>

<mosaic_0001>
module attributes {stable_mosaic.version = 11 : i64} {
  func.func @mhsa_kernel(%arg0: i32, %arg1: memref<1x128x256xf32, #tpu.memory_space<vmem>>, %arg2: memref<128x256xf32, #tpu.memory_space<vmem>>, %arg3: memref<384x128xf32, #tpu.memory_space<vmem>>, %arg4: memref<384x1xf32, #tpu.memory_space<vmem>>, %arg5: memref<128x128xf32, #tpu.memory_space<vmem>>, %arg6: memref<128x1xf32, #tpu.memory_space<vmem>>, %arg7: memref<1x128x256xf32, #tpu.memory_space<vmem>>) attributes {dimension_semantics = [#tpu.dimension_semantics<parallel>], iteration_bounds = array<i64: 2>, scalar_prefetch = 0 : i64, scratch_operands = 0 : i64, tpu.core_type = #tpu.core_type<tc>, window_params = [{transform_indices = @transform_0, window_bounds = array<i64: 1, 128, 256>}, {pipeline_mode = #tpu.pipeline_mode<synchronous>, transform_indices = @transform_1, window_bounds = array<i64: 128, 256>}, {pipeline_mode = #tpu.pipeline_mode<synchronous>, transform_indices = @transform_2, window_bounds = array<i64: 384, 128>}, {pipeline_mode = #tpu.pipeline_mode<synchronous>, transform_indices = @transform_3, window_bounds = array<i64: 384, 1>}, {pipeline_mode = #tpu.pipeline_mode<synchronous>, transform_indices = @transform_4, window_bounds = array<i64: 128, 128>}, {pipeline_mode = #tpu.pipeline_mode<synchronous>, transform_indices = @transform_5, window_bounds = array<i64: 128, 1>}, {transform_indices = @transform_6, window_bounds = array<i64: 1, 128, 256>}]} {
    %c0 = arith.constant 0 : index
    %c0_0 = arith.constant 0 : index
    %c0_1 = arith.constant 0 : index
    %0 = vector.load %arg1[%c0, %c0_0, %c0_1] : memref<1x128x256xf32, #tpu.memory_space<vmem>>, vector<1x128x256xf32>
    %1 = vector.shape_cast %0 : vector<1x128x256xf32> to vector<128x256xf32>
    %c0_2 = arith.constant 0 : index
    %c0_3 = arith.constant 0 : index
    %2 = vector.load %arg2[%c0_2, %c0_3] : memref<128x256xf32, #tpu.memory_space<vmem>>, vector<128x256xf32>
    %3 = arith.addf %1, %2 : vector<128x256xf32>
    %c0_4 = arith.constant 0 : index
    %c0_5 = arith.constant 0 : index
    %4 = vector.load %arg3[%c0_4, %c0_5] : memref<384x128xf32, #tpu.memory_space<vmem>>, vector<384x128xf32>
    %5 = arith.truncf %4 : vector<384x128xf32> to vector<384x128xbf16>
    %6 = arith.truncf %3 : vector<128x256xf32> to vector<128x256xbf16>
    %cst = arith.constant dense<0.000000e+00> : vector<384x256xf32>
    %7 = tpu.matmul %5, %6, %cst {dimension_numbers = #tpu.dot_dimension_numbers<[1], [0], [0], [1], [0, 0, 1, 1], [], []>} : vector<384x128xbf16>, vector<128x256xbf16>, vector<384x256xf32> -> vector<384x256xf32>
    %c0_6 = arith.constant 0 : index
    %c0_7 = arith.constant 0 : index
    %8 = vector.load %arg4[%c0_6, %c0_7] : memref<384x1xf32, #tpu.memory_space<vmem>>, vector<384x1xf32>
    %9 = vector.broadcast %8 : vector<384x1xf32> to vector<384x256xf32>
    %10 = arith.addf %7, %9 : vector<384x256xf32>
    %11 = arith.truncf %10 : vector<384x256xf32> to vector<384x256xbf16>
    %12 = vector.extract_strided_slice %11 {offsets = [0, 0], sizes = [128, 256], strides = [1, 1]} : vector<384x256xbf16> to vector<128x256xbf16>
    %13 = vector.shape_cast %12 : vector<128x256xbf16> to vector<8x16x256xbf16>
    %14 = vector.extract_strided_slice %11 {offsets = [128, 0], sizes = [128, 256], strides = [1, 1]} : vector<384x256xbf16> to vector<128x256xbf16>
    %15 = vector.shape_cast %14 : vector<128x256xbf16> to vector<8x16x256xbf16>
    %16 = vector.extract_strided_slice %11 {offsets = [256, 0], sizes = [128, 256], strides = [1, 1]} : vector<384x256xbf16> to vector<128x256xbf16>
    %17 = vector.shape_cast %16 : vector<128x256xbf16> to vector<8x16x256xbf16>
    %c0_8 = arith.constant 0 : index
    %c0_9 = arith.constant 0 : index
    %18 = vector.load %arg5[%c0_8, %c0_9] : memref<128x128xf32, #tpu.memory_space<vmem>>, vector<128x128xf32>
    %19 = arith.truncf %18 : vector<128x128xf32> to vector<128x128xbf16>
    %c0_10 = arith.constant 0 : index
    %c0_11 = arith.constant 0 : index
    %20 = vector.load %arg6[%c0_10, %c0_11] : memref<128x1xf32, #tpu.memory_space<vmem>>, vector<128x1xf32>
    %21 = vector.extract_strided_slice %13 {offsets = [0, 0, 0], sizes = [8, 16, 128], strides = [1, 1, 1]} : vector<8x16x256xbf16> to vector<8x16x128xbf16>
    %cst_12 = arith.constant dense<0.000000e+00> : vector<8x256x128xf32>
    %22 = tpu.matmul %15, %21, %cst_12 {dimension_numbers = #tpu.dot_dimension_numbers<[1], [1], [2], [2], [0, 0, 0, 2, 1, 2], [0], [0]>} : vector<8x16x256xbf16>, vector<8x16x128xbf16>, vector<8x256x128xf32> -> vector<8x256x128xf32>
    %cst_13 = arith.constant dense<0xFF800000> : vector<8x128xf32>
    %23 = vector.multi_reduction <maximumf>, %22, %cst_13 [1] : vector<8x256x128xf32> to vector<8x128xf32>
    %24 = vector.shape_cast %23 : vector<8x128xf32> to vector<8x1x128xf32>
    %25 = vector.broadcast %24 : vector<8x1x128xf32> to vector<8x256x128xf32>
    %26 = arith.subf %22, %25 : vector<8x256x128xf32>
    %27 = math.exp %26 : vector<8x256x128xf32>
    %cst_14 = arith.constant dense<0.000000e+00> : vector<8x128xf32>
    %28 = vector.multi_reduction <add>, %27, %cst_14 [1] : vector<8x256x128xf32> to vector<8x128xf32>
    %29 = vector.shape_cast %28 : vector<8x128xf32> to vector<8x1x128xf32>
    %30 = arith.truncf %27 : vector<8x256x128xf32> to vector<8x256x128xbf16>
    %cst_15 = arith.constant dense<0.000000e+00> : vector<8x16x128xf32>
    %31 = tpu.matmul %17, %30, %cst_15 {dimension_numbers = #tpu.dot_dimension_numbers<[2], [1], [1], [2], [0, 0, 0, 1, 1, 2], [0], [0]>} : vector<8x16x256xbf16>, vector<8x256x128xbf16>, vector<8x16x128xf32> -> vector<8x16x128xf32>
    %32 = tpu.reciprocal %29 {approx = true} : vector<8x1x128xf32> -> vector<8x1x128xf32>
    %33 = vector.broadcast %32 : vector<8x1x128xf32> to vector<8x16x128xf32>
    %34 = arith.mulf %31, %33 : vector<8x16x128xf32>
    %35 = vector.shape_cast %34 : vector<8x16x128xf32> to vector<128x128xf32>
    %36 = arith.truncf %35 : vector<128x128xf32> to vector<128x128xbf16>
    %cst_16 = arith.constant dense<0.000000e+00> : vector<128x128xf32>
    %37 = tpu.matmul %19, %36, %cst_16 {dimension_numbers = #tpu.dot_dimension_numbers<[1], [0], [0], [1], [0, 0, 1, 1], [], []>} : vector<128x128xbf16>, vector<128x128xbf16>, vector<128x128xf32> -> vector<128x128xf32>
    %38 = vector.broadcast %20 : vector<128x1xf32> to vector<128x128xf32>
    %39 = arith.addf %37, %38 : vector<128x128xf32>
    %c0_17 = arith.constant 0 : index
    %c0_18 = arith.constant 0 : index
    %c0_19 = arith.constant 0 : index
    %40 = vector.load %arg7[%c0_17, %c0_18, %c0_19] : memref<1x128x256xf32, #tpu.memory_space<vmem>>, vector<1x128x128xf32>
    %41 = vector.shape_cast %40 : vector<1x128x128xf32> to vector<128x128xf32>
    %42 = vector.shape_cast %39 : vector<128x128xf32> to vector<1x128x128xf32>
    tpu.vector_store %arg7[%c0_17, %c0_18, %c0_19], %42 {strides = array<i32>} : memref<1x128x256xf32, #tpu.memory_space<vmem>>, vector<1x128x128xf32>,
    %43 = vector.extract_strided_slice %13 {offsets = [0, 0, 128], sizes = [8, 16, 128], strides = [1, 1, 1]} : vector<8x16x256xbf16> to vector<8x16x128xbf16>
    %cst_20 = arith.constant dense<0.000000e+00> : vector<8x256x128xf32>
    %44 = tpu.matmul %15, %43, %cst_20 {dimension_numbers = #tpu.dot_dimension_numbers<[1], [1], [2], [2], [0, 0, 0, 2, 1, 2], [0], [0]>} : vector<8x16x256xbf16>, vector<8x16x128xbf16>, vector<8x256x128xf32> -> vector<8x256x128xf32>
    %cst_21 = arith.constant dense<0xFF800000> : vector<8x128xf32>
    %45 = vector.multi_reduction <maximumf>, %44, %cst_21 [1] : vector<8x256x128xf32> to vector<8x128xf32>
    %46 = vector.shape_cast %45 : vector<8x128xf32> to vector<8x1x128xf32>
    %47 = vector.broadcast %46 : vector<8x1x128xf32> to vector<8x256x128xf32>
    %48 = arith.subf %44, %47 : vector<8x256x128xf32>
    %49 = math.exp %48 : vector<8x256x128xf32>
    %cst_22 = arith.constant dense<0.000000e+00> : vector<8x128xf32>
    %50 = vector.multi_reduction <add>, %49, %cst_22 [1] : vector<8x256x128xf32> to vector<8x128xf32>
    %51 = vector.shape_cast %50 : vector<8x128xf32> to vector<8x1x128xf32>
    %52 = arith.truncf %49 : vector<8x256x128xf32> to vector<8x256x128xbf16>
    %cst_23 = arith.constant dense<0.000000e+00> : vector<8x16x128xf32>
    %53 = tpu.matmul %17, %52, %cst_23 {dimension_numbers = #tpu.dot_dimension_numbers<[2], [1], [1], [2], [0, 0, 0, 1, 1, 2], [0], [0]>} : vector<8x16x256xbf16>, vector<8x256x128xbf16>, vector<8x16x128xf32> -> vector<8x16x128xf32>
    %54 = tpu.reciprocal %51 {approx = true} : vector<8x1x128xf32> -> vector<8x1x128xf32>
    %55 = vector.broadcast %54 : vector<8x1x128xf32> to vector<8x16x128xf32>
    %56 = arith.mulf %53, %55 : vector<8x16x128xf32>
    %57 = vector.shape_cast %56 : vector<8x16x128xf32> to vector<128x128xf32>
    %58 = arith.truncf %57 : vector<128x128xf32> to vector<128x128xbf16>
    %cst_24 = arith.constant dense<0.000000e+00> : vector<128x128xf32>
    %59 = tpu.matmul %19, %58, %cst_24 {dimension_numbers = #tpu.dot_dimension_numbers<[1], [0], [0], [1], [0, 0, 1, 1], [], []>} : vector<128x128xbf16>, vector<128x128xbf16>, vector<128x128xf32> -> vector<128x128xf32>
    %60 = vector.broadcast %20 : vector<128x1xf32> to vector<128x128xf32>
    %61 = arith.addf %59, %60 : vector<128x128xf32>
    %c0_25 = arith.constant 0 : index
    %c0_26 = arith.constant 0 : index
    %c128 = arith.constant 128 : index
    %62 = vector.load %arg7[%c0_25, %c0_26, %c128] : memref<1x128x256xf32, #tpu.memory_space<vmem>>, vector<1x128x128xf32>
    %63 = vector.shape_cast %62 : vector<1x128x128xf32> to vector<128x128xf32>
    %64 = vector.shape_cast %61 : vector<128x128xf32> to vector<1x128x128xf32>
    tpu.vector_store %arg7[%c0_25, %c0_26, %c128], %64 {strides = array<i32>} : memref<1x128x256xf32, #tpu.memory_space<vmem>>, vector<1x128x128xf32>,
    return
  }
  func.func @transform_0(%arg0: i32) -> (i32, i32, i32) {
    %c0_i32 = arith.constant 0 : i32
    %c0_i32_0 = arith.constant 0 : i32
    %c0_i32_1 = arith.constant 0 : i32
    return %arg0, %c0_i32, %c0_i32_0 : i32, i32, i32
  }
  func.func @transform_1(%arg0: i32) -> (i32, i32) {
    %c0_i32 = arith.constant 0 : i32
    %c0_i32_0 = arith.constant 0 : i32
    %c0_i32_1 = arith.constant 0 : i32
    return %c0_i32, %c0_i32_0 : i32, i32
  }
  func.func @transform_2(%arg0: i32) -> (i32, i32) {
    %c0_i32 = arith.constant 0 : i32
    %c0_i32_0 = arith.constant 0 : i32
    %c0_i32_1 = arith.constant 0 : i32
    return %c0_i32, %c0_i32_0 : i32, i32
  }
  func.func @transform_3(%arg0: i32) -> (i32, i32) {
    %c0_i32 = arith.constant 0 : i32
    %c0_i32_0 = arith.constant 0 : i32
    %c0_i32_1 = arith.constant 0 : i32
    return %c0_i32, %c0_i32_0 : i32, i32
  }
  func.func @transform_4(%arg0: i32) -> (i32, i32) {
    %c0_i32 = arith.constant 0 : i32
    %c0_i32_0 = arith.constant 0 : i32
    %c0_i32_1 = arith.constant 0 : i32
    return %c0_i32, %c0_i32_0 : i32, i32
  }
  func.func @transform_5(%arg0: i32) -> (i32, i32) {
    %c0_i32 = arith.constant 0 : i32
    %c0_i32_0 = arith.constant 0 : i32
    %c0_i32_1 = arith.constant 0 : i32
    return %c0_i32, %c0_i32_0 : i32, i32
  }
  func.func @transform_6(%arg0: i32) -> (i32, i32, i32) {
    %c0_i32 = arith.constant 0 : i32
    %c0_i32_0 = arith.constant 0 : i32
    %c0_i32_1 = arith.constant 0 : i32
    return %arg0, %c0_i32, %c0_i32_0 : i32, i32, i32
  }
}

</mosaic_0001>

<llo_original>
// kernel: tpu_custom_call.1
$region0: #{tpu_custom_call.1}
  #allocation0 [shape = 'u32[]', space=smem, size = 0x4, offset = 0x4, fixed_abs, tag = 'smem constant byte address 0x4 - core index']
  #allocation1 [shape = 'u32[144,128]{1,0:T(1,128)}', space=vmem, size = 0x12000, scoped, tag = 'internal scratch']
  %s0 = inlined_call_operand.vmem [shape: f32[2,128,256], index: 0, kind: input, shape index: {}]
  %s1 = inlined_call_operand.hbm [shape: f32[128,256], index: 1, kind: input, shape index: {}]
  %s2 = inlined_call_operand.hbm [shape: f32[384,128], index: 2, kind: input, shape index: {}]
  %s3 = inlined_call_operand.vmem [shape: f32[384,1], index: 3, kind: input, shape index: {}]
  %s4 = inlined_call_operand.hbm [shape: f32[128,128], index: 4, kind: input, shape index: {}]
  %s5 = inlined_call_operand.vmem [shape: f32[128,1], index: 5, kind: input, shape index: {}]
  %s6 = inlined_call_operand.hbm [shape: f32[2,128,256], index: 6, kind: output, shape index: {}]
  %s7 = sld [smem:[#allocation0]]
  $region69: #{tpu_custom_call.1} parent=0
    _
  %s9 = ssub.s32 1, %s7
  %s10 = scalar_select 0, %s9, %s7
  $region1: #{tpu_custom_call.1} parent=0
    #allocation2 [shape = 'u8[131072]{0}', space=vmem, size = 0x20000, scoped, tag = 'input window, operand 1, single buffered']
    #allocation3 [shape = 's32[2]{0}', space=sflag, size = 0x8, scoped, tag = 'scoped memory for tpu_custom_call.1']
    #allocation4 [shape = 's32[2]{0}', space=sflag, size = 0x8, scoped, tag = 'scoped memory for tpu_custom_call.1']
    #allocation5 [shape = 'u8[196608]{0}', space=vmem, size = 0x30000, scoped, tag = 'input window, operand 2, single buffered']
    #allocation6 [shape = 's32[1]{0}', space=sflag, size = 0x4, scoped, tag = 'scoped memory for tpu_custom_call.1']
    #allocation7 [shape = 'u8[65536]{0}', space=vmem, size = 0x10000, scoped, tag = 'input window, operand 4, single buffered']
    #allocation8 [shape = 'u8[262144]{0}', space=vmem, size = 0x40000, scoped, tag = 'output window, operand 0']
    %11 = vsyncpa [#allocation3], 0
    %12 = vsyncpa [#allocation6], 0
    %13 = vsyncpa [#allocation4], 0
    %s14 = scalar_lea.sflag [#allocation4], 1
    %15 = vsyncpa %s14, 0
    loop: start=0, step=1, limit=4
    $region2: #{tpu_custom_call.1} parent=1 // loop_pre_header
      _
    $region3: #{tpu_custom_call.1} parent=1 // loop_header
      %s17 = sphi 0, %s21
      %p18 = scmp.ge.s32.totalorder %s17, 4
      %s27 = sphi 0, %s29
      %s30 = sphi 0, %s27
      %s31 = sphi 0, %s30
      %s47 = sphi 0, %s31
      %s51 = sphi 0, %s51
      %s53 = sphi 0, %s51
      %s54 = sphi 0, %s53
      %s68 = sphi 0, %s54
      %s72 = sphi 0, %s72
      %s74 = sphi 0, %s72
      %s75 = sphi 0, %s74
      %s89 = sphi 0, %s75
      %s93 = sphi 0, %s93
      %s95 = sphi 0, %s93
      %s96 = sphi 0, %s95
      %s110 = sphi 0, %s96
      %s114 = sphi 0, %s114
      %s116 = sphi 0, %s114
      %s117 = sphi 0, %s116
      %s131 = sphi 0, %s117
      %s135 = sphi 0, %s135
      %s137 = sphi 0, %s135
      %s138 = sphi 0, %s137
      %s152 = sphi 0, %s138
      %s158 = sphi 0, %s160
      %s161 = sphi 0, %s158
      %s162 = sphi 0, %s161
      %s178 = sphi 0, %s162
    $region4: #{tpu_custom_call.1} parent=1 // loop_header_branch
      %20 = sbr.rel (%p18) target = $region8
    $region5: #{tpu_custom_call.1} parent=1 // loop_body
      %s22 = ssub.s32 %s17, 1
      %s23 = ssub.s32 %s17, 2
      %s24 = sadd.s32 %s17, 1
      %s25 = ssub.s32 %s17, %s24
      %p26 = scmp.eq.s32.totalorder %s25, 0
      %s28 = sadd.s32 %s27, 1
      %s29 = scalar_select %p26, %s27, %s28
      %p32 = pneg %p26
      %p33 = scmp.eq.s32.totalorder %s17, 1
      %p34 = por %p32, %p33
      %p35 = scmp.ne.s32.totalorder %s27, %s30
      %p36 = scmp.eq.s32.totalorder %s17, 0
      %p37 = por %p35, %p36
      %p38 = scmp.ne.s32.totalorder %s27, %s30
      %p39 = scmp.eq.s32.totalorder %s22, 1
      %p40 = por %p38, %p39
      %p41 = scmp.ne.s32.totalorder %s30, %s31
      %p42 = scmp.eq.s32.totalorder %s22, 0
      %p43 = por %p41, %p42
      %p44 = scmp.ne.s32.totalorder %s30, %s31
      %p45 = scmp.eq.s32.totalorder %s23, 1
      %p46 = por %p44, %p45
      %p48 = scmp.ne.s32.totalorder %s31, %s47
      %p49 = scmp.eq.s32.totalorder %s23, 0
      %p50 = por %p48, %p49
      %s52 = sadd.s32 %s51, 1
      %p55 = scmp.eq.s32.totalorder %s17, 1
      %p56 = scmp.ne.s32.totalorder %s51, %s53
      %p57 = scmp.eq.s32.totalorder %s17, 0
      %p58 = por %p56, %p57
      %p59 = scmp.ne.s32.totalorder %s51, %s53
      %p60 = scmp.eq.s32.totalorder %s22, 1
      %p61 = por %p59, %p60
      %p62 = scmp.ne.s32.totalorder %s53, %s54
      %p63 = scmp.eq.s32.totalorder %s22, 0
      %p64 = por %p62, %p63
      %p65 = scmp.ne.s32.totalorder %s53, %s54
      %p66 = scmp.eq.s32.totalorder %s23, 1
      %p67 = por %p65, %p66
      %p69 = scmp.ne.s32.totalorder %s54, %s68
      %p70 = scmp.eq.s32.totalorder %s23, 0
      %p71 = por %p69, %p70
      %s73 = sadd.s32 %s72, 1
      %p76 = scmp.eq.s32.totalorder %s17, 1
      %p77 = scmp.ne.s32.totalorder %s72, %s74
      %p78 = scmp.eq.s32.totalorder %s17, 0
      %p79 = por %p77, %p78
      %p80 = scmp.ne.s32.totalorder %s72, %s74
      %p81 = scmp.eq.s32.totalorder %s22, 1
      %p82 = por %p80, %p81
      %p83 = scmp.ne.s32.totalorder %s74, %s75
      %p84 = scmp.eq.s32.totalorder %s22, 0
      %p85 = por %p83, %p84
      %p86 = scmp.ne.s32.totalorder %s74, %s75
      %p87 = scmp.eq.s32.totalorder %s23, 1
      %p88 = por %p86, %p87
      %p90 = scmp.ne.s32.totalorder %s75, %s89
      %p91 = scmp.eq.s32.totalorder %s23, 0
      %p92 = por %p90, %p91
      %s94 = sadd.s32 %s93, 1
      %p97 = scmp.eq.s32.totalorder %s17, 1
      %p98 = scmp.ne.s32.totalorder %s93, %s95
      %p99 = scmp.eq.s32.totalorder %s17, 0
      %p100 = por %p98, %p99
      %p101 = scmp.ne.s32.totalorder %s93, %s95
      %p102 = scmp.eq.s32.totalorder %s22, 1
      %p103 = por %p101, %p102
      %p104 = scmp.ne.s32.totalorder %s95, %s96
      %p105 = scmp.eq.s32.totalorder %s22, 0
      %p106 = por %p104, %p105
      %p107 = scmp.ne.s32.totalorder %s95, %s96
      %p108 = scmp.eq.s32.totalorder %s23, 1
      %p109 = por %p107, %p108
      %p111 = scmp.ne.s32.totalorder %s96, %s110
      %p112 = scmp.eq.s32.totalorder %s23, 0
      %p113 = por %p111, %p112
      %s115 = sadd.s32 %s114, 1
      %p118 = scmp.eq.s32.totalorder %s17, 1
      %p119 = scmp.ne.s32.totalorder %s114, %s116
      %p120 = scmp.eq.s32.totalorder %s17, 0
      %p121 = por %p119, %p120
      %p122 = scmp.ne.s32.totalorder %s114, %s116
      %p123 = scmp.eq.s32.totalorder %s22, 1
      %p124 = por %p122, %p123
      %p125 = scmp.ne.s32.totalorder %s116, %s117
      %p126 = scmp.eq.s32.totalorder %s22, 0
      %p127 = por %p125, %p126
      %p128 = scmp.ne.s32.totalorder %s116, %s117
      %p129 = scmp.eq.s32.totalorder %s23, 1
      %p130 = por %p128, %p129
      %p132 = scmp.ne.s32.totalorder %s117, %s131
      %p133 = scmp.eq.s32.totalorder %s23, 0
      %p134 = por %p132, %p133
      %s136 = sadd.s32 %s135, 1
      %p139 = scmp.eq.s32.totalorder %s17, 1
      %p140 = scmp.ne.s32.totalorder %s135, %s137
      %p141 = scmp.eq.s32.totalorder %s17, 0
      %p142 = por %p140, %p141
      %p143 = scmp.ne.s32.totalorder %s135, %s137
      %p144 = scmp.eq.s32.totalorder %s22, 1
      %p145 = por %p143, %p144
      %p146 = scmp.ne.s32.totalorder %s137, %s138
      %p147 = scmp.eq.s32.totalorder %s22, 0
      %p148 = por %p146, %p147
      %p149 = scmp.ne.s32.totalorder %s137, %s138
      %p150 = scmp.eq.s32.totalorder %s23, 1
      %p151 = por %p149, %p150
      %p153 = scmp.ne.s32.totalorder %s138, %s152
      %p154 = scmp.eq.s32.totalorder %s23, 0
      %p155 = por %p153, %p154
      %s156 = ssub.s32 %s17, %s24
      %p157 = scmp.eq.s32.totalorder %s156, 0
      %s159 = sadd.s32 %s158, 1
      %s160 = scalar_select %p157, %s158, %s159
      %p163 = pneg %p157
      %p164 = scmp.eq.s32.totalorder %s17, 1
      %p165 = por %p163, %p164
      %p166 = scmp.ne.s32.totalorder %s158, %s161
      %p167 = scmp.eq.s32.totalorder %s17, 0
      %p168 = por %p166, %p167
      %p169 = scmp.ne.s32.totalorder %s158, %s161
      %p170 = scmp.eq.s32.totalorder %s22, 1
      %p171 = por %p169, %p170
      %p172 = scmp.ne.s32.totalorder %s161, %s162
      %p173 = scmp.eq.s32.totalorder %s22, 0
      %p174 = por %p172, %p173
      %p175 = scmp.ne.s32.totalorder %s161, %s162
      %p176 = scmp.eq.s32.totalorder %s23, 1
      %p177 = por %p175, %p176
      %p179 = scmp.ne.s32.totalorder %s162, %s178
      %p180 = scmp.eq.s32.totalorder %s23, 0
      %p181 = por %p179, %p180
      %p182 = scmp.le.s32.totalorder 1, %s17
      %p183 = scmp.lt.s32.totalorder %s17, 3
      %p184 = pnand %p182, %p183
      %p185 = pneg %p184
      // Predicated region
      $region9: #{tpu_custom_call.1} parent=5 // pred_check
        _
      $region10: #{tpu_custom_call.1} parent=5 // pred_check_branch
        %187 = sbr.rel (%p184) target = $region12
      $region11: #{tpu_custom_call.1} parent=5 // pred_region
        %s188 = ssub.s32 %s17, 1
        // Predicated region
        $region13: #{tpu_custom_call.1} parent=11 // pred_check
          %p189 = pneg %p64
        $region14: #{tpu_custom_call.1} parent=11 // pred_check_branch
          %191 = sbr.rel (%p189) target = $region16
        $region15: #{tpu_custom_call.1} parent=11 // pred_region
          %s193 = ssub.s32 4096, 4096
          %194 = vsyncadd [#allocation3], %s193
          %s195 = sshll.u32 [#allocation2], 4
          %s196 = int_to_ptr.vmem [resolvable:$true] %s195
          %201 = dma.hbm_to_vmem [thread:$0]  %s1, 4096, %s196, [#allocation3], 256, 256, 16
        $region16: #{tpu_custom_call.1} parent=11 // pred_fallthru
          _
        // Predicated region
        $region17: #{tpu_custom_call.1} parent=11 // pred_check
          %p202 = pneg %p85
        $region18: #{tpu_custom_call.1} parent=11 // pred_check_branch
          %204 = sbr.rel (%p202) target = $region20
        $region19: #{tpu_custom_call.1} parent=11 // pred_region
          %s206 = ssub.s32 6144, 6144
          %207 = vsyncadd [#allocation6], %s206
          %s208 = sshll.u32 [#allocation5], 4
          %s209 = int_to_ptr.vmem [resolvable:$true] %s208
          %214 = dma.hbm_to_vmem [thread:$0]  %s2, 6144, %s209, [#allocation6], 128, 128, 8
        $region20: #{tpu_custom_call.1} parent=11 // pred_fallthru
          _
        // Predicated region
        $region21: #{tpu_custom_call.1} parent=11 // pred_check
          %p215 = pneg %p106
        $region22: #{tpu_custom_call.1} parent=11 // pred_check_branch
          %217 = sbr.rel (%p215) target = $region24
        $region23: #{tpu_custom_call.1} parent=11 // pred_region
          _
        $region24: #{tpu_custom_call.1} parent=11 // pred_fallthru
          _
        // Predicated region
        $region25: #{tpu_custom_call.1} parent=11 // pred_check
          %p218 = pneg %p127
        $region26: #{tpu_custom_call.1} parent=11 // pred_check_branch
          %220 = sbr.rel (%p218) target = $region28
        $region27: #{tpu_custom_call.1} parent=11 // pred_region
          %s222 = ssub.s32 2048, 2048
          %223 = vsyncadd [#allocation6], %s222
          %s224 = sshll.u32 [#allocation7], 4
          %s225 = int_to_ptr.vmem [resolvable:$true] %s224
          %230 = dma.hbm_to_vmem [thread:$0]  %s4, 2048, %s225, [#allocation6], 128, 128, 8
        $region28: #{tpu_custom_call.1} parent=11 // pred_fallthru
          _
        // Predicated region
        $region29: #{tpu_custom_call.1} parent=11 // pred_check
          %p231 = pneg %p148
        $region30: #{tpu_custom_call.1} parent=11 // pred_check_branch
          %233 = sbr.rel (%p231) target = $region32
        $region31: #{tpu_custom_call.1} parent=11 // pred_region
          _
        $region32: #{tpu_custom_call.1} parent=11 // pred_fallthru
          _
      $region12: #{tpu_custom_call.1} parent=5 // pred_fallthru
        _
      %p234 = scmp.lt.s32.totalorder %s17, 2
      // Predicated region
      $region33: #{tpu_custom_call.1} parent=5 // pred_check
        %p235 = pneg %p234
      $region34: #{tpu_custom_call.1} parent=5 // pred_check_branch
        %237 = sbr.rel (%p235) target = $region36
      $region35: #{tpu_custom_call.1} parent=5 // pred_region
        // Predicated region
        $region37: #{tpu_custom_call.1} parent=35 // pred_check
          %p238 = pneg %p37
        $region38: #{tpu_custom_call.1} parent=35 // pred_check_branch
          %240 = sbr.rel (%p238) target = $region40
        $region39: #{tpu_custom_call.1} parent=35 // pred_region
          %p241 = scmp.lt.s32.totalorder %s17, 1
          %s242 = scalar_select %p241, %s17, 1
          %s243 = smul.addr %s242, 32
          %s244 = smul.addr %s243, 8
          %s245 = scalar_lea.vmem %s0, %s244
        $region40: #{tpu_custom_call.1} parent=35 // pred_fallthru
          _
      $region36: #{tpu_custom_call.1} parent=5 // pred_fallthru
        _
      %p246 = scmp.le.s32.totalorder 1, %s17
      %p247 = scmp.lt.s32.totalorder %s17, 3
      %p248 = pnand %p246, %p247
      %p249 = pneg %p248
      // Predicated region
      $region41: #{tpu_custom_call.1} parent=5 // pred_check
        _
      $region42: #{tpu_custom_call.1} parent=5 // pred_check_branch
        %251 = sbr.rel (%p248) target = $region44
      $region43: #{tpu_custom_call.1} parent=5 // pred_region
        %s252 = ssub.s32 %s17, 1
        // Predicated region
        $region45: #{tpu_custom_call.1} parent=43 // pred_check
          %p253 = pneg %p64
        $region46: #{tpu_custom_call.1} parent=43 // pred_check_branch
          %255 = sbr.rel (%p253) target = $region48
        $region47: #{tpu_custom_call.1} parent=43 // pred_region
          %256 = dma.done [#allocation3], 4096
        $region48: #{tpu_custom_call.1} parent=43 // pred_fallthru
          _
        // Predicated region
        $region49: #{tpu_custom_call.1} parent=43 // pred_check
          %p257 = pneg %p85
        $region50: #{tpu_custom_call.1} parent=43 // pred_check_branch
          %259 = sbr.rel (%p257) target = $region52
        $region51: #{tpu_custom_call.1} parent=43 // pred_region
          %260 = dma.done [#allocation6], 6144
        $region52: #{tpu_custom_call.1} parent=43 // pred_fallthru
          _
        // Predicated region
        $region53: #{tpu_custom_call.1} parent=43 // pred_check
          %p261 = pneg %p127
        $region54: #{tpu_custom_call.1} parent=43 // pred_check_branch
          %263 = sbr.rel (%p261) target = $region56
        $region55: #{tpu_custom_call.1} parent=43 // pred_region
          %264 = dma.done [#allocation6], 2048
        $region56: #{tpu_custom_call.1} parent=43 // pred_fallthru
          _
        %p265 = scmp.lt.s32.totalorder %s22, 1
        %s266 = scalar_select %p265, %s22, 1
        %s267 = smul.addr %s266, 32
        %s268 = smul.addr %s267, 8
        %s269 = scalar_lea.vmem %s0, %s268
        %p270 = pneg %p43
        %p271 = pneg %p40
        %p272 = pneg %p64
        %p273 = pneg %p61
        %p274 = pneg %p85
        %p275 = pneg %p82
        %p276 = pneg %p106
        %p277 = pneg %p103
        %p278 = pneg %p127
        %p279 = pneg %p124
        %p280 = pneg %p148
        %p281 = pneg %p145
        %p282 = pneg %p174
        %p283 = pneg %p171
        %s284 = sand.u32 %s161, 1
        %s285 = scalar_lea.sflag [#allocation4], %s284
        %s286 = sand.u32 %s161, 1
        %s287 = smul.addr %s286, 256
        %s288 = scalar_lea.vmem [#allocation8], %s287
        %p289 = scmp.lt.s32.totalorder %s22, 1
        %s290 = scalar_select %p289, %s22, 1
        %s291 = smul.addr %s290, 32
        %s292 = smul.addr %s291, 8
        %s293 = scalar_lea.vmem %s0, %s292
        %v295 = vld [vmem:[%s293] sm:$0xff]
        %v296 = vld [vmem:[%s293 + $0x8] sm:$0xff]
        %v297 = vld [vmem:[%s293 + $0x10] sm:$0xff]
        %v298 = vld [vmem:[%s293 + $0x18] sm:$0xff]
        %v299 = vld [vmem:[%s293 + $0x20] sm:$0xff]
        %v300 = vld [vmem:[%s293 + $0x28] sm:$0xff]
        %v301 = vld [vmem:[%s293 + $0x30] sm:$0xff]
        %v302 = vld [vmem:[%s293 + $0x38] sm:$0xff]
        %v303 = vld [vmem:[%s293 + $0x40] sm:$0xff]
        %v304 = vld [vmem:[%s293 + $0x48] sm:$0xff]
        %v305 = vld [vmem:[%s293 + $0x50] sm:$0xff]
        %v306 = vld [vmem:[%s293 + $0x58] sm:$0xff]
        %v307 = vld [vmem:[%s293 + $0x60] sm:$0xff]
        %v308 = vld [vmem:[%s293 + $0x68] sm:$0xff]
        %v309 = vld [vmem:[%s293 + $0x70] sm:$0xff]
        %v310 = vld [vmem:[%s293 + $0x78] sm:$0xff]
        %v311 = vld [vmem:[%s293 + $0x80] sm:$0xff]
        %v312 = vld [vmem:[%s293 + $0x88] sm:$0xff]
        %v313 = vld [vmem:[%s293 + $0x90] sm:$0xff]
        %v314 = vld [vmem:[%s293 + $0x98] sm:$0xff]
        %v315 = vld [vmem:[%s293 + $0xa0] sm:$0xff]
        %v316 = vld [vmem:[%s293 + $0xa8] sm:$0xff]
        %v317 = vld [vmem:[%s293 + $0xb0] sm:$0xff]
        %v318 = vld [vmem:[%s293 + $0xb8] sm:$0xff]
        %v319 = vld [vmem:[%s293 + $0xc0] sm:$0xff]
        %v320 = vld [vmem:[%s293 + $0xc8] sm:$0xff]
        %v321 = vld [vmem:[%s293 + $0xd0] sm:$0xff]
        %v322 = vld [vmem:[%s293 + $0xd8] sm:$0xff]
        %v323 = vld [vmem:[%s293 + $0xe0] sm:$0xff]
        %v324 = vld [vmem:[%s293 + $0xe8] sm:$0xff]
        %v325 = vld [vmem:[%s293 + $0xf0] sm:$0xff]
        %v326 = vld [vmem:[%s293 + $0xf8] sm:$0xff]
        %v327 = vld [vmem:[#allocation2] sm:$0xff]
        %v328 = vld [vmem:[#allocation2 + $0x8] sm:$0xff]
        %v329 = vld [vmem:[#allocation2 + $0x10] sm:$0xff]
        %v330 = vld [vmem:[#allocation2 + $0x18] sm:$0xff]
        %v331 = vld [vmem:[#allocation2 + $0x20] sm:$0xff]
        %v332 = vld [vmem:[#allocation2 + $0x28] sm:$0xff]
        %v333 = vld [vmem:[#allocation2 + $0x30] sm:$0xff]
        %v334 = vld [vmem:[#allocation2 + $0x38] sm:$0xff]
        %v335 = vld [vmem:[#allocation2 + $0x40] sm:$0xff]
        %v336 = vld [vmem:[#allocation2 + $0x48] sm:$0xff]
        %v337 = vld [vmem:[#allocation2 + $0x50] sm:$0xff]
        %v338 = vld [vmem:[#allocation2 + $0x58] sm:$0xff]
        %v339 = vld [vmem:[#allocation2 + $0x60] sm:$0xff]
        %v340 = vld [vmem:[#allocation2 + $0x68] sm:$0xff]
        %v341 = vld [vmem:[#allocation2 + $0x70] sm:$0xff]
        %v342 = vld [vmem:[#allocation2 + $0x78] sm:$0xff]
        %v343 = vld [vmem:[#allocation2 + $0x80] sm:$0xff]
        %v344 = vld [vmem:[#allocation2 + $0x88] sm:$0xff]
        %v345 = vld [vmem:[#allocation2 + $0x90] sm:$0xff]
        %v346 = vld [vmem:[#allocation2 + $0x98] sm:$0xff]
        %v347 = vld [vmem:[#allocation2 + $0xa0] sm:$0xff]
        %v348 = vld [vmem:[#allocation2 + $0xa8] sm:$0xff]
        %v349 = vld [vmem:[#allocation2 + $0xb0] sm:$0xff]
        %v350 = vld [vmem:[#allocation2 + $0xb8] sm:$0xff]
        %v351 = vld [vmem:[#allocation2 + $0xc0] sm:$0xff]
        %v352 = vld [vmem:[#allocation2 + $0xc8] sm:$0xff]
        %v353 = vld [vmem:[#allocation2 + $0xd0] sm:$0xff]
        %v354 = vld [vmem:[#allocation2 + $0xd8] sm:$0xff]
        %v355 = vld [vmem:[#allocation2 + $0xe0] sm:$0xff]
        %v356 = vld [vmem:[#allocation2 + $0xe8] sm:$0xff]
        %v357 = vld [vmem:[#allocation2 + $0xf0] sm:$0xff]
        %v358 = vld [vmem:[#allocation2 + $0xf8] sm:$0xff]
        %v359 = vadd.f32 %v295, %v327
        %v360 = vadd.f32 %v296, %v328
        %v361 = vadd.f32 %v297, %v329
        %v362 = vadd.f32 %v298, %v330
        %v363 = vadd.f32 %v299, %v331
        %v364 = vadd.f32 %v300, %v332
        %v365 = vadd.f32 %v301, %v333
        %v366 = vadd.f32 %v302, %v334
        %v367 = vadd.f32 %v303, %v335
        %v368 = vadd.f32 %v304, %v336
        %v369 = vadd.f32 %v305, %v337
        %v370 = vadd.f32 %v306, %v338
        %v371 = vadd.f32 %v307, %v339
        %v372 = vadd.f32 %v308, %v340
        %v373 = vadd.f32 %v309, %v341
        %v374 = vadd.f32 %v310, %v342
        %v375 = vadd.f32 %v311, %v343
        %v376 = vadd.f32 %v312, %v344
        %v377 = vadd.f32 %v313, %v345
        %v378 = vadd.f32 %v314, %v346
        %v379 = vadd.f32 %v315, %v347
        %v380 = vadd.f32 %v316, %v348
        %v381 = vadd.f32 %v317, %v349
        %v382 = vadd.f32 %v318, %v350
        %v383 = vadd.f32 %v319, %v351
        %v384 = vadd.f32 %v320, %v352
        %v385 = vadd.f32 %v321, %v353
        %v386 = vadd.f32 %v322, %v354
        %v387 = vadd.f32 %v323, %v355
        %v388 = vadd.f32 %v324, %v356
        %v389 = vadd.f32 %v325, %v357
        %v390 = vadd.f32 %v326, %v358
        %v391 = vld [vmem:[#allocation5] sm:$0xff]
        %v392 = vld [vmem:[#allocation5 + $0x8] sm:$0xff]
        %v393 = vld [vmem:[#allocation5 + $0x10] sm:$0xff]
        %v394 = vld [vmem:[#allocation5 + $0x18] sm:$0xff]
        %v395 = vld [vmem:[#allocation5 + $0x20] sm:$0xff]
        %v396 = vld [vmem:[#allocation5 + $0x28] sm:$0xff]
        %v397 = vld [vmem:[#allocation5 + $0x30] sm:$0xff]
        %v398 = vld [vmem:[#allocation5 + $0x38] sm:$0xff]
        %v399 = vld [vmem:[#allocation5 + $0x40] sm:$0xff]
        %v400 = vld [vmem:[#allocation5 + $0x48] sm:$0xff]
        %v401 = vld [vmem:[#allocation5 + $0x50] sm:$0xff]
        %v402 = vld [vmem:[#allocation5 + $0x58] sm:$0xff]
        %v403 = vld [vmem:[#allocation5 + $0x60] sm:$0xff]
        %v404 = vld [vmem:[#allocation5 + $0x68] sm:$0xff]
        %v405 = vld [vmem:[#allocation5 + $0x70] sm:$0xff]
        %v406 = vld [vmem:[#allocation5 + $0x78] sm:$0xff]
        %v407 = vld [vmem:[#allocation5 + $0x80] sm:$0xff]
        %v408 = vld [vmem:[#allocation5 + $0x88] sm:$0xff]
        %v409 = vld [vmem:[#allocation5 + $0x90] sm:$0xff]
        %v410 = vld [vmem:[#allocation5 + $0x98] sm:$0xff]
        %v411 = vld [vmem:[#allocation5 + $0xa0] sm:$0xff]
        %v412 = vld [vmem:[#allocation5 + $0xa8] sm:$0xff]
        %v413 = vld [vmem:[#allocation5 + $0xb0] sm:$0xff]
        %v414 = vld [vmem:[#allocation5 + $0xb8] sm:$0xff]
        %v415 = vld [vmem:[#allocation5 + $0xc0] sm:$0xff]
        %v416 = vld [vmem:[#allocation5 + $0xc8] sm:$0xff]
        %v417 = vld [vmem:[#allocation5 + $0xd0] sm:$0xff]
        %v418 = vld [vmem:[#allocation5 + $0xd8] sm:$0xff]
        %v419 = vld [vmem:[#allocation5 + $0xe0] sm:$0xff]
        %v420 = vld [vmem:[#allocation5 + $0xe8] sm:$0xff]
        %v421 = vld [vmem:[#allocation5 + $0xf0] sm:$0xff]
        %v422 = vld [vmem:[#allocation5 + $0xf8] sm:$0xff]
        %v423 = vld [vmem:[#allocation5 + $0x100] sm:$0xff]
        %v424 = vld [vmem:[#allocation5 + $0x108] sm:$0xff]
        %v425 = vld [vmem:[#allocation5 + $0x110] sm:$0xff]
        %v426 = vld [vmem:[#allocation5 + $0x118] sm:$0xff]
        %v427 = vld [vmem:[#allocation5 + $0x120] sm:$0xff]
        %v428 = vld [vmem:[#allocation5 + $0x128] sm:$0xff]
        %v429 = vld [vmem:[#allocation5 + $0x130] sm:$0xff]
        %v430 = vld [vmem:[#allocation5 + $0x138] sm:$0xff]
        %v431 = vld [vmem:[#allocation5 + $0x140] sm:$0xff]
        %v432 = vld [vmem:[#allocation5 + $0x148] sm:$0xff]
        %v433 = vld [vmem:[#allocation5 + $0x150] sm:$0xff]
        %v434 = vld [vmem:[#allocation5 + $0x158] sm:$0xff]
        %v435 = vld [vmem:[#allocation5 + $0x160] sm:$0xff]
        %v436 = vld [vmem:[#allocation5 + $0x168] sm:$0xff]
        %v437 = vld [vmem:[#allocation5 + $0x170] sm:$0xff]
        %v438 = vld [vmem:[#allocation5 + $0x178] sm:$0xff]
        %v439 = vpack.c.bf16 %v392, %v391
        %v440 = vpack.c.bf16 %v394, %v393
        %v441 = vpack.c.bf16 %v396, %v395
        %v442 = vpack.c.bf16 %v398, %v397
        %v443 = vpack.c.bf16 %v400, %v399
        %v444 = vpack.c.bf16 %v402, %v401
        %v445 = vpack.c.bf16 %v404, %v403
        %v446 = vpack.c.bf16 %v406, %v405
        %v447 = vpack.c.bf16 %v408, %v407
        %v448 = vpack.c.bf16 %v410, %v409
        %v449 = vpack.c.bf16 %v412, %v411
        %v450 = vpack.c.bf16 %v414, %v413
        %v451 = vpack.c.bf16 %v416, %v415
        %v452 = vpack.c.bf16 %v418, %v417
        %v453 = vpack.c.bf16 %v420, %v419
        %v454 = vpack.c.bf16 %v422, %v421
        %v455 = vpack.c.bf16 %v424, %v423
        %v456 = vpack.c.bf16 %v426, %v425
        %v457 = vpack.c.bf16 %v428, %v427
        %v458 = vpack.c.bf16 %v430, %v429
        %v459 = vpack.c.bf16 %v432, %v431
        %v460 = vpack.c.bf16 %v434, %v433
        %v461 = vpack.c.bf16 %v436, %v435
        %v462 = vpack.c.bf16 %v438, %v437
        %v463 = vpack.c.bf16 %v361, %v359
        %v464 = vpack.c.bf16 %v362, %v360
        %v465 = vpack.c.bf16 %v365, %v363
        %v466 = vpack.c.bf16 %v366, %v364
        %v467 = vpack.c.bf16 %v369, %v367
        %v468 = vpack.c.bf16 %v370, %v368
        %v469 = vpack.c.bf16 %v373, %v371
        %v470 = vpack.c.bf16 %v374, %v372
        %v471 = vpack.c.bf16 %v377, %v375
        %v472 = vpack.c.bf16 %v378, %v376
        %v473 = vpack.c.bf16 %v381, %v379
        %v474 = vpack.c.bf16 %v382, %v380
        %v475 = vpack.c.bf16 %v385, %v383
        %v476 = vpack.c.bf16 %v386, %v384
        %v477 = vpack.c.bf16 %v389, %v387
        %v478 = vpack.c.bf16 %v390, %v388
        %v479 = vld [vmem:[%s3] sm:$0xff]
        %v480 = vld [vmem:[%s3 + $0x8] sm:$0xff]
        %v481 = vld [vmem:[%s3 + $0x10] sm:$0xff]
        %v482 = vld [vmem:[%s3 + $0x18] sm:$0xff]
        %v483 = vld [vmem:[%s3 + $0x20] sm:$0xff]
        %v484 = vld [vmem:[%s3 + $0x28] sm:$0xff]
        %v485 = vld [vmem:[%s3 + $0x30] sm:$0xff]
        %v486 = vld [vmem:[%s3 + $0x38] sm:$0xff]
        %v487 = vld [vmem:[%s3 + $0x40] sm:$0xff]
        %v488 = vld [vmem:[%s3 + $0x48] sm:$0xff]
        %v489 = vld [vmem:[%s3 + $0x50] sm:$0xff]
        %v490 = vld [vmem:[%s3 + $0x58] sm:$0xff]
        %v491 = vld [vmem:[%s3 + $0x60] sm:$0xff]
        %v492 = vld [vmem:[%s3 + $0x68] sm:$0xff]
        %v493 = vld [vmem:[%s3 + $0x70] sm:$0xff]
        %v494 = vld [vmem:[%s3 + $0x78] sm:$0xff]
        %v495 = vld [vmem:[%s3 + $0x80] sm:$0xff]
        %v496 = vld [vmem:[%s3 + $0x88] sm:$0xff]
        %v497 = vld [vmem:[%s3 + $0x90] sm:$0xff]
        %v498 = vld [vmem:[%s3 + $0x98] sm:$0xff]
        %v499 = vld [vmem:[%s3 + $0xa0] sm:$0xff]
        %v500 = vld [vmem:[%s3 + $0xa8] sm:$0xff]
        %v501 = vld [vmem:[%s3 + $0xb0] sm:$0xff]
        %v502 = vld [vmem:[%s3 + $0xb8] sm:$0xff]
        %v503 = vld [vmem:[%s3 + $0xc0] sm:$0xff]
        %v504 = vld [vmem:[%s3 + $0xc8] sm:$0xff]
        %v505 = vld [vmem:[%s3 + $0xd0] sm:$0xff]
        %v506 = vld [vmem:[%s3 + $0xd8] sm:$0xff]
        %v507 = vld [vmem:[%s3 + $0xe0] sm:$0xff]
        %v508 = vld [vmem:[%s3 + $0xe8] sm:$0xff]
        %v509 = vld [vmem:[%s3 + $0xf0] sm:$0xff]
        %v510 = vld [vmem:[%s3 + $0xf8] sm:$0xff]
        %v511 = vld [vmem:[%s3 + $0x100] sm:$0xff]
        %v512 = vld [vmem:[%s3 + $0x108] sm:$0xff]
        %v513 = vld [vmem:[%s3 + $0x110] sm:$0xff]
        %v514 = vld [vmem:[%s3 + $0x118] sm:$0xff]
        %v515 = vld [vmem:[%s3 + $0x120] sm:$0xff]
        %v516 = vld [vmem:[%s3 + $0x128] sm:$0xff]
        %v517 = vld [vmem:[%s3 + $0x130] sm:$0xff]
        %v518 = vld [vmem:[%s3 + $0x138] sm:$0xff]
        %v519 = vld [vmem:[%s3 + $0x140] sm:$0xff]
        %v520 = vld [vmem:[%s3 + $0x148] sm:$0xff]
        %v521 = vld [vmem:[%s3 + $0x150] sm:$0xff]
        %v522 = vld [vmem:[%s3 + $0x158] sm:$0xff]
        %v523 = vld [vmem:[%s3 + $0x160] sm:$0xff]
        %v524 = vld [vmem:[%s3 + $0x168] sm:$0xff]
        %v525 = vld [vmem:[%s3 + $0x170] sm:$0xff]
        %v526 = vld [vmem:[%s3 + $0x178] sm:$0xff]
        %528 = vset.pattern.permute.xlu0 0
        %529 = vperm.xlu0 %528, %v479
        %v530 = vpop.permute.xlu0 %529
        %533 = vset.pattern.permute.xlu0 0
        %534 = vperm.xlu0 %533, %v480
        %v535 = vpop.permute.xlu0 %534
        %538 = vset.pattern.permute.xlu0 0
        %539 = vperm.xlu0 %538, %v481
        %v540 = vpop.permute.xlu0 %539
        %543 = vset.pattern.permute.xlu0 0
        %544 = vperm.xlu0 %543, %v482
        %v545 = vpop.permute.xlu0 %544
        %548 = vset.pattern.permute.xlu0 0
        %549 = vperm.xlu0 %548, %v483
        %v550 = vpop.permute.xlu0 %549
        %553 = vset.pattern.permute.xlu0 0
        %554 = vperm.xlu0 %553, %v484
        %v555 = vpop.permute.xlu0 %554
        %558 = vset.pattern.permute.xlu0 0
        %559 = vperm.xlu0 %558, %v485
        %v560 = vpop.permute.xlu0 %559
        %563 = vset.pattern.permute.xlu0 0
        %564 = vperm.xlu0 %563, %v486
        %v565 = vpop.permute.xlu0 %564
        %568 = vset.pattern.permute.xlu0 0
        %569 = vperm.xlu0 %568, %v487
        %v570 = vpop.permute.xlu0 %569
        %573 = vset.pattern.permute.xlu0 0
        %574 = vperm.xlu0 %573, %v488
        %v575 = vpop.permute.xlu0 %574
        %578 = vset.pattern.permute.xlu0 0
        %579 = vperm.xlu0 %578, %v489
        %v580 = vpop.permute.xlu0 %579
        %583 = vset.pattern.permute.xlu0 0
        %584 = vperm.xlu0 %583, %v490
        %v585 = vpop.permute.xlu0 %584
        %588 = vset.pattern.permute.xlu0 0
        %589 = vperm.xlu0 %588, %v491
        %v590 = vpop.permute.xlu0 %589
        %593 = vset.pattern.permute.xlu0 0
        %594 = vperm.xlu0 %593, %v492
        %v595 = vpop.permute.xlu0 %594
        %598 = vset.pattern.permute.xlu0 0
        %599 = vperm.xlu0 %598, %v493
        %v600 = vpop.permute.xlu0 %599
        %603 = vset.pattern.permute.xlu0 0
        %604 = vperm.xlu0 %603, %v494
        %v605 = vpop.permute.xlu0 %604
        %608 = vset.pattern.permute.xlu0 0
        %609 = vperm.xlu0 %608, %v495
        %v610 = vpop.permute.xlu0 %609
        %613 = vset.pattern.permute.xlu0 0
        %614 = vperm.xlu0 %613, %v496
        %v615 = vpop.permute.xlu0 %614
        %618 = vset.pattern.permute.xlu0 0
        %619 = vperm.xlu0 %618, %v497
        %v620 = vpop.permute.xlu0 %619
        %623 = vset.pattern.permute.xlu0 0
        %624 = vperm.xlu0 %623, %v498
        %v625 = vpop.permute.xlu0 %624
        %628 = vset.pattern.permute.xlu0 0
        %629 = vperm.xlu0 %628, %v499
        %v630 = vpop.permute.xlu0 %629
        %633 = vset.pattern.permute.xlu0 0
        %634 = vperm.xlu0 %633, %v500
        %v635 = vpop.permute.xlu0 %634
        %638 = vset.pattern.permute.xlu0 0
        %639 = vperm.xlu0 %638, %v501
        %v640 = vpop.permute.xlu0 %639
        %643 = vset.pattern.permute.xlu0 0
        %644 = vperm.xlu0 %643, %v502
        %v645 = vpop.permute.xlu0 %644
        %648 = vset.pattern.permute.xlu0 0
        %649 = vperm.xlu0 %648, %v503
        %v650 = vpop.permute.xlu0 %649
        %653 = vset.pattern.permute.xlu0 0
        %654 = vperm.xlu0 %653, %v504
        %v655 = vpop.permute.xlu0 %654
        %658 = vset.pattern.permute.xlu0 0
        %659 = vperm.xlu0 %658, %v505
        %v660 = vpop.permute.xlu0 %659
        %663 = vset.pattern.permute.xlu0 0
        %664 = vperm.xlu0 %663, %v506
        %v665 = vpop.permute.xlu0 %664
        %668 = vset.pattern.permute.xlu0 0
        %669 = vperm.xlu0 %668, %v507
        %v670 = vpop.permute.xlu0 %669
        %673 = vset.pattern.permute.xlu0 0
        %674 = vperm.xlu0 %673, %v508
        %v675 = vpop.permute.xlu0 %674
        %678 = vset.pattern.permute.xlu0 0
        %679 = vperm.xlu0 %678, %v509
        %v680 = vpop.permute.xlu0 %679
        %683 = vset.pattern.permute.xlu0 0
        %684 = vperm.xlu0 %683, %v510
        %v685 = vpop.permute.xlu0 %684
        %688 = vset.pattern.permute.xlu0 0
        %689 = vperm.xlu0 %688, %v511
        %v690 = vpop.permute.xlu0 %689
        %693 = vset.pattern.permute.xlu0 0
        %694 = vperm.xlu0 %693, %v512
        %v695 = vpop.permute.xlu0 %694
        %698 = vset.pattern.permute.xlu0 0
        %699 = vperm.xlu0 %698, %v513
        %v700 = vpop.permute.xlu0 %699
        %703 = vset.pattern.permute.xlu0 0
        %704 = vperm.xlu0 %703, %v514
        %v705 = vpop.permute.xlu0 %704
        %708 = vset.pattern.permute.xlu0 0
        %709 = vperm.xlu0 %708, %v515
        %v710 = vpop.permute.xlu0 %709
        %713 = vset.pattern.permute.xlu0 0
        %714 = vperm.xlu0 %713, %v516
        %v715 = vpop.permute.xlu0 %714
        %718 = vset.pattern.permute.xlu0 0
        %719 = vperm.xlu0 %718, %v517
        %v720 = vpop.permute.xlu0 %719
        %723 = vset.pattern.permute.xlu0 0
        %724 = vperm.xlu0 %723, %v518
        %v725 = vpop.permute.xlu0 %724
        %728 = vset.pattern.permute.xlu0 0
        %729 = vperm.xlu0 %728, %v519
        %v730 = vpop.permute.xlu0 %729
        %733 = vset.pattern.permute.xlu0 0
        %734 = vperm.xlu0 %733, %v520
        %v735 = vpop.permute.xlu0 %734
        %738 = vset.pattern.permute.xlu0 0
        %739 = vperm.xlu0 %738, %v521
        %v740 = vpop.permute.xlu0 %739
        %743 = vset.pattern.permute.xlu0 0
        %744 = vperm.xlu0 %743, %v522
        %v745 = vpop.permute.xlu0 %744
        %748 = vset.pattern.permute.xlu0 0
        %749 = vperm.xlu0 %748, %v523
        %v750 = vpop.permute.xlu0 %749
        %753 = vset.pattern.permute.xlu0 0
        %754 = vperm.xlu0 %753, %v524
        %v755 = vpop.permute.xlu0 %754
        %758 = vset.pattern.permute.xlu0 0
        %759 = vperm.xlu0 %758, %v525
        %v760 = vpop.permute.xlu0 %759
        %763 = vset.pattern.permute.xlu0 0
        %764 = vperm.xlu0 %763, %v526
        %v765 = vpop.permute.xlu0 %764
        %767 = vmatprep.subr.bf16.mxu0 %v464
        %768 = vmatpush1.bf16.msra.mxu0 %v463
        %769 = vmatprep.subr.bf16.mxu0 %v466
        %770 = vmatpush1.bf16.msra.mxu0 %v465
        %771 = vmatprep.subr.bf16.mxu0 %v468
        %772 = vmatpush1.bf16.msra.mxu0 %v467
        %773 = vmatprep.subr.bf16.mxu0 %v470
        %774 = vmatpush1.bf16.msra.mxu0 %v469
        %775 = vmatprep.subr.bf16.mxu0 %v472
        %776 = vmatpush1.bf16.msra.mxu0 %v471
        %777 = vmatprep.subr.bf16.mxu0 %v474
        %778 = vmatpush1.bf16.msra.mxu0 %v473
        %779 = vmatprep.subr.bf16.mxu0 %v476
        %780 = vmatpush1.bf16.msra.mxu0 %v475
        %781 = vmatprep.subr.bf16.mxu0 %v478
        %782 = vmatpush1.bf16.msra.mxu0 %v477
        %783 = vmatprep.subr.bf16.mxu0 0
        %784 = vmatpush1.bf16.msra.mxu0 0
        %785 = vmatprep.subr.bf16.mxu0 0
        %786 = vmatpush1.bf16.msra.mxu0 0
        %787 = vmatprep.subr.bf16.mxu0 0
        %788 = vmatpush1.bf16.msra.mxu0 0
        %789 = vmatprep.subr.bf16.mxu0 0
        %790 = vmatpush1.bf16.msra.mxu0 0
        %791 = vmatprep.subr.bf16.mxu0 0
        %792 = vmatpush1.bf16.msra.mxu0 0
        %793 = vmatprep.subr.bf16.mxu0 0
        %794 = vmatpush1.bf16.msra.mxu0 0
        %795 = vmatprep.subr.bf16.mxu0 0
        %796 = vmatpush1.bf16.msra.mxu0 0
        %797 = vmatprep.subr.bf16.mxu0 0
        %798 = vmatpush1.bf16.msra.mxu0 0
        %799 = vmatprep.mubr.bf16.mxu0 0
        %800 = vmatmul.mubr.bf16.gmra.mrb[0].mxu0 %v439
        %v801 = vpop.f32.mrb[0].mxu0
        %v802 = vadd.f32 %v530, %v801
        %v803 = vpop.f32.mrb[0].mxu0
        %v804 = vadd.f32 %v530, %v803
        %v805 = vpop.f32.mrb[0].mxu0
        %v806 = vadd.f32 %v535, %v805
        %v807 = vpop.f32.mrb[0].mxu0
        %v808 = vadd.f32 %v535, %v807
        %809 = vmatprep.mubr.bf16.mxu0 0
        %810 = vmatmul.mubr.bf16.gmra.mrb[0].mxu0 %v440
        %v811 = vpop.f32.mrb[0].mxu0
        %v812 = vadd.f32 %v540, %v811
        %v813 = vpop.f32.mrb[0].mxu0
        %v814 = vadd.f32 %v540, %v813
        %v815 = vpop.f32.mrb[0].mxu0
        %v816 = vadd.f32 %v545, %v815
        %v817 = vpop.f32.mrb[0].mxu0
        %v818 = vadd.f32 %v545, %v817
        %819 = vmatprep.mubr.bf16.mxu0 0
        %820 = vmatmul.mubr.bf16.gmra.mrb[0].mxu0 %v441
        %v821 = vpop.f32.mrb[0].mxu0
        %v822 = vadd.f32 %v550, %v821
        %v823 = vpop.f32.mrb[0].mxu0
        %v824 = vadd.f32 %v550, %v823
        %v825 = vpop.f32.mrb[0].mxu0
        %v826 = vadd.f32 %v555, %v825
        %v827 = vpop.f32.mrb[0].mxu0
        %v828 = vadd.f32 %v555, %v827
        %829 = vmatprep.mubr.bf16.mxu0 0
        %830 = vmatmul.mubr.bf16.gmra.mrb[0].mxu0 %v442
        %v831 = vpop.f32.mrb[0].mxu0
        %v832 = vadd.f32 %v560, %v831
        %v833 = vpop.f32.mrb[0].mxu0
        %v834 = vadd.f32 %v560, %v833
        %v835 = vpop.f32.mrb[0].mxu0
        %v836 = vadd.f32 %v565, %v835
        %v837 = vpop.f32.mrb[0].mxu0
        %v838 = vadd.f32 %v565, %v837
        %839 = vmatprep.mubr.bf16.mxu0 0
        %840 = vmatmul.mubr.bf16.gmra.mrb[0].mxu0 %v443
        %v841 = vpop.f32.mrb[0].mxu0
        %v842 = vadd.f32 %v570, %v841
        %v843 = vpop.f32.mrb[0].mxu0
        %v844 = vadd.f32 %v570, %v843
        %v845 = vpop.f32.mrb[0].mxu0
        %v846 = vadd.f32 %v575, %v845
        %v847 = vpop.f32.mrb[0].mxu0
        %v848 = vadd.f32 %v575, %v847
        %849 = vmatprep.mubr.bf16.mxu0 0
        %850 = vmatmul.mubr.bf16.gmra.mrb[0].mxu0 %v444
        %v851 = vpop.f32.mrb[0].mxu0
        %v852 = vadd.f32 %v580, %v851
        %v853 = vpop.f32.mrb[0].mxu0
        %v854 = vadd.f32 %v580, %v853
        %v855 = vpop.f32.mrb[0].mxu0
        %v856 = vadd.f32 %v585, %v855
        %v857 = vpop.f32.mrb[0].mxu0
        %v858 = vadd.f32 %v585, %v857
        %859 = vmatprep.mubr.bf16.mxu0 0
        %860 = vmatmul.mubr.bf16.gmra.mrb[0].mxu0 %v445
        %v861 = vpop.f32.mrb[0].mxu0
        %v862 = vadd.f32 %v590, %v861
        %v863 = vpop.f32.mrb[0].mxu0
        %v864 = vadd.f32 %v590, %v863
        %v865 = vpop.f32.mrb[0].mxu0
        %v866 = vadd.f32 %v595, %v865
        %v867 = vpop.f32.mrb[0].mxu0
        %v868 = vadd.f32 %v595, %v867
        %869 = vmatprep.mubr.bf16.mxu0 0
        %870 = vmatmul.mubr.bf16.gmra.mrb[0].mxu0 %v446
        %v871 = vpop.f32.mrb[0].mxu0
        %v872 = vadd.f32 %v600, %v871
        %v873 = vpop.f32.mrb[0].mxu0
        %v874 = vadd.f32 %v600, %v873
        %v875 = vpop.f32.mrb[0].mxu0
        %v876 = vadd.f32 %v605, %v875
        %v877 = vpop.f32.mrb[0].mxu0
        %v878 = vadd.f32 %v605, %v877
        %879 = vmatprep.mubr.bf16.mxu0 0
        %880 = vmatmul.mubr.bf16.gmra.mrb[0].mxu0 %v447
        %v881 = vpop.f32.mrb[0].mxu0
        %v882 = vadd.f32 %v610, %v881
        %v883 = vpop.f32.mrb[0].mxu0
        %v884 = vadd.f32 %v610, %v883
        %v885 = vpop.f32.mrb[0].mxu0
        %v886 = vadd.f32 %v615, %v885
        %v887 = vpop.f32.mrb[0].mxu0
        %v888 = vadd.f32 %v615, %v887
        %889 = vmatprep.mubr.bf16.mxu0 0
        %890 = vmatmul.mubr.bf16.gmra.mrb[0].mxu0 %v448
        %v891 = vpop.f32.mrb[0].mxu0
        %v892 = vadd.f32 %v620, %v891
        %v893 = vpop.f32.mrb[0].mxu0
        %v894 = vadd.f32 %v620, %v893
        %v895 = vpop.f32.mrb[0].mxu0
        %v896 = vadd.f32 %v625, %v895
        %v897 = vpop.f32.mrb[0].mxu0
        %v898 = vadd.f32 %v625, %v897
        %899 = vmatprep.mubr.bf16.mxu0 0
        %900 = vmatmul.mubr.bf16.gmra.mrb[0].mxu0 %v449
        %v901 = vpop.f32.mrb[0].mxu0
        %v902 = vadd.f32 %v630, %v901
        %v903 = vpop.f32.mrb[0].mxu0
        %v904 = vadd.f32 %v630, %v903
        %v905 = vpop.f32.mrb[0].mxu0
        %v906 = vadd.f32 %v635, %v905
        %v907 = vpop.f32.mrb[0].mxu0
        %v908 = vadd.f32 %v635, %v907
        %909 = vmatprep.mubr.bf16.mxu0 0
        %910 = vmatmul.mubr.bf16.gmra.mrb[0].mxu0 %v450
        %v911 = vpop.f32.mrb[0].mxu0
        %v912 = vadd.f32 %v640, %v911
        %v913 = vpop.f32.mrb[0].mxu0
        %v914 = vadd.f32 %v640, %v913
        %v915 = vpop.f32.mrb[0].mxu0
        %v916 = vadd.f32 %v645, %v915
        %v917 = vpop.f32.mrb[0].mxu0
        %v918 = vadd.f32 %v645, %v917
        %919 = vmatprep.mubr.bf16.mxu0 0
        %920 = vmatmul.mubr.bf16.gmra.mrb[0].mxu0 %v451
        %v921 = vpop.f32.mrb[0].mxu0
        %v922 = vadd.f32 %v650, %v921
        %v923 = vpop.f32.mrb[0].mxu0
        %v924 = vadd.f32 %v650, %v923
        %v925 = vpop.f32.mrb[0].mxu0
        %v926 = vadd.f32 %v655, %v925
        %v927 = vpop.f32.mrb[0].mxu0
        %v928 = vadd.f32 %v655, %v927
        %929 = vmatprep.mubr.bf16.mxu0 0
        %930 = vmatmul.mubr.bf16.gmra.mrb[0].mxu0 %v452
        %v931 = vpop.f32.mrb[0].mxu0
        %v932 = vadd.f32 %v660, %v931
        %v933 = vpop.f32.mrb[0].mxu0
        %v934 = vadd.f32 %v660, %v933
        %v935 = vpop.f32.mrb[0].mxu0
        %v936 = vadd.f32 %v665, %v935
        %v937 = vpop.f32.mrb[0].mxu0
        %v938 = vadd.f32 %v665, %v937
        %939 = vmatprep.mubr.bf16.mxu0 0
        %940 = vmatmul.mubr.bf16.gmra.mrb[0].mxu0 %v453
        %v941 = vpop.f32.mrb[0].mxu0
        %v942 = vadd.f32 %v670, %v941
        %v943 = vpop.f32.mrb[0].mxu0
        %v944 = vadd.f32 %v670, %v943
        %v945 = vpop.f32.mrb[0].mxu0
        %v946 = vadd.f32 %v675, %v945
        %v947 = vpop.f32.mrb[0].mxu0
        %v948 = vadd.f32 %v675, %v947
        %949 = vmatprep.mubr.bf16.mxu0 0
        %950 = vmatmul.mubr.bf16.gmra.mrb[0].mxu0 %v454
        %v951 = vpop.f32.mrb[0].mxu0
        %v952 = vadd.f32 %v680, %v951
        %v953 = vpop.f32.mrb[0].mxu0
        %v954 = vadd.f32 %v680, %v953
        %v955 = vpop.f32.mrb[0].mxu0
        %v956 = vadd.f32 %v685, %v955
        %v957 = vpop.f32.mrb[0].mxu0
        %v958 = vadd.f32 %v685, %v957
        %959 = vmatprep.mubr.bf16.mxu0 0
        %960 = vmatmul.mubr.bf16.gmra.mrb[0].mxu0 %v455
        %v961 = vpop.f32.mrb[0].mxu0
        %v962 = vadd.f32 %v690, %v961
        %v963 = vpop.f32.mrb[0].mxu0
        %v964 = vadd.f32 %v690, %v963
        %v965 = vpop.f32.mrb[0].mxu0
        %v966 = vadd.f32 %v695, %v965
        %v967 = vpop.f32.mrb[0].mxu0
        %v968 = vadd.f32 %v695, %v967
        %969 = vmatprep.mubr.bf16.mxu0 0
        %970 = vmatmul.mubr.bf16.gmra.mrb[0].mxu0 %v456
        %v971 = vpop.f32.mrb[0].mxu0
        %v972 = vadd.f32 %v700, %v971
        %v973 = vpop.f32.mrb[0].mxu0
        %v974 = vadd.f32 %v700, %v973
        %v975 = vpop.f32.mrb[0].mxu0
        %v976 = vadd.f32 %v705, %v975
        %v977 = vpop.f32.mrb[0].mxu0
        %v978 = vadd.f32 %v705, %v977
        %979 = vmatprep.mubr.bf16.mxu0 0
        %980 = vmatmul.mubr.bf16.gmra.mrb[0].mxu0 %v457
        %v981 = vpop.f32.mrb[0].mxu0
        %v982 = vadd.f32 %v710, %v981
        %v983 = vpop.f32.mrb[0].mxu0
        %v984 = vadd.f32 %v710, %v983
        %v985 = vpop.f32.mrb[0].mxu0
        %v986 = vadd.f32 %v715, %v985
        %v987 = vpop.f32.mrb[0].mxu0
        %v988 = vadd.f32 %v715, %v987
        %989 = vmatprep.mubr.bf16.mxu0 0
        %990 = vmatmul.mubr.bf16.gmra.mrb[0].mxu0 %v458
        %v991 = vpop.f32.mrb[0].mxu0
        %v992 = vadd.f32 %v720, %v991
        %v993 = vpop.f32.mrb[0].mxu0
        %v994 = vadd.f32 %v720, %v993
        %v995 = vpop.f32.mrb[0].mxu0
        %v996 = vadd.f32 %v725, %v995
        %v997 = vpop.f32.mrb[0].mxu0
        %v998 = vadd.f32 %v725, %v997
        %999 = vmatprep.mubr.bf16.mxu0 0
        %1000 = vmatmul.mubr.bf16.gmra.mrb[0].mxu0 %v459
        %v1001 = vpop.f32.mrb[0].mxu0
        %v1002 = vadd.f32 %v730, %v1001
        %v1003 = vpop.f32.mrb[0].mxu0
        %v1004 = vadd.f32 %v730, %v1003
        %v1005 = vpop.f32.mrb[0].mxu0
        %v1006 = vadd.f32 %v735, %v1005
        %v1007 = vpop.f32.mrb[0].mxu0
        %v1008 = vadd.f32 %v735, %v1007
        %1009 = vmatprep.mubr.bf16.mxu0 0
        %1010 = vmatmul.mubr.bf16.gmra.mrb[0].mxu0 %v460
        %v1011 = vpop.f32.mrb[0].mxu0
        %v1012 = vadd.f32 %v740, %v1011
        %v1013 = vpop.f32.mrb[0].mxu0
        %v1014 = vadd.f32 %v740, %v1013
        %v1015 = vpop.f32.mrb[0].mxu0
        %v1016 = vadd.f32 %v745, %v1015
        %v1017 = vpop.f32.mrb[0].mxu0
        %v1018 = vadd.f32 %v745, %v1017
        %1019 = vmatprep.mubr.bf16.mxu0 0
        %1020 = vmatmul.mubr.bf16.gmra.mrb[0].mxu0 %v461
        %v1021 = vpop.f32.mrb[0].mxu0
        %v1022 = vadd.f32 %v750, %v1021
        %v1023 = vpop.f32.mrb[0].mxu0
        %v1024 = vadd.f32 %v750, %v1023
        %v1025 = vpop.f32.mrb[0].mxu0
        %v1026 = vadd.f32 %v755, %v1025
        %v1027 = vpop.f32.mrb[0].mxu0
        %v1028 = vadd.f32 %v755, %v1027
        %1029 = vmatprep.mubr.bf16.mxu0 0
        %1030 = vmatmul.mubr.bf16.gmra.mrb[0].mxu0 %v462
        %v1031 = vpop.f32.mrb[0].mxu0
        %v1032 = vadd.f32 %v760, %v1031
        %v1033 = vpop.f32.mrb[0].mxu0
        %v1034 = vadd.f32 %v760, %v1033
        %v1035 = vpop.f32.mrb[0].mxu0
        %v1036 = vadd.f32 %v765, %v1035
        %v1037 = vpop.f32.mrb[0].mxu0
        %v1038 = vadd.f32 %v765, %v1037
        %1039 = vdwg.mxu0
        %v1040 = vpack.c.bf16 %v806, %v802
        %v1041 = vpack.c.bf16 %v808, %v804
        %v1042 = vpack.c.bf16 %v816, %v812
        %v1043 = vpack.c.bf16 %v818, %v814
        %v1044 = vpack.c.bf16 %v826, %v822
        %v1045 = vpack.c.bf16 %v828, %v824
        %v1046 = vpack.c.bf16 %v836, %v832
        %v1047 = vpack.c.bf16 %v838, %v834
        %v1048 = vpack.c.bf16 %v846, %v842
        %v1049 = vpack.c.bf16 %v848, %v844
        %v1050 = vpack.c.bf16 %v856, %v852
        %v1051 = vpack.c.bf16 %v858, %v854
        %v1052 = vpack.c.bf16 %v866, %v862
        %v1053 = vpack.c.bf16 %v868, %v864
        %v1054 = vpack.c.bf16 %v876, %v872
        %v1055 = vpack.c.bf16 %v878, %v874
        %v1056 = vpack.c.bf16 %v886, %v882
        %v1057 = vpack.c.bf16 %v888, %v884
        %v1058 = vpack.c.bf16 %v896, %v892
        %v1059 = vpack.c.bf16 %v898, %v894
        %v1060 = vpack.c.bf16 %v906, %v902
        %v1061 = vpack.c.bf16 %v908, %v904
        %v1062 = vpack.c.bf16 %v916, %v912
        %v1063 = vpack.c.bf16 %v918, %v914
        %v1064 = vpack.c.bf16 %v926, %v922
        %v1065 = vpack.c.bf16 %v928, %v924
        %v1066 = vpack.c.bf16 %v936, %v932
        %v1067 = vpack.c.bf16 %v938, %v934
        %v1068 = vpack.c.bf16 %v946, %v942
        %v1069 = vpack.c.bf16 %v948, %v944
        %v1070 = vpack.c.bf16 %v956, %v952
        %v1071 = vpack.c.bf16 %v958, %v954
        %v1072 = vpack.c.bf16 %v966, %v962
        %v1073 = vpack.c.bf16 %v968, %v964
        %v1074 = vpack.c.bf16 %v976, %v972
        %v1075 = vpack.c.bf16 %v978, %v974
        %v1076 = vpack.c.bf16 %v986, %v982
        %v1077 = vpack.c.bf16 %v988, %v984
        %v1078 = vpack.c.bf16 %v996, %v992
        %v1079 = vpack.c.bf16 %v998, %v994
        %v1080 = vpack.c.bf16 %v1006, %v1002
        %v1081 = vpack.c.bf16 %v1008, %v1004
        %v1082 = vpack.c.bf16 %v1016, %v1012
        %v1083 = vpack.c.bf16 %v1018, %v1014
        %v1084 = vpack.c.bf16 %v1026, %v1022
        %v1085 = vpack.c.bf16 %v1028, %v1024
        %v1086 = vpack.c.bf16 %v1036, %v1032
        %v1087 = vpack.c.bf16 %v1038, %v1034
        %v1088 = vld [vmem:[#allocation7] sm:$0xff]
        %v1089 = vld [vmem:[#allocation7 + $0x8] sm:$0xff]
        %v1090 = vld [vmem:[#allocation7 + $0x10] sm:$0xff]
        %v1091 = vld [vmem:[#allocation7 + $0x18] sm:$0xff]
        %v1092 = vld [vmem:[#allocation7 + $0x20] sm:$0xff]
        %v1093 = vld [vmem:[#allocation7 + $0x28] sm:$0xff]
        %v1094 = vld [vmem:[#allocation7 + $0x30] sm:$0xff]
        %v1095 = vld [vmem:[#allocation7 + $0x38] sm:$0xff]
        %v1096 = vld [vmem:[#allocation7 + $0x40] sm:$0xff]
        %v1097 = vld [vmem:[#allocation7 + $0x48] sm:$0xff]
        %v1098 = vld [vmem:[#allocation7 + $0x50] sm:$0xff]
        %v1099 = vld [vmem:[#allocation7 + $0x58] sm:$0xff]
        %v1100 = vld [vmem:[#allocation7 + $0x60] sm:$0xff]
        %v1101 = vld [vmem:[#allocation7 + $0x68] sm:$0xff]
        %v1102 = vld [vmem:[#allocation7 + $0x70] sm:$0xff]
        %v1103 = vld [vmem:[#allocation7 + $0x78] sm:$0xff]
        %v1104 = vpack.c.bf16 %v1089, %v1088
        %v1105 = vpack.c.bf16 %v1091, %v1090
        %v1106 = vpack.c.bf16 %v1093, %v1092
        %v1107 = vpack.c.bf16 %v1095, %v1094
        %v1108 = vpack.c.bf16 %v1097, %v1096
        %v1109 = vpack.c.bf16 %v1099, %v1098
        %v1110 = vpack.c.bf16 %v1101, %v1100
        %v1111 = vpack.c.bf16 %v1103, %v1102
        %v1112 = vld [vmem:[%s5] sm:$0xff]
        %v1113 = vld [vmem:[%s5 + $0x8] sm:$0xff]
        %v1114 = vld [vmem:[%s5 + $0x10] sm:$0xff]
        %v1115 = vld [vmem:[%s5 + $0x18] sm:$0xff]
        %v1116 = vld [vmem:[%s5 + $0x20] sm:$0xff]
        %v1117 = vld [vmem:[%s5 + $0x28] sm:$0xff]
        %v1118 = vld [vmem:[%s5 + $0x30] sm:$0xff]
        %v1119 = vld [vmem:[%s5 + $0x38] sm:$0xff]
        %v1120 = vld [vmem:[%s5 + $0x40] sm:$0xff]
        %v1121 = vld [vmem:[%s5 + $0x48] sm:$0xff]
        %v1122 = vld [vmem:[%s5 + $0x50] sm:$0xff]
        %v1123 = vld [vmem:[%s5 + $0x58] sm:$0xff]
        %v1124 = vld [vmem:[%s5 + $0x60] sm:$0xff]
        %v1125 = vld [vmem:[%s5 + $0x68] sm:$0xff]
        %v1126 = vld [vmem:[%s5 + $0x70] sm:$0xff]
        %v1127 = vld [vmem:[%s5 + $0x78] sm:$0xff]
        %1128 = vxpose.xlu0.c.b16.start [1/8] %v1056, 128
        %1129 = vxpose.xlu0.c.b16.cont [2/8] 0, 128
        %1130 = vxpose.xlu0.c.b16.cont [3/8] 0, 128
        %1131 = vxpose.xlu0.c.b16.cont [4/8] 0, 128
        %1132 = vxpose.xlu0.c.b16.cont [5/8] 0, 128
        %1133 = vxpose.xlu0.c.b16.cont [6/8] 0, 128
        %1134 = vxpose.xlu0.c.b16.cont [7/8] 0, 128
        %1135 = vxpose.xlu0.c.b16.end [8/8] 0, 128
        %v1136 = vpop.trf.xlu0
        %v1137 = vpop.trf.xlu0
        %v1138 = vpop.trf.xlu0
        %v1139 = vpop.trf.xlu0
        %v1140 = vpop.trf.xlu0
        %v1141 = vpop.trf.xlu0
        %v1142 = vpop.trf.xlu0
        %v1143 = vpop.trf.xlu0
        %1144 = vxpose.xlu0.c.b16.start [1/8] %v1057, 128
        %1145 = vxpose.xlu0.c.b16.cont [2/8] 0, 128
        %1146 = vxpose.xlu0.c.b16.cont [3/8] 0, 128
        %1147 = vxpose.xlu0.c.b16.cont [4/8] 0, 128
        %1148 = vxpose.xlu0.c.b16.cont [5/8] 0, 128
        %1149 = vxpose.xlu0.c.b16.cont [6/8] 0, 128
        %1150 = vxpose.xlu0.c.b16.cont [7/8] 0, 128
        %1151 = vxpose.xlu0.c.b16.end [8/8] 0, 128
        %v1152 = vpop.trf.xlu0
        %v1153 = vpop.trf.xlu0
        %v1154 = vpop.trf.xlu0
        %v1155 = vpop.trf.xlu0
        %v1156 = vpop.trf.xlu0
        %v1157 = vpop.trf.xlu0
        %v1158 = vpop.trf.xlu0
        %v1159 = vpop.trf.xlu0
        %vm1160 = vcmask 130048
        %v1162 = vsel %vm1160, %v1136, 0
        %v1165 = vsel %vm1160, %v1137, 0
        %v1168 = vsel %vm1160, %v1138, 0
        %v1171 = vsel %vm1160, %v1139, 0
        %v1174 = vsel %vm1160, %v1140, 0
        %v1177 = vsel %vm1160, %v1141, 0
        %v1180 = vsel %vm1160, %v1142, 0
        %v1183 = vsel %vm1160, %v1143, 0
        %v1186 = vsel %vm1160, %v1152, 0
        %v1189 = vsel %vm1160, %v1153, 0
        %v1192 = vsel %vm1160, %v1154, 0
        %v1195 = vsel %vm1160, %v1155, 0
        %v1198 = vsel %vm1160, %v1156, 0
        %v1201 = vsel %vm1160, %v1157, 0
        %v1204 = vsel %vm1160, %v1158, 0
        %v1207 = vsel %vm1160, %v1159, 0
        %1209 = vmatprep.subr.bf16.mxu0 0
        %1210 = vmatpush1.bf16.msra.mxu0 %v1040
        %1211 = vmatprep.subr.bf16.mxu0 0
        %1212 = vmatpush1.bf16.msra.mxu0 0
        %1213 = vmatprep.subr.bf16.mxu0 0
        %1214 = vmatpush1.bf16.msra.mxu0 0
        %1215 = vmatprep.subr.bf16.mxu0 0
        %1216 = vmatpush1.bf16.msra.mxu0 0
        %1217 = vmatprep.subr.bf16.mxu0 0
        %1218 = vmatpush1.bf16.msra.mxu0 0
        %1219 = vmatprep.subr.bf16.mxu0 0
        %1220 = vmatpush1.bf16.msra.mxu0 0
        %1221 = vmatprep.subr.bf16.mxu0 0
        %1222 = vmatpush1.bf16.msra.mxu0 0
        %1223 = vmatprep.subr.bf16.mxu0 0
        %1224 = vmatpush1.bf16.msra.mxu0 0
        %1225 = vmatprep.subr.bf16.mxu0 0
        %1226 = vmatpush1.bf16.msra.mxu0 0
        %1227 = vmatprep.subr.bf16.mxu0 0
        %1228 = vmatpush1.bf16.msra.mxu0 0
        %1229 = vmatprep.subr.bf16.mxu0 0
        %1230 = vmatpush1.bf16.msra.mxu0 0
        %1231 = vmatprep.subr.bf16.mxu0 0
        %1232 = vmatpush1.bf16.msra.mxu0 0
        %1233 = vmatprep.subr.bf16.mxu0 0
        %1234 = vmatpush1.bf16.msra.mxu0 0
        %1235 = vmatprep.subr.bf16.mxu0 0
        %1236 = vmatpush1.bf16.msra.mxu0 0
        %1237 = vmatprep.subr.bf16.mxu0 0
        %1238 = vmatpush1.bf16.msra.mxu0 0
        %1239 = vmatprep.subr.bf16.mxu0 0
        %1240 = vmatpush1.bf16.msra.mxu0 0
        %1241 = vmatprep.mubr.bf16.mxu0 0
        %1242 = vmatmul.mubr.bf16.gmra.mrb[0].mxu0 %v1162
        %v1243 = vpop.f32.mrb[0].mxu0
        %v1244 = vadd.f32 0.0, %v1243
        %v1245 = vpop.f32.mrb[0].mxu0
        %v1246 = vpop.f32.mrb[0].mxu0
        %v1247 = vadd.f32 0.0, %v1246
        %v1248 = vpop.f32.mrb[0].mxu0
        %1249 = vmatprep.mubr.bf16.mxu0 0
        %1250 = vmatmul.mubr.bf16.gmra.mrb[0].mxu0 %v1165
        %v1251 = vpop.f32.mrb[0].mxu0
        %v1252 = vadd.f32 0.0, %v1251
        %v1253 = vpop.f32.mrb[0].mxu0
        %v1254 = vpop.f32.mrb[0].mxu0
        %v1255 = vadd.f32 0.0, %v1254
        %v1256 = vpop.f32.mrb[0].mxu0
        %1257 = vmatprep.mubr.bf16.mxu0 0
        %1258 = vmatmul.mubr.bf16.gmra.mrb[0].mxu0 %v1168
        %v1259 = vpop.f32.mrb[0].mxu0
        %v1260 = vadd.f32 0.0, %v1259
        %v1261 = vpop.f32.mrb[0].mxu0
        %v1262 = vpop.f32.mrb[0].mxu0
        %v1263 = vadd.f32 0.0, %v1262
        %v1264 = vpop.f32.mrb[0].mxu0
        %1265 = vmatprep.mubr.bf16.mxu0 0
        %1266 = vmatmul.mubr.bf16.gmra.mrb[0].mxu0 %v1171
        %v1267 = vpop.f32.mrb[0].mxu0
        %v1268 = vadd.f32 0.0, %v1267
        %v1269 = vpop.f32.mrb[0].mxu0
        %v1270 = vpop.f32.mrb[0].mxu0
        %v1271 = vadd.f32 0.0, %v1270
        %v1272 = vpop.f32.mrb[0].mxu0
        %1273 = vmatprep.mubr.bf16.mxu0 0
        %1274 = vmatmul.mubr.bf16.gmra.mrb[0].mxu0 %v1174
        %v1275 = vpop.f32.mrb[0].mxu0
        %v1276 = vadd.f32 0.0, %v1275
        %v1277 = vpop.f32.mrb[0].mxu0
        %v1278 = vpop.f32.mrb[0].mxu0
        %v1279 = vadd.f32 0.0, %v1278
        %v1280 = vpop.f32.mrb[0].mxu0
        %1281 = vmatprep.mubr.bf16.mxu0 0
        %1282 = vmatmul.mubr.bf16.gmra.mrb[0].mxu0 %v1177
        %v1283 = vpop.f32.mrb[0].mxu0
        %v1284 = vadd.f32 0.0, %v1283
        %v1285 = vpop.f32.mrb[0].mxu0
        %v1286 = vpop.f32.mrb[0].mxu0
        %v1287 = vadd.f32 0.0, %v1286
        %v1288 = vpop.f32.mrb[0].mxu0
        %1289 = vmatprep.mubr.bf16.mxu0 0
        %1290 = vmatmul.mubr.bf16.gmra.mrb[0].mxu0 %v1180
        %v1291 = vpop.f32.mrb[0].mxu0
        %v1292 = vadd.f32 0.0, %v1291
        %v1293 = vpop.f32.mrb[0].mxu0
        %v1294 = vpop.f32.mrb[0].mxu0
        %v1295 = vadd.f32 0.0, %v1294
        %v1296 = vpop.f32.mrb[0].mxu0
        %1297 = vmatprep.mubr.bf16.mxu0 0
        %1298 = vmatmul.mubr.bf16.gmra.mrb[0].mxu0 %v1183
        %v1299 = vpop.f32.mrb[0].mxu0
        %v1300 = vadd.f32 0.0, %v1299
        %v1301 = vpop.f32.mrb[0].mxu0
        %v1302 = vpop.f32.mrb[0].mxu0
        %v1303 = vadd.f32 0.0, %v1302
        %v1304 = vpop.f32.mrb[0].mxu0
        %1305 = vmatprep.mubr.bf16.mxu0 0
        %1306 = vmatmul.mubr.bf16.gmra.mrb[0].mxu0 %v1186
        %v1307 = vpop.f32.mrb[0].mxu0
        %v1308 = vadd.f32 0.0, %v1307
        %v1309 = vpop.f32.mrb[0].mxu0
        %v1310 = vpop.f32.mrb[0].mxu0
        %v1311 = vadd.f32 0.0, %v1310
        %v1312 = vpop.f32.mrb[0].mxu0
        %1313 = vmatprep.mubr.bf16.mxu0 0
        %1314 = vmatmul.mubr.bf16.gmra.mrb[0].mxu0 %v1189
        %v1315 = vpop.f32.mrb[0].mxu0
        %v1316 = vadd.f32 0.0, %v1315
        %v1317 = vpop.f32.mrb[0].mxu0
        %v1318 = vpop.f32.mrb[0].mxu0
        %v1319 = vadd.f32 0.0, %v1318
        %v1320 = vpop.f32.mrb[0].mxu0
        %1321 = vmatprep.mubr.bf16.mxu0 0
        %1322 = vmatmul.mubr.bf16.gmra.mrb[0].mxu0 %v1192
        %v1323 = vpop.f32.mrb[0].mxu0
        %v1324 = vadd.f32 0.0, %v1323
        %v1325 = vpop.f32.mrb[0].mxu0
        %v1326 = vpop.f32.mrb[0].mxu0
        %v1327 = vadd.f32 0.0, %v1326
        %v1328 = vpop.f32.mrb[0].mxu0
        %1329 = vmatprep.mubr.bf16.mxu0 0
        %1330 = vmatmul.mubr.bf16.gmra.mrb[0].mxu0 %v1195
        %v1331 = vpop.f32.mrb[0].mxu0
        %v1332 = vadd.f32 0.0, %v1331
        %v1333 = vpop.f32.mrb[0].mxu0
        %v1334 = vpop.f32.mrb[0].mxu0
        %v1335 = vadd.f32 0.0, %v1334
        %v1336 = vpop.f32.mrb[0].mxu0
        %1337 = vmatprep.mubr.bf16.mxu0 0
        %1338 = vmatmul.mubr.bf16.gmra.mrb[0].mxu0 %v1198
        %v1339 = vpop.f32.mrb[0].mxu0
        %v1340 = vadd.f32 0.0, %v1339
        %v1341 = vpop.f32.mrb[0].mxu0
        %v1342 = vpop.f32.mrb[0].mxu0
        %v1343 = vadd.f32 0.0, %v1342
        %v1344 = vpop.f32.mrb[0].mxu0
        %1345 = vmatprep.mubr.bf16.mxu0 0
        %1346 = vmatmul.mubr.bf16.gmra.mrb[0].mxu0 %v1201
        %v1347 = vpop.f32.mrb[0].mxu0
        %v1348 = vadd.f32 0.0, %v1347
        %v1349 = vpop.f32.mrb[0].mxu0
        %v1350 = vpop.f32.mrb[0].mxu0
        %v1351 = vadd.f32 0.0, %v1350
        %v1352 = vpop.f32.mrb[0].mxu0
        %1353 = vmatprep.mubr.bf16.mxu0 0
        %1354 = vmatmul.mubr.bf16.gmra.mrb[0].mxu0 %v1204
        %v1355 = vpop.f32.mrb[0].mxu0
        %v1356 = vadd.f32 0.0, %v1355
        %v1357 = vpop.f32.mrb[0].mxu0
        %v1358 = vpop.f32.mrb[0].mxu0
        %v1359 = vadd.f32 0.0, %v1358
        %v1360 = vpop.f32.mrb[0].mxu0
        %1361 = vmatprep.mubr.bf16.mxu0 0
        %1362 = vmatmul.mubr.bf16.gmra.mrb[0].mxu0 %v1207
        %v1363 = vpop.f32.mrb[0].mxu0
        %v1364 = vadd.f32 0.0, %v1363
        %v1365 = vpop.f32.mrb[0].mxu0
        %v1366 = vpop.f32.mrb[0].mxu0
        %v1367 = vadd.f32 0.0, %v1366
        %v1368 = vpop.f32.mrb[0].mxu0
        %1369 = vdwg.mxu0
        %1370 = vxpose.xlu0.c.b16.start [1/8] %v1058, 128
        %1371 = vxpose.xlu0.c.b16.cont [2/8] 0, 128
        %1372 = vxpose.xlu0.c.b16.cont [3/8] 0, 128
        %1373 = vxpose.xlu0.c.b16.cont [4/8] 0, 128
        %1374 = vxpose.xlu0.c.b16.cont [5/8] 0, 128
        %1375 = vxpose.xlu0.c.b16.cont [6/8] 0, 128
        %1376 = vxpose.xlu0.c.b16.cont [7/8] 0, 128
        %1377 = vxpose.xlu0.c.b16.end [8/8] 0, 128
        %v1378 = vpop.trf.xlu0
        %v1379 = vpop.trf.xlu0
        %v1380 = vpop.trf.xlu0
        %v1381 = vpop.trf.xlu0
        %v1382 = vpop.trf.xlu0
        %v1383 = vpop.trf.xlu0
        %v1384 = vpop.trf.xlu0
        %v1385 = vpop.trf.xlu0
        %1386 = vxpose.xlu0.c.b16.start [1/8] %v1059, 128
        %1387 = vxpose.xlu0.c.b16.cont [2/8] 0, 128
        %1388 = vxpose.xlu0.c.b16.cont [3/8] 0, 128
        %1389 = vxpose.xlu0.c.b16.cont [4/8] 0, 128
        %1390 = vxpose.xlu0.c.b16.cont [5/8] 0, 128
        %1391 = vxpose.xlu0.c.b16.cont [6/8] 0, 128
        %1392 = vxpose.xlu0.c.b16.cont [7/8] 0, 128
        %1393 = vxpose.xlu0.c.b16.end [8/8] 0, 128
        %v1394 = vpop.trf.xlu0
        %v1395 = vpop.trf.xlu0
        %v1396 = vpop.trf.xlu0
        %v1397 = vpop.trf.xlu0
        %v1398 = vpop.trf.xlu0
        %v1399 = vpop.trf.xlu0
        %v1400 = vpop.trf.xlu0
        %v1401 = vpop.trf.xlu0
        %v1403 = vsel %vm1160, %v1378, 0
        %v1406 = vsel %vm1160, %v1379, 0
        %v1409 = vsel %vm1160, %v1380, 0
        %v1412 = vsel %vm1160, %v1381, 0
        %v1415 = vsel %vm1160, %v1382, 0
        %v1418 = vsel %vm1160, %v1383, 0
        %v1421 = vsel %vm1160, %v1384, 0
        %v1424 = vsel %vm1160, %v1385, 0
        %v1427 = vsel %vm1160, %v1394, 0
        %v1430 = vsel %vm1160, %v1395, 0
        %v1433 = vsel %vm1160, %v1396, 0
        %v1436 = vsel %vm1160, %v1397, 0
        %v1439 = vsel %vm1160, %v1398, 0
        %v1442 = vsel %vm1160, %v1399, 0
        %v1445 = vsel %vm1160, %v1400, 0
        %v1448 = vsel %vm1160, %v1401, 0
        %1450 = vmatprep.subr.bf16.mxu0 0
        %1451 = vmatpush1.bf16.msra.mxu0 %v1042
        %1452 = vmatprep.subr.bf16.mxu0 0
        %1453 = vmatpush1.bf16.msra.mxu0 0
        %1454 = vmatprep.subr.bf16.mxu0 0
        %1455 = vmatpush1.bf16.msra.mxu0 0
        %1456 = vmatprep.subr.bf16.mxu0 0
        %1457 = vmatpush1.bf16.msra.mxu0 0
        %1458 = vmatprep.subr.bf16.mxu0 0
        %1459 = vmatpush1.bf16.msra.mxu0 0
        %1460 = vmatprep.subr.bf16.mxu0 0
        %1461 = vmatpush1.bf16.msra.mxu0 0
        %1462 = vmatprep.subr.bf16.mxu0 0
        %1463 = vmatpush1.bf16.msra.mxu0 0
        %1464 = vmatprep.subr.bf16.mxu0 0
        %1465 = vmatpush1.bf16.msra.mxu0 0
        %1466 = vmatprep.subr.bf16.mxu0 0
        %1467 = vmatpush1.bf16.msra.mxu0 0
        %1468 = vmatprep.subr.bf16.mxu0 0
        %1469 = vmatpush1.bf16.msra.mxu0 0
        %1470 = vmatprep.subr.bf16.mxu0 0
        %1471 = vmatpush1.bf16.msra.mxu0 0
        %1472 = vmatprep.subr.bf16.mxu0 0
        %1473 = vmatpush1.bf16.msra.mxu0 0
        %1474 = vmatprep.subr.bf16.mxu0 0
        %1475 = vmatpush1.bf16.msra.mxu0 0
        %1476 = vmatprep.subr.bf16.mxu0 0
        %1477 = vmatpush1.bf16.msra.mxu0 0
        %1478 = vmatprep.subr.bf16.mxu0 0
        %1479 = vmatpush1.bf16.msra.mxu0 0
        %1480 = vmatprep.subr.bf16.mxu0 0
        %1481 = vmatpush1.bf16.msra.mxu0 0
        %1482 = vmatprep.mubr.bf16.mxu0 0
        %1483 = vmatmul.mubr.bf16.gmra.mrb[0].mxu0 %v1403
        %v1484 = vpop.f32.mrb[0].mxu0
        %v1485 = vadd.f32 0.0, %v1484
        %v1486 = vpop.f32.mrb[0].mxu0
        %v1487 = vpop.f32.mrb[0].mxu0
        %v1488 = vadd.f32 0.0, %v1487
        %v1489 = vpop.f32.mrb[0].mxu0
        %1490 = vmatprep.mubr.bf16.mxu0 0
        %1491 = vmatmul.mubr.bf16.gmra.mrb[0].mxu0 %v1406
        %v1492 = vpop.f32.mrb[0].mxu0
        %v1493 = vadd.f32 0.0, %v1492
        %v1494 = vpop.f32.mrb[0].mxu0
        %v1495 = vpop.f32.mrb[0].mxu0
        %v1496 = vadd.f32 0.0, %v1495
        %v1497 = vpop.f32.mrb[0].mxu0
        %1498 = vmatprep.mubr.bf16.mxu0 0
        %1499 = vmatmul.mubr.bf16.gmra.mrb[0].mxu0 %v1409
        %v1500 = vpop.f32.mrb[0].mxu0
        %v1501 = vadd.f32 0.0, %v1500
        %v1502 = vpop.f32.mrb[0].mxu0
        %v1503 = vpop.f32.mrb[0].mxu0
        %v1504 = vadd.f32 0.0, %v1503
        %v1505 = vpop.f32.mrb[0].mxu0
        %1506 = vmatprep.mubr.bf16.mxu0 0
        %1507 = vmatmul.mubr.bf16.gmra.mrb[0].mxu0 %v1412
        %v1508 = vpop.f32.mrb[0].mxu0
        %v1509 = vadd.f32 0.0, %v1508
        %v1510 = vpop.f32.mrb[0].mxu0
        %v1511 = vpop.f32.mrb[0].mxu0
        %v1512 = vadd.f32 0.0, %v1511
        %v1513 = vpop.f32.mrb[0].mxu0
        %1514 = vmatprep.mubr.bf16.mxu0 0
        %1515 = vmatmul.mubr.bf16.gmra.mrb[0].mxu0 %v1415
        %v1516 = vpop.f32.mrb[0].mxu0
        %v1517 = vadd.f32 0.0, %v1516
        %v1518 = vpop.f32.mrb[0].mxu0
        %v1519 = vpop.f32.mrb[0].mxu0
        %v1520 = vadd.f32 0.0, %v1519
        %v1521 = vpop.f32.mrb[0].mxu0
        %1522 = vmatprep.mubr.bf16.mxu0 0
        %1523 = vmatmul.mubr.bf16.gmra.mrb[0].mxu0 %v1418
        %v1524 = vpop.f32.mrb[0].mxu0
        %v1525 = vadd.f32 0.0, %v1524
        %v1526 = vpop.f32.mrb[0].mxu0
        %v1527 = vpop.f32.mrb[0].mxu0
        %v1528 = vadd.f32 0.0, %v1527
        %v1529 = vpop.f32.mrb[0].mxu0
        %1530 = vmatprep.mubr.bf16.mxu0 0
        %1531 = vmatmul.mubr.bf16.gmra.mrb[0].mxu0 %v1421
        %v1532 = vpop.f32.mrb[0].mxu0
        %v1533 = vadd.f32 0.0, %v1532
        %v1534 = vpop.f32.mrb[0].mxu0
        %v1535 = vpop.f32.mrb[0].mxu0
        %v1536 = vadd.f32 0.0, %v1535
        %v1537 = vpop.f32.mrb[0].mxu0
        %1538 = vmatprep.mubr.bf16.mxu0 0
        %1539 = vmatmul.mubr.bf16.gmra.mrb[0].mxu0 %v1424
        %v1540 = vpop.f32.mrb[0].mxu0
        %v1541 = vadd.f32 0.0, %v1540
        %v1542 = vpop.f32.mrb[0].mxu0
        %v1543 = vpop.f32.mrb[0].mxu0
        %v1544 = vadd.f32 0.0, %v1543
        %v1545 = vpop.f32.mrb[0].mxu0
        %1546 = vmatprep.mubr.bf16.mxu0 0
        %1547 = vmatmul.mubr.bf16.gmra.mrb[0].mxu0 %v1427
        %v1548 = vpop.f32.mrb[0].mxu0
        %v1549 = vadd.f32 0.0, %v1548
        %v1550 = vpop.f32.mrb[0].mxu0
        %v1551 = vpop.f32.mrb[0].mxu0
        %v1552 = vadd.f32 0.0, %v1551
        %v1553 = vpop.f32.mrb[0].mxu0
        %1554 = vmatprep.mubr.bf16.mxu0 0
        %1555 = vmatmul.mubr.bf16.gmra.mrb[0].mxu0 %v1430
        %v1556 = vpop.f32.mrb[0].mxu0
        %v1557 = vadd.f32 0.0, %v1556
        %v1558 = vpop.f32.mrb[0].mxu0
        %v1559 = vpop.f32.mrb[0].mxu0
        %v1560 = vadd.f32 0.0, %v1559
        %v1561 = vpop.f32.mrb[0].mxu0
        %1562 = vmatprep.mubr.bf16.mxu0 0
        %1563 = vmatmul.mubr.bf16.gmra.mrb[0].mxu0 %v1433
        %v1564 = vpop.f32.mrb[0].mxu0
        %v1565 = vadd.f32 0.0, %v1564
        %v1566 = vpop.f32.mrb[0].mxu0
        %v1567 = vpop.f32.mrb[0].mxu0
        %v1568 = vadd.f32 0.0, %v1567
        %v1569 = vpop.f32.mrb[0].mxu0
        %1570 = vmatprep.mubr.bf16.mxu0 0
        %1571 = vmatmul.mubr.bf16.gmra.mrb[0].mxu0 %v1436
        %v1572 = vpop.f32.mrb[0].mxu0
        %v1573 = vadd.f32 0.0, %v1572
        %v1574 = vpop.f32.mrb[0].mxu0
        %v1575 = vpop.f32.mrb[0].mxu0
        %v1576 = vadd.f32 0.0, %v1575
        %v1577 = vpop.f32.mrb[0].mxu0
        %1578 = vmatprep.mubr.bf16.mxu0 0
        %1579 = vmatmul.mubr.bf16.gmra.mrb[0].mxu0 %v1439
        %v1580 = vpop.f32.mrb[0].mxu0
        %v1581 = vadd.f32 0.0, %v1580
        %v1582 = vpop.f32.mrb[0].mxu0
        %v1583 = vpop.f32.mrb[0].mxu0
        %v1584 = vadd.f32 0.0, %v1583
        %v1585 = vpop.f32.mrb[0].mxu0
        %1586 = vmatprep.mubr.bf16.mxu0 0
        %1587 = vmatmul.mubr.bf16.gmra.mrb[0].mxu0 %v1442
        %v1588 = vpop.f32.mrb[0].mxu0
        %v1589 = vadd.f32 0.0, %v1588
        %v1590 = vpop.f32.mrb[0].mxu0
        %v1591 = vpop.f32.mrb[0].mxu0
        %v1592 = vadd.f32 0.0, %v1591
        %v1593 = vpop.f32.mrb[0].mxu0
        %1594 = vmatprep.mubr.bf16.mxu0 0
        %1595 = vmatmul.mubr.bf16.gmra.mrb[0].mxu0 %v1445
        %v1596 = vpop.f32.mrb[0].mxu0
        %v1597 = vadd.f32 0.0, %v1596
        %v1598 = vpop.f32.mrb[0].mxu0
        %v1599 = vpop.f32.mrb[0].mxu0
        %v1600 = vadd.f32 0.0, %v1599
        %v1601 = vpop.f32.mrb[0].mxu0
        %1602 = vmatprep.mubr.bf16.mxu0 0
        %1603 = vmatmul.mubr.bf16.gmra.mrb[0].mxu0 %v1448
        %v1604 = vpop.f32.mrb[0].mxu0
        %v1605 = vadd.f32 0.0, %v1604
        %v1606 = vpop.f32.mrb[0].mxu0
        %v1607 = vpop.f32.mrb[0].mxu0
        %v1608 = vadd.f32 0.0, %v1607
        %v1609 = vpop.f32.mrb[0].mxu0
        %1610 = vdwg.mxu0
        %1611 = vxpose.xlu0.c.b16.start [1/8] %v1060, 128
        %1612 = vxpose.xlu0.c.b16.cont [2/8] 0, 128
        %1613 = vxpose.xlu0.c.b16.cont [3/8] 0, 128
        %1614 = vxpose.xlu0.c.b16.cont [4/8] 0, 128
        %1615 = vxpose.xlu0.c.b16.cont [5/8] 0, 128
        %1616 = vxpose.xlu0.c.b16.cont [6/8] 0, 128
        %1617 = vxpose.xlu0.c.b16.cont [7/8] 0, 128
        %1618 = vxpose.xlu0.c.b16.end [8/8] 0, 128
        %v1619 = vpop.trf.xlu0
        %v1620 = vpop.trf.xlu0
        %v1621 = vpop.trf.xlu0
        %v1622 = vpop.trf.xlu0
        %v1623 = vpop.trf.xlu0
        %v1624 = vpop.trf.xlu0
        %v1625 = vpop.trf.xlu0
        %v1626 = vpop.trf.xlu0
        %1627 = vxpose.xlu0.c.b16.start [1/8] %v1061, 128
        %1628 = vxpose.xlu0.c.b16.cont [2/8] 0, 128
        %1629 = vxpose.xlu0.c.b16.cont [3/8] 0, 128
        %1630 = vxpose.xlu0.c.b16.cont [4/8] 0, 128
        %1631 = vxpose.xlu0.c.b16.cont [5/8] 0, 128
        %1632 = vxpose.xlu0.c.b16.cont [6/8] 0, 128
        %1633 = vxpose.xlu0.c.b16.cont [7/8] 0, 128
        %1634 = vxpose.xlu0.c.b16.end [8/8] 0, 128
        %v1635 = vpop.trf.xlu0
        %v1636 = vpop.trf.xlu0
        %v1637 = vpop.trf.xlu0
        %v1638 = vpop.trf.xlu0
        %v1639 = vpop.trf.xlu0
        %v1640 = vpop.trf.xlu0
        %v1641 = vpop.trf.xlu0
        %v1642 = vpop.trf.xlu0
        %v1644 = vsel %vm1160, %v1619, 0
        %v1647 = vsel %vm1160, %v1620, 0
        %v1650 = vsel %vm1160, %v1621, 0
        %v1653 = vsel %vm1160, %v1622, 0
        %v1656 = vsel %vm1160, %v1623, 0
        %v1659 = vsel %vm1160, %v1624, 0
        %v1662 = vsel %vm1160, %v1625, 0
        %v1665 = vsel %vm1160, %v1626, 0
        %v1668 = vsel %vm1160, %v1635, 0
        %v1671 = vsel %vm1160, %v1636, 0
        %v1674 = vsel %vm1160, %v1637, 0
        %v1677 = vsel %vm1160, %v1638, 0
        %v1680 = vsel %vm1160, %v1639, 0
        %v1683 = vsel %vm1160, %v1640, 0
        %v1686 = vsel %vm1160, %v1641, 0
        %v1689 = vsel %vm1160, %v1642, 0
        %1691 = vmatprep.subr.bf16.mxu0 0
        %1692 = vmatpush1.bf16.msra.mxu0 %v1044
        %1693 = vmatprep.subr.bf16.mxu0 0
        %1694 = vmatpush1.bf16.msra.mxu0 0
        %1695 = vmatprep.subr.bf16.mxu0 0
        %1696 = vmatpush1.bf16.msra.mxu0 0
        %1697 = vmatprep.subr.bf16.mxu0 0
        %1698 = vmatpush1.bf16.msra.mxu0 0
        %1699 = vmatprep.subr.bf16.mxu0 0
        %1700 = vmatpush1.bf16.msra.mxu0 0
        %1701 = vmatprep.subr.bf16.mxu0 0
        %1702 = vmatpush1.bf16.msra.mxu0 0
        %1703 = vmatprep.subr.bf16.mxu0 0
        %1704 = vmatpush1.bf16.msra.mxu0 0
        %1705 = vmatprep.subr.bf16.mxu0 0
        %1706 = vmatpush1.bf16.msra.mxu0 0
        %1707 = vmatprep.subr.bf16.mxu0 0
        %1708 = vmatpush1.bf16.msra.mxu0 0
        %1709 = vmatprep.subr.bf16.mxu0 0
        %1710 = vmatpush1.bf16.msra.mxu0 0
        %1711 = vmatprep.subr.bf16.mxu0 0
        %1712 = vmatpush1.bf16.msra.mxu0 0
        %1713 = vmatprep.subr.bf16.mxu0 0
        %1714 = vmatpush1.bf16.msra.mxu0 0
        %1715 = vmatprep.subr.bf16.mxu0 0
        %1716 = vmatpush1.bf16.msra.mxu0 0
        %1717 = vmatprep.subr.bf16.mxu0 0
        %1718 = vmatpush1.bf16.msra.mxu0 0
        %1719 = vmatprep.subr.bf16.mxu0 0
        %1720 = vmatpush1.bf16.msra.mxu0 0
        %1721 = vmatprep.subr.bf16.mxu0 0
        %1722 = vmatpush1.bf16.msra.mxu0 0
        %1723 = vmatprep.mubr.bf16.mxu0 0
        %1724 = vmatmul.mubr.bf16.gmra.mrb[0].mxu0 %v1644
        %v1725 = vpop.f32.mrb[0].mxu0
        %v1726 = vadd.f32 0.0, %v1725
        %v1727 = vpop.f32.mrb[0].mxu0
        %v1728 = vpop.f32.mrb[0].mxu0
        %v1729 = vadd.f32 0.0, %v1728
        %v1730 = vpop.f32.mrb[0].mxu0
        %1731 = vmatprep.mubr.bf16.mxu0 0
        %1732 = vmatmul.mubr.bf16.gmra.mrb[0].mxu0 %v1647
        %v1733 = vpop.f32.mrb[0].mxu0
        %v1734 = vadd.f32 0.0, %v1733
        %v1735 = vpop.f32.mrb[0].mxu0
        %v1736 = vpop.f32.mrb[0].mxu0
        %v1737 = vadd.f32 0.0, %v1736
        %v1738 = vpop.f32.mrb[0].mxu0
        %1739 = vmatprep.mubr.bf16.mxu0 0
        %1740 = vmatmul.mubr.bf16.gmra.mrb[0].mxu0 %v1650
        %v1741 = vpop.f32.mrb[0].mxu0
        %v1742 = vadd.f32 0.0, %v1741
        %v1743 = vpop.f32.mrb[0].mxu0
        %v1744 = vpop.f32.mrb[0].mxu0
        %v1745 = vadd.f32 0.0, %v1744
        %v1746 = vpop.f32.mrb[0].mxu0
        %1747 = vmatprep.mubr.bf16.mxu0 0
        %1748 = vmatmul.mubr.bf16.gmra.mrb[0].mxu0 %v1653
        %v1749 = vpop.f32.mrb[0].mxu0
        %v1750 = vadd.f32 0.0, %v1749
        %v1751 = vpop.f32.mrb[0].mxu0
        %v1752 = vpop.f32.mrb[0].mxu0
        %v1753 = vadd.f32 0.0, %v1752
        %v1754 = vpop.f32.mrb[0].mxu0
        %1755 = vmatprep.mubr.bf16.mxu0 0
        %1756 = vmatmul.mubr.bf16.gmra.mrb[0].mxu0 %v1656
        %v1757 = vpop.f32.mrb[0].mxu0
        %v1758 = vadd.f32 0.0, %v1757
        %v1759 = vpop.f32.mrb[0].mxu0
        %v1760 = vpop.f32.mrb[0].mxu0
        %v1761 = vadd.f32 0.0, %v1760
        %v1762 = vpop.f32.mrb[0].mxu0
        %1763 = vmatprep.mubr.bf16.mxu0 0
        %1764 = vmatmul.mubr.bf16.gmra.mrb[0].mxu0 %v1659
        %v1765 = vpop.f32.mrb[0].mxu0
        %v1766 = vadd.f32 0.0, %v1765
        %v1767 = vpop.f32.mrb[0].mxu0
        %v1768 = vpop.f32.mrb[0].mxu0
        %v1769 = vadd.f32 0.0, %v1768
        %v1770 = vpop.f32.mrb[0].mxu0
        %1771 = vmatprep.mubr.bf16.mxu0 0
        %1772 = vmatmul.mubr.bf16.gmra.mrb[0].mxu0 %v1662
        %v1773 = vpop.f32.mrb[0].mxu0
        %v1774 = vadd.f32 0.0, %v1773
        %v1775 = vpop.f32.mrb[0].mxu0
        %v1776 = vpop.f32.mrb[0].mxu0
        %v1777 = vadd.f32 0.0, %v1776
        %v1778 = vpop.f32.mrb[0].mxu0
        %1779 = vmatprep.mubr.bf16.mxu0 0
        %1780 = vmatmul.mubr.bf16.gmra.mrb[0].mxu0 %v1665
        %v1781 = vpop.f32.mrb[0].mxu0
        %v1782 = vadd.f32 0.0, %v1781
        %v1783 = vpop.f32.mrb[0].mxu0
        %v1784 = vpop.f32.mrb[0].mxu0
        %v1785 = vadd.f32 0.0, %v1784
        %v1786 = vpop.f32.mrb[0].mxu0
        %1787 = vmatprep.mubr.bf16.mxu0 0
        %1788 = vmatmul.mubr.bf16.gmra.mrb[0].mxu0 %v1668
        %v1789 = vpop.f32.mrb[0].mxu0
        %v1790 = vadd.f32 0.0, %v1789
        %v1791 = vpop.f32.mrb[0].mxu0
        %v1792 = vpop.f32.mrb[0].mxu0
        %v1793 = vadd.f32 0.0, %v1792
        %v1794 = vpop.f32.mrb[0].mxu0
        %1795 = vmatprep.mubr.bf16.mxu0 0
        %1796 = vmatmul.mubr.bf16.gmra.mrb[0].mxu0 %v1671
        %v1797 = vpop.f32.mrb[0].mxu0
        %v1798 = vadd.f32 0.0, %v1797
        %v1799 = vpop.f32.mrb[0].mxu0
        %v1800 = vpop.f32.mrb[0].mxu0
        %v1801 = vadd.f32 0.0, %v1800
        %v1802 = vpop.f32.mrb[0].mxu0
        %1803 = vmatprep.mubr.bf16.mxu0 0
        %1804 = vmatmul.mubr.bf16.gmra.mrb[0].mxu0 %v1674
        %v1805 = vpop.f32.mrb[0].mxu0
        %v1806 = vadd.f32 0.0, %v1805
        %v1807 = vpop.f32.mrb[0].mxu0
        %v1808 = vpop.f32.mrb[0].mxu0
        %v1809 = vadd.f32 0.0, %v1808
        %v1810 = vpop.f32.mrb[0].mxu0
        %1811 = vmatprep.mubr.bf16.mxu0 0
        %1812 = vmatmul.mubr.bf16.gmra.mrb[0].mxu0 %v1677
        %v1813 = vpop.f32.mrb[0].mxu0
        %v1814 = vadd.f32 0.0, %v1813
        %v1815 = vpop.f32.mrb[0].mxu0
        %v1816 = vpop.f32.mrb[0].mxu0
        %v1817 = vadd.f32 0.0, %v1816
        %v1818 = vpop.f32.mrb[0].mxu0
        %1819 = vmatprep.mubr.bf16.mxu0 0
        %1820 = vmatmul.mubr.bf16.gmra.mrb[0].mxu0 %v1680
        %v1821 = vpop.f32.mrb[0].mxu0
        %v1822 = vadd.f32 0.0, %v1821
        %v1823 = vpop.f32.mrb[0].mxu0
        %v1824 = vpop.f32.mrb[0].mxu0
        %v1825 = vadd.f32 0.0, %v1824
        %v1826 = vpop.f32.mrb[0].mxu0
        %1827 = vmatprep.mubr.bf16.mxu0 0
        %1828 = vmatmul.mubr.bf16.gmra.mrb[0].mxu0 %v1683
        %v1829 = vpop.f32.mrb[0].mxu0
        %v1830 = vadd.f32 0.0, %v1829
        %v1831 = vpop.f32.mrb[0].mxu0
        %v1832 = vpop.f32.mrb[0].mxu0
        %v1833 = vadd.f32 0.0, %v1832
        %v1834 = vpop.f32.mrb[0].mxu0
        %1835 = vmatprep.mubr.bf16.mxu0 0
        %1836 = vmatmul.mubr.bf16.gmra.mrb[0].mxu0 %v1686
        %v1837 = vpop.f32.mrb[0].mxu0
        %v1838 = vadd.f32 0.0, %v1837
        %v1839 = vpop.f32.mrb[0].mxu0
        %v1840 = vpop.f32.mrb[0].mxu0
        %v1841 = vadd.f32 0.0, %v1840
        %v1842 = vpop.f32.mrb[0].mxu0
        %1843 = vmatprep.mubr.bf16.mxu0 0
        %1844 = vmatmul.mubr.bf16.gmra.mrb[0].mxu0 %v1689
        %v1845 = vpop.f32.mrb[0].mxu0
        %v1846 = vadd.f32 0.0, %v1845
        %v1847 = vpop.f32.mrb[0].mxu0
        %v1848 = vpop.f32.mrb[0].mxu0
        %v1849 = vadd.f32 0.0, %v1848
        %v1850 = vpop.f32.mrb[0].mxu0
        %1851 = vdwg.mxu0
        %1852 = vxpose.xlu0.c.b16.start [1/8] %v1062, 128
        %1853 = vxpose.xlu0.c.b16.cont [2/8] 0, 128
        %1854 = vxpose.xlu0.c.b16.cont [3/8] 0, 128
        %1855 = vxpose.xlu0.c.b16.cont [4/8] 0, 128
        %1856 = vxpose.xlu0.c.b16.cont [5/8] 0, 128
        %1857 = vxpose.xlu0.c.b16.cont [6/8] 0, 128
        %1858 = vxpose.xlu0.c.b16.cont [7/8] 0, 128
        %1859 = vxpose.xlu0.c.b16.end [8/8] 0, 128
        %v1860 = vpop.trf.xlu0
        %v1861 = vpop.trf.xlu0
        %v1862 = vpop.trf.xlu0
        %v1863 = vpop.trf.xlu0
        %v1864 = vpop.trf.xlu0
        %v1865 = vpop.trf.xlu0
        %v1866 = vpop.trf.xlu0
        %v1867 = vpop.trf.xlu0
        %1868 = vxpose.xlu0.c.b16.start [1/8] %v1063, 128
        %1869 = vxpose.xlu0.c.b16.cont [2/8] 0, 128
        %1870 = vxpose.xlu0.c.b16.cont [3/8] 0, 128
        %1871 = vxpose.xlu0.c.b16.cont [4/8] 0, 128
        %1872 = vxpose.xlu0.c.b16.cont [5/8] 0, 128
        %1873 = vxpose.xlu0.c.b16.cont [6/8] 0, 128
        %1874 = vxpose.xlu0.c.b16.cont [7/8] 0, 128
        %1875 = vxpose.xlu0.c.b16.end [8/8] 0, 128
        %v1876 = vpop.trf.xlu0
        %v1877 = vpop.trf.xlu0
        %v1878 = vpop.trf.xlu0
        %v1879 = vpop.trf.xlu0
        %v1880 = vpop.trf.xlu0
        %v1881 = vpop.trf.xlu0
        %v1882 = vpop.trf.xlu0
        %v1883 = vpop.trf.xlu0
        %v1885 = vsel %vm1160, %v1860, 0
        %v1888 = vsel %vm1160, %v1861, 0
        %v1891 = vsel %vm1160, %v1862, 0
        %v1894 = vsel %vm1160, %v1863, 0
        %v1897 = vsel %vm1160, %v1864, 0
        %v1900 = vsel %vm1160, %v1865, 0
        %v1903 = vsel %vm1160, %v1866, 0
        %v1906 = vsel %vm1160, %v1867, 0
        %v1909 = vsel %vm1160, %v1876, 0
        %v1912 = vsel %vm1160, %v1877, 0
        %v1915 = vsel %vm1160, %v1878, 0
        %v1918 = vsel %vm1160, %v1879, 0
        %v1921 = vsel %vm1160, %v1880, 0
        %v1924 = vsel %vm1160, %v1881, 0
        %v1927 = vsel %vm1160, %v1882, 0
        %v1930 = vsel %vm1160, %v1883, 0
        %1932 = vmatprep.subr.bf16.mxu0 0
        %1933 = vmatpush1.bf16.msra.mxu0 %v1046
        %1934 = vmatprep.subr.bf16.mxu0 0
        %1935 = vmatpush1.bf16.msra.mxu0 0
        %1936 = vmatprep.subr.bf16.mxu0 0
        %1937 = vmatpush1.bf16.msra.mxu0 0
        %1938 = vmatprep.subr.bf16.mxu0 0
        %1939 = vmatpush1.bf16.msra.mxu0 0
        %1940 = vmatprep.subr.bf16.mxu0 0
        %1941 = vmatpush1.bf16.msra.mxu0 0
        %1942 = vmatprep.subr.bf16.mxu0 0
        %1943 = vmatpush1.bf16.msra.mxu0 0
        %1944 = vmatprep.subr.bf16.mxu0 0
        %1945 = vmatpush1.bf16.msra.mxu0 0
        %1946 = vmatprep.subr.bf16.mxu0 0
        %1947 = vmatpush1.bf16.msra.mxu0 0
        %1948 = vmatprep.subr.bf16.mxu0 0
        %1949 = vmatpush1.bf16.msra.mxu0 0
        %1950 = vmatprep.subr.bf16.mxu0 0
        %1951 = vmatpush1.bf16.msra.mxu0 0
        %1952 = vmatprep.subr.bf16.mxu0 0
        %1953 = vmatpush1.bf16.msra.mxu0 0
        %1954 = vmatprep.subr.bf16.mxu0 0
        %1955 = vmatpush1.bf16.msra.mxu0 0
        %1956 = vmatprep.subr.bf16.mxu0 0
        %1957 = vmatpush1.bf16.msra.mxu0 0
        %1958 = vmatprep.subr.bf16.mxu0 0
        %1959 = vmatpush1.bf16.msra.mxu0 0
        %1960 = vmatprep.subr.bf16.mxu0 0
        %1961 = vmatpush1.bf16.msra.mxu0 0
        %1962 = vmatprep.subr.bf16.mxu0 0
        %1963 = vmatpush1.bf16.msra.mxu0 0
        %1964 = vmatprep.mubr.bf16.mxu0 0
        %1965 = vmatmul.mubr.bf16.gmra.mrb[0].mxu0 %v1885
        %v1966 = vpop.f32.mrb[0].mxu0
        %v1967 = vadd.f32 0.0, %v1966
        %v1968 = vpop.f32.mrb[0].mxu0
        %v1969 = vpop.f32.mrb[0].mxu0
        %v1970 = vadd.f32 0.0, %v1969
        %v1971 = vpop.f32.mrb[0].mxu0
        %1972 = vmatprep.mubr.bf16.mxu0 0
        %1973 = vmatmul.mubr.bf16.gmra.mrb[0].mxu0 %v1888
        %v1974 = vpop.f32.mrb[0].mxu0
        %v1975 = vadd.f32 0.0, %v1974
        %v1976 = vpop.f32.mrb[0].mxu0
        %v1977 = vpop.f32.mrb[0].mxu0
        %v1978 = vadd.f32 0.0, %v1977
        %v1979 = vpop.f32.mrb[0].mxu0
        %1980 = vmatprep.mubr.bf16.mxu0 0
        %1981 = vmatmul.mubr.bf16.gmra.mrb[0].mxu0 %v1891
        %v1982 = vpop.f32.mrb[0].mxu0
        %v1983 = vadd.f32 0.0, %v1982
        %v1984 = vpop.f32.mrb[0].mxu0
        %v1985 = vpop.f32.mrb[0].mxu0
        %v1986 = vadd.f32 0.0, %v1985
        %v1987 = vpop.f32.mrb[0].mxu0
        %1988 = vmatprep.mubr.bf16.mxu0 0
        %1989 = vmatmul.mubr.bf16.gmra.mrb[0].mxu0 %v1894
        %v1990 = vpop.f32.mrb[0].mxu0
        %v1991 = vadd.f32 0.0, %v1990
        %v1992 = vpop.f32.mrb[0].mxu0
        %v1993 = vpop.f32.mrb[0].mxu0
        %v1994 = vadd.f32 0.0, %v1993
        %v1995 = vpop.f32.mrb[0].mxu0
        %1996 = vmatprep.mubr.bf16.mxu0 0
        %1997 = vmatmul.mubr.bf16.gmra.mrb[0].mxu0 %v1897
        %v1998 = vpop.f32.mrb[0].mxu0
        %v1999 = vadd.f32 0.0, %v1998
        %v2000 = vpop.f32.mrb[0].mxu0
        %v2001 = vpop.f32.mrb[0].mxu0
        %v2002 = vadd.f32 0.0, %v2001
        %v2003 = vpop.f32.mrb[0].mxu0
        %2004 = vmatprep.mubr.bf16.mxu0 0
        %2005 = vmatmul.mubr.bf16.gmra.mrb[0].mxu0 %v1900
        %v2006 = vpop.f32.mrb[0].mxu0
        %v2007 = vadd.f32 0.0, %v2006
        %v2008 = vpop.f32.mrb[0].mxu0
        %v2009 = vpop.f32.mrb[0].mxu0
        %v2010 = vadd.f32 0.0, %v2009
        %v2011 = vpop.f32.mrb[0].mxu0
        %2012 = vmatprep.mubr.bf16.mxu0 0
        %2013 = vmatmul.mubr.bf16.gmra.mrb[0].mxu0 %v1903
        %v2014 = vpop.f32.mrb[0].mxu0
        %v2015 = vadd.f32 0.0, %v2014
        %v2016 = vpop.f32.mrb[0].mxu0
        %v2017 = vpop.f32.mrb[0].mxu0
        %v2018 = vadd.f32 0.0, %v2017
        %v2019 = vpop.f32.mrb[0].mxu0
        %2020 = vmatprep.mubr.bf16.mxu0 0
        %2021 = vmatmul.mubr.bf16.gmra.mrb[0].mxu0 %v1906
        %v2022 = vpop.f32.mrb[0].mxu0
        %v2023 = vadd.f32 0.0, %v2022
        %v2024 = vpop.f32.mrb[0].mxu0
        %v2025 = vpop.f32.mrb[0].mxu0
        %v2026 = vadd.f32 0.0, %v2025
        %v2027 = vpop.f32.mrb[0].mxu0
        %2028 = vmatprep.mubr.bf16.mxu0 0
        %2029 = vmatmul.mubr.bf16.gmra.mrb[0].mxu0 %v1909
        %v2030 = vpop.f32.mrb[0].mxu0
        %v2031 = vadd.f32 0.0, %v2030
        %v2032 = vpop.f32.mrb[0].mxu0
        %v2033 = vpop.f32.mrb[0].mxu0
        %v2034 = vadd.f32 0.0, %v2033
        %v2035 = vpop.f32.mrb[0].mxu0
        %2036 = vmatprep.mubr.bf16.mxu0 0
        %2037 = vmatmul.mubr.bf16.gmra.mrb[0].mxu0 %v1912
        %v2038 = vpop.f32.mrb[0].mxu0
        %v2039 = vadd.f32 0.0, %v2038
        %v2040 = vpop.f32.mrb[0].mxu0
        %v2041 = vpop.f32.mrb[0].mxu0
        %v2042 = vadd.f32 0.0, %v2041
        %v2043 = vpop.f32.mrb[0].mxu0
        %2044 = vmatprep.mubr.bf16.mxu0 0
        %2045 = vmatmul.mubr.bf16.gmra.mrb[0].mxu0 %v1915
        %v2046 = vpop.f32.mrb[0].mxu0
        %v2047 = vadd.f32 0.0, %v2046
        %v2048 = vpop.f32.mrb[0].mxu0
        %v2049 = vpop.f32.mrb[0].mxu0
        %v2050 = vadd.f32 0.0, %v2049
        %v2051 = vpop.f32.mrb[0].mxu0
        %2052 = vmatprep.mubr.bf16.mxu0 0
        %2053 = vmatmul.mubr.bf16.gmra.mrb[0].mxu0 %v1918
        %v2054 = vpop.f32.mrb[0].mxu0
        %v2055 = vadd.f32 0.0, %v2054
        %v2056 = vpop.f32.mrb[0].mxu0
        %v2057 = vpop.f32.mrb[0].mxu0
        %v2058 = vadd.f32 0.0, %v2057
        %v2059 = vpop.f32.mrb[0].mxu0
        %2060 = vmatprep.mubr.bf16.mxu0 0
        %2061 = vmatmul.mubr.bf16.gmra.mrb[0].mxu0 %v1921
        %v2062 = vpop.f32.mrb[0].mxu0
        %v2063 = vadd.f32 0.0, %v2062
        %v2064 = vpop.f32.mrb[0].mxu0
        %v2065 = vpop.f32.mrb[0].mxu0
        %v2066 = vadd.f32 0.0, %v2065
        %v2067 = vpop.f32.mrb[0].mxu0
        %2068 = vmatprep.mubr.bf16.mxu0 0
        %2069 = vmatmul.mubr.bf16.gmra.mrb[0].mxu0 %v1924
        %v2070 = vpop.f32.mrb[0].mxu0
        %v2071 = vadd.f32 0.0, %v2070
        %v2072 = vpop.f32.mrb[0].mxu0
        %v2073 = vpop.f32.mrb[0].mxu0
        %v2074 = vadd.f32 0.0, %v2073
        %v2075 = vpop.f32.mrb[0].mxu0
        %2076 = vmatprep.mubr.bf16.mxu0 0
        %2077 = vmatmul.mubr.bf16.gmra.mrb[0].mxu0 %v1927
        %v2078 = vpop.f32.mrb[0].mxu0
        %v2079 = vadd.f32 0.0, %v2078
        %v2080 = vpop.f32.mrb[0].mxu0
        %v2081 = vpop.f32.mrb[0].mxu0
        %v2082 = vadd.f32 0.0, %v2081
        %v2083 = vpop.f32.mrb[0].mxu0
        %2084 = vmatprep.mubr.bf16.mxu0 0
        %2085 = vmatmul.mubr.bf16.gmra.mrb[0].mxu0 %v1930
        %v2086 = vpop.f32.mrb[0].mxu0
        %v2087 = vadd.f32 0.0, %v2086
        %v2088 = vpop.f32.mrb[0].mxu0
        %v2089 = vpop.f32.mrb[0].mxu0
        %v2090 = vadd.f32 0.0, %v2089
        %v2091 = vpop.f32.mrb[0].mxu0
        %2092 = vdwg.mxu0
        %2093 = vxpose.xlu0.c.b16.start [1/8] %v1064, 128
        %2094 = vxpose.xlu0.c.b16.cont [2/8] 0, 128
        %2095 = vxpose.xlu0.c.b16.cont [3/8] 0, 128
        %2096 = vxpose.xlu0.c.b16.cont [4/8] 0, 128
        %2097 = vxpose.xlu0.c.b16.cont [5/8] 0, 128
        %2098 = vxpose.xlu0.c.b16.cont [6/8] 0, 128
        %2099 = vxpose.xlu0.c.b16.cont [7/8] 0, 128
        %2100 = vxpose.xlu0.c.b16.end [8/8] 0, 128
        %v2101 = vpop.trf.xlu0
        %v2102 = vpop.trf.xlu0
        %v2103 = vpop.trf.xlu0
        %v2104 = vpop.trf.xlu0
        %v2105 = vpop.trf.xlu0
        %v2106 = vpop.trf.xlu0
        %v2107 = vpop.trf.xlu0
        %v2108 = vpop.trf.xlu0
        %2109 = vxpose.xlu0.c.b16.start [1/8] %v1065, 128
        %2110 = vxpose.xlu0.c.b16.cont [2/8] 0, 128
        %2111 = vxpose.xlu0.c.b16.cont [3/8] 0, 128
        %2112 = vxpose.xlu0.c.b16.cont [4/8] 0, 128
        %2113 = vxpose.xlu0.c.b16.cont [5/8] 0, 128
        %2114 = vxpose.xlu0.c.b16.cont [6/8] 0, 128
        %2115 = vxpose.xlu0.c.b16.cont [7/8] 0, 128
        %2116 = vxpose.xlu0.c.b16.end [8/8] 0, 128
        %v2117 = vpop.trf.xlu0
        %v2118 = vpop.trf.xlu0
        %v2119 = vpop.trf.xlu0
        %v2120 = vpop.trf.xlu0
        %v2121 = vpop.trf.xlu0
        %v2122 = vpop.trf.xlu0
        %v2123 = vpop.trf.xlu0
        %v2124 = vpop.trf.xlu0
        %v2126 = vsel %vm1160, %v2101, 0
        %v2129 = vsel %vm1160, %v2102, 0
        %v2132 = vsel %vm1160, %v2103, 0
        %v2135 = vsel %vm1160, %v2104, 0
        %v2138 = vsel %vm1160, %v2105, 0
        %v2141 = vsel %vm1160, %v2106, 0
        %v2144 = vsel %vm1160, %v2107, 0
        %v2147 = vsel %vm1160, %v2108, 0
        %v2150 = vsel %vm1160, %v2117, 0
        %v2153 = vsel %vm1160, %v2118, 0
        %v2156 = vsel %vm1160, %v2119, 0
        %v2159 = vsel %vm1160, %v2120, 0
        %v2162 = vsel %vm1160, %v2121, 0
        %v2165 = vsel %vm1160, %v2122, 0
        %v2168 = vsel %vm1160, %v2123, 0
        %v2171 = vsel %vm1160, %v2124, 0
        %2173 = vmatprep.subr.bf16.mxu0 0
        %2174 = vmatpush1.bf16.msra.mxu0 %v1048
        %2175 = vmatprep.subr.bf16.mxu0 0
        %2176 = vmatpush1.bf16.msra.mxu0 0
        %2177 = vmatprep.subr.bf16.mxu0 0
        %2178 = vmatpush1.bf16.msra.mxu0 0
        %2179 = vmatprep.subr.bf16.mxu0 0
        %2180 = vmatpush1.bf16.msra.mxu0 0
        %2181 = vmatprep.subr.bf16.mxu0 0
        %2182 = vmatpush1.bf16.msra.mxu0 0
        %2183 = vmatprep.subr.bf16.mxu0 0
        %2184 = vmatpush1.bf16.msra.mxu0 0
        %2185 = vmatprep.subr.bf16.mxu0 0
        %2186 = vmatpush1.bf16.msra.mxu0 0
        %2187 = vmatprep.subr.bf16.mxu0 0
        %2188 = vmatpush1.bf16.msra.mxu0 0
        %2189 = vmatprep.subr.bf16.mxu0 0
        %2190 = vmatpush1.bf16.msra.mxu0 0
        %2191 = vmatprep.subr.bf16.mxu0 0
        %2192 = vmatpush1.bf16.msra.mxu0 0
        %2193 = vmatprep.subr.bf16.mxu0 0
        %2194 = vmatpush1.bf16.msra.mxu0 0
        %2195 = vmatprep.subr.bf16.mxu0 0
        %2196 = vmatpush1.bf16.msra.mxu0 0
        %2197 = vmatprep.subr.bf16.mxu0 0
        %2198 = vmatpush1.bf16.msra.mxu0 0
        %2199 = vmatprep.subr.bf16.mxu0 0
        %2200 = vmatpush1.bf16.msra.mxu0 0
        %2201 = vmatprep.subr.bf16.mxu0 0
        %2202 = vmatpush1.bf16.msra.mxu0 0
        %2203 = vmatprep.subr.bf16.mxu0 0
        %2204 = vmatpush1.bf16.msra.mxu0 0
        %2205 = vmatprep.mubr.bf16.mxu0 0
        %2206 = vmatmul.mubr.bf16.gmra.mrb[0].mxu0 %v2126
        %v2207 = vpop.f32.mrb[0].mxu0
        %v2208 = vadd.f32 0.0, %v2207
        %v2209 = vpop.f32.mrb[0].mxu0
        %v2210 = vpop.f32.mrb[0].mxu0
        %v2211 = vadd.f32 0.0, %v2210
        %v2212 = vpop.f32.mrb[0].mxu0
        %2213 = vmatprep.mubr.bf16.mxu0 0
        %2214 = vmatmul.mubr.bf16.gmra.mrb[0].mxu0 %v2129
        %v2215 = vpop.f32.mrb[0].mxu0
        %v2216 = vadd.f32 0.0, %v2215
        %v2217 = vpop.f32.mrb[0].mxu0
        %v2218 = vpop.f32.mrb[0].mxu0
        %v2219 = vadd.f32 0.0, %v2218
        %v2220 = vpop.f32.mrb[0].mxu0
        %2221 = vmatprep.mubr.bf16.mxu0 0
        %2222 = vmatmul.mubr.bf16.gmra.mrb[0].mxu0 %v2132
        %v2223 = vpop.f32.mrb[0].mxu0
        %v2224 = vadd.f32 0.0, %v2223
        %v2225 = vpop.f32.mrb[0].mxu0
        %v2226 = vpop.f32.mrb[0].mxu0
        %v2227 = vadd.f32 0.0, %v2226
        %v2228 = vpop.f32.mrb[0].mxu0
        %2229 = vmatprep.mubr.bf16.mxu0 0
        %2230 = vmatmul.mubr.bf16.gmra.mrb[0].mxu0 %v2135
        %v2231 = vpop.f32.mrb[0].mxu0
        %v2232 = vadd.f32 0.0, %v2231
        %v2233 = vpop.f32.mrb[0].mxu0
        %v2234 = vpop.f32.mrb[0].mxu0
        %v2235 = vadd.f32 0.0, %v2234
        %v2236 = vpop.f32.mrb[0].mxu0
        %2237 = vmatprep.mubr.bf16.mxu0 0
        %2238 = vmatmul.mubr.bf16.gmra.mrb[0].mxu0 %v2138
        %v2239 = vpop.f32.mrb[0].mxu0
        %v2240 = vadd.f32 0.0, %v2239
        %v2241 = vpop.f32.mrb[0].mxu0
        %v2242 = vpop.f32.mrb[0].mxu0
        %v2243 = vadd.f32 0.0, %v2242
        %v2244 = vpop.f32.mrb[0].mxu0
        %2245 = vmatprep.mubr.bf16.mxu0 0
        %2246 = vmatmul.mubr.bf16.gmra.mrb[0].mxu0 %v2141
        %v2247 = vpop.f32.mrb[0].mxu0
        %v2248 = vadd.f32 0.0, %v2247
        %v2249 = vpop.f32.mrb[0].mxu0
        %v2250 = vpop.f32.mrb[0].mxu0
        %v2251 = vadd.f32 0.0, %v2250
        %v2252 = vpop.f32.mrb[0].mxu0
        %2253 = vmatprep.mubr.bf16.mxu0 0
        %2254 = vmatmul.mubr.bf16.gmra.mrb[0].mxu0 %v2144
        %v2255 = vpop.f32.mrb[0].mxu0
        %v2256 = vadd.f32 0.0, %v2255
        %v2257 = vpop.f32.mrb[0].mxu0
        %v2258 = vpop.f32.mrb[0].mxu0
        %v2259 = vadd.f32 0.0, %v2258
        %v2260 = vpop.f32.mrb[0].mxu0
        %2261 = vmatprep.mubr.bf16.mxu0 0
        %2262 = vmatmul.mubr.bf16.gmra.mrb[0].mxu0 %v2147
        %v2263 = vpop.f32.mrb[0].mxu0
        %v2264 = vadd.f32 0.0, %v2263
        %v2265 = vpop.f32.mrb[0].mxu0
        %v2266 = vpop.f32.mrb[0].mxu0
        %v2267 = vadd.f32 0.0, %v2266
        %v2268 = vpop.f32.mrb[0].mxu0
        %2269 = vmatprep.mubr.bf16.mxu0 0
        %2270 = vmatmul.mubr.bf16.gmra.mrb[0].mxu0 %v2150
        %v2271 = vpop.f32.mrb[0].mxu0
        %v2272 = vadd.f32 0.0, %v2271
        %v2273 = vpop.f32.mrb[0].mxu0
        %v2274 = vpop.f32.mrb[0].mxu0
        %v2275 = vadd.f32 0.0, %v2274
        %v2276 = vpop.f32.mrb[0].mxu0
        %2277 = vmatprep.mubr.bf16.mxu0 0
        %2278 = vmatmul.mubr.bf16.gmra.mrb[0].mxu0 %v2153
        %v2279 = vpop.f32.mrb[0].mxu0
        %v2280 = vadd.f32 0.0, %v2279
        %v2281 = vpop.f32.mrb[0].mxu0
        %v2282 = vpop.f32.mrb[0].mxu0
        %v2283 = vadd.f32 0.0, %v2282
        %v2284 = vpop.f32.mrb[0].mxu0
        %2285 = vmatprep.mubr.bf16.mxu0 0
        %2286 = vmatmul.mubr.bf16.gmra.mrb[0].mxu0 %v2156
        %v2287 = vpop.f32.mrb[0].mxu0
        %v2288 = vadd.f32 0.0, %v2287
        %v2289 = vpop.f32.mrb[0].mxu0
        %v2290 = vpop.f32.mrb[0].mxu0
        %v2291 = vadd.f32 0.0, %v2290
        %v2292 = vpop.f32.mrb[0].mxu0
        %2293 = vmatprep.mubr.bf16.mxu0 0
        %2294 = vmatmul.mubr.bf16.gmra.mrb[0].mxu0 %v2159
        %v2295 = vpop.f32.mrb[0].mxu0
        %v2296 = vadd.f32 0.0, %v2295
        %v2297 = vpop.f32.mrb[0].mxu0
        %v2298 = vpop.f32.mrb[0].mxu0
        %v2299 = vadd.f32 0.0, %v2298
        %v2300 = vpop.f32.mrb[0].mxu0
        %2301 = vmatprep.mubr.bf16.mxu0 0
        %2302 = vmatmul.mubr.bf16.gmra.mrb[0].mxu0 %v2162
        %v2303 = vpop.f32.mrb[0].mxu0
        %v2304 = vadd.f32 0.0, %v2303
        %v2305 = vpop.f32.mrb[0].mxu0
        %v2306 = vpop.f32.mrb[0].mxu0
        %v2307 = vadd.f32 0.0, %v2306
        %v2308 = vpop.f32.mrb[0].mxu0
        %2309 = vmatprep.mubr.bf16.mxu0 0
        %2310 = vmatmul.mubr.bf16.gmra.mrb[0].mxu0 %v2165
        %v2311 = vpop.f32.mrb[0].mxu0
        %v2312 = vadd.f32 0.0, %v2311
        %v2313 = vpop.f32.mrb[0].mxu0
        %v2314 = vpop.f32.mrb[0].mxu0
        %v2315 = vadd.f32 0.0, %v2314
        %v2316 = vpop.f32.mrb[0].mxu0
        %2317 = vmatprep.mubr.bf16.mxu0 0
        %2318 = vmatmul.mubr.bf16.gmra.mrb[0].mxu0 %v2168
        %v2319 = vpop.f32.mrb[0].mxu0
        %v2320 = vadd.f32 0.0, %v2319
        %v2321 = vpop.f32.mrb[0].mxu0
        %v2322 = vpop.f32.mrb[0].mxu0
        %v2323 = vadd.f32 0.0, %v2322
        %v2324 = vpop.f32.mrb[0].mxu0
        %2325 = vmatprep.mubr.bf16.mxu0 0
        %2326 = vmatmul.mubr.bf16.gmra.mrb[0].mxu0 %v2171
        %v2327 = vpop.f32.mrb[0].mxu0
        %v2328 = vadd.f32 0.0, %v2327
        %v2329 = vpop.f32.mrb[0].mxu0
        %v2330 = vpop.f32.mrb[0].mxu0
        %v2331 = vadd.f32 0.0, %v2330
        %v2332 = vpop.f32.mrb[0].mxu0
        %2333 = vdwg.mxu0
        %2334 = vxpose.xlu0.c.b16.start [1/8] %v1066, 128
        %2335 = vxpose.xlu0.c.b16.cont [2/8] 0, 128
        %2336 = vxpose.xlu0.c.b16.cont [3/8] 0, 128
        %2337 = vxpose.xlu0.c.b16.cont [4/8] 0, 128
        %2338 = vxpose.xlu0.c.b16.cont [5/8] 0, 128
        %2339 = vxpose.xlu0.c.b16.cont [6/8] 0, 128
        %2340 = vxpose.xlu0.c.b16.cont [7/8] 0, 128
        %2341 = vxpose.xlu0.c.b16.end [8/8] 0, 128
        %v2342 = vpop.trf.xlu0
        %v2343 = vpop.trf.xlu0
        %v2344 = vpop.trf.xlu0
        %v2345 = vpop.trf.xlu0
        %v2346 = vpop.trf.xlu0
        %v2347 = vpop.trf.xlu0
        %v2348 = vpop.trf.xlu0
        %v2349 = vpop.trf.xlu0
        %2350 = vxpose.xlu0.c.b16.start [1/8] %v1067, 128
        %2351 = vxpose.xlu0.c.b16.cont [2/8] 0, 128
        %2352 = vxpose.xlu0.c.b16.cont [3/8] 0, 128
        %2353 = vxpose.xlu0.c.b16.cont [4/8] 0, 128
        %2354 = vxpose.xlu0.c.b16.cont [5/8] 0, 128
        %2355 = vxpose.xlu0.c.b16.cont [6/8] 0, 128
        %2356 = vxpose.xlu0.c.b16.cont [7/8] 0, 128
        %2357 = vxpose.xlu0.c.b16.end [8/8] 0, 128
        %v2358 = vpop.trf.xlu0
        %v2359 = vpop.trf.xlu0
        %v2360 = vpop.trf.xlu0
        %v2361 = vpop.trf.xlu0
        %v2362 = vpop.trf.xlu0
        %v2363 = vpop.trf.xlu0
        %v2364 = vpop.trf.xlu0
        %v2365 = vpop.trf.xlu0
        %v2367 = vsel %vm1160, %v2342, 0
        %v2370 = vsel %vm1160, %v2343, 0
        %v2373 = vsel %vm1160, %v2344, 0
        %v2376 = vsel %vm1160, %v2345, 0
        %v2379 = vsel %vm1160, %v2346, 0
        %v2382 = vsel %vm1160, %v2347, 0
        %v2385 = vsel %vm1160, %v2348, 0
        %v2388 = vsel %vm1160, %v2349, 0
        %v2391 = vsel %vm1160, %v2358, 0
        %v2394 = vsel %vm1160, %v2359, 0
        %v2397 = vsel %vm1160, %v2360, 0
        %v2400 = vsel %vm1160, %v2361, 0
        %v2403 = vsel %vm1160, %v2362, 0
        %v2406 = vsel %vm1160, %v2363, 0
        %v2409 = vsel %vm1160, %v2364, 0
        %v2412 = vsel %vm1160, %v2365, 0
        %2414 = vmatprep.subr.bf16.mxu0 0
        %2415 = vmatpush1.bf16.msra.mxu0 %v1050
        %2416 = vmatprep.subr.bf16.mxu0 0
        %2417 = vmatpush1.bf16.msra.mxu0 0
        %2418 = vmatprep.subr.bf16.mxu0 0
        %2419 = vmatpush1.bf16.msra.mxu0 0
        %2420 = vmatprep.subr.bf16.mxu0 0
        %2421 = vmatpush1.bf16.msra.mxu0 0
        %2422 = vmatprep.subr.bf16.mxu0 0
        %2423 = vmatpush1.bf16.msra.mxu0 0
        %2424 = vmatprep.subr.bf16.mxu0 0
        %2425 = vmatpush1.bf16.msra.mxu0 0
        %2426 = vmatprep.subr.bf16.mxu0 0
        %2427 = vmatpush1.bf16.msra.mxu0 0
        %2428 = vmatprep.subr.bf16.mxu0 0
        %2429 = vmatpush1.bf16.msra.mxu0 0
        %2430 = vmatprep.subr.bf16.mxu0 0
        %2431 = vmatpush1.bf16.msra.mxu0 0
        %2432 = vmatprep.subr.bf16.mxu0 0
        %2433 = vmatpush1.bf16.msra.mxu0 0
        %2434 = vmatprep.subr.bf16.mxu0 0
        %2435 = vmatpush1.bf16.msra.mxu0 0
        %2436 = vmatprep.subr.bf16.mxu0 0
        %2437 = vmatpush1.bf16.msra.mxu0 0
        %2438 = vmatprep.subr.bf16.mxu0 0
        %2439 = vmatpush1.bf16.msra.mxu0 0
        %2440 = vmatprep.subr.bf16.mxu0 0
        %2441 = vmatpush1.bf16.msra.mxu0 0
        %2442 = vmatprep.subr.bf16.mxu0 0
        %2443 = vmatpush1.bf16.msra.mxu0 0
        %2444 = vmatprep.subr.bf16.mxu0 0
        %2445 = vmatpush1.bf16.msra.mxu0 0
        %2446 = vmatprep.mubr.bf16.mxu0 0
        %2447 = vmatmul.mubr.bf16.gmra.mrb[0].mxu0 %v2367
        %v2448 = vpop.f32.mrb[0].mxu0
        %v2449 = vadd.f32 0.0, %v2448
        %v2450 = vpop.f32.mrb[0].mxu0
        %v2451 = vpop.f32.mrb[0].mxu0
        %v2452 = vadd.f32 0.0, %v2451
        %v2453 = vpop.f32.mrb[0].mxu0
        %2454 = vmatprep.mubr.bf16.mxu0 0
        %2455 = vmatmul.mubr.bf16.gmra.mrb[0].mxu0 %v2370
        %v2456 = vpop.f32.mrb[0].mxu0
        %v2457 = vadd.f32 0.0, %v2456
        %v2458 = vpop.f32.mrb[0].mxu0
        %v2459 = vpop.f32.mrb[0].mxu0
        %v2460 = vadd.f32 0.0, %v2459
        %v2461 = vpop.f32.mrb[0].mxu0
        %2462 = vmatprep.mubr.bf16.mxu0 0
        %2463 = vmatmul.mubr.bf16.gmra.mrb[0].mxu0 %v2373
        %v2464 = vpop.f32.mrb[0].mxu0
        %v2465 = vadd.f32 0.0, %v2464
        %v2466 = vpop.f32.mrb[0].mxu0
        %v2467 = vpop.f32.mrb[0].mxu0
        %v2468 = vadd.f32 0.0, %v2467
        %v2469 = vpop.f32.mrb[0].mxu0
        %2470 = vmatprep.mubr.bf16.mxu0 0
        %2471 = vmatmul.mubr.bf16.gmra.mrb[0].mxu0 %v2376
        %v2472 = vpop.f32.mrb[0].mxu0
        %v2473 = vadd.f32 0.0, %v2472
        %v2474 = vpop.f32.mrb[0].mxu0
        %v2475 = vpop.f32.mrb[0].mxu0
        %v2476 = vadd.f32 0.0, %v2475
        %v2477 = vpop.f32.mrb[0].mxu0
        %2478 = vmatprep.mubr.bf16.mxu0 0
        %2479 = vmatmul.mubr.bf16.gmra.mrb[0].mxu0 %v2379
        %v2480 = vpop.f32.mrb[0].mxu0
        %v2481 = vadd.f32 0.0, %v2480
        %v2482 = vpop.f32.mrb[0].mxu0
        %v2483 = vpop.f32.mrb[0].mxu0
        %v2484 = vadd.f32 0.0, %v2483
        %v2485 = vpop.f32.mrb[0].mxu0
        %2486 = vmatprep.mubr.bf16.mxu0 0
        %2487 = vmatmul.mubr.bf16.gmra.mrb[0].mxu0 %v2382
        %v2488 = vpop.f32.mrb[0].mxu0
        %v2489 = vadd.f32 0.0, %v2488
        %v2490 = vpop.f32.mrb[0].mxu0
        %v2491 = vpop.f32.mrb[0].mxu0
        %v2492 = vadd.f32 0.0, %v2491
        %v2493 = vpop.f32.mrb[0].mxu0
        %2494 = vmatprep.mubr.bf16.mxu0 0
        %2495 = vmatmul.mubr.bf16.gmra.mrb[0].mxu0 %v2385
        %v2496 = vpop.f32.mrb[0].mxu0
        %v2497 = vadd.f32 0.0, %v2496
        %v2498 = vpop.f32.mrb[0].mxu0
        %v2499 = vpop.f32.mrb[0].mxu0
        %v2500 = vadd.f32 0.0, %v2499
        %v2501 = vpop.f32.mrb[0].mxu0
        %2502 = vmatprep.mubr.bf16.mxu0 0
        %2503 = vmatmul.mubr.bf16.gmra.mrb[0].mxu0 %v2388
        %v2504 = vpop.f32.mrb[0].mxu0
        %v2505 = vadd.f32 0.0, %v2504
        %v2506 = vpop.f32.mrb[0].mxu0
        %v2507 = vpop.f32.mrb[0].mxu0
        %v2508 = vadd.f32 0.0, %v2507
        %v2509 = vpop.f32.mrb[0].mxu0
        %2510 = vmatprep.mubr.bf16.mxu0 0
        %2511 = vmatmul.mubr.bf16.gmra.mrb[0].mxu0 %v2391
        %v2512 = vpop.f32.mrb[0].mxu0
        %v2513 = vadd.f32 0.0, %v2512
        %v2514 = vpop.f32.mrb[0].mxu0
        %v2515 = vpop.f32.mrb[0].mxu0
        %v2516 = vadd.f32 0.0, %v2515
        %v2517 = vpop.f32.mrb[0].mxu0
        %2518 = vmatprep.mubr.bf16.mxu0 0
        %2519 = vmatmul.mubr.bf16.gmra.mrb[0].mxu0 %v2394
        %v2520 = vpop.f32.mrb[0].mxu0
        %v2521 = vadd.f32 0.0, %v2520
        %v2522 = vpop.f32.mrb[0].mxu0
        %v2523 = vpop.f32.mrb[0].mxu0
        %v2524 = vadd.f32 0.0, %v2523
        %v2525 = vpop.f32.mrb[0].mxu0
        %2526 = vmatprep.mubr.bf16.mxu0 0
        %2527 = vmatmul.mubr.bf16.gmra.mrb[0].mxu0 %v2397
        %v2528 = vpop.f32.mrb[0].mxu0
        %v2529 = vadd.f32 0.0, %v2528
        %v2530 = vpop.f32.mrb[0].mxu0
        %v2531 = vpop.f32.mrb[0].mxu0
        %v2532 = vadd.f32 0.0, %v2531
        %v2533 = vpop.f32.mrb[0].mxu0
        %2534 = vmatprep.mubr.bf16.mxu0 0
        %2535 = vmatmul.mubr.bf16.gmra.mrb[0].mxu0 %v2400
        %v2536 = vpop.f32.mrb[0].mxu0
        %v2537 = vadd.f32 0.0, %v2536
        %v2538 = vpop.f32.mrb[0].mxu0
        %v2539 = vpop.f32.mrb[0].mxu0
        %v2540 = vadd.f32 0.0, %v2539
        %v2541 = vpop.f32.mrb[0].mxu0
        %2542 = vmatprep.mubr.bf16.mxu0 0
        %2543 = vmatmul.mubr.bf16.gmra.mrb[0].mxu0 %v2403
        %v2544 = vpop.f32.mrb[0].mxu0
        %v2545 = vadd.f32 0.0, %v2544
        %v2546 = vpop.f32.mrb[0].mxu0
        %v2547 = vpop.f32.mrb[0].mxu0
        %v2548 = vadd.f32 0.0, %v2547
        %v2549 = vpop.f32.mrb[0].mxu0
        %2550 = vmatprep.mubr.bf16.mxu0 0
        %2551 = vmatmul.mubr.bf16.gmra.mrb[0].mxu0 %v2406
        %v2552 = vpop.f32.mrb[0].mxu0
        %v2553 = vadd.f32 0.0, %v2552
        %v2554 = vpop.f32.mrb[0].mxu0
        %v2555 = vpop.f32.mrb[0].mxu0
        %v2556 = vadd.f32 0.0, %v2555
        %v2557 = vpop.f32.mrb[0].mxu0
        %2558 = vmatprep.mubr.bf16.mxu0 0
        %2559 = vmatmul.mubr.bf16.gmra.mrb[0].mxu0 %v2409
        %v2560 = vpop.f32.mrb[0].mxu0
        %v2561 = vadd.f32 0.0, %v2560
        %v2562 = vpop.f32.mrb[0].mxu0
        %v2563 = vpop.f32.mrb[0].mxu0
        %v2564 = vadd.f32 0.0, %v2563
        %v2565 = vpop.f32.mrb[0].mxu0
        %2566 = vmatprep.mubr.bf16.mxu0 0
        %2567 = vmatmul.mubr.bf16.gmra.mrb[0].mxu0 %v2412
        %v2568 = vpop.f32.mrb[0].mxu0
        %v2569 = vadd.f32 0.0, %v2568
        %v2570 = vpop.f32.mrb[0].mxu0
        %v2571 = vpop.f32.mrb[0].mxu0
        %v2572 = vadd.f32 0.0, %v2571
        %v2573 = vpop.f32.mrb[0].mxu0
        %2574 = vdwg.mxu0
        %2575 = vxpose.xlu0.c.b16.start [1/8] %v1068, 128
        %2576 = vxpose.xlu0.c.b16.cont [2/8] 0, 128
        %2577 = vxpose.xlu0.c.b16.cont [3/8] 0, 128
        %2578 = vxpose.xlu0.c.b16.cont [4/8] 0, 128
        %2579 = vxpose.xlu0.c.b16.cont [5/8] 0, 128
        %2580 = vxpose.xlu0.c.b16.cont [6/8] 0, 128
        %2581 = vxpose.xlu0.c.b16.cont [7/8] 0, 128
        %2582 = vxpose.xlu0.c.b16.end [8/8] 0, 128
        %v2583 = vpop.trf.xlu0
        %v2584 = vpop.trf.xlu0
        %v2585 = vpop.trf.xlu0
        %v2586 = vpop.trf.xlu0
        %v2587 = vpop.trf.xlu0
        %v2588 = vpop.trf.xlu0
        %v2589 = vpop.trf.xlu0
        %v2590 = vpop.trf.xlu0
        %2591 = vxpose.xlu0.c.b16.start [1/8] %v1069, 128
        %2592 = vxpose.xlu0.c.b16.cont [2/8] 0, 128
        %2593 = vxpose.xlu0.c.b16.cont [3/8] 0, 128
        %2594 = vxpose.xlu0.c.b16.cont [4/8] 0, 128
        %2595 = vxpose.xlu0.c.b16.cont [5/8] 0, 128
        %2596 = vxpose.xlu0.c.b16.cont [6/8] 0, 128
        %2597 = vxpose.xlu0.c.b16.cont [7/8] 0, 128
        %2598 = vxpose.xlu0.c.b16.end [8/8] 0, 128
        %v2599 = vpop.trf.xlu0
        %v2600 = vpop.trf.xlu0
        %v2601 = vpop.trf.xlu0
        %v2602 = vpop.trf.xlu0
        %v2603 = vpop.trf.xlu0
        %v2604 = vpop.trf.xlu0
        %v2605 = vpop.trf.xlu0
        %v2606 = vpop.trf.xlu0
        %v2608 = vsel %vm1160, %v2583, 0
        %v2611 = vsel %vm1160, %v2584, 0
        %v2614 = vsel %vm1160, %v2585, 0
        %v2617 = vsel %vm1160, %v2586, 0
        %v2620 = vsel %vm1160, %v2587, 0
        %v2623 = vsel %vm1160, %v2588, 0
        %v2626 = vsel %vm1160, %v2589, 0
        %v2629 = vsel %vm1160, %v2590, 0
        %v2632 = vsel %vm1160, %v2599, 0
        %v2635 = vsel %vm1160, %v2600, 0
        %v2638 = vsel %vm1160, %v2601, 0
        %v2641 = vsel %vm1160, %v2602, 0
        %v2644 = vsel %vm1160, %v2603, 0
        %v2647 = vsel %vm1160, %v2604, 0
        %v2650 = vsel %vm1160, %v2605, 0
        %v2653 = vsel %vm1160, %v2606, 0
        %2655 = vmatprep.subr.bf16.mxu0 0
        %2656 = vmatpush1.bf16.msra.mxu0 %v1052
        %2657 = vmatprep.subr.bf16.mxu0 0
        %2658 = vmatpush1.bf16.msra.mxu0 0
        %2659 = vmatprep.subr.bf16.mxu0 0
        %2660 = vmatpush1.bf16.msra.mxu0 0
        %2661 = vmatprep.subr.bf16.mxu0 0
        %2662 = vmatpush1.bf16.msra.mxu0 0
        %2663 = vmatprep.subr.bf16.mxu0 0
        %2664 = vmatpush1.bf16.msra.mxu0 0
        %2665 = vmatprep.subr.bf16.mxu0 0
        %2666 = vmatpush1.bf16.msra.mxu0 0
        %2667 = vmatprep.subr.bf16.mxu0 0
        %2668 = vmatpush1.bf16.msra.mxu0 0
        %2669 = vmatprep.subr.bf16.mxu0 0
        %2670 = vmatpush1.bf16.msra.mxu0 0
        %2671 = vmatprep.subr.bf16.mxu0 0
        %2672 = vmatpush1.bf16.msra.mxu0 0
        %2673 = vmatprep.subr.bf16.mxu0 0
        %2674 = vmatpush1.bf16.msra.mxu0 0
        %2675 = vmatprep.subr.bf16.mxu0 0
        %2676 = vmatpush1.bf16.msra.mxu0 0
        %2677 = vmatprep.subr.bf16.mxu0 0
        %2678 = vmatpush1.bf16.msra.mxu0 0
        %2679 = vmatprep.subr.bf16.mxu0 0
        %2680 = vmatpush1.bf16.msra.mxu0 0
        %2681 = vmatprep.subr.bf16.mxu0 0
        %2682 = vmatpush1.bf16.msra.mxu0 0
        %2683 = vmatprep.subr.bf16.mxu0 0
        %2684 = vmatpush1.bf16.msra.mxu0 0
        %2685 = vmatprep.subr.bf16.mxu0 0
        %2686 = vmatpush1.bf16.msra.mxu0 0
        %2687 = vmatprep.mubr.bf16.mxu0 0
        %2688 = vmatmul.mubr.bf16.gmra.mrb[0].mxu0 %v2608
        %v2689 = vpop.f32.mrb[0].mxu0
        %v2690 = vadd.f32 0.0, %v2689
        %v2691 = vpop.f32.mrb[0].mxu0
        %v2692 = vpop.f32.mrb[0].mxu0
        %v2693 = vadd.f32 0.0, %v2692
        %v2694 = vpop.f32.mrb[0].mxu0
        %2695 = vmatprep.mubr.bf16.mxu0 0
        %2696 = vmatmul.mubr.bf16.gmra.mrb[0].mxu0 %v2611
        %v2697 = vpop.f32.mrb[0].mxu0
        %v2698 = vadd.f32 0.0, %v2697
        %v2699 = vpop.f32.mrb[0].mxu0
        %v2700 = vpop.f32.mrb[0].mxu0
        %v2701 = vadd.f32 0.0, %v2700
        %v2702 = vpop.f32.mrb[0].mxu0
        %2703 = vmatprep.mubr.bf16.mxu0 0
        %2704 = vmatmul.mubr.bf16.gmra.mrb[0].mxu0 %v2614
        %v2705 = vpop.f32.mrb[0].mxu0
        %v2706 = vadd.f32 0.0, %v2705
        %v2707 = vpop.f32.mrb[0].mxu0
        %v2708 = vpop.f32.mrb[0].mxu0
        %v2709 = vadd.f32 0.0, %v2708
        %v2710 = vpop.f32.mrb[0].mxu0
        %2711 = vmatprep.mubr.bf16.mxu0 0
        %2712 = vmatmul.mubr.bf16.gmra.mrb[0].mxu0 %v2617
        %v2713 = vpop.f32.mrb[0].mxu0
        %v2714 = vadd.f32 0.0, %v2713
        %v2715 = vpop.f32.mrb[0].mxu0
        %v2716 = vpop.f32.mrb[0].mxu0
        %v2717 = vadd.f32 0.0, %v2716
        %v2718 = vpop.f32.mrb[0].mxu0
        %2719 = vmatprep.mubr.bf16.mxu0 0
        %2720 = vmatmul.mubr.bf16.gmra.mrb[0].mxu0 %v2620
        %v2721 = vpop.f32.mrb[0].mxu0
        %v2722 = vadd.f32 0.0, %v2721
        %v2723 = vpop.f32.mrb[0].mxu0
        %v2724 = vpop.f32.mrb[0].mxu0
        %v2725 = vadd.f32 0.0, %v2724
        %v2726 = vpop.f32.mrb[0].mxu0
        %2727 = vmatprep.mubr.bf16.mxu0 0
        %2728 = vmatmul.mubr.bf16.gmra.mrb[0].mxu0 %v2623
        %v2729 = vpop.f32.mrb[0].mxu0
        %v2730 = vadd.f32 0.0, %v2729
        %v2731 = vpop.f32.mrb[0].mxu0
        %v2732 = vpop.f32.mrb[0].mxu0
        %v2733 = vadd.f32 0.0, %v2732
        %v2734 = vpop.f32.mrb[0].mxu0
        %2735 = vmatprep.mubr.bf16.mxu0 0
        %2736 = vmatmul.mubr.bf16.gmra.mrb[0].mxu0 %v2626
        %v2737 = vpop.f32.mrb[0].mxu0
        %v2738 = vadd.f32 0.0, %v2737
        %v2739 = vpop.f32.mrb[0].mxu0
        %v2740 = vpop.f32.mrb[0].mxu0
        %v2741 = vadd.f32 0.0, %v2740
        %v2742 = vpop.f32.mrb[0].mxu0
        %2743 = vmatprep.mubr.bf16.mxu0 0
        %2744 = vmatmul.mubr.bf16.gmra.mrb[0].mxu0 %v2629
        %v2745 = vpop.f32.mrb[0].mxu0
        %v2746 = vadd.f32 0.0, %v2745
        %v2747 = vpop.f32.mrb[0].mxu0
        %v2748 = vpop.f32.mrb[0].mxu0
        %v2749 = vadd.f32 0.0, %v2748
        %v2750 = vpop.f32.mrb[0].mxu0
        %2751 = vmatprep.mubr.bf16.mxu0 0
        %2752 = vmatmul.mubr.bf16.gmra.mrb[0].mxu0 %v2632
        %v2753 = vpop.f32.mrb[0].mxu0
        %v2754 = vadd.f32 0.0, %v2753
        %v2755 = vpop.f32.mrb[0].mxu0
        %v2756 = vpop.f32.mrb[0].mxu0
        %v2757 = vadd.f32 0.0, %v2756
        %v2758 = vpop.f32.mrb[0].mxu0
        %2759 = vmatprep.mubr.bf16.mxu0 0
        %2760 = vmatmul.mubr.bf16.gmra.mrb[0].mxu0 %v2635
        %v2761 = vpop.f32.mrb[0].mxu0
        %v2762 = vadd.f32 0.0, %v2761
        %v2763 = vpop.f32.mrb[0].mxu0
        %v2764 = vpop.f32.mrb[0].mxu0
        %v2765 = vadd.f32 0.0, %v2764
        %v2766 = vpop.f32.mrb[0].mxu0
        %2767 = vmatprep.mubr.bf16.mxu0 0
        %2768 = vmatmul.mubr.bf16.gmra.mrb[0].mxu0 %v2638
        %v2769 = vpop.f32.mrb[0].mxu0
        %v2770 = vadd.f32 0.0, %v2769
        %v2771 = vpop.f32.mrb[0].mxu0
        %v2772 = vpop.f32.mrb[0].mxu0
        %v2773 = vadd.f32 0.0, %v2772
        %v2774 = vpop.f32.mrb[0].mxu0
        %2775 = vmatprep.mubr.bf16.mxu0 0
        %2776 = vmatmul.mubr.bf16.gmra.mrb[0].mxu0 %v2641
        %v2777 = vpop.f32.mrb[0].mxu0
        %v2778 = vadd.f32 0.0, %v2777
        %v2779 = vpop.f32.mrb[0].mxu0
        %v2780 = vpop.f32.mrb[0].mxu0
        %v2781 = vadd.f32 0.0, %v2780
        %v2782 = vpop.f32.mrb[0].mxu0
        %2783 = vmatprep.mubr.bf16.mxu0 0
        %2784 = vmatmul.mubr.bf16.gmra.mrb[0].mxu0 %v2644
        %v2785 = vpop.f32.mrb[0].mxu0
        %v2786 = vadd.f32 0.0, %v2785
        %v2787 = vpop.f32.mrb[0].mxu0
        %v2788 = vpop.f32.mrb[0].mxu0
        %v2789 = vadd.f32 0.0, %v2788
        %v2790 = vpop.f32.mrb[0].mxu0
        %2791 = vmatprep.mubr.bf16.mxu0 0
        %2792 = vmatmul.mubr.bf16.gmra.mrb[0].mxu0 %v2647
        %v2793 = vpop.f32.mrb[0].mxu0
        %v2794 = vadd.f32 0.0, %v2793
        %v2795 = vpop.f32.mrb[0].mxu0
        %v2796 = vpop.f32.mrb[0].mxu0
        %v2797 = vadd.f32 0.0, %v2796
        %v2798 = vpop.f32.mrb[0].mxu0
        %2799 = vmatprep.mubr.bf16.mxu0 0
        %2800 = vmatmul.mubr.bf16.gmra.mrb[0].mxu0 %v2650
        %v2801 = vpop.f32.mrb[0].mxu0
        %v2802 = vadd.f32 0.0, %v2801
        %v2803 = vpop.f32.mrb[0].mxu0
        %v2804 = vpop.f32.mrb[0].mxu0
        %v2805 = vadd.f32 0.0, %v2804
        %v2806 = vpop.f32.mrb[0].mxu0
        %2807 = vmatprep.mubr.bf16.mxu0 0
        %2808 = vmatmul.mubr.bf16.gmra.mrb[0].mxu0 %v2653
        %v2809 = vpop.f32.mrb[0].mxu0
        %v2810 = vadd.f32 0.0, %v2809
        %v2811 = vpop.f32.mrb[0].mxu0
        %v2812 = vpop.f32.mrb[0].mxu0
        %v2813 = vadd.f32 0.0, %v2812
        %v2814 = vpop.f32.mrb[0].mxu0
        %2815 = vdwg.mxu0
        %2816 = vxpose.xlu0.c.b16.start [1/8] %v1070, 128
        %2817 = vxpose.xlu0.c.b16.cont [2/8] 0, 128
        %2818 = vxpose.xlu0.c.b16.cont [3/8] 0, 128
        %2819 = vxpose.xlu0.c.b16.cont [4/8] 0, 128
        %2820 = vxpose.xlu0.c.b16.cont [5/8] 0, 128
        %2821 = vxpose.xlu0.c.b16.cont [6/8] 0, 128
        %2822 = vxpose.xlu0.c.b16.cont [7/8] 0, 128
        %2823 = vxpose.xlu0.c.b16.end [8/8] 0, 128
        %v2824 = vpop.trf.xlu0
        %v2825 = vpop.trf.xlu0
        %v2826 = vpop.trf.xlu0
        %v2827 = vpop.trf.xlu0
        %v2828 = vpop.trf.xlu0
        %v2829 = vpop.trf.xlu0
        %v2830 = vpop.trf.xlu0
        %v2831 = vpop.trf.xlu0
        %2832 = vxpose.xlu0.c.b16.start [1/8] %v1071, 128
        %2833 = vxpose.xlu0.c.b16.cont [2/8] 0, 128
        %2834 = vxpose.xlu0.c.b16.cont [3/8] 0, 128
        %2835 = vxpose.xlu0.c.b16.cont [4/8] 0, 128
        %2836 = vxpose.xlu0.c.b16.cont [5/8] 0, 128
        %2837 = vxpose.xlu0.c.b16.cont [6/8] 0, 128
        %2838 = vxpose.xlu0.c.b16.cont [7/8] 0, 128
        %2839 = vxpose.xlu0.c.b16.end [8/8] 0, 128
        %v2840 = vpop.trf.xlu0
        %v2841 = vpop.trf.xlu0
        %v2842 = vpop.trf.xlu0
        %v2843 = vpop.trf.xlu0
        %v2844 = vpop.trf.xlu0
        %v2845 = vpop.trf.xlu0
        %v2846 = vpop.trf.xlu0
        %v2847 = vpop.trf.xlu0
        %v2849 = vsel %vm1160, %v2824, 0
        %v2852 = vsel %vm1160, %v2825, 0
        %v2855 = vsel %vm1160, %v2826, 0
        %v2858 = vsel %vm1160, %v2827, 0
        %v2861 = vsel %vm1160, %v2828, 0
        %v2864 = vsel %vm1160, %v2829, 0
        %v2867 = vsel %vm1160, %v2830, 0
        %v2870 = vsel %vm1160, %v2831, 0
        %v2873 = vsel %vm1160, %v2840, 0
        %v2876 = vsel %vm1160, %v2841, 0
        %v2879 = vsel %vm1160, %v2842, 0
        %v2882 = vsel %vm1160, %v2843, 0
        %v2885 = vsel %vm1160, %v2844, 0
        %v2888 = vsel %vm1160, %v2845, 0
        %v2891 = vsel %vm1160, %v2846, 0
        %v2894 = vsel %vm1160, %v2847, 0
        %2896 = vmatprep.subr.bf16.mxu0 0
        %2897 = vmatpush1.bf16.msra.mxu0 %v1054
        %2898 = vmatprep.subr.bf16.mxu0 0
        %2899 = vmatpush1.bf16.msra.mxu0 0
        %2900 = vmatprep.subr.bf16.mxu0 0
        %2901 = vmatpush1.bf16.msra.mxu0 0
        %2902 = vmatprep.subr.bf16.mxu0 0
        %2903 = vmatpush1.bf16.msra.mxu0 0
        %2904 = vmatprep.subr.bf16.mxu0 0
        %2905 = vmatpush1.bf16.msra.mxu0 0
        %2906 = vmatprep.subr.bf16.mxu0 0
        %2907 = vmatpush1.bf16.msra.mxu0 0
        %2908 = vmatprep.subr.bf16.mxu0 0
        %2909 = vmatpush1.bf16.msra.mxu0 0
        %2910 = vmatprep.subr.bf16.mxu0 0
        %2911 = vmatpush1.bf16.msra.mxu0 0
        %2912 = vmatprep.subr.bf16.mxu0 0
        %2913 = vmatpush1.bf16.msra.mxu0 0
        %2914 = vmatprep.subr.bf16.mxu0 0
        %2915 = vmatpush1.bf16.msra.mxu0 0
        %2916 = vmatprep.subr.bf16.mxu0 0
        %2917 = vmatpush1.bf16.msra.mxu0 0
        %2918 = vmatprep.subr.bf16.mxu0 0
        %2919 = vmatpush1.bf16.msra.mxu0 0
        %2920 = vmatprep.subr.bf16.mxu0 0
        %2921 = vmatpush1.bf16.msra.mxu0 0
        %2922 = vmatprep.subr.bf16.mxu0 0
        %2923 = vmatpush1.bf16.msra.mxu0 0
        %2924 = vmatprep.subr.bf16.mxu0 0
        %2925 = vmatpush1.bf16.msra.mxu0 0
        %2926 = vmatprep.subr.bf16.mxu0 0
        %2927 = vmatpush1.bf16.msra.mxu0 0
        %2928 = vmatprep.mubr.bf16.mxu0 0
        %2929 = vmatmul.mubr.bf16.gmra.mrb[0].mxu0 %v2849
        %v2930 = vpop.f32.mrb[0].mxu0
        %v2931 = vadd.f32 0.0, %v2930
        %v2932 = vpop.f32.mrb[0].mxu0
        %v2933 = vpop.f32.mrb[0].mxu0
        %v2934 = vadd.f32 0.0, %v2933
        %v2935 = vpop.f32.mrb[0].mxu0
        %2936 = vmatprep.mubr.bf16.mxu0 0
        %2937 = vmatmul.mubr.bf16.gmra.mrb[0].mxu0 %v2852
        %v2938 = vpop.f32.mrb[0].mxu0
        %v2939 = vadd.f32 0.0, %v2938
        %v2940 = vpop.f32.mrb[0].mxu0
        %v2941 = vpop.f32.mrb[0].mxu0
        %v2942 = vadd.f32 0.0, %v2941
        %v2943 = vpop.f32.mrb[0].mxu0
        %2944 = vmatprep.mubr.bf16.mxu0 0
        %2945 = vmatmul.mubr.bf16.gmra.mrb[0].mxu0 %v2855
        %v2946 = vpop.f32.mrb[0].mxu0
        %v2947 = vadd.f32 0.0, %v2946
        %v2948 = vpop.f32.mrb[0].mxu0
        %v2949 = vpop.f32.mrb[0].mxu0
        %v2950 = vadd.f32 0.0, %v2949
        %v2951 = vpop.f32.mrb[0].mxu0
        %2952 = vmatprep.mubr.bf16.mxu0 0
        %2953 = vmatmul.mubr.bf16.gmra.mrb[0].mxu0 %v2858
        %v2954 = vpop.f32.mrb[0].mxu0
        %v2955 = vadd.f32 0.0, %v2954
        %v2956 = vpop.f32.mrb[0].mxu0
        %v2957 = vpop.f32.mrb[0].mxu0
        %v2958 = vadd.f32 0.0, %v2957
        %v2959 = vpop.f32.mrb[0].mxu0
        %2960 = vmatprep.mubr.bf16.mxu0 0
        %2961 = vmatmul.mubr.bf16.gmra.mrb[0].mxu0 %v2861
        %v2962 = vpop.f32.mrb[0].mxu0
        %v2963 = vadd.f32 0.0, %v2962
        %v2964 = vpop.f32.mrb[0].mxu0
        %v2965 = vpop.f32.mrb[0].mxu0
        %v2966 = vadd.f32 0.0, %v2965
        %v2967 = vpop.f32.mrb[0].mxu0
        %2968 = vmatprep.mubr.bf16.mxu0 0
        %2969 = vmatmul.mubr.bf16.gmra.mrb[0].mxu0 %v2864
        %v2970 = vpop.f32.mrb[0].mxu0
        %v2971 = vadd.f32 0.0, %v2970
        %v2972 = vpop.f32.mrb[0].mxu0
        %v2973 = vpop.f32.mrb[0].mxu0
        %v2974 = vadd.f32 0.0, %v2973
        %v2975 = vpop.f32.mrb[0].mxu0
        %2976 = vmatprep.mubr.bf16.mxu0 0
        %2977 = vmatmul.mubr.bf16.gmra.mrb[0].mxu0 %v2867
        %v2978 = vpop.f32.mrb[0].mxu0
        %v2979 = vadd.f32 0.0, %v2978
        %v2980 = vpop.f32.mrb[0].mxu0
        %v2981 = vpop.f32.mrb[0].mxu0
        %v2982 = vadd.f32 0.0, %v2981
        %v2983 = vpop.f32.mrb[0].mxu0
        %2984 = vmatprep.mubr.bf16.mxu0 0
        %2985 = vmatmul.mubr.bf16.gmra.mrb[0].mxu0 %v2870
        %v2986 = vpop.f32.mrb[0].mxu0
        %v2987 = vadd.f32 0.0, %v2986
        %v2988 = vpop.f32.mrb[0].mxu0
        %v2989 = vpop.f32.mrb[0].mxu0
        %v2990 = vadd.f32 0.0, %v2989
        %v2991 = vpop.f32.mrb[0].mxu0
        %2992 = vmatprep.mubr.bf16.mxu0 0
        %2993 = vmatmul.mubr.bf16.gmra.mrb[0].mxu0 %v2873
        %v2994 = vpop.f32.mrb[0].mxu0
        %v2995 = vadd.f32 0.0, %v2994
        %v2996 = vpop.f32.mrb[0].mxu0
        %v2997 = vpop.f32.mrb[0].mxu0
        %v2998 = vadd.f32 0.0, %v2997
        %v2999 = vpop.f32.mrb[0].mxu0
        %3000 = vmatprep.mubr.bf16.mxu0 0
        %3001 = vmatmul.mubr.bf16.gmra.mrb[0].mxu0 %v2876
        %v3002 = vpop.f32.mrb[0].mxu0
        %v3003 = vadd.f32 0.0, %v3002
        %v3004 = vpop.f32.mrb[0].mxu0
        %v3005 = vpop.f32.mrb[0].mxu0
        %v3006 = vadd.f32 0.0, %v3005
        %v3007 = vpop.f32.mrb[0].mxu0
        %3008 = vmatprep.mubr.bf16.mxu0 0
        %3009 = vmatmul.mubr.bf16.gmra.mrb[0].mxu0 %v2879
        %v3010 = vpop.f32.mrb[0].mxu0
        %v3011 = vadd.f32 0.0, %v3010
        %v3012 = vpop.f32.mrb[0].mxu0
        %v3013 = vpop.f32.mrb[0].mxu0
        %v3014 = vadd.f32 0.0, %v3013
        %v3015 = vpop.f32.mrb[0].mxu0
        %3016 = vmatprep.mubr.bf16.mxu0 0
        %3017 = vmatmul.mubr.bf16.gmra.mrb[0].mxu0 %v2882
        %v3018 = vpop.f32.mrb[0].mxu0
        %v3019 = vadd.f32 0.0, %v3018
        %v3020 = vpop.f32.mrb[0].mxu0
        %v3021 = vpop.f32.mrb[0].mxu0
        %v3022 = vadd.f32 0.0, %v3021
        %v3023 = vpop.f32.mrb[0].mxu0
        %3024 = vmatprep.mubr.bf16.mxu0 0
        %3025 = vmatmul.mubr.bf16.gmra.mrb[0].mxu0 %v2885
        %v3026 = vpop.f32.mrb[0].mxu0
        %v3027 = vadd.f32 0.0, %v3026
        %v3028 = vpop.f32.mrb[0].mxu0
        %v3029 = vpop.f32.mrb[0].mxu0
        %v3030 = vadd.f32 0.0, %v3029
        %v3031 = vpop.f32.mrb[0].mxu0
        %3032 = vmatprep.mubr.bf16.mxu0 0
        %3033 = vmatmul.mubr.bf16.gmra.mrb[0].mxu0 %v2888
        %v3034 = vpop.f32.mrb[0].mxu0
        %v3035 = vadd.f32 0.0, %v3034
        %v3036 = vpop.f32.mrb[0].mxu0
        %v3037 = vpop.f32.mrb[0].mxu0
        %v3038 = vadd.f32 0.0, %v3037
        %v3039 = vpop.f32.mrb[0].mxu0
        %3040 = vmatprep.mubr.bf16.mxu0 0
        %3041 = vmatmul.mubr.bf16.gmra.mrb[0].mxu0 %v2891
        %v3042 = vpop.f32.mrb[0].mxu0
        %v3043 = vadd.f32 0.0, %v3042
        %v3044 = vpop.f32.mrb[0].mxu0
        %v3045 = vpop.f32.mrb[0].mxu0
        %v3046 = vadd.f32 0.0, %v3045
        %v3047 = vpop.f32.mrb[0].mxu0
        %3048 = vmatprep.mubr.bf16.mxu0 0
        %3049 = vmatmul.mubr.bf16.gmra.mrb[0].mxu0 %v2894
        %v3050 = vpop.f32.mrb[0].mxu0
        %v3051 = vadd.f32 0.0, %v3050
        %v3052 = vpop.f32.mrb[0].mxu0
        %v3053 = vpop.f32.mrb[0].mxu0
        %v3054 = vadd.f32 0.0, %v3053
        %v3055 = vpop.f32.mrb[0].mxu0
        %3056 = vdwg.mxu0
        %v3057 = vmax.f32 %v1244, %v1247
        %v3058 = vmax.f32 %v3057, %v1252
        %v3059 = vmax.f32 %v3058, %v1255
        %v3060 = vmax.f32 %v3059, %v1260
        %v3061 = vmax.f32 %v3060, %v1263
        %v3062 = vmax.f32 %v3061, %v1268
        %v3063 = vmax.f32 %v3062, %v1271
        %v3064 = vmax.f32 %v3063, %v1276
        %v3065 = vmax.f32 %v3064, %v1279
        %v3066 = vmax.f32 %v3065, %v1284
        %v3067 = vmax.f32 %v3066, %v1287
        %v3068 = vmax.f32 %v3067, %v1292
        %v3069 = vmax.f32 %v3068, %v1295
        %v3070 = vmax.f32 %v3069, %v1300
        %v3071 = vmax.f32 %v3070, %v1303
        %v3072 = vmax.f32 %v3071, %v1308
        %v3073 = vmax.f32 %v3072, %v1311
        %v3074 = vmax.f32 %v3073, %v1316
        %v3075 = vmax.f32 %v3074, %v1319
        %v3076 = vmax.f32 %v3075, %v1324
        %v3077 = vmax.f32 %v3076, %v1327
        %v3078 = vmax.f32 %v3077, %v1332
        %v3079 = vmax.f32 %v3078, %v1335
        %v3080 = vmax.f32 %v3079, %v1340
        %v3081 = vmax.f32 %v3080, %v1343
        %v3082 = vmax.f32 %v3081, %v1348
        %v3083 = vmax.f32 %v3082, %v1351
        %v3084 = vmax.f32 %v3083, %v1356
        %v3085 = vmax.f32 %v3084, %v1359
        %v3086 = vmax.f32 %v3085, %v1364
        %v3087 = vmax.f32 %v3086, %v1367
        %v3088 = vrot.slane %v3087, 4
        %v3089 = vmax.f32 %v3087, %v3088
        %v3090 = vrot.slane %v3089, 2
        %v3091 = vmax.f32 %v3089, %v3090
        %v3092 = vrot.slane %v3091, 1
        %v3093 = vmax.f32 %v3091, %v3092
        %v3094 = vmax.f32 %v1485, %v1488
        %v3095 = vmax.f32 %v3094, %v1493
        %v3096 = vmax.f32 %v3095, %v1496
        %v3097 = vmax.f32 %v3096, %v1501
        %v3098 = vmax.f32 %v3097, %v1504
        %v3099 = vmax.f32 %v3098, %v1509
        %v3100 = vmax.f32 %v3099, %v1512
        %v3101 = vmax.f32 %v3100, %v1517
        %v3102 = vmax.f32 %v3101, %v1520
        %v3103 = vmax.f32 %v3102, %v1525
        %v3104 = vmax.f32 %v3103, %v1528
        %v3105 = vmax.f32 %v3104, %v1533
        %v3106 = vmax.f32 %v3105, %v1536
        %v3107 = vmax.f32 %v3106, %v1541
        %v3108 = vmax.f32 %v3107, %v1544
        %v3109 = vmax.f32 %v3108, %v1549
        %v3110 = vmax.f32 %v3109, %v1552
        %v3111 = vmax.f32 %v3110, %v1557
        %v3112 = vmax.f32 %v3111, %v1560
        %v3113 = vmax.f32 %v3112, %v1565
        %v3114 = vmax.f32 %v3113, %v1568
        %v3115 = vmax.f32 %v3114, %v1573
        %v3116 = vmax.f32 %v3115, %v1576
        %v3117 = vmax.f32 %v3116, %v1581
        %v3118 = vmax.f32 %v3117, %v1584
        %v3119 = vmax.f32 %v3118, %v1589
        %v3120 = vmax.f32 %v3119, %v1592
        %v3121 = vmax.f32 %v3120, %v1597
        %v3122 = vmax.f32 %v3121, %v1600
        %v3123 = vmax.f32 %v3122, %v1605
        %v3124 = vmax.f32 %v3123, %v1608
        %v3125 = vrot.slane %v3124, 4
        %v3126 = vmax.f32 %v3124, %v3125
        %v3127 = vrot.slane %v3126, 2
        %v3128 = vmax.f32 %v3126, %v3127
        %v3129 = vrot.slane %v3128, 1
        %v3130 = vmax.f32 %v3128, %v3129
        %v3131 = vmax.f32 %v1726, %v1729
        %v3132 = vmax.f32 %v3131, %v1734
        %v3133 = vmax.f32 %v3132, %v1737
        %v3134 = vmax.f32 %v3133, %v1742
        %v3135 = vmax.f32 %v3134, %v1745
        %v3136 = vmax.f32 %v3135, %v1750
        %v3137 = vmax.f32 %v3136, %v1753
        %v3138 = vmax.f32 %v3137, %v1758
        %v3139 = vmax.f32 %v3138, %v1761
        %v3140 = vmax.f32 %v3139, %v1766
        %v3141 = vmax.f32 %v3140, %v1769
        %v3142 = vmax.f32 %v3141, %v1774
        %v3143 = vmax.f32 %v3142, %v1777
        %v3144 = vmax.f32 %v3143, %v1782
        %v3145 = vmax.f32 %v3144, %v1785
        %v3146 = vmax.f32 %v3145, %v1790
        %v3147 = vmax.f32 %v3146, %v1793
        %v3148 = vmax.f32 %v3147, %v1798
        %v3149 = vmax.f32 %v3148, %v1801
        %v3150 = vmax.f32 %v3149, %v1806
        %v3151 = vmax.f32 %v3150, %v1809
        %v3152 = vmax.f32 %v3151, %v1814
        %v3153 = vmax.f32 %v3152, %v1817
        %v3154 = vmax.f32 %v3153, %v1822
        %v3155 = vmax.f32 %v3154, %v1825
        %v3156 = vmax.f32 %v3155, %v1830
        %v3157 = vmax.f32 %v3156, %v1833
        %v3158 = vmax.f32 %v3157, %v1838
        %v3159 = vmax.f32 %v3158, %v1841
        %v3160 = vmax.f32 %v3159, %v1846
        %v3161 = vmax.f32 %v3160, %v1849
        %v3162 = vrot.slane %v3161, 4
        %v3163 = vmax.f32 %v3161, %v3162
        %v3164 = vrot.slane %v3163, 2
        %v3165 = vmax.f32 %v3163, %v3164
        %v3166 = vrot.slane %v3165, 1
        %v3167 = vmax.f32 %v3165, %v3166
        %v3168 = vmax.f32 %v1967, %v1970
        %v3169 = vmax.f32 %v3168, %v1975
        %v3170 = vmax.f32 %v3169, %v1978
        %v3171 = vmax.f32 %v3170, %v1983
        %v3172 = vmax.f32 %v3171, %v1986
        %v3173 = vmax.f32 %v3172, %v1991
        %v3174 = vmax.f32 %v3173, %v1994
        %v3175 = vmax.f32 %v3174, %v1999
        %v3176 = vmax.f32 %v3175, %v2002
        %v3177 = vmax.f32 %v3176, %v2007
        %v3178 = vmax.f32 %v3177, %v2010
        %v3179 = vmax.f32 %v3178, %v2015
        %v3180 = vmax.f32 %v3179, %v2018
        %v3181 = vmax.f32 %v3180, %v2023
        %v3182 = vmax.f32 %v3181, %v2026
        %v3183 = vmax.f32 %v3182, %v2031
        %v3184 = vmax.f32 %v3183, %v2034
        %v3185 = vmax.f32 %v3184, %v2039
        %v3186 = vmax.f32 %v3185, %v2042
        %v3187 = vmax.f32 %v3186, %v2047
        %v3188 = vmax.f32 %v3187, %v2050
        %v3189 = vmax.f32 %v3188, %v2055
        %v3190 = vmax.f32 %v3189, %v2058
        %v3191 = vmax.f32 %v3190, %v2063
        %v3192 = vmax.f32 %v3191, %v2066
        %v3193 = vmax.f32 %v3192, %v2071
        %v3194 = vmax.f32 %v3193, %v2074
        %v3195 = vmax.f32 %v3194, %v2079
        %v3196 = vmax.f32 %v3195, %v2082
        %v3197 = vmax.f32 %v3196, %v2087
        %v3198 = vmax.f32 %v3197, %v2090
        %v3199 = vrot.slane %v3198, 4
        %v3200 = vmax.f32 %v3198, %v3199
        %v3201 = vrot.slane %v3200, 2
        %v3202 = vmax.f32 %v3200, %v3201
        %v3203 = vrot.slane %v3202, 1
        %v3204 = vmax.f32 %v3202, %v3203
        %v3205 = vmax.f32 %v2208, %v2211
        %v3206 = vmax.f32 %v3205, %v2216
        %v3207 = vmax.f32 %v3206, %v2219
        %v3208 = vmax.f32 %v3207, %v2224
        %v3209 = vmax.f32 %v3208, %v2227
        %v3210 = vmax.f32 %v3209, %v2232
        %v3211 = vmax.f32 %v3210, %v2235
        %v3212 = vmax.f32 %v3211, %v2240
        %v3213 = vmax.f32 %v3212, %v2243
        %v3214 = vmax.f32 %v3213, %v2248
        %v3215 = vmax.f32 %v3214, %v2251
        %v3216 = vmax.f32 %v3215, %v2256
        %v3217 = vmax.f32 %v3216, %v2259
        %v3218 = vmax.f32 %v3217, %v2264
        %v3219 = vmax.f32 %v3218, %v2267
        %v3220 = vmax.f32 %v3219, %v2272
        %v3221 = vmax.f32 %v3220, %v2275
        %v3222 = vmax.f32 %v3221, %v2280
        %v3223 = vmax.f32 %v3222, %v2283
        %v3224 = vmax.f32 %v3223, %v2288
        %v3225 = vmax.f32 %v3224, %v2291
        %v3226 = vmax.f32 %v3225, %v2296
        %v3227 = vmax.f32 %v3226, %v2299
        %v3228 = vmax.f32 %v3227, %v2304
        %v3229 = vmax.f32 %v3228, %v2307
        %v3230 = vmax.f32 %v3229, %v2312
        %v3231 = vmax.f32 %v3230, %v2315
        %v3232 = vmax.f32 %v3231, %v2320
        %v3233 = vmax.f32 %v3232, %v2323
        %v3234 = vmax.f32 %v3233, %v2328
        %v3235 = vmax.f32 %v3234, %v2331
        %v3236 = vrot.slane %v3235, 4
        %v3237 = vmax.f32 %v3235, %v3236
        %v3238 = vrot.slane %v3237, 2
        %v3239 = vmax.f32 %v3237, %v3238
        %v3240 = vrot.slane %v3239, 1
        %v3241 = vmax.f32 %v3239, %v3240
        %v3242 = vmax.f32 %v2449, %v2452
        %v3243 = vmax.f32 %v3242, %v2457
        %v3244 = vmax.f32 %v3243, %v2460
        %v3245 = vmax.f32 %v3244, %v2465
        %v3246 = vmax.f32 %v3245, %v2468
        %v3247 = vmax.f32 %v3246, %v2473
        %v3248 = vmax.f32 %v3247, %v2476
        %v3249 = vmax.f32 %v3248, %v2481
        %v3250 = vmax.f32 %v3249, %v2484
        %v3251 = vmax.f32 %v3250, %v2489
        %v3252 = vmax.f32 %v3251, %v2492
        %v3253 = vmax.f32 %v3252, %v2497
        %v3254 = vmax.f32 %v3253, %v2500
        %v3255 = vmax.f32 %v3254, %v2505
        %v3256 = vmax.f32 %v3255, %v2508
        %v3257 = vmax.f32 %v3256, %v2513
        %v3258 = vmax.f32 %v3257, %v2516
        %v3259 = vmax.f32 %v3258, %v2521
        %v3260 = vmax.f32 %v3259, %v2524
        %v3261 = vmax.f32 %v3260, %v2529
        %v3262 = vmax.f32 %v3261, %v2532
        %v3263 = vmax.f32 %v3262, %v2537
        %v3264 = vmax.f32 %v3263, %v2540
        %v3265 = vmax.f32 %v3264, %v2545
        %v3266 = vmax.f32 %v3265, %v2548
        %v3267 = vmax.f32 %v3266, %v2553
        %v3268 = vmax.f32 %v3267, %v2556
        %v3269 = vmax.f32 %v3268, %v2561
        %v3270 = vmax.f32 %v3269, %v2564
        %v3271 = vmax.f32 %v3270, %v2569
        %v3272 = vmax.f32 %v3271, %v2572
        %v3273 = vrot.slane %v3272, 4
        %v3274 = vmax.f32 %v3272, %v3273
        %v3275 = vrot.slane %v3274, 2
        %v3276 = vmax.f32 %v3274, %v3275
        %v3277 = vrot.slane %v3276, 1
        %v3278 = vmax.f32 %v3276, %v3277
        %v3279 = vmax.f32 %v2690, %v2693
        %v3280 = vmax.f32 %v3279, %v2698
        %v3281 = vmax.f32 %v3280, %v2701
        %v3282 = vmax.f32 %v3281, %v2706
        %v3283 = vmax.f32 %v3282, %v2709
        %v3284 = vmax.f32 %v3283, %v2714
        %v3285 = vmax.f32 %v3284, %v2717
        %v3286 = vmax.f32 %v3285, %v2722
        %v3287 = vmax.f32 %v3286, %v2725
        %v3288 = vmax.f32 %v3287, %v2730
        %v3289 = vmax.f32 %v3288, %v2733
        %v3290 = vmax.f32 %v3289, %v2738
        %v3291 = vmax.f32 %v3290, %v2741
        %v3292 = vmax.f32 %v3291, %v2746
        %v3293 = vmax.f32 %v3292, %v2749
        %v3294 = vmax.f32 %v3293, %v2754
        %v3295 = vmax.f32 %v3294, %v2757
        %v3296 = vmax.f32 %v3295, %v2762
        %v3297 = vmax.f32 %v3296, %v2765
        %v3298 = vmax.f32 %v3297, %v2770
        %v3299 = vmax.f32 %v3298, %v2773
        %v3300 = vmax.f32 %v3299, %v2778
        %v3301 = vmax.f32 %v3300, %v2781
        %v3302 = vmax.f32 %v3301, %v2786
        %v3303 = vmax.f32 %v3302, %v2789
        %v3304 = vmax.f32 %v3303, %v2794
        %v3305 = vmax.f32 %v3304, %v2797
        %v3306 = vmax.f32 %v3305, %v2802
        %v3307 = vmax.f32 %v3306, %v2805
        %v3308 = vmax.f32 %v3307, %v2810
        %v3309 = vmax.f32 %v3308, %v2813
        %v3310 = vrot.slane %v3309, 4
        %v3311 = vmax.f32 %v3309, %v3310
        %v3312 = vrot.slane %v3311, 2
        %v3313 = vmax.f32 %v3311, %v3312
        %v3314 = vrot.slane %v3313, 1
        %v3315 = vmax.f32 %v3313, %v3314
        %v3316 = vmax.f32 %v2931, %v2934
        %v3317 = vmax.f32 %v3316, %v2939
        %v3318 = vmax.f32 %v3317, %v2942
        %v3319 = vmax.f32 %v3318, %v2947
        %v3320 = vmax.f32 %v3319, %v2950
        %v3321 = vmax.f32 %v3320, %v2955
        %v3322 = vmax.f32 %v3321, %v2958
        %v3323 = vmax.f32 %v3322, %v2963
        %v3324 = vmax.f32 %v3323, %v2966
        %v3325 = vmax.f32 %v3324, %v2971
        %v3326 = vmax.f32 %v3325, %v2974
        %v3327 = vmax.f32 %v3326, %v2979
        %v3328 = vmax.f32 %v3327, %v2982
        %v3329 = vmax.f32 %v3328, %v2987
        %v3330 = vmax.f32 %v3329, %v2990
        %v3331 = vmax.f32 %v3330, %v2995
        %v3332 = vmax.f32 %v3331, %v2998
        %v3333 = vmax.f32 %v3332, %v3003
        %v3334 = vmax.f32 %v3333, %v3006
        %v3335 = vmax.f32 %v3334, %v3011
        %v3336 = vmax.f32 %v3335, %v3014
        %v3337 = vmax.f32 %v3336, %v3019
        %v3338 = vmax.f32 %v3337, %v3022
        %v3339 = vmax.f32 %v3338, %v3027
        %v3340 = vmax.f32 %v3339, %v3030
        %v3341 = vmax.f32 %v3340, %v3035
        %v3342 = vmax.f32 %v3341, %v3038
        %v3343 = vmax.f32 %v3342, %v3043
        %v3344 = vmax.f32 %v3343, %v3046
        %v3345 = vmax.f32 %v3344, %v3051
        %v3346 = vmax.f32 %v3345, %v3054
        %v3347 = vrot.slane %v3346, 4
        %v3348 = vmax.f32 %v3346, %v3347
        %v3349 = vrot.slane %v3348, 2
        %v3350 = vmax.f32 %v3348, %v3349
        %v3351 = vrot.slane %v3350, 1
        %v3352 = vmax.f32 %v3350, %v3351
        %v3353 = vsub.f32 %v1244, %v3093
        %v3354 = vsub.f32 %v1247, %v3093
        %v3355 = vsub.f32 %v1252, %v3093
        %v3356 = vsub.f32 %v1255, %v3093
        %v3357 = vsub.f32 %v1260, %v3093
        %v3358 = vsub.f32 %v1263, %v3093
        %v3359 = vsub.f32 %v1268, %v3093
        %v3360 = vsub.f32 %v1271, %v3093
        %v3361 = vsub.f32 %v1276, %v3093
        %v3362 = vsub.f32 %v1279, %v3093
        %v3363 = vsub.f32 %v1284, %v3093
        %v3364 = vsub.f32 %v1287, %v3093
        %v3365 = vsub.f32 %v1292, %v3093
        %v3366 = vsub.f32 %v1295, %v3093
        %v3367 = vsub.f32 %v1300, %v3093
        %v3368 = vsub.f32 %v1303, %v3093
        %v3369 = vsub.f32 %v1308, %v3093
        %v3370 = vsub.f32 %v1311, %v3093
        %v3371 = vsub.f32 %v1316, %v3093
        %v3372 = vsub.f32 %v1319, %v3093
        %v3373 = vsub.f32 %v1324, %v3093
        %v3374 = vsub.f32 %v1327, %v3093
        %v3375 = vsub.f32 %v1332, %v3093
        %v3376 = vsub.f32 %v1335, %v3093
        %v3377 = vsub.f32 %v1340, %v3093
        %v3378 = vsub.f32 %v1343, %v3093
        %v3379 = vsub.f32 %v1348, %v3093
        %v3380 = vsub.f32 %v1351, %v3093
        %v3381 = vsub.f32 %v1356, %v3093
        %v3382 = vsub.f32 %v1359, %v3093
        %v3383 = vsub.f32 %v1364, %v3093
        %v3384 = vsub.f32 %v1367, %v3093
        %v3385 = vsub.f32 %v1485, %v3130
        %v3386 = vsub.f32 %v1488, %v3130
        %v3387 = vsub.f32 %v1493, %v3130
        %v3388 = vsub.f32 %v1496, %v3130
        %v3389 = vsub.f32 %v1501, %v3130
        %v3390 = vsub.f32 %v1504, %v3130
        %v3391 = vsub.f32 %v1509, %v3130
        %v3392 = vsub.f32 %v1512, %v3130
        %v3393 = vsub.f32 %v1517, %v3130
        %v3394 = vsub.f32 %v1520, %v3130
        %v3395 = vsub.f32 %v1525, %v3130
        %v3396 = vsub.f32 %v1528, %v3130
        %v3397 = vsub.f32 %v1533, %v3130
        %v3398 = vsub.f32 %v1536, %v3130
        %v3399 = vsub.f32 %v1541, %v3130
        %v3400 = vsub.f32 %v1544, %v3130
        %v3401 = vsub.f32 %v1549, %v3130
        %v3402 = vsub.f32 %v1552, %v3130
        %v3403 = vsub.f32 %v1557, %v3130
        %v3404 = vsub.f32 %v1560, %v3130
        %v3405 = vsub.f32 %v1565, %v3130
        %v3406 = vsub.f32 %v1568, %v3130
        %v3407 = vsub.f32 %v1573, %v3130
        %v3408 = vsub.f32 %v1576, %v3130
        %v3409 = vsub.f32 %v1581, %v3130
        %v3410 = vsub.f32 %v1584, %v3130
        %v3411 = vsub.f32 %v1589, %v3130
        %v3412 = vsub.f32 %v1592, %v3130
        %v3413 = vsub.f32 %v1597, %v3130
        %v3414 = vsub.f32 %v1600, %v3130
        %v3415 = vsub.f32 %v1605, %v3130
        %v3416 = vsub.f32 %v1608, %v3130
        %v3417 = vsub.f32 %v1726, %v3167
        %v3418 = vsub.f32 %v1729, %v3167
        %v3419 = vsub.f32 %v1734, %v3167
        %v3420 = vsub.f32 %v1737, %v3167
        %v3421 = vsub.f32 %v1742, %v3167
        %v3422 = vsub.f32 %v1745, %v3167
        %v3423 = vsub.f32 %v1750, %v3167
        %v3424 = vsub.f32 %v1753, %v3167
        %v3425 = vsub.f32 %v1758, %v3167
        %v3426 = vsub.f32 %v1761, %v3167
        %v3427 = vsub.f32 %v1766, %v3167
        %v3428 = vsub.f32 %v1769, %v3167
        %v3429 = vsub.f32 %v1774, %v3167
        %v3430 = vsub.f32 %v1777, %v3167
        %v3431 = vsub.f32 %v1782, %v3167
        %v3432 = vsub.f32 %v1785, %v3167
        %v3433 = vsub.f32 %v1790, %v3167
        %v3434 = vsub.f32 %v1793, %v3167
        %v3435 = vsub.f32 %v1798, %v3167
        %v3436 = vsub.f32 %v1801, %v3167
        %v3437 = vsub.f32 %v1806, %v3167
        %v3438 = vsub.f32 %v1809, %v3167
        %v3439 = vsub.f32 %v1814, %v3167
        %v3440 = vsub.f32 %v1817, %v3167
        %v3441 = vsub.f32 %v1822, %v3167
        %v3442 = vsub.f32 %v1825, %v3167
        %v3443 = vsub.f32 %v1830, %v3167
        %v3444 = vsub.f32 %v1833, %v3167
        %v3445 = vsub.f32 %v1838, %v3167
        %v3446 = vsub.f32 %v1841, %v3167
        %v3447 = vsub.f32 %v1846, %v3167
        %v3448 = vsub.f32 %v1849, %v3167
        %v3449 = vsub.f32 %v1967, %v3204
        %v3450 = vsub.f32 %v1970, %v3204
        %v3451 = vsub.f32 %v1975, %v3204
        %v3452 = vsub.f32 %v1978, %v3204
        %v3453 = vsub.f32 %v1983, %v3204
        %v3454 = vsub.f32 %v1986, %v3204
        %v3455 = vsub.f32 %v1991, %v3204
        %v3456 = vsub.f32 %v1994, %v3204
        %v3457 = vsub.f32 %v1999, %v3204
        %v3458 = vsub.f32 %v2002, %v3204
        %v3459 = vsub.f32 %v2007, %v3204
        %v3460 = vsub.f32 %v2010, %v3204
        %v3461 = vsub.f32 %v2015, %v3204
        %v3462 = vsub.f32 %v2018, %v3204
        %v3463 = vsub.f32 %v2023, %v3204
        %v3464 = vsub.f32 %v2026, %v3204
        %v3465 = vsub.f32 %v2031, %v3204
        %v3466 = vsub.f32 %v2034, %v3204
        %v3467 = vsub.f32 %v2039, %v3204
        %v3468 = vsub.f32 %v2042, %v3204
        %v3469 = vsub.f32 %v2047, %v3204
        %v3470 = vsub.f32 %v2050, %v3204
        %v3471 = vsub.f32 %v2055, %v3204
        %v3472 = vsub.f32 %v2058, %v3204
        %v3473 = vsub.f32 %v2063, %v3204
        %v3474 = vsub.f32 %v2066, %v3204
        %v3475 = vsub.f32 %v2071, %v3204
        %v3476 = vsub.f32 %v2074, %v3204
        %v3477 = vsub.f32 %v2079, %v3204
        %v3478 = vsub.f32 %v2082, %v3204
        %v3479 = vsub.f32 %v2087, %v3204
        %v3480 = vsub.f32 %v2090, %v3204
        %v3481 = vsub.f32 %v2208, %v3241
        %v3482 = vsub.f32 %v2211, %v3241
        %v3483 = vsub.f32 %v2216, %v3241
        %v3484 = vsub.f32 %v2219, %v3241
        %v3485 = vsub.f32 %v2224, %v3241
        %v3486 = vsub.f32 %v2227, %v3241
        %v3487 = vsub.f32 %v2232, %v3241
        %v3488 = vsub.f32 %v2235, %v3241
        %v3489 = vsub.f32 %v2240, %v3241
        %v3490 = vsub.f32 %v2243, %v3241
        %v3491 = vsub.f32 %v2248, %v3241
        %v3492 = vsub.f32 %v2251, %v3241
        %v3493 = vsub.f32 %v2256, %v3241
        %v3494 = vsub.f32 %v2259, %v3241
        %v3495 = vsub.f32 %v2264, %v3241
        %v3496 = vsub.f32 %v2267, %v3241
        %v3497 = vsub.f32 %v2272, %v3241
        %v3498 = vsub.f32 %v2275, %v3241
        %v3499 = vsub.f32 %v2280, %v3241
        %v3500 = vsub.f32 %v2283, %v3241
        %v3501 = vsub.f32 %v2288, %v3241
        %v3502 = vsub.f32 %v2291, %v3241
        %v3503 = vsub.f32 %v2296, %v3241
        %v3504 = vsub.f32 %v2299, %v3241
        %v3505 = vsub.f32 %v2304, %v3241
        %v3506 = vsub.f32 %v2307, %v3241
        %v3507 = vsub.f32 %v2312, %v3241
        %v3508 = vsub.f32 %v2315, %v3241
        %v3509 = vsub.f32 %v2320, %v3241
        %v3510 = vsub.f32 %v2323, %v3241
        %v3511 = vsub.f32 %v2328, %v3241
        %v3512 = vsub.f32 %v2331, %v3241
        %v3513 = vsub.f32 %v2449, %v3278
        %v3514 = vsub.f32 %v2452, %v3278
        %v3515 = vsub.f32 %v2457, %v3278
        %v3516 = vsub.f32 %v2460, %v3278
        %v3517 = vsub.f32 %v2465, %v3278
        %v3518 = vsub.f32 %v2468, %v3278
        %v3519 = vsub.f32 %v2473, %v3278
        %v3520 = vsub.f32 %v2476, %v3278
        %v3521 = vsub.f32 %v2481, %v3278
        %v3522 = vsub.f32 %v2484, %v3278
        %v3523 = vsub.f32 %v2489, %v3278
        %v3524 = vsub.f32 %v2492, %v3278
        %v3525 = vsub.f32 %v2497, %v3278
        %v3526 = vsub.f32 %v2500, %v3278
        %v3527 = vsub.f32 %v2505, %v3278
        %v3528 = vsub.f32 %v2508, %v3278
        %v3529 = vsub.f32 %v2513, %v3278
        %v3530 = vsub.f32 %v2516, %v3278
        %v3531 = vsub.f32 %v2521, %v3278
        %v3532 = vsub.f32 %v2524, %v3278
        %v3533 = vsub.f32 %v2529, %v3278
        %v3534 = vsub.f32 %v2532, %v3278
        %v3535 = vsub.f32 %v2537, %v3278
        %v3536 = vsub.f32 %v2540, %v3278
        %v3537 = vsub.f32 %v2545, %v3278
        %v3538 = vsub.f32 %v2548, %v3278
        %v3539 = vsub.f32 %v2553, %v3278
        %v3540 = vsub.f32 %v2556, %v3278
        %v3541 = vsub.f32 %v2561, %v3278
        %v3542 = vsub.f32 %v2564, %v3278
        %v3543 = vsub.f32 %v2569, %v3278
        %v3544 = vsub.f32 %v2572, %v3278
        %v3545 = vsub.f32 %v2690, %v3315
        %v3546 = vsub.f32 %v2693, %v3315
        %v3547 = vsub.f32 %v2698, %v3315
        %v3548 = vsub.f32 %v2701, %v3315
        %v3549 = vsub.f32 %v2706, %v3315
        %v3550 = vsub.f32 %v2709, %v3315
        %v3551 = vsub.f32 %v2714, %v3315
        %v3552 = vsub.f32 %v2717, %v3315
        %v3553 = vsub.f32 %v2722, %v3315
        %v3554 = vsub.f32 %v2725, %v3315
        %v3555 = vsub.f32 %v2730, %v3315
        %v3556 = vsub.f32 %v2733, %v3315
        %v3557 = vsub.f32 %v2738, %v3315
        %v3558 = vsub.f32 %v2741, %v3315
        %v3559 = vsub.f32 %v2746, %v3315
        %v3560 = vsub.f32 %v2749, %v3315
        %v3561 = vsub.f32 %v2754, %v3315
        %v3562 = vsub.f32 %v2757, %v3315
        %v3563 = vsub.f32 %v2762, %v3315
        %v3564 = vsub.f32 %v2765, %v3315
        %v3565 = vsub.f32 %v2770, %v3315
        %v3566 = vsub.f32 %v2773, %v3315
        %v3567 = vsub.f32 %v2778, %v3315
        %v3568 = vsub.f32 %v2781, %v3315
        %v3569 = vsub.f32 %v2786, %v3315
        %v3570 = vsub.f32 %v2789, %v3315
        %v3571 = vsub.f32 %v2794, %v3315
        %v3572 = vsub.f32 %v2797, %v3315
        %v3573 = vsub.f32 %v2802, %v3315
        %v3574 = vsub.f32 %v2805, %v3315
        %v3575 = vsub.f32 %v2810, %v3315
        %v3576 = vsub.f32 %v2813, %v3315
        %v3577 = vsub.f32 %v2931, %v3352
        %v3578 = vsub.f32 %v2934, %v3352
        %v3579 = vsub.f32 %v2939, %v3352
        %v3580 = vsub.f32 %v2942, %v3352
        %v3581 = vsub.f32 %v2947, %v3352
        %v3582 = vsub.f32 %v2950, %v3352
        %v3583 = vsub.f32 %v2955, %v3352
        %v3584 = vsub.f32 %v2958, %v3352
        %v3585 = vsub.f32 %v2963, %v3352
        %v3586 = vsub.f32 %v2966, %v3352
        %v3587 = vsub.f32 %v2971, %v3352
        %v3588 = vsub.f32 %v2974, %v3352
        %v3589 = vsub.f32 %v2979, %v3352
        %v3590 = vsub.f32 %v2982, %v3352
        %v3591 = vsub.f32 %v2987, %v3352
        %v3592 = vsub.f32 %v2990, %v3352
        %v3593 = vsub.f32 %v2995, %v3352
        %v3594 = vsub.f32 %v2998, %v3352
        %v3595 = vsub.f32 %v3003, %v3352
        %v3596 = vsub.f32 %v3006, %v3352
        %v3597 = vsub.f32 %v3011, %v3352
        %v3598 = vsub.f32 %v3014, %v3352
        %v3599 = vsub.f32 %v3019, %v3352
        %v3600 = vsub.f32 %v3022, %v3352
        %v3601 = vsub.f32 %v3027, %v3352
        %v3602 = vsub.f32 %v3030, %v3352
        %v3603 = vsub.f32 %v3035, %v3352
        %v3604 = vsub.f32 %v3038, %v3352
        %v3605 = vsub.f32 %v3043, %v3352
        %v3606 = vsub.f32 %v3046, %v3352
        %v3607 = vsub.f32 %v3051, %v3352
        %v3608 = vsub.f32 %v3054, %v3352
        %v3609 = vmul.f32 %v3353, 1.442695
        %v3610 = vpow.pop %v3609
        %v3611 = vmul.f32 %v3354, 1.442695
        %v3612 = vpow.pop %v3611
        %v3613 = vmul.f32 %v3355, 1.442695
        %v3614 = vpow.pop %v3613
        %v3615 = vmul.f32 %v3356, 1.442695
        %v3616 = vpow.pop %v3615
        %v3617 = vmul.f32 %v3357, 1.442695
        %v3618 = vpow.pop %v3617
        %v3619 = vmul.f32 %v3358, 1.442695
        %v3620 = vpow.pop %v3619
        %v3621 = vmul.f32 %v3359, 1.442695
        %v3622 = vpow.pop %v3621
        %v3623 = vmul.f32 %v3360, 1.442695
        %v3624 = vpow.pop %v3623
        %v3625 = vmul.f32 %v3361, 1.442695
        %v3626 = vpow.pop %v3625
        %v3627 = vmul.f32 %v3362, 1.442695
        %v3628 = vpow.pop %v3627
        %v3629 = vmul.f32 %v3363, 1.442695
        %v3630 = vpow.pop %v3629
        %v3631 = vmul.f32 %v3364, 1.442695
        %v3632 = vpow.pop %v3631
        %v3633 = vmul.f32 %v3365, 1.442695
        %v3634 = vpow.pop %v3633
        %v3635 = vmul.f32 %v3366, 1.442695
        %v3636 = vpow.pop %v3635
        %v3637 = vmul.f32 %v3367, 1.442695
        %v3638 = vpow.pop %v3637
        %v3639 = vmul.f32 %v3368, 1.442695
        %v3640 = vpow.pop %v3639
        %v3641 = vmul.f32 %v3369, 1.442695
        %v3642 = vpow.pop %v3641
        %v3643 = vmul.f32 %v3370, 1.442695
        %v3644 = vpow.pop %v3643
        %v3645 = vmul.f32 %v3371, 1.442695
        %v3646 = vpow.pop %v3645
        %v3647 = vmul.f32 %v3372, 1.442695
        %v3648 = vpow.pop %v3647
        %v3649 = vmul.f32 %v3373, 1.442695
        %v3650 = vpow.pop %v3649
        %v3651 = vmul.f32 %v3374, 1.442695
        %v3652 = vpow.pop %v3651
        %v3653 = vmul.f32 %v3375, 1.442695
        %v3654 = vpow.pop %v3653
        %v3655 = vmul.f32 %v3376, 1.442695
        %v3656 = vpow.pop %v3655
        %v3657 = vmul.f32 %v3377, 1.442695
        %v3658 = vpow.pop %v3657
        %v3659 = vmul.f32 %v3378, 1.442695
        %v3660 = vpow.pop %v3659
        %v3661 = vmul.f32 %v3379, 1.442695
        %v3662 = vpow.pop %v3661
        %v3663 = vmul.f32 %v3380, 1.442695
        %v3664 = vpow.pop %v3663
        %v3665 = vmul.f32 %v3381, 1.442695
        %v3666 = vpow.pop %v3665
        %v3667 = vmul.f32 %v3382, 1.442695
        %v3668 = vpow.pop %v3667
        %v3669 = vmul.f32 %v3383, 1.442695
        %v3670 = vpow.pop %v3669
        %v3671 = vmul.f32 %v3384, 1.442695
        %v3672 = vpow.pop %v3671
        %v3673 = vmul.f32 %v3385, 1.442695
        %v3674 = vpow.pop %v3673
        %v3675 = vmul.f32 %v3386, 1.442695
        %v3676 = vpow.pop %v3675
        %v3677 = vmul.f32 %v3387, 1.442695
        %v3678 = vpow.pop %v3677
        %v3679 = vmul.f32 %v3388, 1.442695
        %v3680 = vpow.pop %v3679
        %v3681 = vmul.f32 %v3389, 1.442695
        %v3682 = vpow.pop %v3681
        %v3683 = vmul.f32 %v3390, 1.442695
        %v3684 = vpow.pop %v3683
        %v3685 = vmul.f32 %v3391, 1.442695
        %v3686 = vpow.pop %v3685
        %v3687 = vmul.f32 %v3392, 1.442695
        %v3688 = vpow.pop %v3687
        %v3689 = vmul.f32 %v3393, 1.442695
        %v3690 = vpow.pop %v3689
        %v3691 = vmul.f32 %v3394, 1.442695
        %v3692 = vpow.pop %v3691
        %v3693 = vmul.f32 %v3395, 1.442695
        %v3694 = vpow.pop %v3693
        %v3695 = vmul.f32 %v3396, 1.442695
        %v3696 = vpow.pop %v3695
        %v3697 = vmul.f32 %v3397, 1.442695
        %v3698 = vpow.pop %v3697
        %v3699 = vmul.f32 %v3398, 1.442695
        %v3700 = vpow.pop %v3699
        %v3701 = vmul.f32 %v3399, 1.442695
        %v3702 = vpow.pop %v3701
        %v3703 = vmul.f32 %v3400, 1.442695
        %v3704 = vpow.pop %v3703
        %v3705 = vmul.f32 %v3401, 1.442695
        %v3706 = vpow.pop %v3705
        %v3707 = vmul.f32 %v3402, 1.442695
        %v3708 = vpow.pop %v3707
        %v3709 = vmul.f32 %v3403, 1.442695
        %v3710 = vpow.pop %v3709
        %v3711 = vmul.f32 %v3404, 1.442695
        %v3712 = vpow.pop %v3711
        %v3713 = vmul.f32 %v3405, 1.442695
        %v3714 = vpow.pop %v3713
        %v3715 = vmul.f32 %v3406, 1.442695
        %v3716 = vpow.pop %v3715
        %v3717 = vmul.f32 %v3407, 1.442695
        %v3718 = vpow.pop %v3717
        %v3719 = vmul.f32 %v3408, 1.442695
        %v3720 = vpow.pop %v3719
        %v3721 = vmul.f32 %v3409, 1.442695
        %v3722 = vpow.pop %v3721
        %v3723 = vmul.f32 %v3410, 1.442695
        %v3724 = vpow.pop %v3723
        %v3725 = vmul.f32 %v3411, 1.442695
        %v3726 = vpow.pop %v3725
        %v3727 = vmul.f32 %v3412, 1.442695
        %v3728 = vpow.pop %v3727
        %v3729 = vmul.f32 %v3413, 1.442695
        %v3730 = vpow.pop %v3729
        %v3731 = vmul.f32 %v3414, 1.442695
        %v3732 = vpow.pop %v3731
        %v3733 = vmul.f32 %v3415, 1.442695
        %v3734 = vpow.pop %v3733
        %v3735 = vmul.f32 %v3416, 1.442695
        %v3736 = vpow.pop %v3735
        %v3737 = vmul.f32 %v3417, 1.442695
        %v3738 = vpow.pop %v3737
        %v3739 = vmul.f32 %v3418, 1.442695
        %v3740 = vpow.pop %v3739
        %v3741 = vmul.f32 %v3419, 1.442695
        %v3742 = vpow.pop %v3741
        %v3743 = vmul.f32 %v3420, 1.442695
        %v3744 = vpow.pop %v3743
        %v3745 = vmul.f32 %v3421, 1.442695
        %v3746 = vpow.pop %v3745
        %v3747 = vmul.f32 %v3422, 1.442695
        %v3748 = vpow.pop %v3747
        %v3749 = vmul.f32 %v3423, 1.442695
        %v3750 = vpow.pop %v3749
        %v3751 = vmul.f32 %v3424, 1.442695
        %v3752 = vpow.pop %v3751
        %v3753 = vmul.f32 %v3425, 1.442695
        %v3754 = vpow.pop %v3753
        %v3755 = vmul.f32 %v3426, 1.442695
        %v3756 = vpow.pop %v3755
        %v3757 = vmul.f32 %v3427, 1.442695
        %v3758 = vpow.pop %v3757
        %v3759 = vmul.f32 %v3428, 1.442695
        %v3760 = vpow.pop %v3759
        %v3761 = vmul.f32 %v3429, 1.442695
        %v3762 = vpow.pop %v3761
        %v3763 = vmul.f32 %v3430, 1.442695
        %v3764 = vpow.pop %v3763
        %v3765 = vmul.f32 %v3431, 1.442695
        %v3766 = vpow.pop %v3765
        %v3767 = vmul.f32 %v3432, 1.442695
        %v3768 = vpow.pop %v3767
        %v3769 = vmul.f32 %v3433, 1.442695
        %v3770 = vpow.pop %v3769
        %v3771 = vmul.f32 %v3434, 1.442695
        %v3772 = vpow.pop %v3771
        %v3773 = vmul.f32 %v3435, 1.442695
        %v3774 = vpow.pop %v3773
        %v3775 = vmul.f32 %v3436, 1.442695
        %v3776 = vpow.pop %v3775
        %v3777 = vmul.f32 %v3437, 1.442695
        %v3778 = vpow.pop %v3777
        %v3779 = vmul.f32 %v3438, 1.442695
        %v3780 = vpow.pop %v3779
        %v3781 = vmul.f32 %v3439, 1.442695
        %v3782 = vpow.pop %v3781
        %v3783 = vmul.f32 %v3440, 1.442695
        %v3784 = vpow.pop %v3783
        %v3785 = vmul.f32 %v3441, 1.442695
        %v3786 = vpow.pop %v3785
        %v3787 = vmul.f32 %v3442, 1.442695
        %v3788 = vpow.pop %v3787
        %v3789 = vmul.f32 %v3443, 1.442695
        %v3790 = vpow.pop %v3789
        %v3791 = vmul.f32 %v3444, 1.442695
        %v3792 = vpow.pop %v3791
        %v3793 = vmul.f32 %v3445, 1.442695
        %v3794 = vpow.pop %v3793
        %v3795 = vmul.f32 %v3446, 1.442695
        %v3796 = vpow.pop %v3795
        %v3797 = vmul.f32 %v3447, 1.442695
        %v3798 = vpow.pop %v3797
        %v3799 = vmul.f32 %v3448, 1.442695
        %v3800 = vpow.pop %v3799
        %v3801 = vmul.f32 %v3449, 1.442695
        %v3802 = vpow.pop %v3801
        %v3803 = vmul.f32 %v3450, 1.442695
        %v3804 = vpow.pop %v3803
        %v3805 = vmul.f32 %v3451, 1.442695
        %v3806 = vpow.pop %v3805
        %v3807 = vmul.f32 %v3452, 1.442695
        %v3808 = vpow.pop %v3807
        %v3809 = vmul.f32 %v3453, 1.442695
        %v3810 = vpow.pop %v3809
        %v3811 = vmul.f32 %v3454, 1.442695
        %v3812 = vpow.pop %v3811
        %v3813 = vmul.f32 %v3455, 1.442695
        %v3814 = vpow.pop %v3813
        %v3815 = vmul.f32 %v3456, 1.442695
        %v3816 = vpow.pop %v3815
        %v3817 = vmul.f32 %v3457, 1.442695
        %v3818 = vpow.pop %v3817
        %v3819 = vmul.f32 %v3458, 1.442695
        %v3820 = vpow.pop %v3819
        %v3821 = vmul.f32 %v3459, 1.442695
        %v3822 = vpow.pop %v3821
        %v3823 = vmul.f32 %v3460, 1.442695
        %v3824 = vpow.pop %v3823
        %v3825 = vmul.f32 %v3461, 1.442695
        %v3826 = vpow.pop %v3825
        %v3827 = vmul.f32 %v3462, 1.442695
        %v3828 = vpow.pop %v3827
        %v3829 = vmul.f32 %v3463, 1.442695
        %v3830 = vpow.pop %v3829
        %v3831 = vmul.f32 %v3464, 1.442695
        %v3832 = vpow.pop %v3831
        %v3833 = vmul.f32 %v3465, 1.442695
        %v3834 = vpow.pop %v3833
        %v3835 = vmul.f32 %v3466, 1.442695
        %v3836 = vpow.pop %v3835
        %v3837 = vmul.f32 %v3467, 1.442695
        %v3838 = vpow.pop %v3837
        %v3839 = vmul.f32 %v3468, 1.442695
        %v3840 = vpow.pop %v3839
        %v3841 = vmul.f32 %v3469, 1.442695
        %v3842 = vpow.pop %v3841
        %v3843 = vmul.f32 %v3470, 1.442695
        %v3844 = vpow.pop %v3843
        %v3845 = vmul.f32 %v3471, 1.442695
        %v3846 = vpow.pop %v3845
        %v3847 = vmul.f32 %v3472, 1.442695
        %v3848 = vpow.pop %v3847
        %v3849 = vmul.f32 %v3473, 1.442695
        %v3850 = vpow.pop %v3849
        %v3851 = vmul.f32 %v3474, 1.442695
        %v3852 = vpow.pop %v3851
        %v3853 = vmul.f32 %v3475, 1.442695
        %v3854 = vpow.pop %v3853
        %v3855 = vmul.f32 %v3476, 1.442695
        %v3856 = vpow.pop %v3855
        %v3857 = vmul.f32 %v3477, 1.442695
        %v3858 = vpow.pop %v3857
        %v3859 = vmul.f32 %v3478, 1.442695
        %v3860 = vpow.pop %v3859
        %v3861 = vmul.f32 %v3479, 1.442695
        %v3862 = vpow.pop %v3861
        %v3863 = vmul.f32 %v3480, 1.442695
        %v3864 = vpow.pop %v3863
        %v3865 = vmul.f32 %v3481, 1.442695
        %v3866 = vpow.pop %v3865
        %v3867 = vmul.f32 %v3482, 1.442695
        %v3868 = vpow.pop %v3867
        %v3869 = vmul.f32 %v3483, 1.442695
        %v3870 = vpow.pop %v3869
        %v3871 = vmul.f32 %v3484, 1.442695
        %v3872 = vpow.pop %v3871
        %v3873 = vmul.f32 %v3485, 1.442695
        %v3874 = vpow.pop %v3873
        %v3875 = vmul.f32 %v3486, 1.442695
        %v3876 = vpow.pop %v3875
        %v3877 = vmul.f32 %v3487, 1.442695
        %v3878 = vpow.pop %v3877
        %v3879 = vmul.f32 %v3488, 1.442695
        %v3880 = vpow.pop %v3879
        %v3881 = vmul.f32 %v3489, 1.442695
        %v3882 = vpow.pop %v3881
        %v3883 = vmul.f32 %v3490, 1.442695
        %v3884 = vpow.pop %v3883
        %v3885 = vmul.f32 %v3491, 1.442695
        %v3886 = vpow.pop %v3885
        %v3887 = vmul.f32 %v3492, 1.442695
        %v3888 = vpow.pop %v3887
        %v3889 = vmul.f32 %v3493, 1.442695
        %v3890 = vpow.pop %v3889
        %v3891 = vmul.f32 %v3494, 1.442695
        %v3892 = vpow.pop %v3891
        %v3893 = vmul.f32 %v3495, 1.442695
        %v3894 = vpow.pop %v3893
        %v3895 = vmul.f32 %v3496, 1.442695
        %v3896 = vpow.pop %v3895
        %v3897 = vmul.f32 %v3497, 1.442695
        %v3898 = vpow.pop %v3897
        %v3899 = vmul.f32 %v3498, 1.442695
        %v3900 = vpow.pop %v3899
        %v3901 = vmul.f32 %v3499, 1.442695
        %v3902 = vpow.pop %v3901
        %v3903 = vmul.f32 %v3500, 1.442695
        %v3904 = vpow.pop %v3903
        %v3905 = vmul.f32 %v3501, 1.442695
        %v3906 = vpow.pop %v3905
        %v3907 = vmul.f32 %v3502, 1.442695
        %v3908 = vpow.pop %v3907
        %v3909 = vmul.f32 %v3503, 1.442695
        %v3910 = vpow.pop %v3909
        %v3911 = vmul.f32 %v3504, 1.442695
        %v3912 = vpow.pop %v3911
        %v3913 = vmul.f32 %v3505, 1.442695
        %v3914 = vpow.pop %v3913
        %v3915 = vmul.f32 %v3506, 1.442695
        %v3916 = vpow.pop %v3915
        %v3917 = vmul.f32 %v3507, 1.442695
        %v3918 = vpow.pop %v3917
        %v3919 = vmul.f32 %v3508, 1.442695
        %v3920 = vpow.pop %v3919
        %v3921 = vmul.f32 %v3509, 1.442695
        %v3922 = vpow.pop %v3921
        %v3923 = vmul.f32 %v3510, 1.442695
        %v3924 = vpow.pop %v3923
        %v3925 = vmul.f32 %v3511, 1.442695
        %v3926 = vpow.pop %v3925
        %v3927 = vmul.f32 %v3512, 1.442695
        %v3928 = vpow.pop %v3927
        %v3929 = vmul.f32 %v3513, 1.442695
        %v3930 = vpow.pop %v3929
        %v3931 = vmul.f32 %v3514, 1.442695
        %v3932 = vpow.pop %v3931
        %v3933 = vmul.f32 %v3515, 1.442695
        %v3934 = vpow.pop %v3933
        %v3935 = vmul.f32 %v3516, 1.442695
        %v3936 = vpow.pop %v3935
        %v3937 = vmul.f32 %v3517, 1.442695
        %v3938 = vpow.pop %v3937
        %v3939 = vmul.f32 %v3518, 1.442695
        %v3940 = vpow.pop %v3939
        %v3941 = vmul.f32 %v3519, 1.442695
        %v3942 = vpow.pop %v3941
        %v3943 = vmul.f32 %v3520, 1.442695
        %v3944 = vpow.pop %v3943
        %v3945 = vmul.f32 %v3521, 1.442695
        %v3946 = vpow.pop %v3945
        %v3947 = vmul.f32 %v3522, 1.442695
        %v3948 = vpow.pop %v3947
        %v3949 = vmul.f32 %v3523, 1.442695
        %v3950 = vpow.pop %v3949
        %v3951 = vmul.f32 %v3524, 1.442695
        %v3952 = vpow.pop %v3951
        %v3953 = vmul.f32 %v3525, 1.442695
        %v3954 = vpow.pop %v3953
        %v3955 = vmul.f32 %v3526, 1.442695
        %v3956 = vpow.pop %v3955
        %v3957 = vmul.f32 %v3527, 1.442695
        %v3958 = vpow.pop %v3957
        %v3959 = vmul.f32 %v3528, 1.442695
        %v3960 = vpow.pop %v3959
        %v3961 = vmul.f32 %v3529, 1.442695
        %v3962 = vpow.pop %v3961
        %v3963 = vmul.f32 %v3530, 1.442695
        %v3964 = vpow.pop %v3963
        %v3965 = vmul.f32 %v3531, 1.442695
        %v3966 = vpow.pop %v3965
        %v3967 = vmul.f32 %v3532, 1.442695
        %v3968 = vpow.pop %v3967
        %v3969 = vmul.f32 %v3533, 1.442695
        %v3970 = vpow.pop %v3969
        %v3971 = vmul.f32 %v3534, 1.442695
        %v3972 = vpow.pop %v3971
        %v3973 = vmul.f32 %v3535, 1.442695
        %v3974 = vpow.pop %v3973
        %v3975 = vmul.f32 %v3536, 1.442695
        %v3976 = vpow.pop %v3975
        %v3977 = vmul.f32 %v3537, 1.442695
        %v3978 = vpow.pop %v3977
        %v3979 = vmul.f32 %v3538, 1.442695
        %v3980 = vpow.pop %v3979
        %v3981 = vmul.f32 %v3539, 1.442695
        %v3982 = vpow.pop %v3981
        %v3983 = vmul.f32 %v3540, 1.442695
        %v3984 = vpow.pop %v3983
        %v3985 = vmul.f32 %v3541, 1.442695
        %v3986 = vpow.pop %v3985
        %v3987 = vmul.f32 %v3542, 1.442695
        %v3988 = vpow.pop %v3987
        %v3989 = vmul.f32 %v3543, 1.442695
        %v3990 = vpow.pop %v3989
        %v3991 = vmul.f32 %v3544, 1.442695
        %v3992 = vpow.pop %v3991
        %v3993 = vmul.f32 %v3545, 1.442695
        %v3994 = vpow.pop %v3993
        %v3995 = vmul.f32 %v3546, 1.442695
        %v3996 = vpow.pop %v3995
        %v3997 = vmul.f32 %v3547, 1.442695
        %v3998 = vpow.pop %v3997
        %v3999 = vmul.f32 %v3548, 1.442695
        %v4000 = vpow.pop %v3999
        %v4001 = vmul.f32 %v3549, 1.442695
        %v4002 = vpow.pop %v4001
        %v4003 = vmul.f32 %v3550, 1.442695
        %v4004 = vpow.pop %v4003
        %v4005 = vmul.f32 %v3551, 1.442695
        %v4006 = vpow.pop %v4005
        %v4007 = vmul.f32 %v3552, 1.442695
        %v4008 = vpow.pop %v4007
        %v4009 = vmul.f32 %v3553, 1.442695
        %v4010 = vpow.pop %v4009
        %v4011 = vmul.f32 %v3554, 1.442695
        %v4012 = vpow.pop %v4011
        %v4013 = vmul.f32 %v3555, 1.442695
        %v4014 = vpow.pop %v4013
        %v4015 = vmul.f32 %v3556, 1.442695
        %v4016 = vpow.pop %v4015
        %v4017 = vmul.f32 %v3557, 1.442695
        %v4018 = vpow.pop %v4017
        %v4019 = vmul.f32 %v3558, 1.442695
        %v4020 = vpow.pop %v4019
        %v4021 = vmul.f32 %v3559, 1.442695
        %v4022 = vpow.pop %v4021
        %v4023 = vmul.f32 %v3560, 1.442695
        %v4024 = vpow.pop %v4023
        %v4025 = vmul.f32 %v3561, 1.442695
        %v4026 = vpow.pop %v4025
        %v4027 = vmul.f32 %v3562, 1.442695
        %v4028 = vpow.pop %v4027
        %v4029 = vmul.f32 %v3563, 1.442695
        %v4030 = vpow.pop %v4029
        %v4031 = vmul.f32 %v3564, 1.442695
        %v4032 = vpow.pop %v4031
        %v4033 = vmul.f32 %v3565, 1.442695
        %v4034 = vpow.pop %v4033
        %v4035 = vmul.f32 %v3566, 1.442695
        %v4036 = vpow.pop %v4035
        %v4037 = vmul.f32 %v3567, 1.442695
        %v4038 = vpow.pop %v4037
        %v4039 = vmul.f32 %v3568, 1.442695
        %v4040 = vpow.pop %v4039
        %v4041 = vmul.f32 %v3569, 1.442695
        %v4042 = vpow.pop %v4041
        %v4043 = vmul.f32 %v3570, 1.442695
        %v4044 = vpow.pop %v4043
        %v4045 = vmul.f32 %v3571, 1.442695
        %v4046 = vpow.pop %v4045
        %v4047 = vmul.f32 %v3572, 1.442695
        %v4048 = vpow.pop %v4047
        %v4049 = vmul.f32 %v3573, 1.442695
        %v4050 = vpow.pop %v4049
        %v4051 = vmul.f32 %v3574, 1.442695
        %v4052 = vpow.pop %v4051
        %v4053 = vmul.f32 %v3575, 1.442695
        %v4054 = vpow.pop %v4053
        %v4055 = vmul.f32 %v3576, 1.442695
        %v4056 = vpow.pop %v4055
        %v4057 = vmul.f32 %v3577, 1.442695
        %v4058 = vpow.pop %v4057
        %v4059 = vmul.f32 %v3578, 1.442695
        %v4060 = vpow.pop %v4059
        %v4061 = vmul.f32 %v3579, 1.442695
        %v4062 = vpow.pop %v4061
        %v4063 = vmul.f32 %v3580, 1.442695
        %v4064 = vpow.pop %v4063
        %v4065 = vmul.f32 %v3581, 1.442695
        %v4066 = vpow.pop %v4065
        %v4067 = vmul.f32 %v3582, 1.442695
        %v4068 = vpow.pop %v4067
        %v4069 = vmul.f32 %v3583, 1.442695
        %v4070 = vpow.pop %v4069
        %v4071 = vmul.f32 %v3584, 1.442695
        %v4072 = vpow.pop %v4071
        %v4073 = vmul.f32 %v3585, 1.442695
        %v4074 = vpow.pop %v4073
        %v4075 = vmul.f32 %v3586, 1.442695
        %v4076 = vpow.pop %v4075
        %v4077 = vmul.f32 %v3587, 1.442695
        %v4078 = vpow.pop %v4077
        %v4079 = vmul.f32 %v3588, 1.442695
        %v4080 = vpow.pop %v4079
        %v4081 = vmul.f32 %v3589, 1.442695
        %v4082 = vpow.pop %v4081
        %v4083 = vmul.f32 %v3590, 1.442695
        %v4084 = vpow.pop %v4083
        %v4085 = vmul.f32 %v3591, 1.442695
        %v4086 = vpow.pop %v4085
        %v4087 = vmul.f32 %v3592, 1.442695
        %v4088 = vpow.pop %v4087
        %v4089 = vmul.f32 %v3593, 1.442695
        %v4090 = vpow.pop %v4089
        %v4091 = vmul.f32 %v3594, 1.442695
        %v4092 = vpow.pop %v4091
        %v4093 = vmul.f32 %v3595, 1.442695
        %v4094 = vpow.pop %v4093
        %v4095 = vmul.f32 %v3596, 1.442695
        %v4096 = vpow.pop %v4095
        %v4097 = vmul.f32 %v3597, 1.442695
        %v4098 = vpow.pop %v4097
        %v4099 = vmul.f32 %v3598, 1.442695
        %v4100 = vpow.pop %v4099
        %v4101 = vmul.f32 %v3599, 1.442695
        %v4102 = vpow.pop %v4101
        %v4103 = vmul.f32 %v3600, 1.442695
        %v4104 = vpow.pop %v4103
        %v4105 = vmul.f32 %v3601, 1.442695
        %v4106 = vpow.pop %v4105
        %v4107 = vmul.f32 %v3602, 1.442695
        %v4108 = vpow.pop %v4107
        %v4109 = vmul.f32 %v3603, 1.442695
        %v4110 = vpow.pop %v4109
        %v4111 = vmul.f32 %v3604, 1.442695
        %v4112 = vpow.pop %v4111
        %v4113 = vmul.f32 %v3605, 1.442695
        %v4114 = vpow.pop %v4113
        %v4115 = vmul.f32 %v3606, 1.442695
        %v4116 = vpow.pop %v4115
        %v4117 = vmul.f32 %v3607, 1.442695
        %v4118 = vpow.pop %v4117
        %v4119 = vmul.f32 %v3608, 1.442695
        %v4120 = vpow.pop %v4119
        %v4121 = vadd.f32 %v3610, %v3612
        %v4122 = vadd.f32 %v4121, %v3614
        %v4123 = vadd.f32 %v4122, %v3616
        %v4124 = vadd.f32 %v4123, %v3618
        %v4125 = vadd.f32 %v4124, %v3620
        %v4126 = vadd.f32 %v4125, %v3622
        %v4127 = vadd.f32 %v4126, %v3624
        %v4128 = vadd.f32 %v4127, %v3626
        %v4129 = vadd.f32 %v4128, %v3628
        %v4130 = vadd.f32 %v4129, %v3630
        %v4131 = vadd.f32 %v4130, %v3632
        %v4132 = vadd.f32 %v4131, %v3634
        %v4133 = vadd.f32 %v4132, %v3636
        %v4134 = vadd.f32 %v4133, %v3638
        %v4135 = vadd.f32 %v4134, %v3640
        %v4136 = vadd.f32 %v4135, %v3642
        %v4137 = vadd.f32 %v4136, %v3644
        %v4138 = vadd.f32 %v4137, %v3646
        %v4139 = vadd.f32 %v4138, %v3648
        %v4140 = vadd.f32 %v4139, %v3650
        %v4141 = vadd.f32 %v4140, %v3652
        %v4142 = vadd.f32 %v4141, %v3654
        %v4143 = vadd.f32 %v4142, %v3656
        %v4144 = vadd.f32 %v4143, %v3658
        %v4145 = vadd.f32 %v4144, %v3660
        %v4146 = vadd.f32 %v4145, %v3662
        %v4147 = vadd.f32 %v4146, %v3664
        %v4148 = vadd.f32 %v4147, %v3666
        %v4149 = vadd.f32 %v4148, %v3668
        %v4150 = vadd.f32 %v4149, %v3670
        %v4151 = vadd.f32 %v4150, %v3672
        %v4152 = vrot.slane %v4151, 4
        %v4153 = vadd.f32 %v4151, %v4152
        %v4154 = vrot.slane %v4153, 2
        %v4155 = vadd.f32 %v4153, %v4154
        %v4156 = vrot.slane %v4155, 1
        %v4157 = vadd.f32 %v4155, %v4156
        %v4158 = vadd.f32 %v3674, %v3676
        %v4159 = vadd.f32 %v4158, %v3678
        %v4160 = vadd.f32 %v4159, %v3680
        %v4161 = vadd.f32 %v4160, %v3682
        %v4162 = vadd.f32 %v4161, %v3684
        %v4163 = vadd.f32 %v4162, %v3686
        %v4164 = vadd.f32 %v4163, %v3688
        %v4165 = vadd.f32 %v4164, %v3690
        %v4166 = vadd.f32 %v4165, %v3692
        %v4167 = vadd.f32 %v4166, %v3694
        %v4168 = vadd.f32 %v4167, %v3696
        %v4169 = vadd.f32 %v4168, %v3698
        %v4170 = vadd.f32 %v4169, %v3700
        %v4171 = vadd.f32 %v4170, %v3702
        %v4172 = vadd.f32 %v4171, %v3704
        %v4173 = vadd.f32 %v4172, %v3706
        %v4174 = vadd.f32 %v4173, %v3708
        %v4175 = vadd.f32 %v4174, %v3710
        %v4176 = vadd.f32 %v4175, %v3712
        %v4177 = vadd.f32 %v4176, %v3714
        %v4178 = vadd.f32 %v4177, %v3716
        %v4179 = vadd.f32 %v4178, %v3718
        %v4180 = vadd.f32 %v4179, %v3720
        %v4181 = vadd.f32 %v4180, %v3722
        %v4182 = vadd.f32 %v4181, %v3724
        %v4183 = vadd.f32 %v4182, %v3726
        %v4184 = vadd.f32 %v4183, %v3728
        %v4185 = vadd.f32 %v4184, %v3730
        %v4186 = vadd.f32 %v4185, %v3732
        %v4187 = vadd.f32 %v4186, %v3734
        %v4188 = vadd.f32 %v4187, %v3736
        %v4189 = vrot.slane %v4188, 4
        %v4190 = vadd.f32 %v4188, %v4189
        %v4191 = vrot.slane %v4190, 2
        %v4192 = vadd.f32 %v4190, %v4191
        %v4193 = vrot.slane %v4192, 1
        %v4194 = vadd.f32 %v4192, %v4193
        %v4195 = vadd.f32 %v3738, %v3740
        %v4196 = vadd.f32 %v4195, %v3742
        %v4197 = vadd.f32 %v4196, %v3744
        %v4198 = vadd.f32 %v4197, %v3746
        %v4199 = vadd.f32 %v4198, %v3748
        %v4200 = vadd.f32 %v4199, %v3750
        %v4201 = vadd.f32 %v4200, %v3752
        %v4202 = vadd.f32 %v4201, %v3754
        %v4203 = vadd.f32 %v4202, %v3756
        %v4204 = vadd.f32 %v4203, %v3758
        %v4205 = vadd.f32 %v4204, %v3760
        %v4206 = vadd.f32 %v4205, %v3762
        %v4207 = vadd.f32 %v4206, %v3764
        %v4208 = vadd.f32 %v4207, %v3766
        %v4209 = vadd.f32 %v4208, %v3768
        %v4210 = vadd.f32 %v4209, %v3770
        %v4211 = vadd.f32 %v4210, %v3772
        %v4212 = vadd.f32 %v4211, %v3774
        %v4213 = vadd.f32 %v4212, %v3776
        %v4214 = vadd.f32 %v4213, %v3778
        %v4215 = vadd.f32 %v4214, %v3780
        %v4216 = vadd.f32 %v4215, %v3782
        %v4217 = vadd.f32 %v4216, %v3784
        %v4218 = vadd.f32 %v4217, %v3786
        %v4219 = vadd.f32 %v4218, %v3788
        %v4220 = vadd.f32 %v4219, %v3790
        %v4221 = vadd.f32 %v4220, %v3792
        %v4222 = vadd.f32 %v4221, %v3794
        %v4223 = vadd.f32 %v4222, %v3796
        %v4224 = vadd.f32 %v4223, %v3798
        %v4225 = vadd.f32 %v4224, %v3800
        %v4226 = vrot.slane %v4225, 4
        %v4227 = vadd.f32 %v4225, %v4226
        %v4228 = vrot.slane %v4227, 2
        %v4229 = vadd.f32 %v4227, %v4228
        %v4230 = vrot.slane %v4229, 1
        %v4231 = vadd.f32 %v4229, %v4230
        %v4232 = vadd.f32 %v3802, %v3804
        %v4233 = vadd.f32 %v4232, %v3806
        %v4234 = vadd.f32 %v4233, %v3808
        %v4235 = vadd.f32 %v4234, %v3810
        %v4236 = vadd.f32 %v4235, %v3812
        %v4237 = vadd.f32 %v4236, %v3814
        %v4238 = vadd.f32 %v4237, %v3816
        %v4239 = vadd.f32 %v4238, %v3818
        %v4240 = vadd.f32 %v4239, %v3820
        %v4241 = vadd.f32 %v4240, %v3822
        %v4242 = vadd.f32 %v4241, %v3824
        %v4243 = vadd.f32 %v4242, %v3826
        %v4244 = vadd.f32 %v4243, %v3828
        %v4245 = vadd.f32 %v4244, %v3830
        %v4246 = vadd.f32 %v4245, %v3832
        %v4247 = vadd.f32 %v4246, %v3834
        %v4248 = vadd.f32 %v4247, %v3836
        %v4249 = vadd.f32 %v4248, %v3838
        %v4250 = vadd.f32 %v4249, %v3840
        %v4251 = vadd.f32 %v4250, %v3842
        %v4252 = vadd.f32 %v4251, %v3844
        %v4253 = vadd.f32 %v4252, %v3846
        %v4254 = vadd.f32 %v4253, %v3848
        %v4255 = vadd.f32 %v4254, %v3850
        %v4256 = vadd.f32 %v4255, %v3852
        %v4257 = vadd.f32 %v4256, %v3854
        %v4258 = vadd.f32 %v4257, %v3856
        %v4259 = vadd.f32 %v4258, %v3858
        %v4260 = vadd.f32 %v4259, %v3860
        %v4261 = vadd.f32 %v4260, %v3862
        %v4262 = vadd.f32 %v4261, %v3864
        %v4263 = vrot.slane %v4262, 4
        %v4264 = vadd.f32 %v4262, %v4263
        %v4265 = vrot.slane %v4264, 2
        %v4266 = vadd.f32 %v4264, %v4265
        %v4267 = vrot.slane %v4266, 1
        %v4268 = vadd.f32 %v4266, %v4267
        %v4269 = vadd.f32 %v3866, %v3868
        %v4270 = vadd.f32 %v4269, %v3870
        %v4271 = vadd.f32 %v4270, %v3872
        %v4272 = vadd.f32 %v4271, %v3874
        %v4273 = vadd.f32 %v4272, %v3876
        %v4274 = vadd.f32 %v4273, %v3878
        %v4275 = vadd.f32 %v4274, %v3880
        %v4276 = vadd.f32 %v4275, %v3882
        %v4277 = vadd.f32 %v4276, %v3884
        %v4278 = vadd.f32 %v4277, %v3886
        %v4279 = vadd.f32 %v4278, %v3888
        %v4280 = vadd.f32 %v4279, %v3890
        %v4281 = vadd.f32 %v4280, %v3892
        %v4282 = vadd.f32 %v4281, %v3894
        %v4283 = vadd.f32 %v4282, %v3896
        %v4284 = vadd.f32 %v4283, %v3898
        %v4285 = vadd.f32 %v4284, %v3900
        %v4286 = vadd.f32 %v4285, %v3902
        %v4287 = vadd.f32 %v4286, %v3904
        %v4288 = vadd.f32 %v4287, %v3906
        %v4289 = vadd.f32 %v4288, %v3908
        %v4290 = vadd.f32 %v4289, %v3910
        %v4291 = vadd.f32 %v4290, %v3912
        %v4292 = vadd.f32 %v4291, %v3914
        %v4293 = vadd.f32 %v4292, %v3916
        %v4294 = vadd.f32 %v4293, %v3918
        %v4295 = vadd.f32 %v4294, %v3920
        %v4296 = vadd.f32 %v4295, %v3922
        %v4297 = vadd.f32 %v4296, %v3924
        %v4298 = vadd.f32 %v4297, %v3926
        %v4299 = vadd.f32 %v4298, %v3928
        %v4300 = vrot.slane %v4299, 4
        %v4301 = vadd.f32 %v4299, %v4300
        %v4302 = vrot.slane %v4301, 2
        %v4303 = vadd.f32 %v4301, %v4302
        %v4304 = vrot.slane %v4303, 1
        %v4305 = vadd.f32 %v4303, %v4304
        %v4306 = vadd.f32 %v3930, %v3932
        %v4307 = vadd.f32 %v4306, %v3934
        %v4308 = vadd.f32 %v4307, %v3936
        %v4309 = vadd.f32 %v4308, %v3938
        %v4310 = vadd.f32 %v4309, %v3940
        %v4311 = vadd.f32 %v4310, %v3942
        %v4312 = vadd.f32 %v4311, %v3944
        %v4313 = vadd.f32 %v4312, %v3946
        %v4314 = vadd.f32 %v4313, %v3948
        %v4315 = vadd.f32 %v4314, %v3950
        %v4316 = vadd.f32 %v4315, %v3952
        %v4317 = vadd.f32 %v4316, %v3954
        %v4318 = vadd.f32 %v4317, %v3956
        %v4319 = vadd.f32 %v4318, %v3958
        %v4320 = vadd.f32 %v4319, %v3960
        %v4321 = vadd.f32 %v4320, %v3962
        %v4322 = vadd.f32 %v4321, %v3964
        %v4323 = vadd.f32 %v4322, %v3966
        %v4324 = vadd.f32 %v4323, %v3968
        %v4325 = vadd.f32 %v4324, %v3970
        %v4326 = vadd.f32 %v4325, %v3972
        %v4327 = vadd.f32 %v4326, %v3974
        %v4328 = vadd.f32 %v4327, %v3976
        %v4329 = vadd.f32 %v4328, %v3978
        %v4330 = vadd.f32 %v4329, %v3980
        %v4331 = vadd.f32 %v4330, %v3982
        %v4332 = vadd.f32 %v4331, %v3984
        %v4333 = vadd.f32 %v4332, %v3986
        %v4334 = vadd.f32 %v4333, %v3988
        %v4335 = vadd.f32 %v4334, %v3990
        %v4336 = vadd.f32 %v4335, %v3992
        %v4337 = vrot.slane %v4336, 4
        %v4338 = vadd.f32 %v4336, %v4337
        %v4339 = vrot.slane %v4338, 2
        %v4340 = vadd.f32 %v4338, %v4339
        %v4341 = vrot.slane %v4340, 1
        %v4342 = vadd.f32 %v4340, %v4341
        %v4343 = vadd.f32 %v3994, %v3996
        %v4344 = vadd.f32 %v4343, %v3998
        %v4345 = vadd.f32 %v4344, %v4000
        %v4346 = vadd.f32 %v4345, %v4002
        %v4347 = vadd.f32 %v4346, %v4004
        %v4348 = vadd.f32 %v4347, %v4006
        %v4349 = vadd.f32 %v4348, %v4008
        %v4350 = vadd.f32 %v4349, %v4010
        %v4351 = vadd.f32 %v4350, %v4012
        %v4352 = vadd.f32 %v4351, %v4014
        %v4353 = vadd.f32 %v4352, %v4016
        %v4354 = vadd.f32 %v4353, %v4018
        %v4355 = vadd.f32 %v4354, %v4020
        %v4356 = vadd.f32 %v4355, %v4022
        %v4357 = vadd.f32 %v4356, %v4024
        %v4358 = vadd.f32 %v4357, %v4026
        %v4359 = vadd.f32 %v4358, %v4028
        %v4360 = vadd.f32 %v4359, %v4030
        %v4361 = vadd.f32 %v4360, %v4032
        %v4362 = vadd.f32 %v4361, %v4034
        %v4363 = vadd.f32 %v4362, %v4036
        %v4364 = vadd.f32 %v4363, %v4038
        %v4365 = vadd.f32 %v4364, %v4040
        %v4366 = vadd.f32 %v4365, %v4042
        %v4367 = vadd.f32 %v4366, %v4044
        %v4368 = vadd.f32 %v4367, %v4046
        %v4369 = vadd.f32 %v4368, %v4048
        %v4370 = vadd.f32 %v4369, %v4050
        %v4371 = vadd.f32 %v4370, %v4052
        %v4372 = vadd.f32 %v4371, %v4054
        %v4373 = vadd.f32 %v4372, %v4056
        %v4374 = vrot.slane %v4373, 4
        %v4375 = vadd.f32 %v4373, %v4374
        %v4376 = vrot.slane %v4375, 2
        %v4377 = vadd.f32 %v4375, %v4376
        %v4378 = vrot.slane %v4377, 1
        %v4379 = vadd.f32 %v4377, %v4378
        %v4380 = vadd.f32 %v4058, %v4060
        %v4381 = vadd.f32 %v4380, %v4062
        %v4382 = vadd.f32 %v4381, %v4064
        %v4383 = vadd.f32 %v4382, %v4066
        %v4384 = vadd.f32 %v4383, %v4068
        %v4385 = vadd.f32 %v4384, %v4070
        %v4386 = vadd.f32 %v4385, %v4072
        %v4387 = vadd.f32 %v4386, %v4074
        %v4388 = vadd.f32 %v4387, %v4076
        %v4389 = vadd.f32 %v4388, %v4078
        %v4390 = vadd.f32 %v4389, %v4080
        %v4391 = vadd.f32 %v4390, %v4082
        %v4392 = vadd.f32 %v4391, %v4084
        %v4393 = vadd.f32 %v4392, %v4086
        %v4394 = vadd.f32 %v4393, %v4088
        %v4395 = vadd.f32 %v4394, %v4090
        %v4396 = vadd.f32 %v4395, %v4092
        %v4397 = vadd.f32 %v4396, %v4094
        %v4398 = vadd.f32 %v4397, %v4096
        %v4399 = vadd.f32 %v4398, %v4098
        %v4400 = vadd.f32 %v4399, %v4100
        %v4401 = vadd.f32 %v4400, %v4102
        %v4402 = vadd.f32 %v4401, %v4104
        %v4403 = vadd.f32 %v4402, %v4106
        %v4404 = vadd.f32 %v4403, %v4108
        %v4405 = vadd.f32 %v4404, %v4110
        %v4406 = vadd.f32 %v4405, %v4112
        %v4407 = vadd.f32 %v4406, %v4114
        %v4408 = vadd.f32 %v4407, %v4116
        %v4409 = vadd.f32 %v4408, %v4118
        %v4410 = vadd.f32 %v4409, %v4120
        %v4411 = vrot.slane %v4410, 4
        %v4412 = vadd.f32 %v4410, %v4411
        %v4413 = vrot.slane %v4412, 2
        %v4414 = vadd.f32 %v4412, %v4413
        %v4415 = vrot.slane %v4414, 1
        %v4416 = vadd.f32 %v4414, %v4415
        %v4417 = vpack.c.bf16 %v3612, %v3610
        %v4418 = vpack.c.bf16 %v3616, %v3614
        %v4419 = vpack.c.bf16 %v3620, %v3618
        %v4420 = vpack.c.bf16 %v3624, %v3622
        %v4421 = vpack.c.bf16 %v3628, %v3626
        %v4422 = vpack.c.bf16 %v3632, %v3630
        %v4423 = vpack.c.bf16 %v3636, %v3634
        %v4424 = vpack.c.bf16 %v3640, %v3638
        %v4425 = vpack.c.bf16 %v3644, %v3642
        %v4426 = vpack.c.bf16 %v3648, %v3646
        %v4427 = vpack.c.bf16 %v3652, %v3650
        %v4428 = vpack.c.bf16 %v3656, %v3654
        %v4429 = vpack.c.bf16 %v3660, %v3658
        %v4430 = vpack.c.bf16 %v3664, %v3662
        %v4431 = vpack.c.bf16 %v3668, %v3666
        %v4432 = vpack.c.bf16 %v3672, %v3670
        %v4433 = vpack.c.bf16 %v3676, %v3674
        %v4434 = vpack.c.bf16 %v3680, %v3678
        %v4435 = vpack.c.bf16 %v3684, %v3682
        %v4436 = vpack.c.bf16 %v3688, %v3686
        %v4437 = vpack.c.bf16 %v3692, %v3690
        %v4438 = vpack.c.bf16 %v3696, %v3694
        %v4439 = vpack.c.bf16 %v3700, %v3698
        %v4440 = vpack.c.bf16 %v3704, %v3702
        %v4441 = vpack.c.bf16 %v3708, %v3706
        %v4442 = vpack.c.bf16 %v3712, %v3710
        %v4443 = vpack.c.bf16 %v3716, %v3714
        %v4444 = vpack.c.bf16 %v3720, %v3718
        %v4445 = vpack.c.bf16 %v3724, %v3722
        %v4446 = vpack.c.bf16 %v3728, %v3726
        %v4447 = vpack.c.bf16 %v3732, %v3730
        %v4448 = vpack.c.bf16 %v3736, %v3734
        %v4449 = vpack.c.bf16 %v3740, %v3738
        %v4450 = vpack.c.bf16 %v3744, %v3742
        %v4451 = vpack.c.bf16 %v3748, %v3746
        %v4452 = vpack.c.bf16 %v3752, %v3750
        %v4453 = vpack.c.bf16 %v3756, %v3754
        %v4454 = vpack.c.bf16 %v3760, %v3758
        %v4455 = vpack.c.bf16 %v3764, %v3762
        %v4456 = vpack.c.bf16 %v3768, %v3766
        %v4457 = vpack.c.bf16 %v3772, %v3770
        %v4458 = vpack.c.bf16 %v3776, %v3774
        %v4459 = vpack.c.bf16 %v3780, %v3778
        %v4460 = vpack.c.bf16 %v3784, %v3782
        %v4461 = vpack.c.bf16 %v3788, %v3786
        %v4462 = vpack.c.bf16 %v3792, %v3790
        %v4463 = vpack.c.bf16 %v3796, %v3794
        %v4464 = vpack.c.bf16 %v3800, %v3798
        %v4465 = vpack.c.bf16 %v3804, %v3802
        %v4466 = vpack.c.bf16 %v3808, %v3806
        %v4467 = vpack.c.bf16 %v3812, %v3810
        %v4468 = vpack.c.bf16 %v3816, %v3814
        %v4469 = vpack.c.bf16 %v3820, %v3818
        %v4470 = vpack.c.bf16 %v3824, %v3822
        %v4471 = vpack.c.bf16 %v3828, %v3826
        %v4472 = vpack.c.bf16 %v3832, %v3830
        %v4473 = vpack.c.bf16 %v3836, %v3834
        %v4474 = vpack.c.bf16 %v3840, %v3838
        %v4475 = vpack.c.bf16 %v3844, %v3842
        %v4476 = vpack.c.bf16 %v3848, %v3846
        %v4477 = vpack.c.bf16 %v3852, %v3850
        %v4478 = vpack.c.bf16 %v3856, %v3854
        %v4479 = vpack.c.bf16 %v3860, %v3858
        %v4480 = vpack.c.bf16 %v3864, %v3862
        %v4481 = vpack.c.bf16 %v3868, %v3866
        %v4482 = vpack.c.bf16 %v3872, %v3870
        %v4483 = vpack.c.bf16 %v3876, %v3874
        %v4484 = vpack.c.bf16 %v3880, %v3878
        %v4485 = vpack.c.bf16 %v3884, %v3882
        %v4486 = vpack.c.bf16 %v3888, %v3886
        %v4487 = vpack.c.bf16 %v3892, %v3890
        %v4488 = vpack.c.bf16 %v3896, %v3894
        %v4489 = vpack.c.bf16 %v3900, %v3898
        %v4490 = vpack.c.bf16 %v3904, %v3902
        %v4491 = vpack.c.bf16 %v3908, %v3906
        %v4492 = vpack.c.bf16 %v3912, %v3910
        %v4493 = vpack.c.bf16 %v3916, %v3914
        %v4494 = vpack.c.bf16 %v3920, %v3918
        %v4495 = vpack.c.bf16 %v3924, %v3922
        %v4496 = vpack.c.bf16 %v3928, %v3926
        %v4497 = vpack.c.bf16 %v3932, %v3930
        %v4498 = vpack.c.bf16 %v3936, %v3934
        %v4499 = vpack.c.bf16 %v3940, %v3938
        %v4500 = vpack.c.bf16 %v3944, %v3942
        %v4501 = vpack.c.bf16 %v3948, %v3946
        %v4502 = vpack.c.bf16 %v3952, %v3950
        %v4503 = vpack.c.bf16 %v3956, %v3954
        %v4504 = vpack.c.bf16 %v3960, %v3958
        %v4505 = vpack.c.bf16 %v3964, %v3962
        %v4506 = vpack.c.bf16 %v3968, %v3966
        %v4507 = vpack.c.bf16 %v3972, %v3970
        %v4508 = vpack.c.bf16 %v3976, %v3974
        %v4509 = vpack.c.bf16 %v3980, %v3978
        %v4510 = vpack.c.bf16 %v3984, %v3982
        %v4511 = vpack.c.bf16 %v3988, %v3986
        %v4512 = vpack.c.bf16 %v3992, %v3990
        %v4513 = vpack.c.bf16 %v3996, %v3994
        %v4514 = vpack.c.bf16 %v4000, %v3998
        %v4515 = vpack.c.bf16 %v4004, %v4002
        %v4516 = vpack.c.bf16 %v4008, %v4006
        %v4517 = vpack.c.bf16 %v4012, %v4010
        %v4518 = vpack.c.bf16 %v4016, %v4014
        %v4519 = vpack.c.bf16 %v4020, %v4018
        %v4520 = vpack.c.bf16 %v4024, %v4022
        %v4521 = vpack.c.bf16 %v4028, %v4026
        %v4522 = vpack.c.bf16 %v4032, %v4030
        %v4523 = vpack.c.bf16 %v4036, %v4034
        %v4524 = vpack.c.bf16 %v4040, %v4038
        %v4525 = vpack.c.bf16 %v4044, %v4042
        %v4526 = vpack.c.bf16 %v4048, %v4046
        %v4527 = vpack.c.bf16 %v4052, %v4050
        %v4528 = vpack.c.bf16 %v4056, %v4054
        %v4529 = vpack.c.bf16 %v4060, %v4058
        %v4530 = vpack.c.bf16 %v4064, %v4062
        %v4531 = vpack.c.bf16 %v4068, %v4066
        %v4532 = vpack.c.bf16 %v4072, %v4070
        %v4533 = vpack.c.bf16 %v4076, %v4074
        %v4534 = vpack.c.bf16 %v4080, %v4078
        %v4535 = vpack.c.bf16 %v4084, %v4082
        %v4536 = vpack.c.bf16 %v4088, %v4086
        %v4537 = vpack.c.bf16 %v4092, %v4090
        %v4538 = vpack.c.bf16 %v4096, %v4094
        %v4539 = vpack.c.bf16 %v4100, %v4098
        %v4540 = vpack.c.bf16 %v4104, %v4102
        %v4541 = vpack.c.bf16 %v4108, %v4106
        %v4542 = vpack.c.bf16 %v4112, %v4110
        %v4543 = vpack.c.bf16 %v4116, %v4114
        %v4544 = vpack.c.bf16 %v4120, %v4118
        %4545 = vmatprep.subr.bf16.mxu0 0
        %4546 = vmatpush1.bf16.msra.mxu0 %v4417
        %4547 = vmatprep.subr.bf16.mxu0 0
        %4548 = vmatpush1.bf16.msra.mxu0 %v4418
        %4549 = vmatprep.subr.bf16.mxu0 0
        %4550 = vmatpush1.bf16.msra.mxu0 %v4419
        %4551 = vmatprep.subr.bf16.mxu0 0
        %4552 = vmatpush1.bf16.msra.mxu0 %v4420
        %4553 = vmatprep.subr.bf16.mxu0 0
        %4554 = vmatpush1.bf16.msra.mxu0 %v4421
        %4555 = vmatprep.subr.bf16.mxu0 0
        %4556 = vmatpush1.bf16.msra.mxu0 %v4422
        %4557 = vmatprep.subr.bf16.mxu0 0
        %4558 = vmatpush1.bf16.msra.mxu0 %v4423
        %4559 = vmatprep.subr.bf16.mxu0 0
        %4560 = vmatpush1.bf16.msra.mxu0 %v4424
        %4561 = vmatprep.subr.bf16.mxu0 0
        %4562 = vmatpush1.bf16.msra.mxu0 %v4425
        %4563 = vmatprep.subr.bf16.mxu0 0
        %4564 = vmatpush1.bf16.msra.mxu0 %v4426
        %4565 = vmatprep.subr.bf16.mxu0 0
        %4566 = vmatpush1.bf16.msra.mxu0 %v4427
        %4567 = vmatprep.subr.bf16.mxu0 0
        %4568 = vmatpush1.bf16.msra.mxu0 %v4428
        %4569 = vmatprep.subr.bf16.mxu0 0
        %4570 = vmatpush1.bf16.msra.mxu0 %v4429
        %4571 = vmatprep.subr.bf16.mxu0 0
        %4572 = vmatpush1.bf16.msra.mxu0 %v4430
        %4573 = vmatprep.subr.bf16.mxu0 0
        %4574 = vmatpush1.bf16.msra.mxu0 %v4431
        %4575 = vmatprep.subr.bf16.mxu0 0
        %4576 = vmatpush1.bf16.msra.mxu0 %v4432
        %4577 = vmatprep.mubr.bf16.mxu0 %v1073
        %4578 = vmatmul.mubr.bf16.gmra.mrb[0].mxu0 %v1072
        %v4579 = vpop.f32.mrb[0].mxu0
        %v4580 = vadd.f32 0.0, %v4579
        %v4581 = vpop.f32.mrb[0].mxu0
        %v4582 = vpop.f32.mrb[0].mxu0
        %v4583 = vadd.f32 0.0, %v4582
        %v4584 = vpop.f32.mrb[0].mxu0
        %4585 = vdwg.mxu0
        %4586 = vmatprep.subr.bf16.mxu0 0
        %4587 = vmatpush1.bf16.msra.mxu0 %v4433
        %4588 = vmatprep.subr.bf16.mxu0 0
        %4589 = vmatpush1.bf16.msra.mxu0 %v4434
        %4590 = vmatprep.subr.bf16.mxu0 0
        %4591 = vmatpush1.bf16.msra.mxu0 %v4435
        %4592 = vmatprep.subr.bf16.mxu0 0
        %4593 = vmatpush1.bf16.msra.mxu0 %v4436
        %4594 = vmatprep.subr.bf16.mxu0 0
        %4595 = vmatpush1.bf16.msra.mxu0 %v4437
        %4596 = vmatprep.subr.bf16.mxu0 0
        %4597 = vmatpush1.bf16.msra.mxu0 %v4438
        %4598 = vmatprep.subr.bf16.mxu0 0
        %4599 = vmatpush1.bf16.msra.mxu0 %v4439
        %4600 = vmatprep.subr.bf16.mxu0 0
        %4601 = vmatpush1.bf16.msra.mxu0 %v4440
        %4602 = vmatprep.subr.bf16.mxu0 0
        %4603 = vmatpush1.bf16.msra.mxu0 %v4441
        %4604 = vmatprep.subr.bf16.mxu0 0
        %4605 = vmatpush1.bf16.msra.mxu0 %v4442
        %4606 = vmatprep.subr.bf16.mxu0 0
        %4607 = vmatpush1.bf16.msra.mxu0 %v4443
        %4608 = vmatprep.subr.bf16.mxu0 0
        %4609 = vmatpush1.bf16.msra.mxu0 %v4444
        %4610 = vmatprep.subr.bf16.mxu0 0
        %4611 = vmatpush1.bf16.msra.mxu0 %v4445
        %4612 = vmatprep.subr.bf16.mxu0 0
        %4613 = vmatpush1.bf16.msra.mxu0 %v4446
        %4614 = vmatprep.subr.bf16.mxu0 0
        %4615 = vmatpush1.bf16.msra.mxu0 %v4447
        %4616 = vmatprep.subr.bf16.mxu0 0
        %4617 = vmatpush1.bf16.msra.mxu0 %v4448
        %4618 = vmatprep.mubr.bf16.mxu0 %v1075
        %4619 = vmatmul.mubr.bf16.gmra.mrb[0].mxu0 %v1074
        %v4620 = vpop.f32.mrb[0].mxu0
        %v4621 = vadd.f32 0.0, %v4620
        %v4622 = vpop.f32.mrb[0].mxu0
        %v4623 = vpop.f32.mrb[0].mxu0
        %v4624 = vadd.f32 0.0, %v4623
        %v4625 = vpop.f32.mrb[0].mxu0
        %4626 = vdwg.mxu0
        %4627 = vmatprep.subr.bf16.mxu0 0
        %4628 = vmatpush1.bf16.msra.mxu0 %v4449
        %4629 = vmatprep.subr.bf16.mxu0 0
        %4630 = vmatpush1.bf16.msra.mxu0 %v4450
        %4631 = vmatprep.subr.bf16.mxu0 0
        %4632 = vmatpush1.bf16.msra.mxu0 %v4451
        %4633 = vmatprep.subr.bf16.mxu0 0
        %4634 = vmatpush1.bf16.msra.mxu0 %v4452
        %4635 = vmatprep.subr.bf16.mxu0 0
        %4636 = vmatpush1.bf16.msra.mxu0 %v4453
        %4637 = vmatprep.subr.bf16.mxu0 0
        %4638 = vmatpush1.bf16.msra.mxu0 %v4454
        %4639 = vmatprep.subr.bf16.mxu0 0
        %4640 = vmatpush1.bf16.msra.mxu0 %v4455
        %4641 = vmatprep.subr.bf16.mxu0 0
        %4642 = vmatpush1.bf16.msra.mxu0 %v4456
        %4643 = vmatprep.subr.bf16.mxu0 0
        %4644 = vmatpush1.bf16.msra.mxu0 %v4457
        %4645 = vmatprep.subr.bf16.mxu0 0
        %4646 = vmatpush1.bf16.msra.mxu0 %v4458
        %4647 = vmatprep.subr.bf16.mxu0 0
        %4648 = vmatpush1.bf16.msra.mxu0 %v4459
        %4649 = vmatprep.subr.bf16.mxu0 0
        %4650 = vmatpush1.bf16.msra.mxu0 %v4460
        %4651 = vmatprep.subr.bf16.mxu0 0
        %4652 = vmatpush1.bf16.msra.mxu0 %v4461
        %4653 = vmatprep.subr.bf16.mxu0 0
        %4654 = vmatpush1.bf16.msra.mxu0 %v4462
        %4655 = vmatprep.subr.bf16.mxu0 0
        %4656 = vmatpush1.bf16.msra.mxu0 %v4463
        %4657 = vmatprep.subr.bf16.mxu0 0
        %4658 = vmatpush1.bf16.msra.mxu0 %v4464
        %4659 = vmatprep.mubr.bf16.mxu0 %v1077
        %4660 = vmatmul.mubr.bf16.gmra.mrb[0].mxu0 %v1076
        %v4661 = vpop.f32.mrb[0].mxu0
        %v4662 = vadd.f32 0.0, %v4661
        %v4663 = vpop.f32.mrb[0].mxu0
        %v4664 = vpop.f32.mrb[0].mxu0
        %v4665 = vadd.f32 0.0, %v4664
        %v4666 = vpop.f32.mrb[0].mxu0
        %4667 = vdwg.mxu0
        %4668 = vmatprep.subr.bf16.mxu0 0
        %4669 = vmatpush1.bf16.msra.mxu0 %v4465
        %4670 = vmatprep.subr.bf16.mxu0 0
        %4671 = vmatpush1.bf16.msra.mxu0 %v4466
        %4672 = vmatprep.subr.bf16.mxu0 0
        %4673 = vmatpush1.bf16.msra.mxu0 %v4467
        %4674 = vmatprep.subr.bf16.mxu0 0
        %4675 = vmatpush1.bf16.msra.mxu0 %v4468
        %4676 = vmatprep.subr.bf16.mxu0 0
        %4677 = vmatpush1.bf16.msra.mxu0 %v4469
        %4678 = vmatprep.subr.bf16.mxu0 0
        %4679 = vmatpush1.bf16.msra.mxu0 %v4470
        %4680 = vmatprep.subr.bf16.mxu0 0
        %4681 = vmatpush1.bf16.msra.mxu0 %v4471
        %4682 = vmatprep.subr.bf16.mxu0 0
        %4683 = vmatpush1.bf16.msra.mxu0 %v4472
        %4684 = vmatprep.subr.bf16.mxu0 0
        %4685 = vmatpush1.bf16.msra.mxu0 %v4473
        %4686 = vmatprep.subr.bf16.mxu0 0
        %4687 = vmatpush1.bf16.msra.mxu0 %v4474
        %4688 = vmatprep.subr.bf16.mxu0 0
        %4689 = vmatpush1.bf16.msra.mxu0 %v4475
        %4690 = vmatprep.subr.bf16.mxu0 0
        %4691 = vmatpush1.bf16.msra.mxu0 %v4476
        %4692 = vmatprep.subr.bf16.mxu0 0
        %4693 = vmatpush1.bf16.msra.mxu0 %v4477
        %4694 = vmatprep.subr.bf16.mxu0 0
        %4695 = vmatpush1.bf16.msra.mxu0 %v4478
        %4696 = vmatprep.subr.bf16.mxu0 0
        %4697 = vmatpush1.bf16.msra.mxu0 %v4479
        %4698 = vmatprep.subr.bf16.mxu0 0
        %4699 = vmatpush1.bf16.msra.mxu0 %v4480
        %4700 = vmatprep.mubr.bf16.mxu0 %v1079
        %4701 = vmatmul.mubr.bf16.gmra.mrb[0].mxu0 %v1078
        %v4702 = vpop.f32.mrb[0].mxu0
        %v4703 = vadd.f32 0.0, %v4702
        %v4704 = vpop.f32.mrb[0].mxu0
        %v4705 = vpop.f32.mrb[0].mxu0
        %v4706 = vadd.f32 0.0, %v4705
        %v4707 = vpop.f32.mrb[0].mxu0
        %4708 = vdwg.mxu0
        %4709 = vmatprep.subr.bf16.mxu0 0
        %4710 = vmatpush1.bf16.msra.mxu0 %v4481
        %4711 = vmatprep.subr.bf16.mxu0 0
        %4712 = vmatpush1.bf16.msra.mxu0 %v4482
        %4713 = vmatprep.subr.bf16.mxu0 0
        %4714 = vmatpush1.bf16.msra.mxu0 %v4483
        %4715 = vmatprep.subr.bf16.mxu0 0
        %4716 = vmatpush1.bf16.msra.mxu0 %v4484
        %4717 = vmatprep.subr.bf16.mxu0 0
        %4718 = vmatpush1.bf16.msra.mxu0 %v4485
        %4719 = vmatprep.subr.bf16.mxu0 0
        %4720 = vmatpush1.bf16.msra.mxu0 %v4486
        %4721 = vmatprep.subr.bf16.mxu0 0
        %4722 = vmatpush1.bf16.msra.mxu0 %v4487
        %4723 = vmatprep.subr.bf16.mxu0 0
        %4724 = vmatpush1.bf16.msra.mxu0 %v4488
        %4725 = vmatprep.subr.bf16.mxu0 0
        %4726 = vmatpush1.bf16.msra.mxu0 %v4489
        %4727 = vmatprep.subr.bf16.mxu0 0
        %4728 = vmatpush1.bf16.msra.mxu0 %v4490
        %4729 = vmatprep.subr.bf16.mxu0 0
        %4730 = vmatpush1.bf16.msra.mxu0 %v4491
        %4731 = vmatprep.subr.bf16.mxu0 0
        %4732 = vmatpush1.bf16.msra.mxu0 %v4492
        %4733 = vmatprep.subr.bf16.mxu0 0
        %4734 = vmatpush1.bf16.msra.mxu0 %v4493
        %4735 = vmatprep.subr.bf16.mxu0 0
        %4736 = vmatpush1.bf16.msra.mxu0 %v4494
        %4737 = vmatprep.subr.bf16.mxu0 0
        %4738 = vmatpush1.bf16.msra.mxu0 %v4495
        %4739 = vmatprep.subr.bf16.mxu0 0
        %4740 = vmatpush1.bf16.msra.mxu0 %v4496
        %4741 = vmatprep.mubr.bf16.mxu0 %v1081
        %4742 = vmatmul.mubr.bf16.gmra.mrb[0].mxu0 %v1080
        %v4743 = vpop.f32.mrb[0].mxu0
        %v4744 = vadd.f32 0.0, %v4743
        %v4745 = vpop.f32.mrb[0].mxu0
        %v4746 = vpop.f32.mrb[0].mxu0
        %v4747 = vadd.f32 0.0, %v4746
        %v4748 = vpop.f32.mrb[0].mxu0
        %4749 = vdwg.mxu0
        %4750 = vmatprep.subr.bf16.mxu0 0
        %4751 = vmatpush1.bf16.msra.mxu0 %v4497
        %4752 = vmatprep.subr.bf16.mxu0 0
        %4753 = vmatpush1.bf16.msra.mxu0 %v4498
        %4754 = vmatprep.subr.bf16.mxu0 0
        %4755 = vmatpush1.bf16.msra.mxu0 %v4499
        %4756 = vmatprep.subr.bf16.mxu0 0
        %4757 = vmatpush1.bf16.msra.mxu0 %v4500
        %4758 = vmatprep.subr.bf16.mxu0 0
        %4759 = vmatpush1.bf16.msra.mxu0 %v4501
        %4760 = vmatprep.subr.bf16.mxu0 0
        %4761 = vmatpush1.bf16.msra.mxu0 %v4502
        %4762 = vmatprep.subr.bf16.mxu0 0
        %4763 = vmatpush1.bf16.msra.mxu0 %v4503
        %4764 = vmatprep.subr.bf16.mxu0 0
        %4765 = vmatpush1.bf16.msra.mxu0 %v4504
        %4766 = vmatprep.subr.bf16.mxu0 0
        %4767 = vmatpush1.bf16.msra.mxu0 %v4505
        %4768 = vmatprep.subr.bf16.mxu0 0
        %4769 = vmatpush1.bf16.msra.mxu0 %v4506
        %4770 = vmatprep.subr.bf16.mxu0 0
        %4771 = vmatpush1.bf16.msra.mxu0 %v4507
        %4772 = vmatprep.subr.bf16.mxu0 0
        %4773 = vmatpush1.bf16.msra.mxu0 %v4508
        %4774 = vmatprep.subr.bf16.mxu0 0
        %4775 = vmatpush1.bf16.msra.mxu0 %v4509
        %4776 = vmatprep.subr.bf16.mxu0 0
        %4777 = vmatpush1.bf16.msra.mxu0 %v4510
        %4778 = vmatprep.subr.bf16.mxu0 0
        %4779 = vmatpush1.bf16.msra.mxu0 %v4511
        %4780 = vmatprep.subr.bf16.mxu0 0
        %4781 = vmatpush1.bf16.msra.mxu0 %v4512
        %4782 = vmatprep.mubr.bf16.mxu0 %v1083
        %4783 = vmatmul.mubr.bf16.gmra.mrb[0].mxu0 %v1082
        %v4784 = vpop.f32.mrb[0].mxu0
        %v4785 = vadd.f32 0.0, %v4784
        %v4786 = vpop.f32.mrb[0].mxu0
        %v4787 = vpop.f32.mrb[0].mxu0
        %v4788 = vadd.f32 0.0, %v4787
        %v4789 = vpop.f32.mrb[0].mxu0
        %4790 = vdwg.mxu0
        %4791 = vmatprep.subr.bf16.mxu0 0
        %4792 = vmatpush1.bf16.msra.mxu0 %v4513
        %4793 = vmatprep.subr.bf16.mxu0 0
        %4794 = vmatpush1.bf16.msra.mxu0 %v4514
        %4795 = vmatprep.subr.bf16.mxu0 0
        %4796 = vmatpush1.bf16.msra.mxu0 %v4515
        %4797 = vmatprep.subr.bf16.mxu0 0
        %4798 = vmatpush1.bf16.msra.mxu0 %v4516
        %4799 = vmatprep.subr.bf16.mxu0 0
        %4800 = vmatpush1.bf16.msra.mxu0 %v4517
        %4801 = vmatprep.subr.bf16.mxu0 0
        %4802 = vmatpush1.bf16.msra.mxu0 %v4518
        %4803 = vmatprep.subr.bf16.mxu0 0
        %4804 = vmatpush1.bf16.msra.mxu0 %v4519
        %4805 = vmatprep.subr.bf16.mxu0 0
        %4806 = vmatpush1.bf16.msra.mxu0 %v4520
        %4807 = vmatprep.subr.bf16.mxu0 0
        %4808 = vmatpush1.bf16.msra.mxu0 %v4521
        %4809 = vmatprep.subr.bf16.mxu0 0
        %4810 = vmatpush1.bf16.msra.mxu0 %v4522
        %4811 = vmatprep.subr.bf16.mxu0 0
        %4812 = vmatpush1.bf16.msra.mxu0 %v4523
        %4813 = vmatprep.subr.bf16.mxu0 0
        %4814 = vmatpush1.bf16.msra.mxu0 %v4524
        %4815 = vmatprep.subr.bf16.mxu0 0
        %4816 = vmatpush1.bf16.msra.mxu0 %v4525
        %4817 = vmatprep.subr.bf16.mxu0 0
        %4818 = vmatpush1.bf16.msra.mxu0 %v4526
        %4819 = vmatprep.subr.bf16.mxu0 0
        %4820 = vmatpush1.bf16.msra.mxu0 %v4527
        %4821 = vmatprep.subr.bf16.mxu0 0
        %4822 = vmatpush1.bf16.msra.mxu0 %v4528
        %4823 = vmatprep.mubr.bf16.mxu0 %v1085
        %4824 = vmatmul.mubr.bf16.gmra.mrb[0].mxu0 %v1084
        %v4825 = vpop.f32.mrb[0].mxu0
        %v4826 = vadd.f32 0.0, %v4825
        %v4827 = vpop.f32.mrb[0].mxu0
        %v4828 = vpop.f32.mrb[0].mxu0
        %v4829 = vadd.f32 0.0, %v4828
        %v4830 = vpop.f32.mrb[0].mxu0
        %4831 = vdwg.mxu0
        %4832 = vmatprep.subr.bf16.mxu0 0
        %4833 = vmatpush1.bf16.msra.mxu0 %v4529
        %4834 = vmatprep.subr.bf16.mxu0 0
        %4835 = vmatpush1.bf16.msra.mxu0 %v4530
        %4836 = vmatprep.subr.bf16.mxu0 0
        %4837 = vmatpush1.bf16.msra.mxu0 %v4531
        %4838 = vmatprep.subr.bf16.mxu0 0
        %4839 = vmatpush1.bf16.msra.mxu0 %v4532
        %4840 = vmatprep.subr.bf16.mxu0 0
        %4841 = vmatpush1.bf16.msra.mxu0 %v4533
        %4842 = vmatprep.subr.bf16.mxu0 0
        %4843 = vmatpush1.bf16.msra.mxu0 %v4534
        %4844 = vmatprep.subr.bf16.mxu0 0
        %4845 = vmatpush1.bf16.msra.mxu0 %v4535
        %4846 = vmatprep.subr.bf16.mxu0 0
        %4847 = vmatpush1.bf16.msra.mxu0 %v4536
        %4848 = vmatprep.subr.bf16.mxu0 0
        %4849 = vmatpush1.bf16.msra.mxu0 %v4537
        %4850 = vmatprep.subr.bf16.mxu0 0
        %4851 = vmatpush1.bf16.msra.mxu0 %v4538
        %4852 = vmatprep.subr.bf16.mxu0 0
        %4853 = vmatpush1.bf16.msra.mxu0 %v4539
        %4854 = vmatprep.subr.bf16.mxu0 0
        %4855 = vmatpush1.bf16.msra.mxu0 %v4540
        %4856 = vmatprep.subr.bf16.mxu0 0
        %4857 = vmatpush1.bf16.msra.mxu0 %v4541
        %4858 = vmatprep.subr.bf16.mxu0 0
        %4859 = vmatpush1.bf16.msra.mxu0 %v4542
        %4860 = vmatprep.subr.bf16.mxu0 0
        %4861 = vmatpush1.bf16.msra.mxu0 %v4543
        %4862 = vmatprep.subr.bf16.mxu0 0
        %4863 = vmatpush1.bf16.msra.mxu0 %v4544
        %4864 = vmatprep.mubr.bf16.mxu0 %v1087
        %4865 = vmatmul.mubr.bf16.gmra.mrb[0].mxu0 %v1086
        %v4866 = vpop.f32.mrb[0].mxu0
        %v4867 = vadd.f32 0.0, %v4866
        %v4868 = vpop.f32.mrb[0].mxu0
        %v4869 = vpop.f32.mrb[0].mxu0
        %v4870 = vadd.f32 0.0, %v4869
        %v4871 = vpop.f32.mrb[0].mxu0
        %4872 = vdwg.mxu0
        %v4873 = vrcp.pop %v4157
        %v4874 = vrcp.pop %v4194
        %v4875 = vrcp.pop %v4231
        %v4876 = vrcp.pop %v4268
        %v4877 = vrcp.pop %v4305
        %v4878 = vrcp.pop %v4342
        %v4879 = vrcp.pop %v4379
        %v4880 = vrcp.pop %v4416
        %v4881 = vmul.f32 %v4580, %v4873
        %v4882 = vmul.f32 %v4583, %v4873
        %v4883 = vmul.f32 %v4621, %v4874
        %v4884 = vmul.f32 %v4624, %v4874
        %v4885 = vmul.f32 %v4662, %v4875
        %v4886 = vmul.f32 %v4665, %v4875
        %v4887 = vmul.f32 %v4703, %v4876
        %v4888 = vmul.f32 %v4706, %v4876
        %v4889 = vmul.f32 %v4744, %v4877
        %v4890 = vmul.f32 %v4747, %v4877
        %v4891 = vmul.f32 %v4785, %v4878
        %v4892 = vmul.f32 %v4788, %v4878
        %v4893 = vmul.f32 %v4826, %v4879
        %v4894 = vmul.f32 %v4829, %v4879
        %v4895 = vmul.f32 %v4867, %v4880
        %v4896 = vmul.f32 %v4870, %v4880
        %v4897 = vpack.c.bf16 %v4882, %v4881
        %v4898 = vpack.c.bf16 %v4884, %v4883
        %v4899 = vpack.c.bf16 %v4886, %v4885
        %v4900 = vpack.c.bf16 %v4888, %v4887
        %v4901 = vpack.c.bf16 %v4890, %v4889
        %v4902 = vpack.c.bf16 %v4892, %v4891
        %v4903 = vpack.c.bf16 %v4894, %v4893
        %v4904 = vpack.c.bf16 %v4896, %v4895
        %4906 = vset.pattern.permute.xlu0 0
        %4907 = vperm.xlu0 %4906, %v1112
        %v4908 = vpop.permute.xlu0 %4907
        %4911 = vset.pattern.permute.xlu0 0
        %4912 = vperm.xlu0 %4911, %v1113
        %v4913 = vpop.permute.xlu0 %4912
        %4916 = vset.pattern.permute.xlu0 0
        %4917 = vperm.xlu0 %4916, %v1114
        %v4918 = vpop.permute.xlu0 %4917
        %4921 = vset.pattern.permute.xlu0 0
        %4922 = vperm.xlu0 %4921, %v1115
        %v4923 = vpop.permute.xlu0 %4922
        %4926 = vset.pattern.permute.xlu0 0
        %4927 = vperm.xlu0 %4926, %v1116
        %v4928 = vpop.permute.xlu0 %4927
        %4931 = vset.pattern.permute.xlu0 0
        %4932 = vperm.xlu0 %4931, %v1117
        %v4933 = vpop.permute.xlu0 %4932
        %4936 = vset.pattern.permute.xlu0 0
        %4937 = vperm.xlu0 %4936, %v1118
        %v4938 = vpop.permute.xlu0 %4937
        %4941 = vset.pattern.permute.xlu0 0
        %4942 = vperm.xlu0 %4941, %v1119
        %v4943 = vpop.permute.xlu0 %4942
        %4946 = vset.pattern.permute.xlu0 0
        %4947 = vperm.xlu0 %4946, %v1120
        %v4948 = vpop.permute.xlu0 %4947
        %4951 = vset.pattern.permute.xlu0 0
        %4952 = vperm.xlu0 %4951, %v1121
        %v4953 = vpop.permute.xlu0 %4952
        %4956 = vset.pattern.permute.xlu0 0
        %4957 = vperm.xlu0 %4956, %v1122
        %v4958 = vpop.permute.xlu0 %4957
        %4961 = vset.pattern.permute.xlu0 0
        %4962 = vperm.xlu0 %4961, %v1123
        %v4963 = vpop.permute.xlu0 %4962
        %4966 = vset.pattern.permute.xlu0 0
        %4967 = vperm.xlu0 %4966, %v1124
        %v4968 = vpop.permute.xlu0 %4967
        %4971 = vset.pattern.permute.xlu0 0
        %4972 = vperm.xlu0 %4971, %v1125
        %v4973 = vpop.permute.xlu0 %4972
        %4976 = vset.pattern.permute.xlu0 0
        %4977 = vperm.xlu0 %4976, %v1126
        %v4978 = vpop.permute.xlu0 %4977
        %4981 = vset.pattern.permute.xlu0 0
        %4982 = vperm.xlu0 %4981, %v1127
        %v4983 = vpop.permute.xlu0 %4982
        %4985 = vmatprep.subr.bf16.mxu0 0
        %4986 = vmatpush1.bf16.msra.mxu0 %v4897
        %4987 = vmatprep.subr.bf16.mxu0 0
        %4988 = vmatpush1.bf16.msra.mxu0 %v4898
        %4989 = vmatprep.subr.bf16.mxu0 0
        %4990 = vmatpush1.bf16.msra.mxu0 %v4899
        %4991 = vmatprep.subr.bf16.mxu0 0
        %4992 = vmatpush1.bf16.msra.mxu0 %v4900
        %4993 = vmatprep.subr.bf16.mxu0 0
        %4994 = vmatpush1.bf16.msra.mxu0 %v4901
        %4995 = vmatprep.subr.bf16.mxu0 0
        %4996 = vmatpush1.bf16.msra.mxu0 %v4902
        %4997 = vmatprep.subr.bf16.mxu0 0
        %4998 = vmatpush1.bf16.msra.mxu0 %v4903
        %4999 = vmatprep.subr.bf16.mxu0 0
        %5000 = vmatpush1.bf16.msra.mxu0 %v4904
        %5001 = vmatprep.subr.bf16.mxu0 0
        %5002 = vmatpush1.bf16.msra.mxu0 0
        %5003 = vmatprep.subr.bf16.mxu0 0
        %5004 = vmatpush1.bf16.msra.mxu0 0
        %5005 = vmatprep.subr.bf16.mxu0 0
        %5006 = vmatpush1.bf16.msra.mxu0 0
        %5007 = vmatprep.subr.bf16.mxu0 0
        %5008 = vmatpush1.bf16.msra.mxu0 0
        %5009 = vmatprep.subr.bf16.mxu0 0
        %5010 = vmatpush1.bf16.msra.mxu0 0
        %5011 = vmatprep.subr.bf16.mxu0 0
        %5012 = vmatpush1.bf16.msra.mxu0 0
        %5013 = vmatprep.subr.bf16.mxu0 0
        %5014 = vmatpush1.bf16.msra.mxu0 0
        %5015 = vmatprep.subr.bf16.mxu0 0
        %5016 = vmatpush1.bf16.msra.mxu0 0
        %5017 = vmatprep.mubr.bf16.mxu0 0
        %5018 = vmatmul.mubr.bf16.gmra.mrb[0].mxu0 %v1104
        %v5019 = vpop.f32.mrb[0].mxu0
        %v5020 = vadd.f32 %v4908, %v5019
        %v5021 = vpop.f32.mrb[0].mxu0
        %v5022 = vpop.f32.mrb[0].mxu0
        %v5023 = vadd.f32 %v4913, %v5022
        %v5024 = vpop.f32.mrb[0].mxu0
        %5025 = vmatprep.mubr.bf16.mxu0 0
        %5026 = vmatmul.mubr.bf16.gmra.mrb[0].mxu0 %v1105
        %v5027 = vpop.f32.mrb[0].mxu0
        %v5028 = vadd.f32 %v4918, %v5027
        %v5029 = vpop.f32.mrb[0].mxu0
        %v5030 = vpop.f32.mrb[0].mxu0
        %v5031 = vadd.f32 %v4923, %v5030
        %v5032 = vpop.f32.mrb[0].mxu0
        %5033 = vmatprep.mubr.bf16.mxu0 0
        %5034 = vmatmul.mubr.bf16.gmra.mrb[0].mxu0 %v1106
        %v5035 = vpop.f32.mrb[0].mxu0
        %v5036 = vadd.f32 %v4928, %v5035
        %v5037 = vpop.f32.mrb[0].mxu0
        %v5038 = vpop.f32.mrb[0].mxu0
        %v5039 = vadd.f32 %v4933, %v5038
        %v5040 = vpop.f32.mrb[0].mxu0
        %5041 = vmatprep.mubr.bf16.mxu0 0
        %5042 = vmatmul.mubr.bf16.gmra.mrb[0].mxu0 %v1107
        %v5043 = vpop.f32.mrb[0].mxu0
        %v5044 = vadd.f32 %v4938, %v5043
        %v5045 = vpop.f32.mrb[0].mxu0
        %v5046 = vpop.f32.mrb[0].mxu0
        %v5047 = vadd.f32 %v4943, %v5046
        %v5048 = vpop.f32.mrb[0].mxu0
        %5049 = vmatprep.mubr.bf16.mxu0 0
        %5050 = vmatmul.mubr.bf16.gmra.mrb[0].mxu0 %v1108
        %v5051 = vpop.f32.mrb[0].mxu0
        %v5052 = vadd.f32 %v4948, %v5051
        %v5053 = vpop.f32.mrb[0].mxu0
        %v5054 = vpop.f32.mrb[0].mxu0
        %v5055 = vadd.f32 %v4953, %v5054
        %v5056 = vpop.f32.mrb[0].mxu0
        %5057 = vmatprep.mubr.bf16.mxu0 0
        %5058 = vmatmul.mubr.bf16.gmra.mrb[0].mxu0 %v1109
        %v5059 = vpop.f32.mrb[0].mxu0
        %v5060 = vadd.f32 %v4958, %v5059
        %v5061 = vpop.f32.mrb[0].mxu0
        %v5062 = vpop.f32.mrb[0].mxu0
        %v5063 = vadd.f32 %v4963, %v5062
        %v5064 = vpop.f32.mrb[0].mxu0
        %5065 = vmatprep.mubr.bf16.mxu0 0
        %5066 = vmatmul.mubr.bf16.gmra.mrb[0].mxu0 %v1110
        %v5067 = vpop.f32.mrb[0].mxu0
        %v5068 = vadd.f32 %v4968, %v5067
        %v5069 = vpop.f32.mrb[0].mxu0
        %v5070 = vpop.f32.mrb[0].mxu0
        %v5071 = vadd.f32 %v4973, %v5070
        %v5072 = vpop.f32.mrb[0].mxu0
        %5073 = vmatprep.mubr.bf16.mxu0 0
        %5074 = vmatmul.mubr.bf16.gmra.mrb[0].mxu0 %v1111
        %v5075 = vpop.f32.mrb[0].mxu0
        %v5076 = vadd.f32 %v4978, %v5075
        %v5077 = vpop.f32.mrb[0].mxu0
        %v5078 = vpop.f32.mrb[0].mxu0
        %v5079 = vadd.f32 %v4983, %v5078
        %v5080 = vpop.f32.mrb[0].mxu0
        %5081 = vdwg.mxu0
        %5082 = vst [vmem:[%s288] sm:$0xff] %v5020
        %5083 = vst [vmem:[%s288 + $0x10] sm:$0xff] %v5023
        %5084 = vst [vmem:[%s288 + $0x20] sm:$0xff] %v5028
        %5085 = vst [vmem:[%s288 + $0x30] sm:$0xff] %v5031
        %5086 = vst [vmem:[%s288 + $0x40] sm:$0xff] %v5036
        %5087 = vst [vmem:[%s288 + $0x50] sm:$0xff] %v5039
        %5088 = vst [vmem:[%s288 + $0x60] sm:$0xff] %v5044
        %5089 = vst [vmem:[%s288 + $0x70] sm:$0xff] %v5047
        %5090 = vst [vmem:[%s288 + $0x80] sm:$0xff] %v5052
        %5091 = vst [vmem:[%s288 + $0x90] sm:$0xff] %v5055
        %5092 = vst [vmem:[%s288 + $0xa0] sm:$0xff] %v5060
        %5093 = vst [vmem:[%s288 + $0xb0] sm:$0xff] %v5063
        %5094 = vst [vmem:[%s288 + $0xc0] sm:$0xff] %v5068
        %5095 = vst [vmem:[%s288 + $0xd0] sm:$0xff] %v5071
        %5096 = vst [vmem:[%s288 + $0xe0] sm:$0xff] %v5076
        %5097 = vst [vmem:[%s288 + $0xf0] sm:$0xff] %v5079
        %5098 = vmatprep.subr.bf16.mxu0 0
        %5099 = vmatpush1.bf16.msra.mxu0 %v1041
        %5100 = vmatprep.subr.bf16.mxu0 0
        %5101 = vmatpush1.bf16.msra.mxu0 0
        %5102 = vmatprep.subr.bf16.mxu0 0
        %5103 = vmatpush1.bf16.msra.mxu0 0
        %5104 = vmatprep.subr.bf16.mxu0 0
        %5105 = vmatpush1.bf16.msra.mxu0 0
        %5106 = vmatprep.subr.bf16.mxu0 0
        %5107 = vmatpush1.bf16.msra.mxu0 0
        %5108 = vmatprep.subr.bf16.mxu0 0
        %5109 = vmatpush1.bf16.msra.mxu0 0
        %5110 = vmatprep.subr.bf16.mxu0 0
        %5111 = vmatpush1.bf16.msra.mxu0 0
        %5112 = vmatprep.subr.bf16.mxu0 0
        %5113 = vmatpush1.bf16.msra.mxu0 0
        %5114 = vmatprep.subr.bf16.mxu0 0
        %5115 = vmatpush1.bf16.msra.mxu0 0
        %5116 = vmatprep.subr.bf16.mxu0 0
        %5117 = vmatpush1.bf16.msra.mxu0 0
        %5118 = vmatprep.subr.bf16.mxu0 0
        %5119 = vmatpush1.bf16.msra.mxu0 0
        %5120 = vmatprep.subr.bf16.mxu0 0
        %5121 = vmatpush1.bf16.msra.mxu0 0
        %5122 = vmatprep.subr.bf16.mxu0 0
        %5123 = vmatpush1.bf16.msra.mxu0 0
        %5124 = vmatprep.subr.bf16.mxu0 0
        %5125 = vmatpush1.bf16.msra.mxu0 0
        %5126 = vmatprep.subr.bf16.mxu0 0
        %5127 = vmatpush1.bf16.msra.mxu0 0
        %5128 = vmatprep.subr.bf16.mxu0 0
        %5129 = vmatpush1.bf16.msra.mxu0 0
        %5130 = vmatprep.mubr.bf16.mxu0 0
        %5131 = vmatmul.mubr.bf16.gmra.mrb[0].mxu0 %v1162
        %v5132 = vpop.f32.mrb[0].mxu0
        %v5133 = vadd.f32 0.0, %v5132
        %v5134 = vpop.f32.mrb[0].mxu0
        %v5135 = vpop.f32.mrb[0].mxu0
        %v5136 = vadd.f32 0.0, %v5135
        %v5137 = vpop.f32.mrb[0].mxu0
        %5138 = vmatprep.mubr.bf16.mxu0 0
        %5139 = vmatmul.mubr.bf16.gmra.mrb[0].mxu0 %v1165
        %v5140 = vpop.f32.mrb[0].mxu0
        %v5141 = vadd.f32 0.0, %v5140
        %v5142 = vpop.f32.mrb[0].mxu0
        %v5143 = vpop.f32.mrb[0].mxu0
        %v5144 = vadd.f32 0.0, %v5143
        %v5145 = vpop.f32.mrb[0].mxu0
        %5146 = vmatprep.mubr.bf16.mxu0 0
        %5147 = vmatmul.mubr.bf16.gmra.mrb[0].mxu0 %v1168
        %v5148 = vpop.f32.mrb[0].mxu0
        %v5149 = vadd.f32 0.0, %v5148
        %v5150 = vpop.f32.mrb[0].mxu0
        %v5151 = vpop.f32.mrb[0].mxu0
        %v5152 = vadd.f32 0.0, %v5151
        %v5153 = vpop.f32.mrb[0].mxu0
        %5154 = vmatprep.mubr.bf16.mxu0 0
        %5155 = vmatmul.mubr.bf16.gmra.mrb[0].mxu0 %v1171
        %v5156 = vpop.f32.mrb[0].mxu0
        %v5157 = vadd.f32 0.0, %v5156
        %v5158 = vpop.f32.mrb[0].mxu0
        %v5159 = vpop.f32.mrb[0].mxu0
        %v5160 = vadd.f32 0.0, %v5159
        %v5161 = vpop.f32.mrb[0].mxu0
        %5162 = vmatprep.mubr.bf16.mxu0 0
        %5163 = vmatmul.mubr.bf16.gmra.mrb[0].mxu0 %v1174
        %v5164 = vpop.f32.mrb[0].mxu0
        %v5165 = vadd.f32 0.0, %v5164
        %v5166 = vpop.f32.mrb[0].mxu0
        %v5167 = vpop.f32.mrb[0].mxu0
        %v5168 = vadd.f32 0.0, %v5167
        %v5169 = vpop.f32.mrb[0].mxu0
        %5170 = vmatprep.mubr.bf16.mxu0 0
        %5171 = vmatmul.mubr.bf16.gmra.mrb[0].mxu0 %v1177
        %v5172 = vpop.f32.mrb[0].mxu0
        %v5173 = vadd.f32 0.0, %v5172
        %v5174 = vpop.f32.mrb[0].mxu0
        %v5175 = vpop.f32.mrb[0].mxu0
        %v5176 = vadd.f32 0.0, %v5175
        %v5177 = vpop.f32.mrb[0].mxu0
        %5178 = vmatprep.mubr.bf16.mxu0 0
        %5179 = vmatmul.mubr.bf16.gmra.mrb[0].mxu0 %v1180
        %v5180 = vpop.f32.mrb[0].mxu0
        %v5181 = vadd.f32 0.0, %v5180
        %v5182 = vpop.f32.mrb[0].mxu0
        %v5183 = vpop.f32.mrb[0].mxu0
        %v5184 = vadd.f32 0.0, %v5183
        %v5185 = vpop.f32.mrb[0].mxu0
        %5186 = vmatprep.mubr.bf16.mxu0 0
        %5187 = vmatmul.mubr.bf16.gmra.mrb[0].mxu0 %v1183
        %v5188 = vpop.f32.mrb[0].mxu0
        %v5189 = vadd.f32 0.0, %v5188
        %v5190 = vpop.f32.mrb[0].mxu0
        %v5191 = vpop.f32.mrb[0].mxu0
        %v5192 = vadd.f32 0.0, %v5191
        %v5193 = vpop.f32.mrb[0].mxu0
        %5194 = vmatprep.mubr.bf16.mxu0 0
        %5195 = vmatmul.mubr.bf16.gmra.mrb[0].mxu0 %v1186
        %v5196 = vpop.f32.mrb[0].mxu0
        %v5197 = vadd.f32 0.0, %v5196
        %v5198 = vpop.f32.mrb[0].mxu0
        %v5199 = vpop.f32.mrb[0].mxu0
        %v5200 = vadd.f32 0.0, %v5199
        %v5201 = vpop.f32.mrb[0].mxu0
        %5202 = vmatprep.mubr.bf16.mxu0 0
        %5203 = vmatmul.mubr.bf16.gmra.mrb[0].mxu0 %v1189
        %v5204 = vpop.f32.mrb[0].mxu0
        %v5205 = vadd.f32 0.0, %v5204
        %v5206 = vpop.f32.mrb[0].mxu0
        %v5207 = vpop.f32.mrb[0].mxu0
        %v5208 = vadd.f32 0.0, %v5207
        %v5209 = vpop.f32.mrb[0].mxu0
        %5210 = vmatprep.mubr.bf16.mxu0 0
        %5211 = vmatmul.mubr.bf16.gmra.mrb[0].mxu0 %v1192
        %v5212 = vpop.f32.mrb[0].mxu0
        %v5213 = vadd.f32 0.0, %v5212
        %v5214 = vpop.f32.mrb[0].mxu0
        %v5215 = vpop.f32.mrb[0].mxu0
        %v5216 = vadd.f32 0.0, %v5215
        %v5217 = vpop.f32.mrb[0].mxu0
        %5218 = vmatprep.mubr.bf16.mxu0 0
        %5219 = vmatmul.mubr.bf16.gmra.mrb[0].mxu0 %v1195
        %v5220 = vpop.f32.mrb[0].mxu0
        %v5221 = vadd.f32 0.0, %v5220
        %v5222 = vpop.f32.mrb[0].mxu0
        %v5223 = vpop.f32.mrb[0].mxu0
        %v5224 = vadd.f32 0.0, %v5223
        %v5225 = vpop.f32.mrb[0].mxu0
        %5226 = vmatprep.mubr.bf16.mxu0 0
        %5227 = vmatmul.mubr.bf16.gmra.mrb[0].mxu0 %v1198
        %v5228 = vpop.f32.mrb[0].mxu0
        %v5229 = vadd.f32 0.0, %v5228
        %v5230 = vpop.f32.mrb[0].mxu0
        %v5231 = vpop.f32.mrb[0].mxu0
        %v5232 = vadd.f32 0.0, %v5231
        %v5233 = vpop.f32.mrb[0].mxu0
        %5234 = vmatprep.mubr.bf16.mxu0 0
        %5235 = vmatmul.mubr.bf16.gmra.mrb[0].mxu0 %v1201
        %v5236 = vpop.f32.mrb[0].mxu0
        %v5237 = vadd.f32 0.0, %v5236
        %v5238 = vpop.f32.mrb[0].mxu0
        %v5239 = vpop.f32.mrb[0].mxu0
        %v5240 = vadd.f32 0.0, %v5239
        %v5241 = vpop.f32.mrb[0].mxu0
        %5242 = vmatprep.mubr.bf16.mxu0 0
        %5243 = vmatmul.mubr.bf16.gmra.mrb[0].mxu0 %v1204
        %v5244 = vpop.f32.mrb[0].mxu0
        %v5245 = vadd.f32 0.0, %v5244
        %v5246 = vpop.f32.mrb[0].mxu0
        %v5247 = vpop.f32.mrb[0].mxu0
        %v5248 = vadd.f32 0.0, %v5247
        %v5249 = vpop.f32.mrb[0].mxu0
        %5250 = vmatprep.mubr.bf16.mxu0 0
        %5251 = vmatmul.mubr.bf16.gmra.mrb[0].mxu0 %v1207
        %v5252 = vpop.f32.mrb[0].mxu0
        %v5253 = vadd.f32 0.0, %v5252
        %v5254 = vpop.f32.mrb[0].mxu0
        %v5255 = vpop.f32.mrb[0].mxu0
        %v5256 = vadd.f32 0.0, %v5255
        %v5257 = vpop.f32.mrb[0].mxu0
        %5258 = vdwg.mxu0
        %5259 = vmatprep.subr.bf16.mxu0 0
        %5260 = vmatpush1.bf16.msra.mxu0 %v1043
        %5261 = vmatprep.subr.bf16.mxu0 0
        %5262 = vmatpush1.bf16.msra.mxu0 0
        %5263 = vmatprep.subr.bf16.mxu0 0
        %5264 = vmatpush1.bf16.msra.mxu0 0
        %5265 = vmatprep.subr.bf16.mxu0 0
        %5266 = vmatpush1.bf16.msra.mxu0 0
        %5267 = vmatprep.subr.bf16.mxu0 0
        %5268 = vmatpush1.bf16.msra.mxu0 0
        %5269 = vmatprep.subr.bf16.mxu0 0
        %5270 = vmatpush1.bf16.msra.mxu0 0
        %5271 = vmatprep.subr.bf16.mxu0 0
        %5272 = vmatpush1.bf16.msra.mxu0 0
        %5273 = vmatprep.subr.bf16.mxu0 0
        %5274 = vmatpush1.bf16.msra.mxu0 0
        %5275 = vmatprep.subr.bf16.mxu0 0
        %5276 = vmatpush1.bf16.msra.mxu0 0
        %5277 = vmatprep.subr.bf16.mxu0 0
        %5278 = vmatpush1.bf16.msra.mxu0 0
        %5279 = vmatprep.subr.bf16.mxu0 0
        %5280 = vmatpush1.bf16.msra.mxu0 0
        %5281 = vmatprep.subr.bf16.mxu0 0
        %5282 = vmatpush1.bf16.msra.mxu0 0
        %5283 = vmatprep.subr.bf16.mxu0 0
        %5284 = vmatpush1.bf16.msra.mxu0 0
        %5285 = vmatprep.subr.bf16.mxu0 0
        %5286 = vmatpush1.bf16.msra.mxu0 0
        %5287 = vmatprep.subr.bf16.mxu0 0
        %5288 = vmatpush1.bf16.msra.mxu0 0
        %5289 = vmatprep.subr.bf16.mxu0 0
        %5290 = vmatpush1.bf16.msra.mxu0 0
        %5291 = vmatprep.mubr.bf16.mxu0 0
        %5292 = vmatmul.mubr.bf16.gmra.mrb[0].mxu0 %v1403
        %v5293 = vpop.f32.mrb[0].mxu0
        %v5294 = vadd.f32 0.0, %v5293
        %v5295 = vpop.f32.mrb[0].mxu0
        %v5296 = vpop.f32.mrb[0].mxu0
        %v5297 = vadd.f32 0.0, %v5296
        %v5298 = vpop.f32.mrb[0].mxu0
        %5299 = vmatprep.mubr.bf16.mxu0 0
        %5300 = vmatmul.mubr.bf16.gmra.mrb[0].mxu0 %v1406
        %v5301 = vpop.f32.mrb[0].mxu0
        %v5302 = vadd.f32 0.0, %v5301
        %v5303 = vpop.f32.mrb[0].mxu0
        %v5304 = vpop.f32.mrb[0].mxu0
        %v5305 = vadd.f32 0.0, %v5304
        %v5306 = vpop.f32.mrb[0].mxu0
        %5307 = vmatprep.mubr.bf16.mxu0 0
        %5308 = vmatmul.mubr.bf16.gmra.mrb[0].mxu0 %v1409
        %v5309 = vpop.f32.mrb[0].mxu0
        %v5310 = vadd.f32 0.0, %v5309
        %v5311 = vpop.f32.mrb[0].mxu0
        %v5312 = vpop.f32.mrb[0].mxu0
        %v5313 = vadd.f32 0.0, %v5312
        %v5314 = vpop.f32.mrb[0].mxu0
        %5315 = vmatprep.mubr.bf16.mxu0 0
        %5316 = vmatmul.mubr.bf16.gmra.mrb[0].mxu0 %v1412
        %v5317 = vpop.f32.mrb[0].mxu0
        %v5318 = vadd.f32 0.0, %v5317
        %v5319 = vpop.f32.mrb[0].mxu0
        %v5320 = vpop.f32.mrb[0].mxu0
        %v5321 = vadd.f32 0.0, %v5320
        %v5322 = vpop.f32.mrb[0].mxu0
        %5323 = vmatprep.mubr.bf16.mxu0 0
        %5324 = vmatmul.mubr.bf16.gmra.mrb[0].mxu0 %v1415
        %v5325 = vpop.f32.mrb[0].mxu0
        %v5326 = vadd.f32 0.0, %v5325
        %v5327 = vpop.f32.mrb[0].mxu0
        %v5328 = vpop.f32.mrb[0].mxu0
        %v5329 = vadd.f32 0.0, %v5328
        %v5330 = vpop.f32.mrb[0].mxu0
        %5331 = vmatprep.mubr.bf16.mxu0 0
        %5332 = vmatmul.mubr.bf16.gmra.mrb[0].mxu0 %v1418
        %v5333 = vpop.f32.mrb[0].mxu0
        %v5334 = vadd.f32 0.0, %v5333
        %v5335 = vpop.f32.mrb[0].mxu0
        %v5336 = vpop.f32.mrb[0].mxu0
        %v5337 = vadd.f32 0.0, %v5336
        %v5338 = vpop.f32.mrb[0].mxu0
        %5339 = vmatprep.mubr.bf16.mxu0 0
        %5340 = vmatmul.mubr.bf16.gmra.mrb[0].mxu0 %v1421
        %v5341 = vpop.f32.mrb[0].mxu0
        %v5342 = vadd.f32 0.0, %v5341
        %v5343 = vpop.f32.mrb[0].mxu0
        %v5344 = vpop.f32.mrb[0].mxu0
        %v5345 = vadd.f32 0.0, %v5344
        %v5346 = vpop.f32.mrb[0].mxu0
        %5347 = vmatprep.mubr.bf16.mxu0 0
        %5348 = vmatmul.mubr.bf16.gmra.mrb[0].mxu0 %v1424
        %v5349 = vpop.f32.mrb[0].mxu0
        %v5350 = vadd.f32 0.0, %v5349
        %v5351 = vpop.f32.mrb[0].mxu0
        %v5352 = vpop.f32.mrb[0].mxu0
        %v5353 = vadd.f32 0.0, %v5352
        %v5354 = vpop.f32.mrb[0].mxu0
        %5355 = vmatprep.mubr.bf16.mxu0 0
        %5356 = vmatmul.mubr.bf16.gmra.mrb[0].mxu0 %v1427
        %v5357 = vpop.f32.mrb[0].mxu0
        %v5358 = vadd.f32 0.0, %v5357
        %v5359 = vpop.f32.mrb[0].mxu0
        %v5360 = vpop.f32.mrb[0].mxu0
        %v5361 = vadd.f32 0.0, %v5360
        %v5362 = vpop.f32.mrb[0].mxu0
        %5363 = vmatprep.mubr.bf16.mxu0 0
        %5364 = vmatmul.mubr.bf16.gmra.mrb[0].mxu0 %v1430
        %v5365 = vpop.f32.mrb[0].mxu0
        %v5366 = vadd.f32 0.0, %v5365
        %v5367 = vpop.f32.mrb[0].mxu0
        %v5368 = vpop.f32.mrb[0].mxu0
        %v5369 = vadd.f32 0.0, %v5368
        %v5370 = vpop.f32.mrb[0].mxu0
        %5371 = vmatprep.mubr.bf16.mxu0 0
        %5372 = vmatmul.mubr.bf16.gmra.mrb[0].mxu0 %v1433
        %v5373 = vpop.f32.mrb[0].mxu0
        %v5374 = vadd.f32 0.0, %v5373
        %v5375 = vpop.f32.mrb[0].mxu0
        %v5376 = vpop.f32.mrb[0].mxu0
        %v5377 = vadd.f32 0.0, %v5376
        %v5378 = vpop.f32.mrb[0].mxu0
        %5379 = vmatprep.mubr.bf16.mxu0 0
        %5380 = vmatmul.mubr.bf16.gmra.mrb[0].mxu0 %v1436
        %v5381 = vpop.f32.mrb[0].mxu0
        %v5382 = vadd.f32 0.0, %v5381
        %v5383 = vpop.f32.mrb[0].mxu0
        %v5384 = vpop.f32.mrb[0].mxu0
        %v5385 = vadd.f32 0.0, %v5384
        %v5386 = vpop.f32.mrb[0].mxu0
        %5387 = vmatprep.mubr.bf16.mxu0 0
        %5388 = vmatmul.mubr.bf16.gmra.mrb[0].mxu0 %v1439
        %v5389 = vpop.f32.mrb[0].mxu0
        %v5390 = vadd.f32 0.0, %v5389
        %v5391 = vpop.f32.mrb[0].mxu0
        %v5392 = vpop.f32.mrb[0].mxu0
        %v5393 = vadd.f32 0.0, %v5392
        %v5394 = vpop.f32.mrb[0].mxu0
        %5395 = vmatprep.mubr.bf16.mxu0 0
        %5396 = vmatmul.mubr.bf16.gmra.mrb[0].mxu0 %v1442
        %v5397 = vpop.f32.mrb[0].mxu0
        %v5398 = vadd.f32 0.0, %v5397
        %v5399 = vpop.f32.mrb[0].mxu0
        %v5400 = vpop.f32.mrb[0].mxu0
        %v5401 = vadd.f32 0.0, %v5400
        %v5402 = vpop.f32.mrb[0].mxu0
        %5403 = vmatprep.mubr.bf16.mxu0 0
        %5404 = vmatmul.mubr.bf16.gmra.mrb[0].mxu0 %v1445
        %v5405 = vpop.f32.mrb[0].mxu0
        %v5406 = vadd.f32 0.0, %v5405
        %v5407 = vpop.f32.mrb[0].mxu0
        %v5408 = vpop.f32.mrb[0].mxu0
        %v5409 = vadd.f32 0.0, %v5408
        %v5410 = vpop.f32.mrb[0].mxu0
        %5411 = vmatprep.mubr.bf16.mxu0 0
        %5412 = vmatmul.mubr.bf16.gmra.mrb[0].mxu0 %v1448
        %v5413 = vpop.f32.mrb[0].mxu0
        %v5414 = vadd.f32 0.0, %v5413
        %v5415 = vpop.f32.mrb[0].mxu0
        %v5416 = vpop.f32.mrb[0].mxu0
        %v5417 = vadd.f32 0.0, %v5416
        %v5418 = vpop.f32.mrb[0].mxu0
        %5419 = vdwg.mxu0
        %5420 = vmatprep.subr.bf16.mxu0 0
        %5421 = vmatpush1.bf16.msra.mxu0 %v1045
        %5422 = vmatprep.subr.bf16.mxu0 0
        %5423 = vmatpush1.bf16.msra.mxu0 0
        %5424 = vmatprep.subr.bf16.mxu0 0
        %5425 = vmatpush1.bf16.msra.mxu0 0
        %5426 = vmatprep.subr.bf16.mxu0 0
        %5427 = vmatpush1.bf16.msra.mxu0 0
        %5428 = vmatprep.subr.bf16.mxu0 0
        %5429 = vmatpush1.bf16.msra.mxu0 0
        %5430 = vmatprep.subr.bf16.mxu0 0
        %5431 = vmatpush1.bf16.msra.mxu0 0
        %5432 = vmatprep.subr.bf16.mxu0 0
        %5433 = vmatpush1.bf16.msra.mxu0 0
        %5434 = vmatprep.subr.bf16.mxu0 0
        %5435 = vmatpush1.bf16.msra.mxu0 0
        %5436 = vmatprep.subr.bf16.mxu0 0
        %5437 = vmatpush1.bf16.msra.mxu0 0
        %5438 = vmatprep.subr.bf16.mxu0 0
        %5439 = vmatpush1.bf16.msra.mxu0 0
        %5440 = vmatprep.subr.bf16.mxu0 0
        %5441 = vmatpush1.bf16.msra.mxu0 0
        %5442 = vmatprep.subr.bf16.mxu0 0
        %5443 = vmatpush1.bf16.msra.mxu0 0
        %5444 = vmatprep.subr.bf16.mxu0 0
        %5445 = vmatpush1.bf16.msra.mxu0 0
        %5446 = vmatprep.subr.bf16.mxu0 0
        %5447 = vmatpush1.bf16.msra.mxu0 0
        %5448 = vmatprep.subr.bf16.mxu0 0
        %5449 = vmatpush1.bf16.msra.mxu0 0
        %5450 = vmatprep.subr.bf16.mxu0 0
        %5451 = vmatpush1.bf16.msra.mxu0 0
        %5452 = vmatprep.mubr.bf16.mxu0 0
        %5453 = vmatmul.mubr.bf16.gmra.mrb[0].mxu0 %v1644
        %v5454 = vpop.f32.mrb[0].mxu0
        %v5455 = vadd.f32 0.0, %v5454
        %v5456 = vpop.f32.mrb[0].mxu0
        %v5457 = vpop.f32.mrb[0].mxu0
        %v5458 = vadd.f32 0.0, %v5457
        %v5459 = vpop.f32.mrb[0].mxu0
        %5460 = vmatprep.mubr.bf16.mxu0 0
        %5461 = vmatmul.mubr.bf16.gmra.mrb[0].mxu0 %v1647
        %v5462 = vpop.f32.mrb[0].mxu0
        %v5463 = vadd.f32 0.0, %v5462
        %v5464 = vpop.f32.mrb[0].mxu0
        %v5465 = vpop.f32.mrb[0].mxu0
        %v5466 = vadd.f32 0.0, %v5465
        %v5467 = vpop.f32.mrb[0].mxu0
        %5468 = vmatprep.mubr.bf16.mxu0 0
        %5469 = vmatmul.mubr.bf16.gmra.mrb[0].mxu0 %v1650
        %v5470 = vpop.f32.mrb[0].mxu0
        %v5471 = vadd.f32 0.0, %v5470
        %v5472 = vpop.f32.mrb[0].mxu0
        %v5473 = vpop.f32.mrb[0].mxu0
        %v5474 = vadd.f32 0.0, %v5473
        %v5475 = vpop.f32.mrb[0].mxu0
        %5476 = vmatprep.mubr.bf16.mxu0 0
        %5477 = vmatmul.mubr.bf16.gmra.mrb[0].mxu0 %v1653
        %v5478 = vpop.f32.mrb[0].mxu0
        %v5479 = vadd.f32 0.0, %v5478
        %v5480 = vpop.f32.mrb[0].mxu0
        %v5481 = vpop.f32.mrb[0].mxu0
        %v5482 = vadd.f32 0.0, %v5481
        %v5483 = vpop.f32.mrb[0].mxu0
        %5484 = vmatprep.mubr.bf16.mxu0 0
        %5485 = vmatmul.mubr.bf16.gmra.mrb[0].mxu0 %v1656
        %v5486 = vpop.f32.mrb[0].mxu0
        %v5487 = vadd.f32 0.0, %v5486
        %v5488 = vpop.f32.mrb[0].mxu0
        %v5489 = vpop.f32.mrb[0].mxu0
        %v5490 = vadd.f32 0.0, %v5489
        %v5491 = vpop.f32.mrb[0].mxu0
        %5492 = vmatprep.mubr.bf16.mxu0 0
        %5493 = vmatmul.mubr.bf16.gmra.mrb[0].mxu0 %v1659
        %v5494 = vpop.f32.mrb[0].mxu0
        %v5495 = vadd.f32 0.0, %v5494
        %v5496 = vpop.f32.mrb[0].mxu0
        %v5497 = vpop.f32.mrb[0].mxu0
        %v5498 = vadd.f32 0.0, %v5497
        %v5499 = vpop.f32.mrb[0].mxu0
        %5500 = vmatprep.mubr.bf16.mxu0 0
        %5501 = vmatmul.mubr.bf16.gmra.mrb[0].mxu0 %v1662
        %v5502 = vpop.f32.mrb[0].mxu0
        %v5503 = vadd.f32 0.0, %v5502
        %v5504 = vpop.f32.mrb[0].mxu0
        %v5505 = vpop.f32.mrb[0].mxu0
        %v5506 = vadd.f32 0.0, %v5505
        %v5507 = vpop.f32.mrb[0].mxu0
        %5508 = vmatprep.mubr.bf16.mxu0 0
        %5509 = vmatmul.mubr.bf16.gmra.mrb[0].mxu0 %v1665
        %v5510 = vpop.f32.mrb[0].mxu0
        %v5511 = vadd.f32 0.0, %v5510
        %v5512 = vpop.f32.mrb[0].mxu0
        %v5513 = vpop.f32.mrb[0].mxu0
        %v5514 = vadd.f32 0.0, %v5513
        %v5515 = vpop.f32.mrb[0].mxu0
        %5516 = vmatprep.mubr.bf16.mxu0 0
        %5517 = vmatmul.mubr.bf16.gmra.mrb[0].mxu0 %v1668
        %v5518 = vpop.f32.mrb[0].mxu0
        %v5519 = vadd.f32 0.0, %v5518
        %v5520 = vpop.f32.mrb[0].mxu0
        %v5521 = vpop.f32.mrb[0].mxu0
        %v5522 = vadd.f32 0.0, %v5521
        %v5523 = vpop.f32.mrb[0].mxu0
        %5524 = vmatprep.mubr.bf16.mxu0 0
        %5525 = vmatmul.mubr.bf16.gmra.mrb[0].mxu0 %v1671
        %v5526 = vpop.f32.mrb[0].mxu0
        %v5527 = vadd.f32 0.0, %v5526
        %v5528 = vpop.f32.mrb[0].mxu0
        %v5529 = vpop.f32.mrb[0].mxu0
        %v5530 = vadd.f32 0.0, %v5529
        %v5531 = vpop.f32.mrb[0].mxu0
        %5532 = vmatprep.mubr.bf16.mxu0 0
        %5533 = vmatmul.mubr.bf16.gmra.mrb[0].mxu0 %v1674
        %v5534 = vpop.f32.mrb[0].mxu0
        %v5535 = vadd.f32 0.0, %v5534
        %v5536 = vpop.f32.mrb[0].mxu0
        %v5537 = vpop.f32.mrb[0].mxu0
        %v5538 = vadd.f32 0.0, %v5537
        %v5539 = vpop.f32.mrb[0].mxu0
        %5540 = vmatprep.mubr.bf16.mxu0 0
        %5541 = vmatmul.mubr.bf16.gmra.mrb[0].mxu0 %v1677
        %v5542 = vpop.f32.mrb[0].mxu0
        %v5543 = vadd.f32 0.0, %v5542
        %v5544 = vpop.f32.mrb[0].mxu0
        %v5545 = vpop.f32.mrb[0].mxu0
        %v5546 = vadd.f32 0.0, %v5545
        %v5547 = vpop.f32.mrb[0].mxu0
        %5548 = vmatprep.mubr.bf16.mxu0 0
        %5549 = vmatmul.mubr.bf16.gmra.mrb[0].mxu0 %v1680
        %v5550 = vpop.f32.mrb[0].mxu0
        %v5551 = vadd.f32 0.0, %v5550
        %v5552 = vpop.f32.mrb[0].mxu0
        %v5553 = vpop.f32.mrb[0].mxu0
        %v5554 = vadd.f32 0.0, %v5553
        %v5555 = vpop.f32.mrb[0].mxu0
        %5556 = vmatprep.mubr.bf16.mxu0 0
        %5557 = vmatmul.mubr.bf16.gmra.mrb[0].mxu0 %v1683
        %v5558 = vpop.f32.mrb[0].mxu0
        %v5559 = vadd.f32 0.0, %v5558
        %v5560 = vpop.f32.mrb[0].mxu0
        %v5561 = vpop.f32.mrb[0].mxu0
        %v5562 = vadd.f32 0.0, %v5561
        %v5563 = vpop.f32.mrb[0].mxu0
        %5564 = vmatprep.mubr.bf16.mxu0 0
        %5565 = vmatmul.mubr.bf16.gmra.mrb[0].mxu0 %v1686
        %v5566 = vpop.f32.mrb[0].mxu0
        %v5567 = vadd.f32 0.0, %v5566
        %v5568 = vpop.f32.mrb[0].mxu0
        %v5569 = vpop.f32.mrb[0].mxu0
        %v5570 = vadd.f32 0.0, %v5569
        %v5571 = vpop.f32.mrb[0].mxu0
        %5572 = vmatprep.mubr.bf16.mxu0 0
        %5573 = vmatmul.mubr.bf16.gmra.mrb[0].mxu0 %v1689
        %v5574 = vpop.f32.mrb[0].mxu0
        %v5575 = vadd.f32 0.0, %v5574
        %v5576 = vpop.f32.mrb[0].mxu0
        %v5577 = vpop.f32.mrb[0].mxu0
        %v5578 = vadd.f32 0.0, %v5577
        %v5579 = vpop.f32.mrb[0].mxu0
        %5580 = vdwg.mxu0
        %5581 = vmatprep.subr.bf16.mxu0 0
        %5582 = vmatpush1.bf16.msra.mxu0 %v1047
        %5583 = vmatprep.subr.bf16.mxu0 0
        %5584 = vmatpush1.bf16.msra.mxu0 0
        %5585 = vmatprep.subr.bf16.mxu0 0
        %5586 = vmatpush1.bf16.msra.mxu0 0
        %5587 = vmatprep.subr.bf16.mxu0 0
        %5588 = vmatpush1.bf16.msra.mxu0 0
        %5589 = vmatprep.subr.bf16.mxu0 0
        %5590 = vmatpush1.bf16.msra.mxu0 0
        %5591 = vmatprep.subr.bf16.mxu0 0
        %5592 = vmatpush1.bf16.msra.mxu0 0
        %5593 = vmatprep.subr.bf16.mxu0 0
        %5594 = vmatpush1.bf16.msra.mxu0 0
        %5595 = vmatprep.subr.bf16.mxu0 0
        %5596 = vmatpush1.bf16.msra.mxu0 0
        %5597 = vmatprep.subr.bf16.mxu0 0
        %5598 = vmatpush1.bf16.msra.mxu0 0
        %5599 = vmatprep.subr.bf16.mxu0 0
        %5600 = vmatpush1.bf16.msra.mxu0 0
        %5601 = vmatprep.subr.bf16.mxu0 0
        %5602 = vmatpush1.bf16.msra.mxu0 0
        %5603 = vmatprep.subr.bf16.mxu0 0
        %5604 = vmatpush1.bf16.msra.mxu0 0
        %5605 = vmatprep.subr.bf16.mxu0 0
        %5606 = vmatpush1.bf16.msra.mxu0 0
        %5607 = vmatprep.subr.bf16.mxu0 0
        %5608 = vmatpush1.bf16.msra.mxu0 0
        %5609 = vmatprep.subr.bf16.mxu0 0
        %5610 = vmatpush1.bf16.msra.mxu0 0
        %5611 = vmatprep.subr.bf16.mxu0 0
        %5612 = vmatpush1.bf16.msra.mxu0 0
        %5613 = vmatprep.mubr.bf16.mxu0 0
        %5614 = vmatmul.mubr.bf16.gmra.mrb[0].mxu0 %v1885
        %v5615 = vpop.f32.mrb[0].mxu0
        %v5616 = vadd.f32 0.0, %v5615
        %v5617 = vpop.f32.mrb[0].mxu0
        %v5618 = vpop.f32.mrb[0].mxu0
        %v5619 = vadd.f32 0.0, %v5618
        %v5620 = vpop.f32.mrb[0].mxu0
        %5621 = vmatprep.mubr.bf16.mxu0 0
        %5622 = vmatmul.mubr.bf16.gmra.mrb[0].mxu0 %v1888
        %v5623 = vpop.f32.mrb[0].mxu0
        %v5624 = vadd.f32 0.0, %v5623
        %v5625 = vpop.f32.mrb[0].mxu0
        %v5626 = vpop.f32.mrb[0].mxu0
        %v5627 = vadd.f32 0.0, %v5626
        %v5628 = vpop.f32.mrb[0].mxu0
        %5629 = vmatprep.mubr.bf16.mxu0 0
        %5630 = vmatmul.mubr.bf16.gmra.mrb[0].mxu0 %v1891
        %v5631 = vpop.f32.mrb[0].mxu0
        %v5632 = vadd.f32 0.0, %v5631
        %v5633 = vpop.f32.mrb[0].mxu0
        %v5634 = vpop.f32.mrb[0].mxu0
        %v5635 = vadd.f32 0.0, %v5634
        %v5636 = vpop.f32.mrb[0].mxu0
        %5637 = vmatprep.mubr.bf16.mxu0 0
        %5638 = vmatmul.mubr.bf16.gmra.mrb[0].mxu0 %v1894
        %v5639 = vpop.f32.mrb[0].mxu0
        %v5640 = vadd.f32 0.0, %v5639
        %v5641 = vpop.f32.mrb[0].mxu0
        %v5642 = vpop.f32.mrb[0].mxu0
        %v5643 = vadd.f32 0.0, %v5642
        %v5644 = vpop.f32.mrb[0].mxu0
        %5645 = vmatprep.mubr.bf16.mxu0 0
        %5646 = vmatmul.mubr.bf16.gmra.mrb[0].mxu0 %v1897
        %v5647 = vpop.f32.mrb[0].mxu0
        %v5648 = vadd.f32 0.0, %v5647
        %v5649 = vpop.f32.mrb[0].mxu0
        %v5650 = vpop.f32.mrb[0].mxu0
        %v5651 = vadd.f32 0.0, %v5650
        %v5652 = vpop.f32.mrb[0].mxu0
        %5653 = vmatprep.mubr.bf16.mxu0 0
        %5654 = vmatmul.mubr.bf16.gmra.mrb[0].mxu0 %v1900
        %v5655 = vpop.f32.mrb[0].mxu0
        %v5656 = vadd.f32 0.0, %v5655
        %v5657 = vpop.f32.mrb[0].mxu0
        %v5658 = vpop.f32.mrb[0].mxu0
        %v5659 = vadd.f32 0.0, %v5658
        %v5660 = vpop.f32.mrb[0].mxu0
        %5661 = vmatprep.mubr.bf16.mxu0 0
        %5662 = vmatmul.mubr.bf16.gmra.mrb[0].mxu0 %v1903
        %v5663 = vpop.f32.mrb[0].mxu0
        %v5664 = vadd.f32 0.0, %v5663
        %v5665 = vpop.f32.mrb[0].mxu0
        %v5666 = vpop.f32.mrb[0].mxu0
        %v5667 = vadd.f32 0.0, %v5666
        %v5668 = vpop.f32.mrb[0].mxu0
        %5669 = vmatprep.mubr.bf16.mxu0 0
        %5670 = vmatmul.mubr.bf16.gmra.mrb[0].mxu0 %v1906
        %v5671 = vpop.f32.mrb[0].mxu0
        %v5672 = vadd.f32 0.0, %v5671
        %v5673 = vpop.f32.mrb[0].mxu0
        %v5674 = vpop.f32.mrb[0].mxu0
        %v5675 = vadd.f32 0.0, %v5674
        %v5676 = vpop.f32.mrb[0].mxu0
        %5677 = vmatprep.mubr.bf16.mxu0 0
        %5678 = vmatmul.mubr.bf16.gmra.mrb[0].mxu0 %v1909
        %v5679 = vpop.f32.mrb[0].mxu0
        %v5680 = vadd.f32 0.0, %v5679
        %v5681 = vpop.f32.mrb[0].mxu0
        %v5682 = vpop.f32.mrb[0].mxu0
        %v5683 = vadd.f32 0.0, %v5682
        %v5684 = vpop.f32.mrb[0].mxu0
        %5685 = vmatprep.mubr.bf16.mxu0 0
        %5686 = vmatmul.mubr.bf16.gmra.mrb[0].mxu0 %v1912
        %v5687 = vpop.f32.mrb[0].mxu0
        %v5688 = vadd.f32 0.0, %v5687
        %v5689 = vpop.f32.mrb[0].mxu0
        %v5690 = vpop.f32.mrb[0].mxu0
        %v5691 = vadd.f32 0.0, %v5690
        %v5692 = vpop.f32.mrb[0].mxu0
        %5693 = vmatprep.mubr.bf16.mxu0 0
        %5694 = vmatmul.mubr.bf16.gmra.mrb[0].mxu0 %v1915
        %v5695 = vpop.f32.mrb[0].mxu0
        %v5696 = vadd.f32 0.0, %v5695
        %v5697 = vpop.f32.mrb[0].mxu0
        %v5698 = vpop.f32.mrb[0].mxu0
        %v5699 = vadd.f32 0.0, %v5698
        %v5700 = vpop.f32.mrb[0].mxu0
        %5701 = vmatprep.mubr.bf16.mxu0 0
        %5702 = vmatmul.mubr.bf16.gmra.mrb[0].mxu0 %v1918
        %v5703 = vpop.f32.mrb[0].mxu0
        %v5704 = vadd.f32 0.0, %v5703
        %v5705 = vpop.f32.mrb[0].mxu0
        %v5706 = vpop.f32.mrb[0].mxu0
        %v5707 = vadd.f32 0.0, %v5706
        %v5708 = vpop.f32.mrb[0].mxu0
        %5709 = vmatprep.mubr.bf16.mxu0 0
        %5710 = vmatmul.mubr.bf16.gmra.mrb[0].mxu0 %v1921
        %v5711 = vpop.f32.mrb[0].mxu0
        %v5712 = vadd.f32 0.0, %v5711
        %v5713 = vpop.f32.mrb[0].mxu0
        %v5714 = vpop.f32.mrb[0].mxu0
        %v5715 = vadd.f32 0.0, %v5714
        %v5716 = vpop.f32.mrb[0].mxu0
        %5717 = vmatprep.mubr.bf16.mxu0 0
        %5718 = vmatmul.mubr.bf16.gmra.mrb[0].mxu0 %v1924
        %v5719 = vpop.f32.mrb[0].mxu0
        %v5720 = vadd.f32 0.0, %v5719
        %v5721 = vpop.f32.mrb[0].mxu0
        %v5722 = vpop.f32.mrb[0].mxu0
        %v5723 = vadd.f32 0.0, %v5722
        %v5724 = vpop.f32.mrb[0].mxu0
        %5725 = vmatprep.mubr.bf16.mxu0 0
        %5726 = vmatmul.mubr.bf16.gmra.mrb[0].mxu0 %v1927
        %v5727 = vpop.f32.mrb[0].mxu0
        %v5728 = vadd.f32 0.0, %v5727
        %v5729 = vpop.f32.mrb[0].mxu0
        %v5730 = vpop.f32.mrb[0].mxu0
        %v5731 = vadd.f32 0.0, %v5730
        %v5732 = vpop.f32.mrb[0].mxu0
        %5733 = vmatprep.mubr.bf16.mxu0 0
        %5734 = vmatmul.mubr.bf16.gmra.mrb[0].mxu0 %v1930
        %v5735 = vpop.f32.mrb[0].mxu0
        %v5736 = vadd.f32 0.0, %v5735
        %v5737 = vpop.f32.mrb[0].mxu0
        %v5738 = vpop.f32.mrb[0].mxu0
        %v5739 = vadd.f32 0.0, %v5738
        %v5740 = vpop.f32.mrb[0].mxu0
        %5741 = vdwg.mxu0
        %5742 = vmatprep.subr.bf16.mxu0 0
        %5743 = vmatpush1.bf16.msra.mxu0 %v1049
        %5744 = vmatprep.subr.bf16.mxu0 0
        %5745 = vmatpush1.bf16.msra.mxu0 0
        %5746 = vmatprep.subr.bf16.mxu0 0
        %5747 = vmatpush1.bf16.msra.mxu0 0
        %5748 = vmatprep.subr.bf16.mxu0 0
        %5749 = vmatpush1.bf16.msra.mxu0 0
        %5750 = vmatprep.subr.bf16.mxu0 0
        %5751 = vmatpush1.bf16.msra.mxu0 0
        %5752 = vmatprep.subr.bf16.mxu0 0
        %5753 = vmatpush1.bf16.msra.mxu0 0
        %5754 = vmatprep.subr.bf16.mxu0 0
        %5755 = vmatpush1.bf16.msra.mxu0 0
        %5756 = vmatprep.subr.bf16.mxu0 0
        %5757 = vmatpush1.bf16.msra.mxu0 0
        %5758 = vmatprep.subr.bf16.mxu0 0
        %5759 = vmatpush1.bf16.msra.mxu0 0
        %5760 = vmatprep.subr.bf16.mxu0 0
        %5761 = vmatpush1.bf16.msra.mxu0 0
        %5762 = vmatprep.subr.bf16.mxu0 0
        %5763 = vmatpush1.bf16.msra.mxu0 0
        %5764 = vmatprep.subr.bf16.mxu0 0
        %5765 = vmatpush1.bf16.msra.mxu0 0
        %5766 = vmatprep.subr.bf16.mxu0 0
        %5767 = vmatpush1.bf16.msra.mxu0 0
        %5768 = vmatprep.subr.bf16.mxu0 0
        %5769 = vmatpush1.bf16.msra.mxu0 0
        %5770 = vmatprep.subr.bf16.mxu0 0
        %5771 = vmatpush1.bf16.msra.mxu0 0
        %5772 = vmatprep.subr.bf16.mxu0 0
        %5773 = vmatpush1.bf16.msra.mxu0 0
        %5774 = vmatprep.mubr.bf16.mxu0 0
        %5775 = vmatmul.mubr.bf16.gmra.mrb[0].mxu0 %v2126
        %v5776 = vpop.f32.mrb[0].mxu0
        %v5777 = vadd.f32 0.0, %v5776
        %v5778 = vpop.f32.mrb[0].mxu0
        %v5779 = vpop.f32.mrb[0].mxu0
        %v5780 = vadd.f32 0.0, %v5779
        %v5781 = vpop.f32.mrb[0].mxu0
        %5782 = vmatprep.mubr.bf16.mxu0 0
        %5783 = vmatmul.mubr.bf16.gmra.mrb[0].mxu0 %v2129
        %v5784 = vpop.f32.mrb[0].mxu0
        %v5785 = vadd.f32 0.0, %v5784
        %v5786 = vpop.f32.mrb[0].mxu0
        %v5787 = vpop.f32.mrb[0].mxu0
        %v5788 = vadd.f32 0.0, %v5787
        %v5789 = vpop.f32.mrb[0].mxu0
        %5790 = vmatprep.mubr.bf16.mxu0 0
        %5791 = vmatmul.mubr.bf16.gmra.mrb[0].mxu0 %v2132
        %v5792 = vpop.f32.mrb[0].mxu0
        %v5793 = vadd.f32 0.0, %v5792
        %v5794 = vpop.f32.mrb[0].mxu0
        %v5795 = vpop.f32.mrb[0].mxu0
        %v5796 = vadd.f32 0.0, %v5795
        %v5797 = vpop.f32.mrb[0].mxu0
        %5798 = vmatprep.mubr.bf16.mxu0 0
        %5799 = vmatmul.mubr.bf16.gmra.mrb[0].mxu0 %v2135
        %v5800 = vpop.f32.mrb[0].mxu0
        %v5801 = vadd.f32 0.0, %v5800
        %v5802 = vpop.f32.mrb[0].mxu0
        %v5803 = vpop.f32.mrb[0].mxu0
        %v5804 = vadd.f32 0.0, %v5803
        %v5805 = vpop.f32.mrb[0].mxu0
        %5806 = vmatprep.mubr.bf16.mxu0 0
        %5807 = vmatmul.mubr.bf16.gmra.mrb[0].mxu0 %v2138
        %v5808 = vpop.f32.mrb[0].mxu0
        %v5809 = vadd.f32 0.0, %v5808
        %v5810 = vpop.f32.mrb[0].mxu0
        %v5811 = vpop.f32.mrb[0].mxu0
        %v5812 = vadd.f32 0.0, %v5811
        %v5813 = vpop.f32.mrb[0].mxu0
        %5814 = vmatprep.mubr.bf16.mxu0 0
        %5815 = vmatmul.mubr.bf16.gmra.mrb[0].mxu0 %v2141
        %v5816 = vpop.f32.mrb[0].mxu0
        %v5817 = vadd.f32 0.0, %v5816
        %v5818 = vpop.f32.mrb[0].mxu0
        %v5819 = vpop.f32.mrb[0].mxu0
        %v5820 = vadd.f32 0.0, %v5819
        %v5821 = vpop.f32.mrb[0].mxu0
        %5822 = vmatprep.mubr.bf16.mxu0 0
        %5823 = vmatmul.mubr.bf16.gmra.mrb[0].mxu0 %v2144
        %v5824 = vpop.f32.mrb[0].mxu0
        %v5825 = vadd.f32 0.0, %v5824
        %v5826 = vpop.f32.mrb[0].mxu0
        %v5827 = vpop.f32.mrb[0].mxu0
        %v5828 = vadd.f32 0.0, %v5827
        %v5829 = vpop.f32.mrb[0].mxu0
        %5830 = vmatprep.mubr.bf16.mxu0 0
        %5831 = vmatmul.mubr.bf16.gmra.mrb[0].mxu0 %v2147
        %v5832 = vpop.f32.mrb[0].mxu0
        %v5833 = vadd.f32 0.0, %v5832
        %v5834 = vpop.f32.mrb[0].mxu0
        %v5835 = vpop.f32.mrb[0].mxu0
        %v5836 = vadd.f32 0.0, %v5835
        %v5837 = vpop.f32.mrb[0].mxu0
        %5838 = vmatprep.mubr.bf16.mxu0 0
        %5839 = vmatmul.mubr.bf16.gmra.mrb[0].mxu0 %v2150
        %v5840 = vpop.f32.mrb[0].mxu0
        %v5841 = vadd.f32 0.0, %v5840
        %v5842 = vpop.f32.mrb[0].mxu0
        %v5843 = vpop.f32.mrb[0].mxu0
        %v5844 = vadd.f32 0.0, %v5843
        %v5845 = vpop.f32.mrb[0].mxu0
        %5846 = vmatprep.mubr.bf16.mxu0 0
        %5847 = vmatmul.mubr.bf16.gmra.mrb[0].mxu0 %v2153
        %v5848 = vpop.f32.mrb[0].mxu0
        %v5849 = vadd.f32 0.0, %v5848
        %v5850 = vpop.f32.mrb[0].mxu0
        %v5851 = vpop.f32.mrb[0].mxu0
        %v5852 = vadd.f32 0.0, %v5851
        %v5853 = vpop.f32.mrb[0].mxu0
        %5854 = vmatprep.mubr.bf16.mxu0 0
        %5855 = vmatmul.mubr.bf16.gmra.mrb[0].mxu0 %v2156
        %v5856 = vpop.f32.mrb[0].mxu0
        %v5857 = vadd.f32 0.0, %v5856
        %v5858 = vpop.f32.mrb[0].mxu0
        %v5859 = vpop.f32.mrb[0].mxu0
        %v5860 = vadd.f32 0.0, %v5859
        %v5861 = vpop.f32.mrb[0].mxu0
        %5862 = vmatprep.mubr.bf16.mxu0 0
        %5863 = vmatmul.mubr.bf16.gmra.mrb[0].mxu0 %v2159
        %v5864 = vpop.f32.mrb[0].mxu0
        %v5865 = vadd.f32 0.0, %v5864
        %v5866 = vpop.f32.mrb[0].mxu0
        %v5867 = vpop.f32.mrb[0].mxu0
        %v5868 = vadd.f32 0.0, %v5867
        %v5869 = vpop.f32.mrb[0].mxu0
        %5870 = vmatprep.mubr.bf16.mxu0 0
        %5871 = vmatmul.mubr.bf16.gmra.mrb[0].mxu0 %v2162
        %v5872 = vpop.f32.mrb[0].mxu0
        %v5873 = vadd.f32 0.0, %v5872
        %v5874 = vpop.f32.mrb[0].mxu0
        %v5875 = vpop.f32.mrb[0].mxu0
        %v5876 = vadd.f32 0.0, %v5875
        %v5877 = vpop.f32.mrb[0].mxu0
        %5878 = vmatprep.mubr.bf16.mxu0 0
        %5879 = vmatmul.mubr.bf16.gmra.mrb[0].mxu0 %v2165
        %v5880 = vpop.f32.mrb[0].mxu0
        %v5881 = vadd.f32 0.0, %v5880
        %v5882 = vpop.f32.mrb[0].mxu0
        %v5883 = vpop.f32.mrb[0].mxu0
        %v5884 = vadd.f32 0.0, %v5883
        %v5885 = vpop.f32.mrb[0].mxu0
        %5886 = vmatprep.mubr.bf16.mxu0 0
        %5887 = vmatmul.mubr.bf16.gmra.mrb[0].mxu0 %v2168
        %v5888 = vpop.f32.mrb[0].mxu0
        %v5889 = vadd.f32 0.0, %v5888
        %v5890 = vpop.f32.mrb[0].mxu0
        %v5891 = vpop.f32.mrb[0].mxu0
        %v5892 = vadd.f32 0.0, %v5891
        %v5893 = vpop.f32.mrb[0].mxu0
        %5894 = vmatprep.mubr.bf16.mxu0 0
        %5895 = vmatmul.mubr.bf16.gmra.mrb[0].mxu0 %v2171
        %v5896 = vpop.f32.mrb[0].mxu0
        %v5897 = vadd.f32 0.0, %v5896
        %v5898 = vpop.f32.mrb[0].mxu0
        %v5899 = vpop.f32.mrb[0].mxu0
        %v5900 = vadd.f32 0.0, %v5899
        %v5901 = vpop.f32.mrb[0].mxu0
        %5902 = vdwg.mxu0
        %5903 = vmatprep.subr.bf16.mxu0 0
        %5904 = vmatpush1.bf16.msra.mxu0 %v1051
        %5905 = vmatprep.subr.bf16.mxu0 0
        %5906 = vmatpush1.bf16.msra.mxu0 0
        %5907 = vmatprep.subr.bf16.mxu0 0
        %5908 = vmatpush1.bf16.msra.mxu0 0
        %5909 = vmatprep.subr.bf16.mxu0 0
        %5910 = vmatpush1.bf16.msra.mxu0 0
        %5911 = vmatprep.subr.bf16.mxu0 0
        %5912 = vmatpush1.bf16.msra.mxu0 0
        %5913 = vmatprep.subr.bf16.mxu0 0
        %5914 = vmatpush1.bf16.msra.mxu0 0
        %5915 = vmatprep.subr.bf16.mxu0 0
        %5916 = vmatpush1.bf16.msra.mxu0 0
        %5917 = vmatprep.subr.bf16.mxu0 0
        %5918 = vmatpush1.bf16.msra.mxu0 0
        %5919 = vmatprep.subr.bf16.mxu0 0
        %5920 = vmatpush1.bf16.msra.mxu0 0
        %5921 = vmatprep.subr.bf16.mxu0 0
        %5922 = vmatpush1.bf16.msra.mxu0 0
        %5923 = vmatprep.subr.bf16.mxu0 0
        %5924 = vmatpush1.bf16.msra.mxu0 0
        %5925 = vmatprep.subr.bf16.mxu0 0
        %5926 = vmatpush1.bf16.msra.mxu0 0
        %5927 = vmatprep.subr.bf16.mxu0 0
        %5928 = vmatpush1.bf16.msra.mxu0 0
        %5929 = vmatprep.subr.bf16.mxu0 0
        %5930 = vmatpush1.bf16.msra.mxu0 0
        %5931 = vmatprep.subr.bf16.mxu0 0
        %5932 = vmatpush1.bf16.msra.mxu0 0
        %5933 = vmatprep.subr.bf16.mxu0 0
        %5934 = vmatpush1.bf16.msra.mxu0 0
        %5935 = vmatprep.mubr.bf16.mxu0 0
        %5936 = vmatmul.mubr.bf16.gmra.mrb[0].mxu0 %v2367
        %v5937 = vpop.f32.mrb[0].mxu0
        %v5938 = vadd.f32 0.0, %v5937
        %v5939 = vpop.f32.mrb[0].mxu0
        %v5940 = vpop.f32.mrb[0].mxu0
        %v5941 = vadd.f32 0.0, %v5940
        %v5942 = vpop.f32.mrb[0].mxu0
        %5943 = vmatprep.mubr.bf16.mxu0 0
        %5944 = vmatmul.mubr.bf16.gmra.mrb[0].mxu0 %v2370
        %v5945 = vpop.f32.mrb[0].mxu0
        %v5946 = vadd.f32 0.0, %v5945
        %v5947 = vpop.f32.mrb[0].mxu0
        %v5948 = vpop.f32.mrb[0].mxu0
        %v5949 = vadd.f32 0.0, %v5948
        %v5950 = vpop.f32.mrb[0].mxu0
        %5951 = vmatprep.mubr.bf16.mxu0 0
        %5952 = vmatmul.mubr.bf16.gmra.mrb[0].mxu0 %v2373
        %v5953 = vpop.f32.mrb[0].mxu0
        %v5954 = vadd.f32 0.0, %v5953
        %v5955 = vpop.f32.mrb[0].mxu0
        %v5956 = vpop.f32.mrb[0].mxu0
        %v5957 = vadd.f32 0.0, %v5956
        %v5958 = vpop.f32.mrb[0].mxu0
        %5959 = vmatprep.mubr.bf16.mxu0 0
        %5960 = vmatmul.mubr.bf16.gmra.mrb[0].mxu0 %v2376
        %v5961 = vpop.f32.mrb[0].mxu0
        %v5962 = vadd.f32 0.0, %v5961
        %v5963 = vpop.f32.mrb[0].mxu0
        %v5964 = vpop.f32.mrb[0].mxu0
        %v5965 = vadd.f32 0.0, %v5964
        %v5966 = vpop.f32.mrb[0].mxu0
        %5967 = vmatprep.mubr.bf16.mxu0 0
        %5968 = vmatmul.mubr.bf16.gmra.mrb[0].mxu0 %v2379
        %v5969 = vpop.f32.mrb[0].mxu0
        %v5970 = vadd.f32 0.0, %v5969
        %v5971 = vpop.f32.mrb[0].mxu0
        %v5972 = vpop.f32.mrb[0].mxu0
        %v5973 = vadd.f32 0.0, %v5972
        %v5974 = vpop.f32.mrb[0].mxu0
        %5975 = vmatprep.mubr.bf16.mxu0 0
        %5976 = vmatmul.mubr.bf16.gmra.mrb[0].mxu0 %v2382
        %v5977 = vpop.f32.mrb[0].mxu0
        %v5978 = vadd.f32 0.0, %v5977
        %v5979 = vpop.f32.mrb[0].mxu0
        %v5980 = vpop.f32.mrb[0].mxu0
        %v5981 = vadd.f32 0.0, %v5980
        %v5982 = vpop.f32.mrb[0].mxu0
        %5983 = vmatprep.mubr.bf16.mxu0 0
        %5984 = vmatmul.mubr.bf16.gmra.mrb[0].mxu0 %v2385
        %v5985 = vpop.f32.mrb[0].mxu0
        %v5986 = vadd.f32 0.0, %v5985
        %v5987 = vpop.f32.mrb[0].mxu0
        %v5988 = vpop.f32.mrb[0].mxu0
        %v5989 = vadd.f32 0.0, %v5988
        %v5990 = vpop.f32.mrb[0].mxu0
        %5991 = vmatprep.mubr.bf16.mxu0 0
        %5992 = vmatmul.mubr.bf16.gmra.mrb[0].mxu0 %v2388
        %v5993 = vpop.f32.mrb[0].mxu0
        %v5994 = vadd.f32 0.0, %v5993
        %v5995 = vpop.f32.mrb[0].mxu0
        %v5996 = vpop.f32.mrb[0].mxu0
        %v5997 = vadd.f32 0.0, %v5996
        %v5998 = vpop.f32.mrb[0].mxu0
        %5999 = vmatprep.mubr.bf16.mxu0 0
        %6000 = vmatmul.mubr.bf16.gmra.mrb[0].mxu0 %v2391
        %v6001 = vpop.f32.mrb[0].mxu0
        %v6002 = vadd.f32 0.0, %v6001
        %v6003 = vpop.f32.mrb[0].mxu0
        %v6004 = vpop.f32.mrb[0].mxu0
        %v6005 = vadd.f32 0.0, %v6004
        %v6006 = vpop.f32.mrb[0].mxu0
        %6007 = vmatprep.mubr.bf16.mxu0 0
        %6008 = vmatmul.mubr.bf16.gmra.mrb[0].mxu0 %v2394
        %v6009 = vpop.f32.mrb[0].mxu0
        %v6010 = vadd.f32 0.0, %v6009
        %v6011 = vpop.f32.mrb[0].mxu0
        %v6012 = vpop.f32.mrb[0].mxu0
        %v6013 = vadd.f32 0.0, %v6012
        %v6014 = vpop.f32.mrb[0].mxu0
        %6015 = vmatprep.mubr.bf16.mxu0 0
        %6016 = vmatmul.mubr.bf16.gmra.mrb[0].mxu0 %v2397
        %v6017 = vpop.f32.mrb[0].mxu0
        %v6018 = vadd.f32 0.0, %v6017
        %v6019 = vpop.f32.mrb[0].mxu0
        %v6020 = vpop.f32.mrb[0].mxu0
        %v6021 = vadd.f32 0.0, %v6020
        %v6022 = vpop.f32.mrb[0].mxu0
        %6023 = vmatprep.mubr.bf16.mxu0 0
        %6024 = vmatmul.mubr.bf16.gmra.mrb[0].mxu0 %v2400
        %v6025 = vpop.f32.mrb[0].mxu0
        %v6026 = vadd.f32 0.0, %v6025
        %v6027 = vpop.f32.mrb[0].mxu0
        %v6028 = vpop.f32.mrb[0].mxu0
        %v6029 = vadd.f32 0.0, %v6028
        %v6030 = vpop.f32.mrb[0].mxu0
        %6031 = vmatprep.mubr.bf16.mxu0 0
        %6032 = vmatmul.mubr.bf16.gmra.mrb[0].mxu0 %v2403
        %v6033 = vpop.f32.mrb[0].mxu0
        %v6034 = vadd.f32 0.0, %v6033
        %v6035 = vpop.f32.mrb[0].mxu0
        %v6036 = vpop.f32.mrb[0].mxu0
        %v6037 = vadd.f32 0.0, %v6036
        %v6038 = vpop.f32.mrb[0].mxu0
        %6039 = vmatprep.mubr.bf16.mxu0 0
        %6040 = vmatmul.mubr.bf16.gmra.mrb[0].mxu0 %v2406
        %v6041 = vpop.f32.mrb[0].mxu0
        %v6042 = vadd.f32 0.0, %v6041
        %v6043 = vpop.f32.mrb[0].mxu0
        %v6044 = vpop.f32.mrb[0].mxu0
        %v6045 = vadd.f32 0.0, %v6044
        %v6046 = vpop.f32.mrb[0].mxu0
        %6047 = vmatprep.mubr.bf16.mxu0 0
        %6048 = vmatmul.mubr.bf16.gmra.mrb[0].mxu0 %v2409
        %v6049 = vpop.f32.mrb[0].mxu0
        %v6050 = vadd.f32 0.0, %v6049
        %v6051 = vpop.f32.mrb[0].mxu0
        %v6052 = vpop.f32.mrb[0].mxu0
        %v6053 = vadd.f32 0.0, %v6052
        %v6054 = vpop.f32.mrb[0].mxu0
        %6055 = vmatprep.mubr.bf16.mxu0 0
        %6056 = vmatmul.mubr.bf16.gmra.mrb[0].mxu0 %v2412
        %v6057 = vpop.f32.mrb[0].mxu0
        %v6058 = vadd.f32 0.0, %v6057
        %v6059 = vpop.f32.mrb[0].mxu0
        %v6060 = vpop.f32.mrb[0].mxu0
        %v6061 = vadd.f32 0.0, %v6060
        %v6062 = vpop.f32.mrb[0].mxu0
        %6063 = vdwg.mxu0
        %6064 = vmatprep.subr.bf16.mxu0 0
        %6065 = vmatpush1.bf16.msra.mxu0 %v1053
        %6066 = vmatprep.subr.bf16.mxu0 0
        %6067 = vmatpush1.bf16.msra.mxu0 0
        %6068 = vmatprep.subr.bf16.mxu0 0
        %6069 = vmatpush1.bf16.msra.mxu0 0
        %6070 = vmatprep.subr.bf16.mxu0 0
        %6071 = vmatpush1.bf16.msra.mxu0 0
        %6072 = vmatprep.subr.bf16.mxu0 0
        %6073 = vmatpush1.bf16.msra.mxu0 0
        %6074 = vmatprep.subr.bf16.mxu0 0
        %6075 = vmatpush1.bf16.msra.mxu0 0
        %6076 = vmatprep.subr.bf16.mxu0 0
        %6077 = vmatpush1.bf16.msra.mxu0 0
        %6078 = vmatprep.subr.bf16.mxu0 0
        %6079 = vmatpush1.bf16.msra.mxu0 0
        %6080 = vmatprep.subr.bf16.mxu0 0
        %6081 = vmatpush1.bf16.msra.mxu0 0
        %6082 = vmatprep.subr.bf16.mxu0 0
        %6083 = vmatpush1.bf16.msra.mxu0 0
        %6084 = vmatprep.subr.bf16.mxu0 0
        %6085 = vmatpush1.bf16.msra.mxu0 0
        %6086 = vmatprep.subr.bf16.mxu0 0
        %6087 = vmatpush1.bf16.msra.mxu0 0
        %6088 = vmatprep.subr.bf16.mxu0 0
        %6089 = vmatpush1.bf16.msra.mxu0 0
        %6090 = vmatprep.subr.bf16.mxu0 0
        %6091 = vmatpush1.bf16.msra.mxu0 0
        %6092 = vmatprep.subr.bf16.mxu0 0
        %6093 = vmatpush1.bf16.msra.mxu0 0
        %6094 = vmatprep.subr.bf16.mxu0 0
        %6095 = vmatpush1.bf16.msra.mxu0 0
        %6096 = vmatprep.mubr.bf16.mxu0 0
        %6097 = vmatmul.mubr.bf16.gmra.mrb[0].mxu0 %v2608
        %v6098 = vpop.f32.mrb[0].mxu0
        %v6099 = vadd.f32 0.0, %v6098
        %v6100 = vpop.f32.mrb[0].mxu0
        %v6101 = vpop.f32.mrb[0].mxu0
        %v6102 = vadd.f32 0.0, %v6101
        %v6103 = vpop.f32.mrb[0].mxu0
        %6104 = vmatprep.mubr.bf16.mxu0 0
        %6105 = vmatmul.mubr.bf16.gmra.mrb[0].mxu0 %v2611
        %v6106 = vpop.f32.mrb[0].mxu0
        %v6107 = vadd.f32 0.0, %v6106
        %v6108 = vpop.f32.mrb[0].mxu0
        %v6109 = vpop.f32.mrb[0].mxu0
        %v6110 = vadd.f32 0.0, %v6109
        %v6111 = vpop.f32.mrb[0].mxu0
        %6112 = vmatprep.mubr.bf16.mxu0 0
        %6113 = vmatmul.mubr.bf16.gmra.mrb[0].mxu0 %v2614
        %v6114 = vpop.f32.mrb[0].mxu0
        %v6115 = vadd.f32 0.0, %v6114
        %v6116 = vpop.f32.mrb[0].mxu0
        %v6117 = vpop.f32.mrb[0].mxu0
        %v6118 = vadd.f32 0.0, %v6117
        %v6119 = vpop.f32.mrb[0].mxu0
        %6120 = vmatprep.mubr.bf16.mxu0 0
        %6121 = vmatmul.mubr.bf16.gmra.mrb[0].mxu0 %v2617
        %v6122 = vpop.f32.mrb[0].mxu0
        %v6123 = vadd.f32 0.0, %v6122
        %v6124 = vpop.f32.mrb[0].mxu0
        %v6125 = vpop.f32.mrb[0].mxu0
        %v6126 = vadd.f32 0.0, %v6125
        %v6127 = vpop.f32.mrb[0].mxu0
        %6128 = vmatprep.mubr.bf16.mxu0 0
        %6129 = vmatmul.mubr.bf16.gmra.mrb[0].mxu0 %v2620
        %v6130 = vpop.f32.mrb[0].mxu0
        %v6131 = vadd.f32 0.0, %v6130
        %v6132 = vpop.f32.mrb[0].mxu0
        %v6133 = vpop.f32.mrb[0].mxu0
        %v6134 = vadd.f32 0.0, %v6133
        %v6135 = vpop.f32.mrb[0].mxu0
        %6136 = vmatprep.mubr.bf16.mxu0 0
        %6137 = vmatmul.mubr.bf16.gmra.mrb[0].mxu0 %v2623
        %v6138 = vpop.f32.mrb[0].mxu0
        %v6139 = vadd.f32 0.0, %v6138
        %v6140 = vpop.f32.mrb[0].mxu0
        %v6141 = vpop.f32.mrb[0].mxu0
        %v6142 = vadd.f32 0.0, %v6141
        %v6143 = vpop.f32.mrb[0].mxu0
        %6144 = vmatprep.mubr.bf16.mxu0 0
        %6145 = vmatmul.mubr.bf16.gmra.mrb[0].mxu0 %v2626
        %v6146 = vpop.f32.mrb[0].mxu0
        %v6147 = vadd.f32 0.0, %v6146
        %v6148 = vpop.f32.mrb[0].mxu0
        %v6149 = vpop.f32.mrb[0].mxu0
        %v6150 = vadd.f32 0.0, %v6149
        %v6151 = vpop.f32.mrb[0].mxu0
        %6152 = vmatprep.mubr.bf16.mxu0 0
        %6153 = vmatmul.mubr.bf16.gmra.mrb[0].mxu0 %v2629
        %v6154 = vpop.f32.mrb[0].mxu0
        %v6155 = vadd.f32 0.0, %v6154
        %v6156 = vpop.f32.mrb[0].mxu0
        %v6157 = vpop.f32.mrb[0].mxu0
        %v6158 = vadd.f32 0.0, %v6157
        %v6159 = vpop.f32.mrb[0].mxu0
        %6160 = vmatprep.mubr.bf16.mxu0 0
        %6161 = vmatmul.mubr.bf16.gmra.mrb[0].mxu0 %v2632
        %v6162 = vpop.f32.mrb[0].mxu0
        %v6163 = vadd.f32 0.0, %v6162
        %v6164 = vpop.f32.mrb[0].mxu0
        %v6165 = vpop.f32.mrb[0].mxu0
        %v6166 = vadd.f32 0.0, %v6165
        %v6167 = vpop.f32.mrb[0].mxu0
        %6168 = vmatprep.mubr.bf16.mxu0 0
        %6169 = vmatmul.mubr.bf16.gmra.mrb[0].mxu0 %v2635
        %v6170 = vpop.f32.mrb[0].mxu0
        %v6171 = vadd.f32 0.0, %v6170
        %v6172 = vpop.f32.mrb[0].mxu0
        %v6173 = vpop.f32.mrb[0].mxu0
        %v6174 = vadd.f32 0.0, %v6173
        %v6175 = vpop.f32.mrb[0].mxu0
        %6176 = vmatprep.mubr.bf16.mxu0 0
        %6177 = vmatmul.mubr.bf16.gmra.mrb[0].mxu0 %v2638
        %v6178 = vpop.f32.mrb[0].mxu0
        %v6179 = vadd.f32 0.0, %v6178
        %v6180 = vpop.f32.mrb[0].mxu0
        %v6181 = vpop.f32.mrb[0].mxu0
        %v6182 = vadd.f32 0.0, %v6181
        %v6183 = vpop.f32.mrb[0].mxu0
        %6184 = vmatprep.mubr.bf16.mxu0 0
        %6185 = vmatmul.mubr.bf16.gmra.mrb[0].mxu0 %v2641
        %v6186 = vpop.f32.mrb[0].mxu0
        %v6187 = vadd.f32 0.0, %v6186
        %v6188 = vpop.f32.mrb[0].mxu0
        %v6189 = vpop.f32.mrb[0].mxu0
        %v6190 = vadd.f32 0.0, %v6189
        %v6191 = vpop.f32.mrb[0].mxu0
        %6192 = vmatprep.mubr.bf16.mxu0 0
        %6193 = vmatmul.mubr.bf16.gmra.mrb[0].mxu0 %v2644
        %v6194 = vpop.f32.mrb[0].mxu0
        %v6195 = vadd.f32 0.0, %v6194
        %v6196 = vpop.f32.mrb[0].mxu0
        %v6197 = vpop.f32.mrb[0].mxu0
        %v6198 = vadd.f32 0.0, %v6197
        %v6199 = vpop.f32.mrb[0].mxu0
        %6200 = vmatprep.mubr.bf16.mxu0 0
        %6201 = vmatmul.mubr.bf16.gmra.mrb[0].mxu0 %v2647
        %v6202 = vpop.f32.mrb[0].mxu0
        %v6203 = vadd.f32 0.0, %v6202
        %v6204 = vpop.f32.mrb[0].mxu0
        %v6205 = vpop.f32.mrb[0].mxu0
        %v6206 = vadd.f32 0.0, %v6205
        %v6207 = vpop.f32.mrb[0].mxu0
        %6208 = vmatprep.mubr.bf16.mxu0 0
        %6209 = vmatmul.mubr.bf16.gmra.mrb[0].mxu0 %v2650
        %v6210 = vpop.f32.mrb[0].mxu0
        %v6211 = vadd.f32 0.0, %v6210
        %v6212 = vpop.f32.mrb[0].mxu0
        %v6213 = vpop.f32.mrb[0].mxu0
        %v6214 = vadd.f32 0.0, %v6213
        %v6215 = vpop.f32.mrb[0].mxu0
        %6216 = vmatprep.mubr.bf16.mxu0 0
        %6217 = vmatmul.mubr.bf16.gmra.mrb[0].mxu0 %v2653
        %v6218 = vpop.f32.mrb[0].mxu0
        %v6219 = vadd.f32 0.0, %v6218
        %v6220 = vpop.f32.mrb[0].mxu0
        %v6221 = vpop.f32.mrb[0].mxu0
        %v6222 = vadd.f32 0.0, %v6221
        %v6223 = vpop.f32.mrb[0].mxu0
        %6224 = vdwg.mxu0
        %6225 = vmatprep.subr.bf16.mxu0 0
        %6226 = vmatpush1.bf16.msra.mxu0 %v1055
        %6227 = vmatprep.subr.bf16.mxu0 0
        %6228 = vmatpush1.bf16.msra.mxu0 0
        %6229 = vmatprep.subr.bf16.mxu0 0
        %6230 = vmatpush1.bf16.msra.mxu0 0
        %6231 = vmatprep.subr.bf16.mxu0 0
        %6232 = vmatpush1.bf16.msra.mxu0 0
        %6233 = vmatprep.subr.bf16.mxu0 0
        %6234 = vmatpush1.bf16.msra.mxu0 0
        %6235 = vmatprep.subr.bf16.mxu0 0
        %6236 = vmatpush1.bf16.msra.mxu0 0
        %6237 = vmatprep.subr.bf16.mxu0 0
        %6238 = vmatpush1.bf16.msra.mxu0 0
        %6239 = vmatprep.subr.bf16.mxu0 0
        %6240 = vmatpush1.bf16.msra.mxu0 0
        %6241 = vmatprep.subr.bf16.mxu0 0
        %6242 = vmatpush1.bf16.msra.mxu0 0
        %6243 = vmatprep.subr.bf16.mxu0 0
        %6244 = vmatpush1.bf16.msra.mxu0 0
        %6245 = vmatprep.subr.bf16.mxu0 0
        %6246 = vmatpush1.bf16.msra.mxu0 0
        %6247 = vmatprep.subr.bf16.mxu0 0
        %6248 = vmatpush1.bf16.msra.mxu0 0
        %6249 = vmatprep.subr.bf16.mxu0 0
        %6250 = vmatpush1.bf16.msra.mxu0 0
        %6251 = vmatprep.subr.bf16.mxu0 0
        %6252 = vmatpush1.bf16.msra.mxu0 0
        %6253 = vmatprep.subr.bf16.mxu0 0
        %6254 = vmatpush1.bf16.msra.mxu0 0
        %6255 = vmatprep.subr.bf16.mxu0 0
        %6256 = vmatpush1.bf16.msra.mxu0 0
        %6257 = vmatprep.mubr.bf16.mxu0 0
        %6258 = vmatmul.mubr.bf16.gmra.mrb[0].mxu0 %v2849
        %v6259 = vpop.f32.mrb[0].mxu0
        %v6260 = vadd.f32 0.0, %v6259
        %v6261 = vpop.f32.mrb[0].mxu0
        %v6262 = vpop.f32.mrb[0].mxu0
        %v6263 = vadd.f32 0.0, %v6262
        %v6264 = vpop.f32.mrb[0].mxu0
        %6265 = vmatprep.mubr.bf16.mxu0 0
        %6266 = vmatmul.mubr.bf16.gmra.mrb[0].mxu0 %v2852
        %v6267 = vpop.f32.mrb[0].mxu0
        %v6268 = vadd.f32 0.0, %v6267
        %v6269 = vpop.f32.mrb[0].mxu0
        %v6270 = vpop.f32.mrb[0].mxu0
        %v6271 = vadd.f32 0.0, %v6270
        %v6272 = vpop.f32.mrb[0].mxu0
        %6273 = vmatprep.mubr.bf16.mxu0 0
        %6274 = vmatmul.mubr.bf16.gmra.mrb[0].mxu0 %v2855
        %v6275 = vpop.f32.mrb[0].mxu0
        %v6276 = vadd.f32 0.0, %v6275
        %v6277 = vpop.f32.mrb[0].mxu0
        %v6278 = vpop.f32.mrb[0].mxu0
        %v6279 = vadd.f32 0.0, %v6278
        %v6280 = vpop.f32.mrb[0].mxu0
        %6281 = vmatprep.mubr.bf16.mxu0 0
        %6282 = vmatmul.mubr.bf16.gmra.mrb[0].mxu0 %v2858
        %v6283 = vpop.f32.mrb[0].mxu0
        %v6284 = vadd.f32 0.0, %v6283
        %v6285 = vpop.f32.mrb[0].mxu0
        %v6286 = vpop.f32.mrb[0].mxu0
        %v6287 = vadd.f32 0.0, %v6286
        %v6288 = vpop.f32.mrb[0].mxu0
        %6289 = vmatprep.mubr.bf16.mxu0 0
        %6290 = vmatmul.mubr.bf16.gmra.mrb[0].mxu0 %v2861
        %v6291 = vpop.f32.mrb[0].mxu0
        %v6292 = vadd.f32 0.0, %v6291
        %v6293 = vpop.f32.mrb[0].mxu0
        %v6294 = vpop.f32.mrb[0].mxu0
        %v6295 = vadd.f32 0.0, %v6294
        %v6296 = vpop.f32.mrb[0].mxu0
        %6297 = vmatprep.mubr.bf16.mxu0 0
        %6298 = vmatmul.mubr.bf16.gmra.mrb[0].mxu0 %v2864
        %v6299 = vpop.f32.mrb[0].mxu0
        %v6300 = vadd.f32 0.0, %v6299
        %v6301 = vpop.f32.mrb[0].mxu0
        %v6302 = vpop.f32.mrb[0].mxu0
        %v6303 = vadd.f32 0.0, %v6302
        %v6304 = vpop.f32.mrb[0].mxu0
        %6305 = vmatprep.mubr.bf16.mxu0 0
        %6306 = vmatmul.mubr.bf16.gmra.mrb[0].mxu0 %v2867
        %v6307 = vpop.f32.mrb[0].mxu0
        %v6308 = vadd.f32 0.0, %v6307
        %v6309 = vpop.f32.mrb[0].mxu0
        %v6310 = vpop.f32.mrb[0].mxu0
        %v6311 = vadd.f32 0.0, %v6310
        %v6312 = vpop.f32.mrb[0].mxu0
        %6313 = vmatprep.mubr.bf16.mxu0 0
        %6314 = vmatmul.mubr.bf16.gmra.mrb[0].mxu0 %v2870
        %v6315 = vpop.f32.mrb[0].mxu0
        %v6316 = vadd.f32 0.0, %v6315
        %v6317 = vpop.f32.mrb[0].mxu0
        %v6318 = vpop.f32.mrb[0].mxu0
        %v6319 = vadd.f32 0.0, %v6318
        %v6320 = vpop.f32.mrb[0].mxu0
        %6321 = vmatprep.mubr.bf16.mxu0 0
        %6322 = vmatmul.mubr.bf16.gmra.mrb[0].mxu0 %v2873
        %v6323 = vpop.f32.mrb[0].mxu0
        %v6324 = vadd.f32 0.0, %v6323
        %v6325 = vpop.f32.mrb[0].mxu0
        %v6326 = vpop.f32.mrb[0].mxu0
        %v6327 = vadd.f32 0.0, %v6326
        %v6328 = vpop.f32.mrb[0].mxu0
        %6329 = vmatprep.mubr.bf16.mxu0 0
        %6330 = vmatmul.mubr.bf16.gmra.mrb[0].mxu0 %v2876
        %v6331 = vpop.f32.mrb[0].mxu0
        %v6332 = vadd.f32 0.0, %v6331
        %v6333 = vpop.f32.mrb[0].mxu0
        %v6334 = vpop.f32.mrb[0].mxu0
        %v6335 = vadd.f32 0.0, %v6334
        %v6336 = vpop.f32.mrb[0].mxu0
        %6337 = vmatprep.mubr.bf16.mxu0 0
        %6338 = vmatmul.mubr.bf16.gmra.mrb[0].mxu0 %v2879
        %v6339 = vpop.f32.mrb[0].mxu0
        %v6340 = vadd.f32 0.0, %v6339
        %v6341 = vpop.f32.mrb[0].mxu0
        %v6342 = vpop.f32.mrb[0].mxu0
        %v6343 = vadd.f32 0.0, %v6342
        %v6344 = vpop.f32.mrb[0].mxu0
        %6345 = vmatprep.mubr.bf16.mxu0 0
        %6346 = vmatmul.mubr.bf16.gmra.mrb[0].mxu0 %v2882
        %v6347 = vpop.f32.mrb[0].mxu0
        %v6348 = vadd.f32 0.0, %v6347
        %v6349 = vpop.f32.mrb[0].mxu0
        %v6350 = vpop.f32.mrb[0].mxu0
        %v6351 = vadd.f32 0.0, %v6350
        %v6352 = vpop.f32.mrb[0].mxu0
        %6353 = vmatprep.mubr.bf16.mxu0 0
        %6354 = vmatmul.mubr.bf16.gmra.mrb[0].mxu0 %v2885
        %v6355 = vpop.f32.mrb[0].mxu0
        %v6356 = vadd.f32 0.0, %v6355
        %v6357 = vpop.f32.mrb[0].mxu0
        %v6358 = vpop.f32.mrb[0].mxu0
        %v6359 = vadd.f32 0.0, %v6358
        %v6360 = vpop.f32.mrb[0].mxu0
        %6361 = vmatprep.mubr.bf16.mxu0 0
        %6362 = vmatmul.mubr.bf16.gmra.mrb[0].mxu0 %v2888
        %v6363 = vpop.f32.mrb[0].mxu0
        %v6364 = vadd.f32 0.0, %v6363
        %v6365 = vpop.f32.mrb[0].mxu0
        %v6366 = vpop.f32.mrb[0].mxu0
        %v6367 = vadd.f32 0.0, %v6366
        %v6368 = vpop.f32.mrb[0].mxu0
        %6369 = vmatprep.mubr.bf16.mxu0 0
        %6370 = vmatmul.mubr.bf16.gmra.mrb[0].mxu0 %v2891
        %v6371 = vpop.f32.mrb[0].mxu0
        %v6372 = vadd.f32 0.0, %v6371
        %v6373 = vpop.f32.mrb[0].mxu0
        %v6374 = vpop.f32.mrb[0].mxu0
        %v6375 = vadd.f32 0.0, %v6374
        %v6376 = vpop.f32.mrb[0].mxu0
        %6377 = vmatprep.mubr.bf16.mxu0 0
        %6378 = vmatmul.mubr.bf16.gmra.mrb[0].mxu0 %v2894
        %v6379 = vpop.f32.mrb[0].mxu0
        %v6380 = vadd.f32 0.0, %v6379
        %v6381 = vpop.f32.mrb[0].mxu0
        %v6382 = vpop.f32.mrb[0].mxu0
        %v6383 = vadd.f32 0.0, %v6382
        %v6384 = vpop.f32.mrb[0].mxu0
        %6385 = vdwg.mxu0
        %v6386 = vmax.f32 %v5133, %v5136
        %v6387 = vmax.f32 %v6386, %v5141
        %v6388 = vmax.f32 %v6387, %v5144
        %v6389 = vmax.f32 %v6388, %v5149
        %v6390 = vmax.f32 %v6389, %v5152
        %v6391 = vmax.f32 %v6390, %v5157
        %v6392 = vmax.f32 %v6391, %v5160
        %v6393 = vmax.f32 %v6392, %v5165
        %v6394 = vmax.f32 %v6393, %v5168
        %v6395 = vmax.f32 %v6394, %v5173
        %v6396 = vmax.f32 %v6395, %v5176
        %v6397 = vmax.f32 %v6396, %v5181
        %v6398 = vmax.f32 %v6397, %v5184
        %v6399 = vmax.f32 %v6398, %v5189
        %v6400 = vmax.f32 %v6399, %v5192
        %v6401 = vmax.f32 %v6400, %v5197
        %v6402 = vmax.f32 %v6401, %v5200
        %v6403 = vmax.f32 %v6402, %v5205
        %v6404 = vmax.f32 %v6403, %v5208
        %v6405 = vmax.f32 %v6404, %v5213
        %v6406 = vmax.f32 %v6405, %v5216
        %v6407 = vmax.f32 %v6406, %v5221
        %v6408 = vmax.f32 %v6407, %v5224
        %v6409 = vmax.f32 %v6408, %v5229
        %v6410 = vmax.f32 %v6409, %v5232
        %v6411 = vmax.f32 %v6410, %v5237
        %v6412 = vmax.f32 %v6411, %v5240
        %v6413 = vmax.f32 %v6412, %v5245
        %v6414 = vmax.f32 %v6413, %v5248
        %v6415 = vmax.f32 %v6414, %v5253
        %v6416 = vmax.f32 %v6415, %v5256
        %v6417 = vrot.slane %v6416, 4
        %v6418 = vmax.f32 %v6416, %v6417
        %v6419 = vrot.slane %v6418, 2
        %v6420 = vmax.f32 %v6418, %v6419
        %v6421 = vrot.slane %v6420, 1
        %v6422 = vmax.f32 %v6420, %v6421
        %v6423 = vmax.f32 %v5294, %v5297
        %v6424 = vmax.f32 %v6423, %v5302
        %v6425 = vmax.f32 %v6424, %v5305
        %v6426 = vmax.f32 %v6425, %v5310
        %v6427 = vmax.f32 %v6426, %v5313
        %v6428 = vmax.f32 %v6427, %v5318
        %v6429 = vmax.f32 %v6428, %v5321
        %v6430 = vmax.f32 %v6429, %v5326
        %v6431 = vmax.f32 %v6430, %v5329
        %v6432 = vmax.f32 %v6431, %v5334
        %v6433 = vmax.f32 %v6432, %v5337
        %v6434 = vmax.f32 %v6433, %v5342
        %v6435 = vmax.f32 %v6434, %v5345
        %v6436 = vmax.f32 %v6435, %v5350
        %v6437 = vmax.f32 %v6436, %v5353
        %v6438 = vmax.f32 %v6437, %v5358
        %v6439 = vmax.f32 %v6438, %v5361
        %v6440 = vmax.f32 %v6439, %v5366
        %v6441 = vmax.f32 %v6440, %v5369
        %v6442 = vmax.f32 %v6441, %v5374
        %v6443 = vmax.f32 %v6442, %v5377
        %v6444 = vmax.f32 %v6443, %v5382
        %v6445 = vmax.f32 %v6444, %v5385
        %v6446 = vmax.f32 %v6445, %v5390
        %v6447 = vmax.f32 %v6446, %v5393
        %v6448 = vmax.f32 %v6447, %v5398
        %v6449 = vmax.f32 %v6448, %v5401
        %v6450 = vmax.f32 %v6449, %v5406
        %v6451 = vmax.f32 %v6450, %v5409
        %v6452 = vmax.f32 %v6451, %v5414
        %v6453 = vmax.f32 %v6452, %v5417
        %v6454 = vrot.slane %v6453, 4
        %v6455 = vmax.f32 %v6453, %v6454
        %v6456 = vrot.slane %v6455, 2
        %v6457 = vmax.f32 %v6455, %v6456
        %v6458 = vrot.slane %v6457, 1
        %v6459 = vmax.f32 %v6457, %v6458
        %v6460 = vmax.f32 %v5455, %v5458
        %v6461 = vmax.f32 %v6460, %v5463
        %v6462 = vmax.f32 %v6461, %v5466
        %v6463 = vmax.f32 %v6462, %v5471
        %v6464 = vmax.f32 %v6463, %v5474
        %v6465 = vmax.f32 %v6464, %v5479
        %v6466 = vmax.f32 %v6465, %v5482
        %v6467 = vmax.f32 %v6466, %v5487
        %v6468 = vmax.f32 %v6467, %v5490
        %v6469 = vmax.f32 %v6468, %v5495
        %v6470 = vmax.f32 %v6469, %v5498
        %v6471 = vmax.f32 %v6470, %v5503
        %v6472 = vmax.f32 %v6471, %v5506
        %v6473 = vmax.f32 %v6472, %v5511
        %v6474 = vmax.f32 %v6473, %v5514
        %v6475 = vmax.f32 %v6474, %v5519
        %v6476 = vmax.f32 %v6475, %v5522
        %v6477 = vmax.f32 %v6476, %v5527
        %v6478 = vmax.f32 %v6477, %v5530
        %v6479 = vmax.f32 %v6478, %v5535
        %v6480 = vmax.f32 %v6479, %v5538
        %v6481 = vmax.f32 %v6480, %v5543
        %v6482 = vmax.f32 %v6481, %v5546
        %v6483 = vmax.f32 %v6482, %v5551
        %v6484 = vmax.f32 %v6483, %v5554
        %v6485 = vmax.f32 %v6484, %v5559
        %v6486 = vmax.f32 %v6485, %v5562
        %v6487 = vmax.f32 %v6486, %v5567
        %v6488 = vmax.f32 %v6487, %v5570
        %v6489 = vmax.f32 %v6488, %v5575
        %v6490 = vmax.f32 %v6489, %v5578
        %v6491 = vrot.slane %v6490, 4
        %v6492 = vmax.f32 %v6490, %v6491
        %v6493 = vrot.slane %v6492, 2
        %v6494 = vmax.f32 %v6492, %v6493
        %v6495 = vrot.slane %v6494, 1
        %v6496 = vmax.f32 %v6494, %v6495
        %v6497 = vmax.f32 %v5616, %v5619
        %v6498 = vmax.f32 %v6497, %v5624
        %v6499 = vmax.f32 %v6498, %v5627
        %v6500 = vmax.f32 %v6499, %v5632
        %v6501 = vmax.f32 %v6500, %v5635
        %v6502 = vmax.f32 %v6501, %v5640
        %v6503 = vmax.f32 %v6502, %v5643
        %v6504 = vmax.f32 %v6503, %v5648
        %v6505 = vmax.f32 %v6504, %v5651
        %v6506 = vmax.f32 %v6505, %v5656
        %v6507 = vmax.f32 %v6506, %v5659
        %v6508 = vmax.f32 %v6507, %v5664
        %v6509 = vmax.f32 %v6508, %v5667
        %v6510 = vmax.f32 %v6509, %v5672
        %v6511 = vmax.f32 %v6510, %v5675
        %v6512 = vmax.f32 %v6511, %v5680
        %v6513 = vmax.f32 %v6512, %v5683
        %v6514 = vmax.f32 %v6513, %v5688
        %v6515 = vmax.f32 %v6514, %v5691
        %v6516 = vmax.f32 %v6515, %v5696
        %v6517 = vmax.f32 %v6516, %v5699
        %v6518 = vmax.f32 %v6517, %v5704
        %v6519 = vmax.f32 %v6518, %v5707
        %v6520 = vmax.f32 %v6519, %v5712
        %v6521 = vmax.f32 %v6520, %v5715
        %v6522 = vmax.f32 %v6521, %v5720
        %v6523 = vmax.f32 %v6522, %v5723
        %v6524 = vmax.f32 %v6523, %v5728
        %v6525 = vmax.f32 %v6524, %v5731
        %v6526 = vmax.f32 %v6525, %v5736
        %v6527 = vmax.f32 %v6526, %v5739
        %v6528 = vrot.slane %v6527, 4
        %v6529 = vmax.f32 %v6527, %v6528
        %v6530 = vrot.slane %v6529, 2
        %v6531 = vmax.f32 %v6529, %v6530
        %v6532 = vrot.slane %v6531, 1
        %v6533 = vmax.f32 %v6531, %v6532
        %v6534 = vmax.f32 %v5777, %v5780
        %v6535 = vmax.f32 %v6534, %v5785
        %v6536 = vmax.f32 %v6535, %v5788
        %v6537 = vmax.f32 %v6536, %v5793
        %v6538 = vmax.f32 %v6537, %v5796
        %v6539 = vmax.f32 %v6538, %v5801
        %v6540 = vmax.f32 %v6539, %v5804
        %v6541 = vmax.f32 %v6540, %v5809
        %v6542 = vmax.f32 %v6541, %v5812
        %v6543 = vmax.f32 %v6542, %v5817
        %v6544 = vmax.f32 %v6543, %v5820
        %v6545 = vmax.f32 %v6544, %v5825
        %v6546 = vmax.f32 %v6545, %v5828
        %v6547 = vmax.f32 %v6546, %v5833
        %v6548 = vmax.f32 %v6547, %v5836
        %v6549 = vmax.f32 %v6548, %v5841
        %v6550 = vmax.f32 %v6549, %v5844
        %v6551 = vmax.f32 %v6550, %v5849
        %v6552 = vmax.f32 %v6551, %v5852
        %v6553 = vmax.f32 %v6552, %v5857
        %v6554 = vmax.f32 %v6553, %v5860
        %v6555 = vmax.f32 %v6554, %v5865
        %v6556 = vmax.f32 %v6555, %v5868
        %v6557 = vmax.f32 %v6556, %v5873
        %v6558 = vmax.f32 %v6557, %v5876
        %v6559 = vmax.f32 %v6558, %v5881
        %v6560 = vmax.f32 %v6559, %v5884
        %v6561 = vmax.f32 %v6560, %v5889
        %v6562 = vmax.f32 %v6561, %v5892
        %v6563 = vmax.f32 %v6562, %v5897
        %v6564 = vmax.f32 %v6563, %v5900
        %v6565 = vrot.slane %v6564, 4
        %v6566 = vmax.f32 %v6564, %v6565
        %v6567 = vrot.slane %v6566, 2
        %v6568 = vmax.f32 %v6566, %v6567
        %v6569 = vrot.slane %v6568, 1
        %v6570 = vmax.f32 %v6568, %v6569
        %v6571 = vmax.f32 %v5938, %v5941
        %v6572 = vmax.f32 %v6571, %v5946
        %v6573 = vmax.f32 %v6572, %v5949
        %v6574 = vmax.f32 %v6573, %v5954
        %v6575 = vmax.f32 %v6574, %v5957
        %v6576 = vmax.f32 %v6575, %v5962
        %v6577 = vmax.f32 %v6576, %v5965
        %v6578 = vmax.f32 %v6577, %v5970
        %v6579 = vmax.f32 %v6578, %v5973
        %v6580 = vmax.f32 %v6579, %v5978
        %v6581 = vmax.f32 %v6580, %v5981
        %v6582 = vmax.f32 %v6581, %v5986
        %v6583 = vmax.f32 %v6582, %v5989
        %v6584 = vmax.f32 %v6583, %v5994
        %v6585 = vmax.f32 %v6584, %v5997
        %v6586 = vmax.f32 %v6585, %v6002
        %v6587 = vmax.f32 %v6586, %v6005
        %v6588 = vmax.f32 %v6587, %v6010
        %v6589 = vmax.f32 %v6588, %v6013
        %v6590 = vmax.f32 %v6589, %v6018
        %v6591 = vmax.f32 %v6590, %v6021
        %v6592 = vmax.f32 %v6591, %v6026
        %v6593 = vmax.f32 %v6592, %v6029
        %v6594 = vmax.f32 %v6593, %v6034
        %v6595 = vmax.f32 %v6594, %v6037
        %v6596 = vmax.f32 %v6595, %v6042
        %v6597 = vmax.f32 %v6596, %v6045
        %v6598 = vmax.f32 %v6597, %v6050
        %v6599 = vmax.f32 %v6598, %v6053
        %v6600 = vmax.f32 %v6599, %v6058
        %v6601 = vmax.f32 %v6600, %v6061
        %v6602 = vrot.slane %v6601, 4
        %v6603 = vmax.f32 %v6601, %v6602
        %v6604 = vrot.slane %v6603, 2
        %v6605 = vmax.f32 %v6603, %v6604
        %v6606 = vrot.slane %v6605, 1
        %v6607 = vmax.f32 %v6605, %v6606
        %v6608 = vmax.f32 %v6099, %v6102
        %v6609 = vmax.f32 %v6608, %v6107
        %v6610 = vmax.f32 %v6609, %v6110
        %v6611 = vmax.f32 %v6610, %v6115
        %v6612 = vmax.f32 %v6611, %v6118
        %v6613 = vmax.f32 %v6612, %v6123
        %v6614 = vmax.f32 %v6613, %v6126
        %v6615 = vmax.f32 %v6614, %v6131
        %v6616 = vmax.f32 %v6615, %v6134
        %v6617 = vmax.f32 %v6616, %v6139
        %v6618 = vmax.f32 %v6617, %v6142
        %v6619 = vmax.f32 %v6618, %v6147
        %v6620 = vmax.f32 %v6619, %v6150
        %v6621 = vmax.f32 %v6620, %v6155
        %v6622 = vmax.f32 %v6621, %v6158
        %v6623 = vmax.f32 %v6622, %v6163
        %v6624 = vmax.f32 %v6623, %v6166
        %v6625 = vmax.f32 %v6624, %v6171
        %v6626 = vmax.f32 %v6625, %v6174
        %v6627 = vmax.f32 %v6626, %v6179
        %v6628 = vmax.f32 %v6627, %v6182
        %v6629 = vmax.f32 %v6628, %v6187
        %v6630 = vmax.f32 %v6629, %v6190
        %v6631 = vmax.f32 %v6630, %v6195
        %v6632 = vmax.f32 %v6631, %v6198
        %v6633 = vmax.f32 %v6632, %v6203
        %v6634 = vmax.f32 %v6633, %v6206
        %v6635 = vmax.f32 %v6634, %v6211
        %v6636 = vmax.f32 %v6635, %v6214
        %v6637 = vmax.f32 %v6636, %v6219
        %v6638 = vmax.f32 %v6637, %v6222
        %v6639 = vrot.slane %v6638, 4
        %v6640 = vmax.f32 %v6638, %v6639
        %v6641 = vrot.slane %v6640, 2
        %v6642 = vmax.f32 %v6640, %v6641
        %v6643 = vrot.slane %v6642, 1
        %v6644 = vmax.f32 %v6642, %v6643
        %v6645 = vmax.f32 %v6260, %v6263
        %v6646 = vmax.f32 %v6645, %v6268
        %v6647 = vmax.f32 %v6646, %v6271
        %v6648 = vmax.f32 %v6647, %v6276
        %v6649 = vmax.f32 %v6648, %v6279
        %v6650 = vmax.f32 %v6649, %v6284
        %v6651 = vmax.f32 %v6650, %v6287
        %v6652 = vmax.f32 %v6651, %v6292
        %v6653 = vmax.f32 %v6652, %v6295
        %v6654 = vmax.f32 %v6653, %v6300
        %v6655 = vmax.f32 %v6654, %v6303
        %v6656 = vmax.f32 %v6655, %v6308
        %v6657 = vmax.f32 %v6656, %v6311
        %v6658 = vmax.f32 %v6657, %v6316
        %v6659 = vmax.f32 %v6658, %v6319
        %v6660 = vmax.f32 %v6659, %v6324
        %v6661 = vmax.f32 %v6660, %v6327
        %v6662 = vmax.f32 %v6661, %v6332
        %v6663 = vmax.f32 %v6662, %v6335
        %v6664 = vmax.f32 %v6663, %v6340
        %v6665 = vmax.f32 %v6664, %v6343
        %v6666 = vmax.f32 %v6665, %v6348
        %v6667 = vmax.f32 %v6666, %v6351
        %v6668 = vmax.f32 %v6667, %v6356
        %v6669 = vmax.f32 %v6668, %v6359
        %v6670 = vmax.f32 %v6669, %v6364
        %v6671 = vmax.f32 %v6670, %v6367
        %v6672 = vmax.f32 %v6671, %v6372
        %v6673 = vmax.f32 %v6672, %v6375
        %v6674 = vmax.f32 %v6673, %v6380
        %v6675 = vmax.f32 %v6674, %v6383
        %v6676 = vrot.slane %v6675, 4
        %v6677 = vmax.f32 %v6675, %v6676
        %v6678 = vrot.slane %v6677, 2
        %v6679 = vmax.f32 %v6677, %v6678
        %v6680 = vrot.slane %v6679, 1
        %v6681 = vmax.f32 %v6679, %v6680
        %v6682 = vsub.f32 %v5133, %v6422
        %v6683 = vsub.f32 %v5136, %v6422
        %v6684 = vsub.f32 %v5141, %v6422
        %v6685 = vsub.f32 %v5144, %v6422
        %v6686 = vsub.f32 %v5149, %v6422
        %v6687 = vsub.f32 %v5152, %v6422
        %v6688 = vsub.f32 %v5157, %v6422
        %v6689 = vsub.f32 %v5160, %v6422
        %v6690 = vsub.f32 %v5165, %v6422
        %v6691 = vsub.f32 %v5168, %v6422
        %v6692 = vsub.f32 %v5173, %v6422
        %v6693 = vsub.f32 %v5176, %v6422
        %v6694 = vsub.f32 %v5181, %v6422
        %v6695 = vsub.f32 %v5184, %v6422
        %v6696 = vsub.f32 %v5189, %v6422
        %v6697 = vsub.f32 %v5192, %v6422
        %v6698 = vsub.f32 %v5197, %v6422
        %v6699 = vsub.f32 %v5200, %v6422
        %v6700 = vsub.f32 %v5205, %v6422
        %v6701 = vsub.f32 %v5208, %v6422
        %v6702 = vsub.f32 %v5213, %v6422
        %v6703 = vsub.f32 %v5216, %v6422
        %v6704 = vsub.f32 %v5221, %v6422
        %v6705 = vsub.f32 %v5224, %v6422
        %v6706 = vsub.f32 %v5229, %v6422
        %v6707 = vsub.f32 %v5232, %v6422
        %v6708 = vsub.f32 %v5237, %v6422
        %v6709 = vsub.f32 %v5240, %v6422
        %v6710 = vsub.f32 %v5245, %v6422
        %v6711 = vsub.f32 %v5248, %v6422
        %v6712 = vsub.f32 %v5253, %v6422
        %v6713 = vsub.f32 %v5256, %v6422
        %v6714 = vsub.f32 %v5294, %v6459
        %v6715 = vsub.f32 %v5297, %v6459
        %v6716 = vsub.f32 %v5302, %v6459
        %v6717 = vsub.f32 %v5305, %v6459
        %v6718 = vsub.f32 %v5310, %v6459
        %v6719 = vsub.f32 %v5313, %v6459
        %v6720 = vsub.f32 %v5318, %v6459
        %v6721 = vsub.f32 %v5321, %v6459
        %v6722 = vsub.f32 %v5326, %v6459
        %v6723 = vsub.f32 %v5329, %v6459
        %v6724 = vsub.f32 %v5334, %v6459
        %v6725 = vsub.f32 %v5337, %v6459
        %v6726 = vsub.f32 %v5342, %v6459
        %v6727 = vsub.f32 %v5345, %v6459
        %v6728 = vsub.f32 %v5350, %v6459
        %v6729 = vsub.f32 %v5353, %v6459
        %v6730 = vsub.f32 %v5358, %v6459
        %v6731 = vsub.f32 %v5361, %v6459
        %v6732 = vsub.f32 %v5366, %v6459
        %v6733 = vsub.f32 %v5369, %v6459
        %v6734 = vsub.f32 %v5374, %v6459
        %v6735 = vsub.f32 %v5377, %v6459
        %v6736 = vsub.f32 %v5382, %v6459
        %v6737 = vsub.f32 %v5385, %v6459
        %v6738 = vsub.f32 %v5390, %v6459
        %v6739 = vsub.f32 %v5393, %v6459
        %v6740 = vsub.f32 %v5398, %v6459
        %v6741 = vsub.f32 %v5401, %v6459
        %v6742 = vsub.f32 %v5406, %v6459
        %v6743 = vsub.f32 %v5409, %v6459
        %v6744 = vsub.f32 %v5414, %v6459
        %v6745 = vsub.f32 %v5417, %v6459
        %v6746 = vsub.f32 %v5455, %v6496
        %v6747 = vsub.f32 %v5458, %v6496
        %v6748 = vsub.f32 %v5463, %v6496
        %v6749 = vsub.f32 %v5466, %v6496
        %v6750 = vsub.f32 %v5471, %v6496
        %v6751 = vsub.f32 %v5474, %v6496
        %v6752 = vsub.f32 %v5479, %v6496
        %v6753 = vsub.f32 %v5482, %v6496
        %v6754 = vsub.f32 %v5487, %v6496
        %v6755 = vsub.f32 %v5490, %v6496
        %v6756 = vsub.f32 %v5495, %v6496
        %v6757 = vsub.f32 %v5498, %v6496
        %v6758 = vsub.f32 %v5503, %v6496
        %v6759 = vsub.f32 %v5506, %v6496
        %v6760 = vsub.f32 %v5511, %v6496
        %v6761 = vsub.f32 %v5514, %v6496
        %v6762 = vsub.f32 %v5519, %v6496
        %v6763 = vsub.f32 %v5522, %v6496
        %v6764 = vsub.f32 %v5527, %v6496
        %v6765 = vsub.f32 %v5530, %v6496
        %v6766 = vsub.f32 %v5535, %v6496
        %v6767 = vsub.f32 %v5538, %v6496
        %v6768 = vsub.f32 %v5543, %v6496
        %v6769 = vsub.f32 %v5546, %v6496
        %v6770 = vsub.f32 %v5551, %v6496
        %v6771 = vsub.f32 %v5554, %v6496
        %v6772 = vsub.f32 %v5559, %v6496
        %v6773 = vsub.f32 %v5562, %v6496
        %v6774 = vsub.f32 %v5567, %v6496
        %v6775 = vsub.f32 %v5570, %v6496
        %v6776 = vsub.f32 %v5575, %v6496
        %v6777 = vsub.f32 %v5578, %v6496
        %v6778 = vsub.f32 %v5616, %v6533
        %v6779 = vsub.f32 %v5619, %v6533
        %v6780 = vsub.f32 %v5624, %v6533
        %v6781 = vsub.f32 %v5627, %v6533
        %v6782 = vsub.f32 %v5632, %v6533
        %v6783 = vsub.f32 %v5635, %v6533
        %v6784 = vsub.f32 %v5640, %v6533
        %v6785 = vsub.f32 %v5643, %v6533
        %v6786 = vsub.f32 %v5648, %v6533
        %v6787 = vsub.f32 %v5651, %v6533
        %v6788 = vsub.f32 %v5656, %v6533
        %v6789 = vsub.f32 %v5659, %v6533
        %v6790 = vsub.f32 %v5664, %v6533
        %v6791 = vsub.f32 %v5667, %v6533
        %v6792 = vsub.f32 %v5672, %v6533
        %v6793 = vsub.f32 %v5675, %v6533
        %v6794 = vsub.f32 %v5680, %v6533
        %v6795 = vsub.f32 %v5683, %v6533
        %v6796 = vsub.f32 %v5688, %v6533
        %v6797 = vsub.f32 %v5691, %v6533
        %v6798 = vsub.f32 %v5696, %v6533
        %v6799 = vsub.f32 %v5699, %v6533
        %v6800 = vsub.f32 %v5704, %v6533
        %v6801 = vsub.f32 %v5707, %v6533
        %v6802 = vsub.f32 %v5712, %v6533
        %v6803 = vsub.f32 %v5715, %v6533
        %v6804 = vsub.f32 %v5720, %v6533
        %v6805 = vsub.f32 %v5723, %v6533
        %v6806 = vsub.f32 %v5728, %v6533
        %v6807 = vsub.f32 %v5731, %v6533
        %v6808 = vsub.f32 %v5736, %v6533
        %v6809 = vsub.f32 %v5739, %v6533
        %v6810 = vsub.f32 %v5777, %v6570
        %v6811 = vsub.f32 %v5780, %v6570
        %v6812 = vsub.f32 %v5785, %v6570
        %v6813 = vsub.f32 %v5788, %v6570
        %v6814 = vsub.f32 %v5793, %v6570
        %v6815 = vsub.f32 %v5796, %v6570
        %v6816 = vsub.f32 %v5801, %v6570
        %v6817 = vsub.f32 %v5804, %v6570
        %v6818 = vsub.f32 %v5809, %v6570
        %v6819 = vsub.f32 %v5812, %v6570
        %v6820 = vsub.f32 %v5817, %v6570
        %v6821 = vsub.f32 %v5820, %v6570
        %v6822 = vsub.f32 %v5825, %v6570
        %v6823 = vsub.f32 %v5828, %v6570
        %v6824 = vsub.f32 %v5833, %v6570
        %v6825 = vsub.f32 %v5836, %v6570
        %v6826 = vsub.f32 %v5841, %v6570
        %v6827 = vsub.f32 %v5844, %v6570
        %v6828 = vsub.f32 %v5849, %v6570
        %v6829 = vsub.f32 %v5852, %v6570
        %v6830 = vsub.f32 %v5857, %v6570
        %v6831 = vsub.f32 %v5860, %v6570
        %v6832 = vsub.f32 %v5865, %v6570
        %v6833 = vsub.f32 %v5868, %v6570
        %v6834 = vsub.f32 %v5873, %v6570
        %v6835 = vsub.f32 %v5876, %v6570
        %v6836 = vsub.f32 %v5881, %v6570
        %v6837 = vsub.f32 %v5884, %v6570
        %v6838 = vsub.f32 %v5889, %v6570
        %v6839 = vsub.f32 %v5892, %v6570
        %v6840 = vsub.f32 %v5897, %v6570
        %v6841 = vsub.f32 %v5900, %v6570
        %v6842 = vsub.f32 %v5938, %v6607
        %v6843 = vsub.f32 %v5941, %v6607
        %v6844 = vsub.f32 %v5946, %v6607
        %v6845 = vsub.f32 %v5949, %v6607
        %v6846 = vsub.f32 %v5954, %v6607
        %v6847 = vsub.f32 %v5957, %v6607
        %v6848 = vsub.f32 %v5962, %v6607
        %v6849 = vsub.f32 %v5965, %v6607
        %v6850 = vsub.f32 %v5970, %v6607
        %v6851 = vsub.f32 %v5973, %v6607
        %v6852 = vsub.f32 %v5978, %v6607
        %v6853 = vsub.f32 %v5981, %v6607
        %v6854 = vsub.f32 %v5986, %v6607
        %v6855 = vsub.f32 %v5989, %v6607
        %v6856 = vsub.f32 %v5994, %v6607
        %v6857 = vsub.f32 %v5997, %v6607
        %v6858 = vsub.f32 %v6002, %v6607
        %v6859 = vsub.f32 %v6005, %v6607
        %v6860 = vsub.f32 %v6010, %v6607
        %v6861 = vsub.f32 %v6013, %v6607
        %v6862 = vsub.f32 %v6018, %v6607
        %v6863 = vsub.f32 %v6021, %v6607
        %v6864 = vsub.f32 %v6026, %v6607
        %v6865 = vsub.f32 %v6029, %v6607
        %v6866 = vsub.f32 %v6034, %v6607
        %v6867 = vsub.f32 %v6037, %v6607
        %v6868 = vsub.f32 %v6042, %v6607
        %v6869 = vsub.f32 %v6045, %v6607
        %v6870 = vsub.f32 %v6050, %v6607
        %v6871 = vsub.f32 %v6053, %v6607
        %v6872 = vsub.f32 %v6058, %v6607
        %v6873 = vsub.f32 %v6061, %v6607
        %v6874 = vsub.f32 %v6099, %v6644
        %v6875 = vsub.f32 %v6102, %v6644
        %v6876 = vsub.f32 %v6107, %v6644
        %v6877 = vsub.f32 %v6110, %v6644
        %v6878 = vsub.f32 %v6115, %v6644
        %v6879 = vsub.f32 %v6118, %v6644
        %v6880 = vsub.f32 %v6123, %v6644
        %v6881 = vsub.f32 %v6126, %v6644
        %v6882 = vsub.f32 %v6131, %v6644
        %v6883 = vsub.f32 %v6134, %v6644
        %v6884 = vsub.f32 %v6139, %v6644
        %v6885 = vsub.f32 %v6142, %v6644
        %v6886 = vsub.f32 %v6147, %v6644
        %v6887 = vsub.f32 %v6150, %v6644
        %v6888 = vsub.f32 %v6155, %v6644
        %v6889 = vsub.f32 %v6158, %v6644
        %v6890 = vsub.f32 %v6163, %v6644
        %v6891 = vsub.f32 %v6166, %v6644
        %v6892 = vsub.f32 %v6171, %v6644
        %v6893 = vsub.f32 %v6174, %v6644
        %v6894 = vsub.f32 %v6179, %v6644
        %v6895 = vsub.f32 %v6182, %v6644
        %v6896 = vsub.f32 %v6187, %v6644
        %v6897 = vsub.f32 %v6190, %v6644
        %v6898 = vsub.f32 %v6195, %v6644
        %v6899 = vsub.f32 %v6198, %v6644
        %v6900 = vsub.f32 %v6203, %v6644
        %v6901 = vsub.f32 %v6206, %v6644
        %v6902 = vsub.f32 %v6211, %v6644
        %v6903 = vsub.f32 %v6214, %v6644
        %v6904 = vsub.f32 %v6219, %v6644
        %v6905 = vsub.f32 %v6222, %v6644
        %v6906 = vsub.f32 %v6260, %v6681
        %v6907 = vsub.f32 %v6263, %v6681
        %v6908 = vsub.f32 %v6268, %v6681
        %v6909 = vsub.f32 %v6271, %v6681
        %v6910 = vsub.f32 %v6276, %v6681
        %v6911 = vsub.f32 %v6279, %v6681
        %v6912 = vsub.f32 %v6284, %v6681
        %v6913 = vsub.f32 %v6287, %v6681
        %v6914 = vsub.f32 %v6292, %v6681
        %v6915 = vsub.f32 %v6295, %v6681
        %v6916 = vsub.f32 %v6300, %v6681
        %v6917 = vsub.f32 %v6303, %v6681
        %v6918 = vsub.f32 %v6308, %v6681
        %v6919 = vsub.f32 %v6311, %v6681
        %v6920 = vsub.f32 %v6316, %v6681
        %v6921 = vsub.f32 %v6319, %v6681
        %v6922 = vsub.f32 %v6324, %v6681
        %v6923 = vsub.f32 %v6327, %v6681
        %v6924 = vsub.f32 %v6332, %v6681
        %v6925 = vsub.f32 %v6335, %v6681
        %v6926 = vsub.f32 %v6340, %v6681
        %v6927 = vsub.f32 %v6343, %v6681
        %v6928 = vsub.f32 %v6348, %v6681
        %v6929 = vsub.f32 %v6351, %v6681
        %v6930 = vsub.f32 %v6356, %v6681
        %v6931 = vsub.f32 %v6359, %v6681
        %v6932 = vsub.f32 %v6364, %v6681
        %v6933 = vsub.f32 %v6367, %v6681
        %v6934 = vsub.f32 %v6372, %v6681
        %v6935 = vsub.f32 %v6375, %v6681
        %v6936 = vsub.f32 %v6380, %v6681
        %v6937 = vsub.f32 %v6383, %v6681
        %v6938 = vmul.f32 %v6682, 1.442695
        %v6939 = vpow.pop %v6938
        %v6940 = vmul.f32 %v6683, 1.442695
        %v6941 = vpow.pop %v6940
        %v6942 = vmul.f32 %v6684, 1.442695
        %v6943 = vpow.pop %v6942
        %v6944 = vmul.f32 %v6685, 1.442695
        %v6945 = vpow.pop %v6944
        %v6946 = vmul.f32 %v6686, 1.442695
        %v6947 = vpow.pop %v6946
        %v6948 = vmul.f32 %v6687, 1.442695
        %v6949 = vpow.pop %v6948
        %v6950 = vmul.f32 %v6688, 1.442695
        %v6951 = vpow.pop %v6950
        %v6952 = vmul.f32 %v6689, 1.442695
        %v6953 = vpow.pop %v6952
        %v6954 = vmul.f32 %v6690, 1.442695
        %v6955 = vpow.pop %v6954
        %v6956 = vmul.f32 %v6691, 1.442695
        %v6957 = vpow.pop %v6956
        %v6958 = vmul.f32 %v6692, 1.442695
        %v6959 = vpow.pop %v6958
        %v6960 = vmul.f32 %v6693, 1.442695
        %v6961 = vpow.pop %v6960
        %v6962 = vmul.f32 %v6694, 1.442695
        %v6963 = vpow.pop %v6962
        %v6964 = vmul.f32 %v6695, 1.442695
        %v6965 = vpow.pop %v6964
        %v6966 = vmul.f32 %v6696, 1.442695
        %v6967 = vpow.pop %v6966
        %v6968 = vmul.f32 %v6697, 1.442695
        %v6969 = vpow.pop %v6968
        %v6970 = vmul.f32 %v6698, 1.442695
        %v6971 = vpow.pop %v6970
        %v6972 = vmul.f32 %v6699, 1.442695
        %v6973 = vpow.pop %v6972
        %v6974 = vmul.f32 %v6700, 1.442695
        %v6975 = vpow.pop %v6974
        %v6976 = vmul.f32 %v6701, 1.442695
        %v6977 = vpow.pop %v6976
        %v6978 = vmul.f32 %v6702, 1.442695
        %v6979 = vpow.pop %v6978
        %v6980 = vmul.f32 %v6703, 1.442695
        %v6981 = vpow.pop %v6980
        %v6982 = vmul.f32 %v6704, 1.442695
        %v6983 = vpow.pop %v6982
        %v6984 = vmul.f32 %v6705, 1.442695
        %v6985 = vpow.pop %v6984
        %v6986 = vmul.f32 %v6706, 1.442695
        %v6987 = vpow.pop %v6986
        %v6988 = vmul.f32 %v6707, 1.442695
        %v6989 = vpow.pop %v6988
        %v6990 = vmul.f32 %v6708, 1.442695
        %v6991 = vpow.pop %v6990
        %v6992 = vmul.f32 %v6709, 1.442695
        %v6993 = vpow.pop %v6992
        %v6994 = vmul.f32 %v6710, 1.442695
        %v6995 = vpow.pop %v6994
        %v6996 = vmul.f32 %v6711, 1.442695
        %v6997 = vpow.pop %v6996
        %v6998 = vmul.f32 %v6712, 1.442695
        %v6999 = vpow.pop %v6998
        %v7000 = vmul.f32 %v6713, 1.442695
        %v7001 = vpow.pop %v7000
        %v7002 = vmul.f32 %v6714, 1.442695
        %v7003 = vpow.pop %v7002
        %v7004 = vmul.f32 %v6715, 1.442695
        %v7005 = vpow.pop %v7004
        %v7006 = vmul.f32 %v6716, 1.442695
        %v7007 = vpow.pop %v7006
        %v7008 = vmul.f32 %v6717, 1.442695
        %v7009 = vpow.pop %v7008
        %v7010 = vmul.f32 %v6718, 1.442695
        %v7011 = vpow.pop %v7010
        %v7012 = vmul.f32 %v6719, 1.442695
        %v7013 = vpow.pop %v7012
        %v7014 = vmul.f32 %v6720, 1.442695
        %v7015 = vpow.pop %v7014
        %v7016 = vmul.f32 %v6721, 1.442695
        %v7017 = vpow.pop %v7016
        %v7018 = vmul.f32 %v6722, 1.442695
        %v7019 = vpow.pop %v7018
        %v7020 = vmul.f32 %v6723, 1.442695
        %v7021 = vpow.pop %v7020
        %v7022 = vmul.f32 %v6724, 1.442695
        %v7023 = vpow.pop %v7022
        %v7024 = vmul.f32 %v6725, 1.442695
        %v7025 = vpow.pop %v7024
        %v7026 = vmul.f32 %v6726, 1.442695
        %v7027 = vpow.pop %v7026
        %v7028 = vmul.f32 %v6727, 1.442695
        %v7029 = vpow.pop %v7028
        %v7030 = vmul.f32 %v6728, 1.442695
        %v7031 = vpow.pop %v7030
        %v7032 = vmul.f32 %v6729, 1.442695
        %v7033 = vpow.pop %v7032
        %v7034 = vmul.f32 %v6730, 1.442695
        %v7035 = vpow.pop %v7034
        %v7036 = vmul.f32 %v6731, 1.442695
        %v7037 = vpow.pop %v7036
        %v7038 = vmul.f32 %v6732, 1.442695
        %v7039 = vpow.pop %v7038
        %v7040 = vmul.f32 %v6733, 1.442695
        %v7041 = vpow.pop %v7040
        %v7042 = vmul.f32 %v6734, 1.442695
        %v7043 = vpow.pop %v7042
        %v7044 = vmul.f32 %v6735, 1.442695
        %v7045 = vpow.pop %v7044
        %v7046 = vmul.f32 %v6736, 1.442695
        %v7047 = vpow.pop %v7046
        %v7048 = vmul.f32 %v6737, 1.442695
        %v7049 = vpow.pop %v7048
        %v7050 = vmul.f32 %v6738, 1.442695
        %v7051 = vpow.pop %v7050
        %v7052 = vmul.f32 %v6739, 1.442695
        %v7053 = vpow.pop %v7052
        %v7054 = vmul.f32 %v6740, 1.442695
        %v7055 = vpow.pop %v7054
        %v7056 = vmul.f32 %v6741, 1.442695
        %v7057 = vpow.pop %v7056
        %v7058 = vmul.f32 %v6742, 1.442695
        %v7059 = vpow.pop %v7058
        %v7060 = vmul.f32 %v6743, 1.442695
        %v7061 = vpow.pop %v7060
        %v7062 = vmul.f32 %v6744, 1.442695
        %v7063 = vpow.pop %v7062
        %v7064 = vmul.f32 %v6745, 1.442695
        %v7065 = vpow.pop %v7064
        %v7066 = vmul.f32 %v6746, 1.442695
        %v7067 = vpow.pop %v7066
        %v7068 = vmul.f32 %v6747, 1.442695
        %v7069 = vpow.pop %v7068
        %v7070 = vmul.f32 %v6748, 1.442695
        %v7071 = vpow.pop %v7070
        %v7072 = vmul.f32 %v6749, 1.442695
        %v7073 = vpow.pop %v7072
        %v7074 = vmul.f32 %v6750, 1.442695
        %v7075 = vpow.pop %v7074
        %v7076 = vmul.f32 %v6751, 1.442695
        %v7077 = vpow.pop %v7076
        %v7078 = vmul.f32 %v6752, 1.442695
        %v7079 = vpow.pop %v7078
        %v7080 = vmul.f32 %v6753, 1.442695
        %v7081 = vpow.pop %v7080
        %v7082 = vmul.f32 %v6754, 1.442695
        %v7083 = vpow.pop %v7082
        %v7084 = vmul.f32 %v6755, 1.442695
        %v7085 = vpow.pop %v7084
        %v7086 = vmul.f32 %v6756, 1.442695
        %v7087 = vpow.pop %v7086
        %v7088 = vmul.f32 %v6757, 1.442695
        %v7089 = vpow.pop %v7088
        %v7090 = vmul.f32 %v6758, 1.442695
        %v7091 = vpow.pop %v7090
        %v7092 = vmul.f32 %v6759, 1.442695
        %v7093 = vpow.pop %v7092
        %v7094 = vmul.f32 %v6760, 1.442695
        %v7095 = vpow.pop %v7094
        %v7096 = vmul.f32 %v6761, 1.442695
        %v7097 = vpow.pop %v7096
        %v7098 = vmul.f32 %v6762, 1.442695
        %v7099 = vpow.pop %v7098
        %v7100 = vmul.f32 %v6763, 1.442695
        %v7101 = vpow.pop %v7100
        %v7102 = vmul.f32 %v6764, 1.442695
        %v7103 = vpow.pop %v7102
        %v7104 = vmul.f32 %v6765, 1.442695
        %v7105 = vpow.pop %v7104
        %v7106 = vmul.f32 %v6766, 1.442695
        %v7107 = vpow.pop %v7106
        %v7108 = vmul.f32 %v6767, 1.442695
        %v7109 = vpow.pop %v7108
        %v7110 = vmul.f32 %v6768, 1.442695
        %v7111 = vpow.pop %v7110
        %v7112 = vmul.f32 %v6769, 1.442695
        %v7113 = vpow.pop %v7112
        %v7114 = vmul.f32 %v6770, 1.442695
        %v7115 = vpow.pop %v7114
        %v7116 = vmul.f32 %v6771, 1.442695
        %v7117 = vpow.pop %v7116
        %v7118 = vmul.f32 %v6772, 1.442695
        %v7119 = vpow.pop %v7118
        %v7120 = vmul.f32 %v6773, 1.442695
        %v7121 = vpow.pop %v7120
        %v7122 = vmul.f32 %v6774, 1.442695
        %v7123 = vpow.pop %v7122
        %v7124 = vmul.f32 %v6775, 1.442695
        %v7125 = vpow.pop %v7124
        %v7126 = vmul.f32 %v6776, 1.442695
        %v7127 = vpow.pop %v7126
        %v7128 = vmul.f32 %v6777, 1.442695
        %v7129 = vpow.pop %v7128
        %v7130 = vmul.f32 %v6778, 1.442695
        %v7131 = vpow.pop %v7130
        %v7132 = vmul.f32 %v6779, 1.442695
        %v7133 = vpow.pop %v7132
        %v7134 = vmul.f32 %v6780, 1.442695
        %v7135 = vpow.pop %v7134
        %v7136 = vmul.f32 %v6781, 1.442695
        %v7137 = vpow.pop %v7136
        %v7138 = vmul.f32 %v6782, 1.442695
        %v7139 = vpow.pop %v7138
        %v7140 = vmul.f32 %v6783, 1.442695
        %v7141 = vpow.pop %v7140
        %v7142 = vmul.f32 %v6784, 1.442695
        %v7143 = vpow.pop %v7142
        %v7144 = vmul.f32 %v6785, 1.442695
        %v7145 = vpow.pop %v7144
        %v7146 = vmul.f32 %v6786, 1.442695
        %v7147 = vpow.pop %v7146
        %v7148 = vmul.f32 %v6787, 1.442695
        %v7149 = vpow.pop %v7148
        %v7150 = vmul.f32 %v6788, 1.442695
        %v7151 = vpow.pop %v7150
        %v7152 = vmul.f32 %v6789, 1.442695
        %v7153 = vpow.pop %v7152
        %v7154 = vmul.f32 %v6790, 1.442695
        %v7155 = vpow.pop %v7154
        %v7156 = vmul.f32 %v6791, 1.442695
        %v7157 = vpow.pop %v7156
        %v7158 = vmul.f32 %v6792, 1.442695
        %v7159 = vpow.pop %v7158
        %v7160 = vmul.f32 %v6793, 1.442695
        %v7161 = vpow.pop %v7160
        %v7162 = vmul.f32 %v6794, 1.442695
        %v7163 = vpow.pop %v7162
        %v7164 = vmul.f32 %v6795, 1.442695
        %v7165 = vpow.pop %v7164
        %v7166 = vmul.f32 %v6796, 1.442695
        %v7167 = vpow.pop %v7166
        %v7168 = vmul.f32 %v6797, 1.442695
        %v7169 = vpow.pop %v7168
        %v7170 = vmul.f32 %v6798, 1.442695
        %v7171 = vpow.pop %v7170
        %v7172 = vmul.f32 %v6799, 1.442695
        %v7173 = vpow.pop %v7172
        %v7174 = vmul.f32 %v6800, 1.442695
        %v7175 = vpow.pop %v7174
        %v7176 = vmul.f32 %v6801, 1.442695
        %v7177 = vpow.pop %v7176
        %v7178 = vmul.f32 %v6802, 1.442695
        %v7179 = vpow.pop %v7178
        %v7180 = vmul.f32 %v6803, 1.442695
        %v7181 = vpow.pop %v7180
        %v7182 = vmul.f32 %v6804, 1.442695
        %v7183 = vpow.pop %v7182
        %v7184 = vmul.f32 %v6805, 1.442695
        %v7185 = vpow.pop %v7184
        %v7186 = vmul.f32 %v6806, 1.442695
        %v7187 = vpow.pop %v7186
        %v7188 = vmul.f32 %v6807, 1.442695
        %v7189 = vpow.pop %v7188
        %v7190 = vmul.f32 %v6808, 1.442695
        %v7191 = vpow.pop %v7190
        %v7192 = vmul.f32 %v6809, 1.442695
        %v7193 = vpow.pop %v7192
        %v7194 = vmul.f32 %v6810, 1.442695
        %v7195 = vpow.pop %v7194
        %v7196 = vmul.f32 %v6811, 1.442695
        %v7197 = vpow.pop %v7196
        %v7198 = vmul.f32 %v6812, 1.442695
        %v7199 = vpow.pop %v7198
        %v7200 = vmul.f32 %v6813, 1.442695
        %v7201 = vpow.pop %v7200
        %v7202 = vmul.f32 %v6814, 1.442695
        %v7203 = vpow.pop %v7202
        %v7204 = vmul.f32 %v6815, 1.442695
        %v7205 = vpow.pop %v7204
        %v7206 = vmul.f32 %v6816, 1.442695
        %v7207 = vpow.pop %v7206
        %v7208 = vmul.f32 %v6817, 1.442695
        %v7209 = vpow.pop %v7208
        %v7210 = vmul.f32 %v6818, 1.442695
        %v7211 = vpow.pop %v7210
        %v7212 = vmul.f32 %v6819, 1.442695
        %v7213 = vpow.pop %v7212
        %v7214 = vmul.f32 %v6820, 1.442695
        %v7215 = vpow.pop %v7214
        %v7216 = vmul.f32 %v6821, 1.442695
        %v7217 = vpow.pop %v7216
        %v7218 = vmul.f32 %v6822, 1.442695
        %v7219 = vpow.pop %v7218
        %v7220 = vmul.f32 %v6823, 1.442695
        %v7221 = vpow.pop %v7220
        %v7222 = vmul.f32 %v6824, 1.442695
        %v7223 = vpow.pop %v7222
        %v7224 = vmul.f32 %v6825, 1.442695
        %v7225 = vpow.pop %v7224
        %v7226 = vmul.f32 %v6826, 1.442695
        %v7227 = vpow.pop %v7226
        %v7228 = vmul.f32 %v6827, 1.442695
        %v7229 = vpow.pop %v7228
        %v7230 = vmul.f32 %v6828, 1.442695
        %v7231 = vpow.pop %v7230
        %v7232 = vmul.f32 %v6829, 1.442695
        %v7233 = vpow.pop %v7232
        %v7234 = vmul.f32 %v6830, 1.442695
        %v7235 = vpow.pop %v7234
        %v7236 = vmul.f32 %v6831, 1.442695
        %v7237 = vpow.pop %v7236
        %v7238 = vmul.f32 %v6832, 1.442695
        %v7239 = vpow.pop %v7238
        %v7240 = vmul.f32 %v6833, 1.442695
        %v7241 = vpow.pop %v7240
        %v7242 = vmul.f32 %v6834, 1.442695
        %v7243 = vpow.pop %v7242
        %v7244 = vmul.f32 %v6835, 1.442695
        %v7245 = vpow.pop %v7244
        %v7246 = vmul.f32 %v6836, 1.442695
        %v7247 = vpow.pop %v7246
        %v7248 = vmul.f32 %v6837, 1.442695
        %v7249 = vpow.pop %v7248
        %v7250 = vmul.f32 %v6838, 1.442695
        %v7251 = vpow.pop %v7250
        %v7252 = vmul.f32 %v6839, 1.442695
        %v7253 = vpow.pop %v7252
        %v7254 = vmul.f32 %v6840, 1.442695
        %v7255 = vpow.pop %v7254
        %v7256 = vmul.f32 %v6841, 1.442695
        %v7257 = vpow.pop %v7256
        %v7258 = vmul.f32 %v6842, 1.442695
        %v7259 = vpow.pop %v7258
        %v7260 = vmul.f32 %v6843, 1.442695
        %v7261 = vpow.pop %v7260
        %v7262 = vmul.f32 %v6844, 1.442695
        %v7263 = vpow.pop %v7262
        %v7264 = vmul.f32 %v6845, 1.442695
        %v7265 = vpow.pop %v7264
        %v7266 = vmul.f32 %v6846, 1.442695
        %v7267 = vpow.pop %v7266
        %v7268 = vmul.f32 %v6847, 1.442695
        %v7269 = vpow.pop %v7268
        %v7270 = vmul.f32 %v6848, 1.442695
        %v7271 = vpow.pop %v7270
        %v7272 = vmul.f32 %v6849, 1.442695
        %v7273 = vpow.pop %v7272
        %v7274 = vmul.f32 %v6850, 1.442695
        %v7275 = vpow.pop %v7274
        %v7276 = vmul.f32 %v6851, 1.442695
        %v7277 = vpow.pop %v7276
        %v7278 = vmul.f32 %v6852, 1.442695
        %v7279 = vpow.pop %v7278
        %v7280 = vmul.f32 %v6853, 1.442695
        %v7281 = vpow.pop %v7280
        %v7282 = vmul.f32 %v6854, 1.442695
        %v7283 = vpow.pop %v7282
        %v7284 = vmul.f32 %v6855, 1.442695
        %v7285 = vpow.pop %v7284
        %v7286 = vmul.f32 %v6856, 1.442695
        %v7287 = vpow.pop %v7286
        %v7288 = vmul.f32 %v6857, 1.442695
        %v7289 = vpow.pop %v7288
        %v7290 = vmul.f32 %v6858, 1.442695
        %v7291 = vpow.pop %v7290
        %v7292 = vmul.f32 %v6859, 1.442695
        %v7293 = vpow.pop %v7292
        %v7294 = vmul.f32 %v6860, 1.442695
        %v7295 = vpow.pop %v7294
        %v7296 = vmul.f32 %v6861, 1.442695
        %v7297 = vpow.pop %v7296
        %v7298 = vmul.f32 %v6862, 1.442695
        %v7299 = vpow.pop %v7298
        %v7300 = vmul.f32 %v6863, 1.442695
        %v7301 = vpow.pop %v7300
        %v7302 = vmul.f32 %v6864, 1.442695
        %v7303 = vpow.pop %v7302
        %v7304 = vmul.f32 %v6865, 1.442695
        %v7305 = vpow.pop %v7304
        %v7306 = vmul.f32 %v6866, 1.442695
        %v7307 = vpow.pop %v7306
        %v7308 = vmul.f32 %v6867, 1.442695
        %v7309 = vpow.pop %v7308
        %v7310 = vmul.f32 %v6868, 1.442695
        %v7311 = vpow.pop %v7310
        %v7312 = vmul.f32 %v6869, 1.442695
        %v7313 = vpow.pop %v7312
        %v7314 = vmul.f32 %v6870, 1.442695
        %v7315 = vpow.pop %v7314
        %v7316 = vmul.f32 %v6871, 1.442695
        %v7317 = vpow.pop %v7316
        %v7318 = vmul.f32 %v6872, 1.442695
        %v7319 = vpow.pop %v7318
        %v7320 = vmul.f32 %v6873, 1.442695
        %v7321 = vpow.pop %v7320
        %v7322 = vmul.f32 %v6874, 1.442695
        %v7323 = vpow.pop %v7322
        %v7324 = vmul.f32 %v6875, 1.442695
        %v7325 = vpow.pop %v7324
        %v7326 = vmul.f32 %v6876, 1.442695
        %v7327 = vpow.pop %v7326
        %v7328 = vmul.f32 %v6877, 1.442695
        %v7329 = vpow.pop %v7328
        %v7330 = vmul.f32 %v6878, 1.442695
        %v7331 = vpow.pop %v7330
        %v7332 = vmul.f32 %v6879, 1.442695
        %v7333 = vpow.pop %v7332
        %v7334 = vmul.f32 %v6880, 1.442695
        %v7335 = vpow.pop %v7334
        %v7336 = vmul.f32 %v6881, 1.442695
        %v7337 = vpow.pop %v7336
        %v7338 = vmul.f32 %v6882, 1.442695
        %v7339 = vpow.pop %v7338
        %v7340 = vmul.f32 %v6883, 1.442695
        %v7341 = vpow.pop %v7340
        %v7342 = vmul.f32 %v6884, 1.442695
        %v7343 = vpow.pop %v7342
        %v7344 = vmul.f32 %v6885, 1.442695
        %v7345 = vpow.pop %v7344
        %v7346 = vmul.f32 %v6886, 1.442695
        %v7347 = vpow.pop %v7346
        %v7348 = vmul.f32 %v6887, 1.442695
        %v7349 = vpow.pop %v7348
        %v7350 = vmul.f32 %v6888, 1.442695
        %v7351 = vpow.pop %v7350
        %v7352 = vmul.f32 %v6889, 1.442695
        %v7353 = vpow.pop %v7352
        %v7354 = vmul.f32 %v6890, 1.442695
        %v7355 = vpow.pop %v7354
        %v7356 = vmul.f32 %v6891, 1.442695
        %v7357 = vpow.pop %v7356
        %v7358 = vmul.f32 %v6892, 1.442695
        %v7359 = vpow.pop %v7358
        %v7360 = vmul.f32 %v6893, 1.442695
        %v7361 = vpow.pop %v7360
        %v7362 = vmul.f32 %v6894, 1.442695
        %v7363 = vpow.pop %v7362
        %v7364 = vmul.f32 %v6895, 1.442695
        %v7365 = vpow.pop %v7364
        %v7366 = vmul.f32 %v6896, 1.442695
        %v7367 = vpow.pop %v7366
        %v7368 = vmul.f32 %v6897, 1.442695
        %v7369 = vpow.pop %v7368
        %v7370 = vmul.f32 %v6898, 1.442695
        %v7371 = vpow.pop %v7370
        %v7372 = vmul.f32 %v6899, 1.442695
        %v7373 = vpow.pop %v7372
        %v7374 = vmul.f32 %v6900, 1.442695
        %v7375 = vpow.pop %v7374
        %v7376 = vmul.f32 %v6901, 1.442695
        %v7377 = vpow.pop %v7376
        %v7378 = vmul.f32 %v6902, 1.442695
        %v7379 = vpow.pop %v7378
        %v7380 = vmul.f32 %v6903, 1.442695
        %v7381 = vpow.pop %v7380
        %v7382 = vmul.f32 %v6904, 1.442695
        %v7383 = vpow.pop %v7382
        %v7384 = vmul.f32 %v6905, 1.442695
        %v7385 = vpow.pop %v7384
        %v7386 = vmul.f32 %v6906, 1.442695
        %v7387 = vpow.pop %v7386
        %v7388 = vmul.f32 %v6907, 1.442695
        %v7389 = vpow.pop %v7388
        %v7390 = vmul.f32 %v6908, 1.442695
        %v7391 = vpow.pop %v7390
        %v7392 = vmul.f32 %v6909, 1.442695
        %v7393 = vpow.pop %v7392
        %v7394 = vmul.f32 %v6910, 1.442695
        %v7395 = vpow.pop %v7394
        %v7396 = vmul.f32 %v6911, 1.442695
        %v7397 = vpow.pop %v7396
        %v7398 = vmul.f32 %v6912, 1.442695
        %v7399 = vpow.pop %v7398
        %v7400 = vmul.f32 %v6913, 1.442695
        %v7401 = vpow.pop %v7400
        %v7402 = vmul.f32 %v6914, 1.442695
        %v7403 = vpow.pop %v7402
        %v7404 = vmul.f32 %v6915, 1.442695
        %v7405 = vpow.pop %v7404
        %v7406 = vmul.f32 %v6916, 1.442695
        %v7407 = vpow.pop %v7406
        %v7408 = vmul.f32 %v6917, 1.442695
        %v7409 = vpow.pop %v7408
        %v7410 = vmul.f32 %v6918, 1.442695
        %v7411 = vpow.pop %v7410
        %v7412 = vmul.f32 %v6919, 1.442695
        %v7413 = vpow.pop %v7412
        %v7414 = vmul.f32 %v6920, 1.442695
        %v7415 = vpow.pop %v7414
        %v7416 = vmul.f32 %v6921, 1.442695
        %v7417 = vpow.pop %v7416
        %v7418 = vmul.f32 %v6922, 1.442695
        %v7419 = vpow.pop %v7418
        %v7420 = vmul.f32 %v6923, 1.442695
        %v7421 = vpow.pop %v7420
        %v7422 = vmul.f32 %v6924, 1.442695
        %v7423 = vpow.pop %v7422
        %v7424 = vmul.f32 %v6925, 1.442695
        %v7425 = vpow.pop %v7424
        %v7426 = vmul.f32 %v6926, 1.442695
        %v7427 = vpow.pop %v7426
        %v7428 = vmul.f32 %v6927, 1.442695
        %v7429 = vpow.pop %v7428
        %v7430 = vmul.f32 %v6928, 1.442695
        %v7431 = vpow.pop %v7430
        %v7432 = vmul.f32 %v6929, 1.442695
        %v7433 = vpow.pop %v7432
        %v7434 = vmul.f32 %v6930, 1.442695
        %v7435 = vpow.pop %v7434
        %v7436 = vmul.f32 %v6931, 1.442695
        %v7437 = vpow.pop %v7436
        %v7438 = vmul.f32 %v6932, 1.442695
        %v7439 = vpow.pop %v7438
        %v7440 = vmul.f32 %v6933, 1.442695
        %v7441 = vpow.pop %v7440
        %v7442 = vmul.f32 %v6934, 1.442695
        %v7443 = vpow.pop %v7442
        %v7444 = vmul.f32 %v6935, 1.442695
        %v7445 = vpow.pop %v7444
        %v7446 = vmul.f32 %v6936, 1.442695
        %v7447 = vpow.pop %v7446
        %v7448 = vmul.f32 %v6937, 1.442695
        %v7449 = vpow.pop %v7448
        %v7450 = vadd.f32 %v6939, %v6941
        %v7451 = vadd.f32 %v7450, %v6943
        %v7452 = vadd.f32 %v7451, %v6945
        %v7453 = vadd.f32 %v7452, %v6947
        %v7454 = vadd.f32 %v7453, %v6949
        %v7455 = vadd.f32 %v7454, %v6951
        %v7456 = vadd.f32 %v7455, %v6953
        %v7457 = vadd.f32 %v7456, %v6955
        %v7458 = vadd.f32 %v7457, %v6957
        %v7459 = vadd.f32 %v7458, %v6959
        %v7460 = vadd.f32 %v7459, %v6961
        %v7461 = vadd.f32 %v7460, %v6963
        %v7462 = vadd.f32 %v7461, %v6965
        %v7463 = vadd.f32 %v7462, %v6967
        %v7464 = vadd.f32 %v7463, %v6969
        %v7465 = vadd.f32 %v7464, %v6971
        %v7466 = vadd.f32 %v7465, %v6973
        %v7467 = vadd.f32 %v7466, %v6975
        %v7468 = vadd.f32 %v7467, %v6977
        %v7469 = vadd.f32 %v7468, %v6979
        %v7470 = vadd.f32 %v7469, %v6981
        %v7471 = vadd.f32 %v7470, %v6983
        %v7472 = vadd.f32 %v7471, %v6985
        %v7473 = vadd.f32 %v7472, %v6987
        %v7474 = vadd.f32 %v7473, %v6989
        %v7475 = vadd.f32 %v7474, %v6991
        %v7476 = vadd.f32 %v7475, %v6993
        %v7477 = vadd.f32 %v7476, %v6995
        %v7478 = vadd.f32 %v7477, %v6997
        %v7479 = vadd.f32 %v7478, %v6999
        %v7480 = vadd.f32 %v7479, %v7001
        %v7481 = vrot.slane %v7480, 4
        %v7482 = vadd.f32 %v7480, %v7481
        %v7483 = vrot.slane %v7482, 2
        %v7484 = vadd.f32 %v7482, %v7483
        %v7485 = vrot.slane %v7484, 1
        %v7486 = vadd.f32 %v7484, %v7485
        %v7487 = vadd.f32 %v7003, %v7005
        %v7488 = vadd.f32 %v7487, %v7007
        %v7489 = vadd.f32 %v7488, %v7009
        %v7490 = vadd.f32 %v7489, %v7011
        %v7491 = vadd.f32 %v7490, %v7013
        %v7492 = vadd.f32 %v7491, %v7015
        %v7493 = vadd.f32 %v7492, %v7017
        %v7494 = vadd.f32 %v7493, %v7019
        %v7495 = vadd.f32 %v7494, %v7021
        %v7496 = vadd.f32 %v7495, %v7023
        %v7497 = vadd.f32 %v7496, %v7025
        %v7498 = vadd.f32 %v7497, %v7027
        %v7499 = vadd.f32 %v7498, %v7029
        %v7500 = vadd.f32 %v7499, %v7031
        %v7501 = vadd.f32 %v7500, %v7033
        %v7502 = vadd.f32 %v7501, %v7035
        %v7503 = vadd.f32 %v7502, %v7037
        %v7504 = vadd.f32 %v7503, %v7039
        %v7505 = vadd.f32 %v7504, %v7041
        %v7506 = vadd.f32 %v7505, %v7043
        %v7507 = vadd.f32 %v7506, %v7045
        %v7508 = vadd.f32 %v7507, %v7047
        %v7509 = vadd.f32 %v7508, %v7049
        %v7510 = vadd.f32 %v7509, %v7051
        %v7511 = vadd.f32 %v7510, %v7053
        %v7512 = vadd.f32 %v7511, %v7055
        %v7513 = vadd.f32 %v7512, %v7057
        %v7514 = vadd.f32 %v7513, %v7059
        %v7515 = vadd.f32 %v7514, %v7061
        %v7516 = vadd.f32 %v7515, %v7063
        %v7517 = vadd.f32 %v7516, %v7065
        %v7518 = vrot.slane %v7517, 4
        %v7519 = vadd.f32 %v7517, %v7518
        %v7520 = vrot.slane %v7519, 2
        %v7521 = vadd.f32 %v7519, %v7520
        %v7522 = vrot.slane %v7521, 1
        %v7523 = vadd.f32 %v7521, %v7522
        %v7524 = vadd.f32 %v7067, %v7069
        %v7525 = vadd.f32 %v7524, %v7071
        %v7526 = vadd.f32 %v7525, %v7073
        %v7527 = vadd.f32 %v7526, %v7075
        %v7528 = vadd.f32 %v7527, %v7077
        %v7529 = vadd.f32 %v7528, %v7079
        %v7530 = vadd.f32 %v7529, %v7081
        %v7531 = vadd.f32 %v7530, %v7083
        %v7532 = vadd.f32 %v7531, %v7085
        %v7533 = vadd.f32 %v7532, %v7087
        %v7534 = vadd.f32 %v7533, %v7089
        %v7535 = vadd.f32 %v7534, %v7091
        %v7536 = vadd.f32 %v7535, %v7093
        %v7537 = vadd.f32 %v7536, %v7095
        %v7538 = vadd.f32 %v7537, %v7097
        %v7539 = vadd.f32 %v7538, %v7099
        %v7540 = vadd.f32 %v7539, %v7101
        %v7541 = vadd.f32 %v7540, %v7103
        %v7542 = vadd.f32 %v7541, %v7105
        %v7543 = vadd.f32 %v7542, %v7107
        %v7544 = vadd.f32 %v7543, %v7109
        %v7545 = vadd.f32 %v7544, %v7111
        %v7546 = vadd.f32 %v7545, %v7113
        %v7547 = vadd.f32 %v7546, %v7115
        %v7548 = vadd.f32 %v7547, %v7117
        %v7549 = vadd.f32 %v7548, %v7119
        %v7550 = vadd.f32 %v7549, %v7121
        %v7551 = vadd.f32 %v7550, %v7123
        %v7552 = vadd.f32 %v7551, %v7125
        %v7553 = vadd.f32 %v7552, %v7127
        %v7554 = vadd.f32 %v7553, %v7129
        %v7555 = vrot.slane %v7554, 4
        %v7556 = vadd.f32 %v7554, %v7555
        %v7557 = vrot.slane %v7556, 2
        %v7558 = vadd.f32 %v7556, %v7557
        %v7559 = vrot.slane %v7558, 1
        %v7560 = vadd.f32 %v7558, %v7559
        %v7561 = vadd.f32 %v7131, %v7133
        %v7562 = vadd.f32 %v7561, %v7135
        %v7563 = vadd.f32 %v7562, %v7137
        %v7564 = vadd.f32 %v7563, %v7139
        %v7565 = vadd.f32 %v7564, %v7141
        %v7566 = vadd.f32 %v7565, %v7143
        %v7567 = vadd.f32 %v7566, %v7145
        %v7568 = vadd.f32 %v7567, %v7147
        %v7569 = vadd.f32 %v7568, %v7149
        %v7570 = vadd.f32 %v7569, %v7151
        %v7571 = vadd.f32 %v7570, %v7153
        %v7572 = vadd.f32 %v7571, %v7155
        %v7573 = vadd.f32 %v7572, %v7157
        %v7574 = vadd.f32 %v7573, %v7159
        %v7575 = vadd.f32 %v7574, %v7161
        %v7576 = vadd.f32 %v7575, %v7163
        %v7577 = vadd.f32 %v7576, %v7165
        %v7578 = vadd.f32 %v7577, %v7167
        %v7579 = vadd.f32 %v7578, %v7169
        %v7580 = vadd.f32 %v7579, %v7171
        %v7581 = vadd.f32 %v7580, %v7173
        %v7582 = vadd.f32 %v7581, %v7175
        %v7583 = vadd.f32 %v7582, %v7177
        %v7584 = vadd.f32 %v7583, %v7179
        %v7585 = vadd.f32 %v7584, %v7181
        %v7586 = vadd.f32 %v7585, %v7183
        %v7587 = vadd.f32 %v7586, %v7185
        %v7588 = vadd.f32 %v7587, %v7187
        %v7589 = vadd.f32 %v7588, %v7189
        %v7590 = vadd.f32 %v7589, %v7191
        %v7591 = vadd.f32 %v7590, %v7193
        %v7592 = vrot.slane %v7591, 4
        %v7593 = vadd.f32 %v7591, %v7592
        %v7594 = vrot.slane %v7593, 2
        %v7595 = vadd.f32 %v7593, %v7594
        %v7596 = vrot.slane %v7595, 1
        %v7597 = vadd.f32 %v7595, %v7596
        %v7598 = vadd.f32 %v7195, %v7197
        %v7599 = vadd.f32 %v7598, %v7199
        %v7600 = vadd.f32 %v7599, %v7201
        %v7601 = vadd.f32 %v7600, %v7203
        %v7602 = vadd.f32 %v7601, %v7205
        %v7603 = vadd.f32 %v7602, %v7207
        %v7604 = vadd.f32 %v7603, %v7209
        %v7605 = vadd.f32 %v7604, %v7211
        %v7606 = vadd.f32 %v7605, %v7213
        %v7607 = vadd.f32 %v7606, %v7215
        %v7608 = vadd.f32 %v7607, %v7217
        %v7609 = vadd.f32 %v7608, %v7219
        %v7610 = vadd.f32 %v7609, %v7221
        %v7611 = vadd.f32 %v7610, %v7223
        %v7612 = vadd.f32 %v7611, %v7225
        %v7613 = vadd.f32 %v7612, %v7227
        %v7614 = vadd.f32 %v7613, %v7229
        %v7615 = vadd.f32 %v7614, %v7231
        %v7616 = vadd.f32 %v7615, %v7233
        %v7617 = vadd.f32 %v7616, %v7235
        %v7618 = vadd.f32 %v7617, %v7237
        %v7619 = vadd.f32 %v7618, %v7239
        %v7620 = vadd.f32 %v7619, %v7241
        %v7621 = vadd.f32 %v7620, %v7243
        %v7622 = vadd.f32 %v7621, %v7245
        %v7623 = vadd.f32 %v7622, %v7247
        %v7624 = vadd.f32 %v7623, %v7249
        %v7625 = vadd.f32 %v7624, %v7251
        %v7626 = vadd.f32 %v7625, %v7253
        %v7627 = vadd.f32 %v7626, %v7255
        %v7628 = vadd.f32 %v7627, %v7257
        %v7629 = vrot.slane %v7628, 4
        %v7630 = vadd.f32 %v7628, %v7629
        %v7631 = vrot.slane %v7630, 2
        %v7632 = vadd.f32 %v7630, %v7631
        %v7633 = vrot.slane %v7632, 1
        %v7634 = vadd.f32 %v7632, %v7633
        %v7635 = vadd.f32 %v7259, %v7261
        %v7636 = vadd.f32 %v7635, %v7263
        %v7637 = vadd.f32 %v7636, %v7265
        %v7638 = vadd.f32 %v7637, %v7267
        %v7639 = vadd.f32 %v7638, %v7269
        %v7640 = vadd.f32 %v7639, %v7271
        %v7641 = vadd.f32 %v7640, %v7273
        %v7642 = vadd.f32 %v7641, %v7275
        %v7643 = vadd.f32 %v7642, %v7277
        %v7644 = vadd.f32 %v7643, %v7279
        %v7645 = vadd.f32 %v7644, %v7281
        %v7646 = vadd.f32 %v7645, %v7283
        %v7647 = vadd.f32 %v7646, %v7285
        %v7648 = vadd.f32 %v7647, %v7287
        %v7649 = vadd.f32 %v7648, %v7289
        %v7650 = vadd.f32 %v7649, %v7291
        %v7651 = vadd.f32 %v7650, %v7293
        %v7652 = vadd.f32 %v7651, %v7295
        %v7653 = vadd.f32 %v7652, %v7297
        %v7654 = vadd.f32 %v7653, %v7299
        %v7655 = vadd.f32 %v7654, %v7301
        %v7656 = vadd.f32 %v7655, %v7303
        %v7657 = vadd.f32 %v7656, %v7305
        %v7658 = vadd.f32 %v7657, %v7307
        %v7659 = vadd.f32 %v7658, %v7309
        %v7660 = vadd.f32 %v7659, %v7311
        %v7661 = vadd.f32 %v7660, %v7313
        %v7662 = vadd.f32 %v7661, %v7315
        %v7663 = vadd.f32 %v7662, %v7317
        %v7664 = vadd.f32 %v7663, %v7319
        %v7665 = vadd.f32 %v7664, %v7321
        %v7666 = vrot.slane %v7665, 4
        %v7667 = vadd.f32 %v7665, %v7666
        %v7668 = vrot.slane %v7667, 2
        %v7669 = vadd.f32 %v7667, %v7668
        %v7670 = vrot.slane %v7669, 1
        %v7671 = vadd.f32 %v7669, %v7670
        %v7672 = vadd.f32 %v7323, %v7325
        %v7673 = vadd.f32 %v7672, %v7327
        %v7674 = vadd.f32 %v7673, %v7329
        %v7675 = vadd.f32 %v7674, %v7331
        %v7676 = vadd.f32 %v7675, %v7333
        %v7677 = vadd.f32 %v7676, %v7335
        %v7678 = vadd.f32 %v7677, %v7337
        %v7679 = vadd.f32 %v7678, %v7339
        %v7680 = vadd.f32 %v7679, %v7341
        %v7681 = vadd.f32 %v7680, %v7343
        %v7682 = vadd.f32 %v7681, %v7345
        %v7683 = vadd.f32 %v7682, %v7347
        %v7684 = vadd.f32 %v7683, %v7349
        %v7685 = vadd.f32 %v7684, %v7351
        %v7686 = vadd.f32 %v7685, %v7353
        %v7687 = vadd.f32 %v7686, %v7355
        %v7688 = vadd.f32 %v7687, %v7357
        %v7689 = vadd.f32 %v7688, %v7359
        %v7690 = vadd.f32 %v7689, %v7361
        %v7691 = vadd.f32 %v7690, %v7363
        %v7692 = vadd.f32 %v7691, %v7365
        %v7693 = vadd.f32 %v7692, %v7367
        %v7694 = vadd.f32 %v7693, %v7369
        %v7695 = vadd.f32 %v7694, %v7371
        %v7696 = vadd.f32 %v7695, %v7373
        %v7697 = vadd.f32 %v7696, %v7375
        %v7698 = vadd.f32 %v7697, %v7377
        %v7699 = vadd.f32 %v7698, %v7379
        %v7700 = vadd.f32 %v7699, %v7381
        %v7701 = vadd.f32 %v7700, %v7383
        %v7702 = vadd.f32 %v7701, %v7385
        %v7703 = vrot.slane %v7702, 4
        %v7704 = vadd.f32 %v7702, %v7703
        %v7705 = vrot.slane %v7704, 2
        %v7706 = vadd.f32 %v7704, %v7705
        %v7707 = vrot.slane %v7706, 1
        %v7708 = vadd.f32 %v7706, %v7707
        %v7709 = vadd.f32 %v7387, %v7389
        %v7710 = vadd.f32 %v7709, %v7391
        %v7711 = vadd.f32 %v7710, %v7393
        %v7712 = vadd.f32 %v7711, %v7395
        %v7713 = vadd.f32 %v7712, %v7397
        %v7714 = vadd.f32 %v7713, %v7399
        %v7715 = vadd.f32 %v7714, %v7401
        %v7716 = vadd.f32 %v7715, %v7403
        %v7717 = vadd.f32 %v7716, %v7405
        %v7718 = vadd.f32 %v7717, %v7407
        %v7719 = vadd.f32 %v7718, %v7409
        %v7720 = vadd.f32 %v7719, %v7411
        %v7721 = vadd.f32 %v7720, %v7413
        %v7722 = vadd.f32 %v7721, %v7415
        %v7723 = vadd.f32 %v7722, %v7417
        %v7724 = vadd.f32 %v7723, %v7419
        %v7725 = vadd.f32 %v7724, %v7421
        %v7726 = vadd.f32 %v7725, %v7423
        %v7727 = vadd.f32 %v7726, %v7425
        %v7728 = vadd.f32 %v7727, %v7427
        %v7729 = vadd.f32 %v7728, %v7429
        %v7730 = vadd.f32 %v7729, %v7431
        %v7731 = vadd.f32 %v7730, %v7433
        %v7732 = vadd.f32 %v7731, %v7435
        %v7733 = vadd.f32 %v7732, %v7437
        %v7734 = vadd.f32 %v7733, %v7439
        %v7735 = vadd.f32 %v7734, %v7441
        %v7736 = vadd.f32 %v7735, %v7443
        %v7737 = vadd.f32 %v7736, %v7445
        %v7738 = vadd.f32 %v7737, %v7447
        %v7739 = vadd.f32 %v7738, %v7449
        %v7740 = vrot.slane %v7739, 4
        %v7741 = vadd.f32 %v7739, %v7740
        %v7742 = vrot.slane %v7741, 2
        %v7743 = vadd.f32 %v7741, %v7742
        %v7744 = vrot.slane %v7743, 1
        %v7745 = vadd.f32 %v7743, %v7744
        %v7746 = vpack.c.bf16 %v6941, %v6939
        %v7747 = vpack.c.bf16 %v6945, %v6943
        %v7748 = vpack.c.bf16 %v6949, %v6947
        %v7749 = vpack.c.bf16 %v6953, %v6951
        %v7750 = vpack.c.bf16 %v6957, %v6955
        %v7751 = vpack.c.bf16 %v6961, %v6959
        %v7752 = vpack.c.bf16 %v6965, %v6963
        %v7753 = vpack.c.bf16 %v6969, %v6967
        %v7754 = vpack.c.bf16 %v6973, %v6971
        %v7755 = vpack.c.bf16 %v6977, %v6975
        %v7756 = vpack.c.bf16 %v6981, %v6979
        %v7757 = vpack.c.bf16 %v6985, %v6983
        %v7758 = vpack.c.bf16 %v6989, %v6987
        %v7759 = vpack.c.bf16 %v6993, %v6991
        %v7760 = vpack.c.bf16 %v6997, %v6995
        %v7761 = vpack.c.bf16 %v7001, %v6999
        %v7762 = vpack.c.bf16 %v7005, %v7003
        %v7763 = vpack.c.bf16 %v7009, %v7007
        %v7764 = vpack.c.bf16 %v7013, %v7011
        %v7765 = vpack.c.bf16 %v7017, %v7015
        %v7766 = vpack.c.bf16 %v7021, %v7019
        %v7767 = vpack.c.bf16 %v7025, %v7023
        %v7768 = vpack.c.bf16 %v7029, %v7027
        %v7769 = vpack.c.bf16 %v7033, %v7031
        %v7770 = vpack.c.bf16 %v7037, %v7035
        %v7771 = vpack.c.bf16 %v7041, %v7039
        %v7772 = vpack.c.bf16 %v7045, %v7043
        %v7773 = vpack.c.bf16 %v7049, %v7047
        %v7774 = vpack.c.bf16 %v7053, %v7051
        %v7775 = vpack.c.bf16 %v7057, %v7055
        %v7776 = vpack.c.bf16 %v7061, %v7059
        %v7777 = vpack.c.bf16 %v7065, %v7063
        %v7778 = vpack.c.bf16 %v7069, %v7067
        %v7779 = vpack.c.bf16 %v7073, %v7071
        %v7780 = vpack.c.bf16 %v7077, %v7075
        %v7781 = vpack.c.bf16 %v7081, %v7079
        %v7782 = vpack.c.bf16 %v7085, %v7083
        %v7783 = vpack.c.bf16 %v7089, %v7087
        %v7784 = vpack.c.bf16 %v7093, %v7091
        %v7785 = vpack.c.bf16 %v7097, %v7095
        %v7786 = vpack.c.bf16 %v7101, %v7099
        %v7787 = vpack.c.bf16 %v7105, %v7103
        %v7788 = vpack.c.bf16 %v7109, %v7107
        %v7789 = vpack.c.bf16 %v7113, %v7111
        %v7790 = vpack.c.bf16 %v7117, %v7115
        %v7791 = vpack.c.bf16 %v7121, %v7119
        %v7792 = vpack.c.bf16 %v7125, %v7123
        %v7793 = vpack.c.bf16 %v7129, %v7127
        %v7794 = vpack.c.bf16 %v7133, %v7131
        %v7795 = vpack.c.bf16 %v7137, %v7135
        %v7796 = vpack.c.bf16 %v7141, %v7139
        %v7797 = vpack.c.bf16 %v7145, %v7143
        %v7798 = vpack.c.bf16 %v7149, %v7147
        %v7799 = vpack.c.bf16 %v7153, %v7151
        %v7800 = vpack.c.bf16 %v7157, %v7155
        %v7801 = vpack.c.bf16 %v7161, %v7159
        %v7802 = vpack.c.bf16 %v7165, %v7163
        %v7803 = vpack.c.bf16 %v7169, %v7167
        %v7804 = vpack.c.bf16 %v7173, %v7171
        %v7805 = vpack.c.bf16 %v7177, %v7175
        %v7806 = vpack.c.bf16 %v7181, %v7179
        %v7807 = vpack.c.bf16 %v7185, %v7183
        %v7808 = vpack.c.bf16 %v7189, %v7187
        %v7809 = vpack.c.bf16 %v7193, %v7191
        %v7810 = vpack.c.bf16 %v7197, %v7195
        %v7811 = vpack.c.bf16 %v7201, %v7199
        %v7812 = vpack.c.bf16 %v7205, %v7203
        %v7813 = vpack.c.bf16 %v7209, %v7207
        %v7814 = vpack.c.bf16 %v7213, %v7211
        %v7815 = vpack.c.bf16 %v7217, %v7215
        %v7816 = vpack.c.bf16 %v7221, %v7219
        %v7817 = vpack.c.bf16 %v7225, %v7223
        %v7818 = vpack.c.bf16 %v7229, %v7227
        %v7819 = vpack.c.bf16 %v7233, %v7231
        %v7820 = vpack.c.bf16 %v7237, %v7235
        %v7821 = vpack.c.bf16 %v7241, %v7239
        %v7822 = vpack.c.bf16 %v7245, %v7243
        %v7823 = vpack.c.bf16 %v7249, %v7247
        %v7824 = vpack.c.bf16 %v7253, %v7251
        %v7825 = vpack.c.bf16 %v7257, %v7255
        %v7826 = vpack.c.bf16 %v7261, %v7259
        %v7827 = vpack.c.bf16 %v7265, %v7263
        %v7828 = vpack.c.bf16 %v7269, %v7267
        %v7829 = vpack.c.bf16 %v7273, %v7271
        %v7830 = vpack.c.bf16 %v7277, %v7275
        %v7831 = vpack.c.bf16 %v7281, %v7279
        %v7832 = vpack.c.bf16 %v7285, %v7283
        %v7833 = vpack.c.bf16 %v7289, %v7287
        %v7834 = vpack.c.bf16 %v7293, %v7291
        %v7835 = vpack.c.bf16 %v7297, %v7295
        %v7836 = vpack.c.bf16 %v7301, %v7299
        %v7837 = vpack.c.bf16 %v7305, %v7303
        %v7838 = vpack.c.bf16 %v7309, %v7307
        %v7839 = vpack.c.bf16 %v7313, %v7311
        %v7840 = vpack.c.bf16 %v7317, %v7315
        %v7841 = vpack.c.bf16 %v7321, %v7319
        %v7842 = vpack.c.bf16 %v7325, %v7323
        %v7843 = vpack.c.bf16 %v7329, %v7327
        %v7844 = vpack.c.bf16 %v7333, %v7331
        %v7845 = vpack.c.bf16 %v7337, %v7335
        %v7846 = vpack.c.bf16 %v7341, %v7339
        %v7847 = vpack.c.bf16 %v7345, %v7343
        %v7848 = vpack.c.bf16 %v7349, %v7347
        %v7849 = vpack.c.bf16 %v7353, %v7351
        %v7850 = vpack.c.bf16 %v7357, %v7355
        %v7851 = vpack.c.bf16 %v7361, %v7359
        %v7852 = vpack.c.bf16 %v7365, %v7363
        %v7853 = vpack.c.bf16 %v7369, %v7367
        %v7854 = vpack.c.bf16 %v7373, %v7371
        %v7855 = vpack.c.bf16 %v7377, %v7375
        %v7856 = vpack.c.bf16 %v7381, %v7379
        %v7857 = vpack.c.bf16 %v7385, %v7383
        %v7858 = vpack.c.bf16 %v7389, %v7387
        %v7859 = vpack.c.bf16 %v7393, %v7391
        %v7860 = vpack.c.bf16 %v7397, %v7395
        %v7861 = vpack.c.bf16 %v7401, %v7399
        %v7862 = vpack.c.bf16 %v7405, %v7403
        %v7863 = vpack.c.bf16 %v7409, %v7407
        %v7864 = vpack.c.bf16 %v7413, %v7411
        %v7865 = vpack.c.bf16 %v7417, %v7415
        %v7866 = vpack.c.bf16 %v7421, %v7419
        %v7867 = vpack.c.bf16 %v7425, %v7423
        %v7868 = vpack.c.bf16 %v7429, %v7427
        %v7869 = vpack.c.bf16 %v7433, %v7431
        %v7870 = vpack.c.bf16 %v7437, %v7435
        %v7871 = vpack.c.bf16 %v7441, %v7439
        %v7872 = vpack.c.bf16 %v7445, %v7443
        %v7873 = vpack.c.bf16 %v7449, %v7447
        %7874 = vmatprep.subr.bf16.mxu0 0
        %7875 = vmatpush1.bf16.msra.mxu0 %v7746
        %7876 = vmatprep.subr.bf16.mxu0 0
        %7877 = vmatpush1.bf16.msra.mxu0 %v7747
        %7878 = vmatprep.subr.bf16.mxu0 0
        %7879 = vmatpush1.bf16.msra.mxu0 %v7748
        %7880 = vmatprep.subr.bf16.mxu0 0
        %7881 = vmatpush1.bf16.msra.mxu0 %v7749
        %7882 = vmatprep.subr.bf16.mxu0 0
        %7883 = vmatpush1.bf16.msra.mxu0 %v7750
        %7884 = vmatprep.subr.bf16.mxu0 0
        %7885 = vmatpush1.bf16.msra.mxu0 %v7751
        %7886 = vmatprep.subr.bf16.mxu0 0
        %7887 = vmatpush1.bf16.msra.mxu0 %v7752
        %7888 = vmatprep.subr.bf16.mxu0 0
        %7889 = vmatpush1.bf16.msra.mxu0 %v7753
        %7890 = vmatprep.subr.bf16.mxu0 0
        %7891 = vmatpush1.bf16.msra.mxu0 %v7754
        %7892 = vmatprep.subr.bf16.mxu0 0
        %7893 = vmatpush1.bf16.msra.mxu0 %v7755
        %7894 = vmatprep.subr.bf16.mxu0 0
        %7895 = vmatpush1.bf16.msra.mxu0 %v7756
        %7896 = vmatprep.subr.bf16.mxu0 0
        %7897 = vmatpush1.bf16.msra.mxu0 %v7757
        %7898 = vmatprep.subr.bf16.mxu0 0
        %7899 = vmatpush1.bf16.msra.mxu0 %v7758
        %7900 = vmatprep.subr.bf16.mxu0 0
        %7901 = vmatpush1.bf16.msra.mxu0 %v7759
        %7902 = vmatprep.subr.bf16.mxu0 0
        %7903 = vmatpush1.bf16.msra.mxu0 %v7760
        %7904 = vmatprep.subr.bf16.mxu0 0
        %7905 = vmatpush1.bf16.msra.mxu0 %v7761
        %7906 = vmatprep.mubr.bf16.mxu0 %v1073
        %7907 = vmatmul.mubr.bf16.gmra.mrb[0].mxu0 %v1072
        %v7908 = vpop.f32.mrb[0].mxu0
        %v7909 = vadd.f32 0.0, %v7908
        %v7910 = vpop.f32.mrb[0].mxu0
        %v7911 = vpop.f32.mrb[0].mxu0
        %v7912 = vadd.f32 0.0, %v7911
        %v7913 = vpop.f32.mrb[0].mxu0
        %7914 = vdwg.mxu0
        %7915 = vmatprep.subr.bf16.mxu0 0
        %7916 = vmatpush1.bf16.msra.mxu0 %v7762
        %7917 = vmatprep.subr.bf16.mxu0 0
        %7918 = vmatpush1.bf16.msra.mxu0 %v7763
        %7919 = vmatprep.subr.bf16.mxu0 0
        %7920 = vmatpush1.bf16.msra.mxu0 %v7764
        %7921 = vmatprep.subr.bf16.mxu0 0
        %7922 = vmatpush1.bf16.msra.mxu0 %v7765
        %7923 = vmatprep.subr.bf16.mxu0 0
        %7924 = vmatpush1.bf16.msra.mxu0 %v7766
        %7925 = vmatprep.subr.bf16.mxu0 0
        %7926 = vmatpush1.bf16.msra.mxu0 %v7767
        %7927 = vmatprep.subr.bf16.mxu0 0
        %7928 = vmatpush1.bf16.msra.mxu0 %v7768
        %7929 = vmatprep.subr.bf16.mxu0 0
        %7930 = vmatpush1.bf16.msra.mxu0 %v7769
        %7931 = vmatprep.subr.bf16.mxu0 0
        %7932 = vmatpush1.bf16.msra.mxu0 %v7770
        %7933 = vmatprep.subr.bf16.mxu0 0
        %7934 = vmatpush1.bf16.msra.mxu0 %v7771
        %7935 = vmatprep.subr.bf16.mxu0 0
        %7936 = vmatpush1.bf16.msra.mxu0 %v7772
        %7937 = vmatprep.subr.bf16.mxu0 0
        %7938 = vmatpush1.bf16.msra.mxu0 %v7773
        %7939 = vmatprep.subr.bf16.mxu0 0
        %7940 = vmatpush1.bf16.msra.mxu0 %v7774
        %7941 = vmatprep.subr.bf16.mxu0 0
        %7942 = vmatpush1.bf16.msra.mxu0 %v7775
        %7943 = vmatprep.subr.bf16.mxu0 0
        %7944 = vmatpush1.bf16.msra.mxu0 %v7776
        %7945 = vmatprep.subr.bf16.mxu0 0
        %7946 = vmatpush1.bf16.msra.mxu0 %v7777
        %7947 = vmatprep.mubr.bf16.mxu0 %v1075
        %7948 = vmatmul.mubr.bf16.gmra.mrb[0].mxu0 %v1074
        %v7949 = vpop.f32.mrb[0].mxu0
        %v7950 = vadd.f32 0.0, %v7949
        %v7951 = vpop.f32.mrb[0].mxu0
        %v7952 = vpop.f32.mrb[0].mxu0
        %v7953 = vadd.f32 0.0, %v7952
        %v7954 = vpop.f32.mrb[0].mxu0
        %7955 = vdwg.mxu0
        %7956 = vmatprep.subr.bf16.mxu0 0
        %7957 = vmatpush1.bf16.msra.mxu0 %v7778
        %7958 = vmatprep.subr.bf16.mxu0 0
        %7959 = vmatpush1.bf16.msra.mxu0 %v7779
        %7960 = vmatprep.subr.bf16.mxu0 0
        %7961 = vmatpush1.bf16.msra.mxu0 %v7780
        %7962 = vmatprep.subr.bf16.mxu0 0
        %7963 = vmatpush1.bf16.msra.mxu0 %v7781
        %7964 = vmatprep.subr.bf16.mxu0 0
        %7965 = vmatpush1.bf16.msra.mxu0 %v7782
        %7966 = vmatprep.subr.bf16.mxu0 0
        %7967 = vmatpush1.bf16.msra.mxu0 %v7783
        %7968 = vmatprep.subr.bf16.mxu0 0
        %7969 = vmatpush1.bf16.msra.mxu0 %v7784
        %7970 = vmatprep.subr.bf16.mxu0 0
        %7971 = vmatpush1.bf16.msra.mxu0 %v7785
        %7972 = vmatprep.subr.bf16.mxu0 0
        %7973 = vmatpush1.bf16.msra.mxu0 %v7786
        %7974 = vmatprep.subr.bf16.mxu0 0
        %7975 = vmatpush1.bf16.msra.mxu0 %v7787
        %7976 = vmatprep.subr.bf16.mxu0 0
        %7977 = vmatpush1.bf16.msra.mxu0 %v7788
        %7978 = vmatprep.subr.bf16.mxu0 0
        %7979 = vmatpush1.bf16.msra.mxu0 %v7789
        %7980 = vmatprep.subr.bf16.mxu0 0
        %7981 = vmatpush1.bf16.msra.mxu0 %v7790
        %7982 = vmatprep.subr.bf16.mxu0 0
        %7983 = vmatpush1.bf16.msra.mxu0 %v7791
        %7984 = vmatprep.subr.bf16.mxu0 0
        %7985 = vmatpush1.bf16.msra.mxu0 %v7792
        %7986 = vmatprep.subr.bf16.mxu0 0
        %7987 = vmatpush1.bf16.msra.mxu0 %v7793
        %7988 = vmatprep.mubr.bf16.mxu0 %v1077
        %7989 = vmatmul.mubr.bf16.gmra.mrb[0].mxu0 %v1076
        %v7990 = vpop.f32.mrb[0].mxu0
        %v7991 = vadd.f32 0.0, %v7990
        %v7992 = vpop.f32.mrb[0].mxu0
        %v7993 = vpop.f32.mrb[0].mxu0
        %v7994 = vadd.f32 0.0, %v7993
        %v7995 = vpop.f32.mrb[0].mxu0
        %7996 = vdwg.mxu0
        %7997 = vmatprep.subr.bf16.mxu0 0
        %7998 = vmatpush1.bf16.msra.mxu0 %v7794
        %7999 = vmatprep.subr.bf16.mxu0 0
        %8000 = vmatpush1.bf16.msra.mxu0 %v7795
        %8001 = vmatprep.subr.bf16.mxu0 0
        %8002 = vmatpush1.bf16.msra.mxu0 %v7796
        %8003 = vmatprep.subr.bf16.mxu0 0
        %8004 = vmatpush1.bf16.msra.mxu0 %v7797
        %8005 = vmatprep.subr.bf16.mxu0 0
        %8006 = vmatpush1.bf16.msra.mxu0 %v7798
        %8007 = vmatprep.subr.bf16.mxu0 0
        %8008 = vmatpush1.bf16.msra.mxu0 %v7799
        %8009 = vmatprep.subr.bf16.mxu0 0
        %8010 = vmatpush1.bf16.msra.mxu0 %v7800
        %8011 = vmatprep.subr.bf16.mxu0 0
        %8012 = vmatpush1.bf16.msra.mxu0 %v7801
        %8013 = vmatprep.subr.bf16.mxu0 0
        %8014 = vmatpush1.bf16.msra.mxu0 %v7802
        %8015 = vmatprep.subr.bf16.mxu0 0
        %8016 = vmatpush1.bf16.msra.mxu0 %v7803
        %8017 = vmatprep.subr.bf16.mxu0 0
        %8018 = vmatpush1.bf16.msra.mxu0 %v7804
        %8019 = vmatprep.subr.bf16.mxu0 0
        %8020 = vmatpush1.bf16.msra.mxu0 %v7805
        %8021 = vmatprep.subr.bf16.mxu0 0
        %8022 = vmatpush1.bf16.msra.mxu0 %v7806
        %8023 = vmatprep.subr.bf16.mxu0 0
        %8024 = vmatpush1.bf16.msra.mxu0 %v7807
        %8025 = vmatprep.subr.bf16.mxu0 0
        %8026 = vmatpush1.bf16.msra.mxu0 %v7808
        %8027 = vmatprep.subr.bf16.mxu0 0
        %8028 = vmatpush1.bf16.msra.mxu0 %v7809
        %8029 = vmatprep.mubr.bf16.mxu0 %v1079
        %8030 = vmatmul.mubr.bf16.gmra.mrb[0].mxu0 %v1078
        %v8031 = vpop.f32.mrb[0].mxu0
        %v8032 = vadd.f32 0.0, %v8031
        %v8033 = vpop.f32.mrb[0].mxu0
        %v8034 = vpop.f32.mrb[0].mxu0
        %v8035 = vadd.f32 0.0, %v8034
        %v8036 = vpop.f32.mrb[0].mxu0
        %8037 = vdwg.mxu0
        %8038 = vmatprep.subr.bf16.mxu0 0
        %8039 = vmatpush1.bf16.msra.mxu0 %v7810
        %8040 = vmatprep.subr.bf16.mxu0 0
        %8041 = vmatpush1.bf16.msra.mxu0 %v7811
        %8042 = vmatprep.subr.bf16.mxu0 0
        %8043 = vmatpush1.bf16.msra.mxu0 %v7812
        %8044 = vmatprep.subr.bf16.mxu0 0
        %8045 = vmatpush1.bf16.msra.mxu0 %v7813
        %8046 = vmatprep.subr.bf16.mxu0 0
        %8047 = vmatpush1.bf16.msra.mxu0 %v7814
        %8048 = vmatprep.subr.bf16.mxu0 0
        %8049 = vmatpush1.bf16.msra.mxu0 %v7815
        %8050 = vmatprep.subr.bf16.mxu0 0
        %8051 = vmatpush1.bf16.msra.mxu0 %v7816
        %8052 = vmatprep.subr.bf16.mxu0 0
        %8053 = vmatpush1.bf16.msra.mxu0 %v7817
        %8054 = vmatprep.subr.bf16.mxu0 0
        %8055 = vmatpush1.bf16.msra.mxu0 %v7818
        %8056 = vmatprep.subr.bf16.mxu0 0
        %8057 = vmatpush1.bf16.msra.mxu0 %v7819
        %8058 = vmatprep.subr.bf16.mxu0 0
        %8059 = vmatpush1.bf16.msra.mxu0 %v7820
        %8060 = vmatprep.subr.bf16.mxu0 0
        %8061 = vmatpush1.bf16.msra.mxu0 %v7821
        %8062 = vmatprep.subr.bf16.mxu0 0
        %8063 = vmatpush1.bf16.msra.mxu0 %v7822
        %8064 = vmatprep.subr.bf16.mxu0 0
        %8065 = vmatpush1.bf16.msra.mxu0 %v7823
        %8066 = vmatprep.subr.bf16.mxu0 0
        %8067 = vmatpush1.bf16.msra.mxu0 %v7824
        %8068 = vmatprep.subr.bf16.mxu0 0
        %8069 = vmatpush1.bf16.msra.mxu0 %v7825
        %8070 = vmatprep.mubr.bf16.mxu0 %v1081
        %8071 = vmatmul.mubr.bf16.gmra.mrb[0].mxu0 %v1080
        %v8072 = vpop.f32.mrb[0].mxu0
        %v8073 = vadd.f32 0.0, %v8072
        %v8074 = vpop.f32.mrb[0].mxu0
        %v8075 = vpop.f32.mrb[0].mxu0
        %v8076 = vadd.f32 0.0, %v8075
        %v8077 = vpop.f32.mrb[0].mxu0
        %8078 = vdwg.mxu0
        %8079 = vmatprep.subr.bf16.mxu0 0
        %8080 = vmatpush1.bf16.msra.mxu0 %v7826
        %8081 = vmatprep.subr.bf16.mxu0 0
        %8082 = vmatpush1.bf16.msra.mxu0 %v7827
        %8083 = vmatprep.subr.bf16.mxu0 0
        %8084 = vmatpush1.bf16.msra.mxu0 %v7828
        %8085 = vmatprep.subr.bf16.mxu0 0
        %8086 = vmatpush1.bf16.msra.mxu0 %v7829
        %8087 = vmatprep.subr.bf16.mxu0 0
        %8088 = vmatpush1.bf16.msra.mxu0 %v7830
        %8089 = vmatprep.subr.bf16.mxu0 0
        %8090 = vmatpush1.bf16.msra.mxu0 %v7831
        %8091 = vmatprep.subr.bf16.mxu0 0
        %8092 = vmatpush1.bf16.msra.mxu0 %v7832
        %8093 = vmatprep.subr.bf16.mxu0 0
        %8094 = vmatpush1.bf16.msra.mxu0 %v7833
        %8095 = vmatprep.subr.bf16.mxu0 0
        %8096 = vmatpush1.bf16.msra.mxu0 %v7834
        %8097 = vmatprep.subr.bf16.mxu0 0
        %8098 = vmatpush1.bf16.msra.mxu0 %v7835
        %8099 = vmatprep.subr.bf16.mxu0 0
        %8100 = vmatpush1.bf16.msra.mxu0 %v7836
        %8101 = vmatprep.subr.bf16.mxu0 0
        %8102 = vmatpush1.bf16.msra.mxu0 %v7837
        %8103 = vmatprep.subr.bf16.mxu0 0
        %8104 = vmatpush1.bf16.msra.mxu0 %v7838
        %8105 = vmatprep.subr.bf16.mxu0 0
        %8106 = vmatpush1.bf16.msra.mxu0 %v7839
        %8107 = vmatprep.subr.bf16.mxu0 0
        %8108 = vmatpush1.bf16.msra.mxu0 %v7840
        %8109 = vmatprep.subr.bf16.mxu0 0
        %8110 = vmatpush1.bf16.msra.mxu0 %v7841
        %8111 = vmatprep.mubr.bf16.mxu0 %v1083
        %8112 = vmatmul.mubr.bf16.gmra.mrb[0].mxu0 %v1082
        %v8113 = vpop.f32.mrb[0].mxu0
        %v8114 = vadd.f32 0.0, %v8113
        %v8115 = vpop.f32.mrb[0].mxu0
        %v8116 = vpop.f32.mrb[0].mxu0
        %v8117 = vadd.f32 0.0, %v8116
        %v8118 = vpop.f32.mrb[0].mxu0
        %8119 = vdwg.mxu0
        %8120 = vmatprep.subr.bf16.mxu0 0
        %8121 = vmatpush1.bf16.msra.mxu0 %v7842
        %8122 = vmatprep.subr.bf16.mxu0 0
        %8123 = vmatpush1.bf16.msra.mxu0 %v7843
        %8124 = vmatprep.subr.bf16.mxu0 0
        %8125 = vmatpush1.bf16.msra.mxu0 %v7844
        %8126 = vmatprep.subr.bf16.mxu0 0
        %8127 = vmatpush1.bf16.msra.mxu0 %v7845
        %8128 = vmatprep.subr.bf16.mxu0 0
        %8129 = vmatpush1.bf16.msra.mxu0 %v7846
        %8130 = vmatprep.subr.bf16.mxu0 0
        %8131 = vmatpush1.bf16.msra.mxu0 %v7847
        %8132 = vmatprep.subr.bf16.mxu0 0
        %8133 = vmatpush1.bf16.msra.mxu0 %v7848
        %8134 = vmatprep.subr.bf16.mxu0 0
        %8135 = vmatpush1.bf16.msra.mxu0 %v7849
        %8136 = vmatprep.subr.bf16.mxu0 0
        %8137 = vmatpush1.bf16.msra.mxu0 %v7850
        %8138 = vmatprep.subr.bf16.mxu0 0
        %8139 = vmatpush1.bf16.msra.mxu0 %v7851
        %8140 = vmatprep.subr.bf16.mxu0 0
        %8141 = vmatpush1.bf16.msra.mxu0 %v7852
        %8142 = vmatprep.subr.bf16.mxu0 0
        %8143 = vmatpush1.bf16.msra.mxu0 %v7853
        %8144 = vmatprep.subr.bf16.mxu0 0
        %8145 = vmatpush1.bf16.msra.mxu0 %v7854
        %8146 = vmatprep.subr.bf16.mxu0 0
        %8147 = vmatpush1.bf16.msra.mxu0 %v7855
        %8148 = vmatprep.subr.bf16.mxu0 0
        %8149 = vmatpush1.bf16.msra.mxu0 %v7856
        %8150 = vmatprep.subr.bf16.mxu0 0
        %8151 = vmatpush1.bf16.msra.mxu0 %v7857
        %8152 = vmatprep.mubr.bf16.mxu0 %v1085
        %8153 = vmatmul.mubr.bf16.gmra.mrb[0].mxu0 %v1084
        %v8154 = vpop.f32.mrb[0].mxu0
        %v8155 = vadd.f32 0.0, %v8154
        %v8156 = vpop.f32.mrb[0].mxu0
        %v8157 = vpop.f32.mrb[0].mxu0
        %v8158 = vadd.f32 0.0, %v8157
        %v8159 = vpop.f32.mrb[0].mxu0
        %8160 = vdwg.mxu0
        %8161 = vmatprep.subr.bf16.mxu0 0
        %8162 = vmatpush1.bf16.msra.mxu0 %v7858
        %8163 = vmatprep.subr.bf16.mxu0 0
        %8164 = vmatpush1.bf16.msra.mxu0 %v7859
        %8165 = vmatprep.subr.bf16.mxu0 0
        %8166 = vmatpush1.bf16.msra.mxu0 %v7860
        %8167 = vmatprep.subr.bf16.mxu0 0
        %8168 = vmatpush1.bf16.msra.mxu0 %v7861
        %8169 = vmatprep.subr.bf16.mxu0 0
        %8170 = vmatpush1.bf16.msra.mxu0 %v7862
        %8171 = vmatprep.subr.bf16.mxu0 0
        %8172 = vmatpush1.bf16.msra.mxu0 %v7863
        %8173 = vmatprep.subr.bf16.mxu0 0
        %8174 = vmatpush1.bf16.msra.mxu0 %v7864
        %8175 = vmatprep.subr.bf16.mxu0 0
        %8176 = vmatpush1.bf16.msra.mxu0 %v7865
        %8177 = vmatprep.subr.bf16.mxu0 0
        %8178 = vmatpush1.bf16.msra.mxu0 %v7866
        %8179 = vmatprep.subr.bf16.mxu0 0
        %8180 = vmatpush1.bf16.msra.mxu0 %v7867
        %8181 = vmatprep.subr.bf16.mxu0 0
        %8182 = vmatpush1.bf16.msra.mxu0 %v7868
        %8183 = vmatprep.subr.bf16.mxu0 0
        %8184 = vmatpush1.bf16.msra.mxu0 %v7869
        %8185 = vmatprep.subr.bf16.mxu0 0
        %8186 = vmatpush1.bf16.msra.mxu0 %v7870
        %8187 = vmatprep.subr.bf16.mxu0 0
        %8188 = vmatpush1.bf16.msra.mxu0 %v7871
        %8189 = vmatprep.subr.bf16.mxu0 0
        %8190 = vmatpush1.bf16.msra.mxu0 %v7872
        %8191 = vmatprep.subr.bf16.mxu0 0
        %8192 = vmatpush1.bf16.msra.mxu0 %v7873
        %8193 = vmatprep.mubr.bf16.mxu0 %v1087
        %8194 = vmatmul.mubr.bf16.gmra.mrb[0].mxu0 %v1086
        %v8195 = vpop.f32.mrb[0].mxu0
        %v8196 = vadd.f32 0.0, %v8195
        %v8197 = vpop.f32.mrb[0].mxu0
        %v8198 = vpop.f32.mrb[0].mxu0
        %v8199 = vadd.f32 0.0, %v8198
        %v8200 = vpop.f32.mrb[0].mxu0
        %8201 = vdwg.mxu0
        %v8202 = vrcp.pop %v7486
        %v8203 = vrcp.pop %v7523
        %v8204 = vrcp.pop %v7560
        %v8205 = vrcp.pop %v7597
        %v8206 = vrcp.pop %v7634
        %v8207 = vrcp.pop %v7671
        %v8208 = vrcp.pop %v7708
        %v8209 = vrcp.pop %v7745
        %v8210 = vmul.f32 %v7909, %v8202
        %v8211 = vmul.f32 %v7912, %v8202
        %v8212 = vmul.f32 %v7950, %v8203
        %v8213 = vmul.f32 %v7953, %v8203
        %v8214 = vmul.f32 %v7991, %v8204
        %v8215 = vmul.f32 %v7994, %v8204
        %v8216 = vmul.f32 %v8032, %v8205
        %v8217 = vmul.f32 %v8035, %v8205
        %v8218 = vmul.f32 %v8073, %v8206
        %v8219 = vmul.f32 %v8076, %v8206
        %v8220 = vmul.f32 %v8114, %v8207
        %v8221 = vmul.f32 %v8117, %v8207
        %v8222 = vmul.f32 %v8155, %v8208
        %v8223 = vmul.f32 %v8158, %v8208
        %v8224 = vmul.f32 %v8196, %v8209
        %v8225 = vmul.f32 %v8199, %v8209
        %v8226 = vpack.c.bf16 %v8211, %v8210
        %v8227 = vpack.c.bf16 %v8213, %v8212
        %v8228 = vpack.c.bf16 %v8215, %v8214
        %v8229 = vpack.c.bf16 %v8217, %v8216
        %v8230 = vpack.c.bf16 %v8219, %v8218
        %v8231 = vpack.c.bf16 %v8221, %v8220
        %v8232 = vpack.c.bf16 %v8223, %v8222
        %v8233 = vpack.c.bf16 %v8225, %v8224
        %8234 = vmatprep.subr.bf16.mxu0 0
        %8235 = vmatpush1.bf16.msra.mxu0 %v8226
        %8236 = vmatprep.subr.bf16.mxu0 0
        %8237 = vmatpush1.bf16.msra.mxu0 %v8227
        %8238 = vmatprep.subr.bf16.mxu0 0
        %8239 = vmatpush1.bf16.msra.mxu0 %v8228
        %8240 = vmatprep.subr.bf16.mxu0 0
        %8241 = vmatpush1.bf16.msra.mxu0 %v8229
        %8242 = vmatprep.subr.bf16.mxu0 0
        %8243 = vmatpush1.bf16.msra.mxu0 %v8230
        %8244 = vmatprep.subr.bf16.mxu0 0
        %8245 = vmatpush1.bf16.msra.mxu0 %v8231
        %8246 = vmatprep.subr.bf16.mxu0 0
        %8247 = vmatpush1.bf16.msra.mxu0 %v8232
        %8248 = vmatprep.subr.bf16.mxu0 0
        %8249 = vmatpush1.bf16.msra.mxu0 %v8233
        %8250 = vmatprep.subr.bf16.mxu0 0
        %8251 = vmatpush1.bf16.msra.mxu0 0
        %8252 = vmatprep.subr.bf16.mxu0 0
        %8253 = vmatpush1.bf16.msra.mxu0 0
        %8254 = vmatprep.subr.bf16.mxu0 0
        %8255 = vmatpush1.bf16.msra.mxu0 0
        %8256 = vmatprep.subr.bf16.mxu0 0
        %8257 = vmatpush1.bf16.msra.mxu0 0
        %8258 = vmatprep.subr.bf16.mxu0 0
        %8259 = vmatpush1.bf16.msra.mxu0 0
        %8260 = vmatprep.subr.bf16.mxu0 0
        %8261 = vmatpush1.bf16.msra.mxu0 0
        %8262 = vmatprep.subr.bf16.mxu0 0
        %8263 = vmatpush1.bf16.msra.mxu0 0
        %8264 = vmatprep.subr.bf16.mxu0 0
        %8265 = vmatpush1.bf16.msra.mxu0 0
        %8266 = vmatprep.mubr.bf16.mxu0 0
        %8267 = vmatmul.mubr.bf16.gmra.mrb[0].mxu0 %v1104
        %v8268 = vpop.f32.mrb[0].mxu0
        %v8269 = vadd.f32 %v4908, %v8268
        %v8270 = vpop.f32.mrb[0].mxu0
        %v8271 = vpop.f32.mrb[0].mxu0
        %v8272 = vadd.f32 %v4913, %v8271
        %v8273 = vpop.f32.mrb[0].mxu0
        %8274 = vmatprep.mubr.bf16.mxu0 0
        %8275 = vmatmul.mubr.bf16.gmra.mrb[0].mxu0 %v1105
        %v8276 = vpop.f32.mrb[0].mxu0
        %v8277 = vadd.f32 %v4918, %v8276
        %v8278 = vpop.f32.mrb[0].mxu0
        %v8279 = vpop.f32.mrb[0].mxu0
        %v8280 = vadd.f32 %v4923, %v8279
        %v8281 = vpop.f32.mrb[0].mxu0
        %8282 = vmatprep.mubr.bf16.mxu0 0
        %8283 = vmatmul.mubr.bf16.gmra.mrb[0].mxu0 %v1106
        %v8284 = vpop.f32.mrb[0].mxu0
        %v8285 = vadd.f32 %v4928, %v8284
        %v8286 = vpop.f32.mrb[0].mxu0
        %v8287 = vpop.f32.mrb[0].mxu0
        %v8288 = vadd.f32 %v4933, %v8287
        %v8289 = vpop.f32.mrb[0].mxu0
        %8290 = vmatprep.mubr.bf16.mxu0 0
        %8291 = vmatmul.mubr.bf16.gmra.mrb[0].mxu0 %v1107
        %v8292 = vpop.f32.mrb[0].mxu0
        %v8293 = vadd.f32 %v4938, %v8292
        %v8294 = vpop.f32.mrb[0].mxu0
        %v8295 = vpop.f32.mrb[0].mxu0
        %v8296 = vadd.f32 %v4943, %v8295
        %v8297 = vpop.f32.mrb[0].mxu0
        %8298 = vmatprep.mubr.bf16.mxu0 0
        %8299 = vmatmul.mubr.bf16.gmra.mrb[0].mxu0 %v1108
        %v8300 = vpop.f32.mrb[0].mxu0
        %v8301 = vadd.f32 %v4948, %v8300
        %v8302 = vpop.f32.mrb[0].mxu0
        %v8303 = vpop.f32.mrb[0].mxu0
        %v8304 = vadd.f32 %v4953, %v8303
        %v8305 = vpop.f32.mrb[0].mxu0
        %8306 = vmatprep.mubr.bf16.mxu0 0
        %8307 = vmatmul.mubr.bf16.gmra.mrb[0].mxu0 %v1109
        %v8308 = vpop.f32.mrb[0].mxu0
        %v8309 = vadd.f32 %v4958, %v8308
        %v8310 = vpop.f32.mrb[0].mxu0
        %v8311 = vpop.f32.mrb[0].mxu0
        %v8312 = vadd.f32 %v4963, %v8311
        %v8313 = vpop.f32.mrb[0].mxu0
        %8314 = vmatprep.mubr.bf16.mxu0 0
        %8315 = vmatmul.mubr.bf16.gmra.mrb[0].mxu0 %v1110
        %v8316 = vpop.f32.mrb[0].mxu0
        %v8317 = vadd.f32 %v4968, %v8316
        %v8318 = vpop.f32.mrb[0].mxu0
        %v8319 = vpop.f32.mrb[0].mxu0
        %v8320 = vadd.f32 %v4973, %v8319
        %v8321 = vpop.f32.mrb[0].mxu0
        %8322 = vmatprep.mubr.bf16.mxu0 0
        %8323 = vmatmul.mubr.bf16.gmra.mrb[0].mxu0 %v1111
        %v8324 = vpop.f32.mrb[0].mxu0
        %v8325 = vadd.f32 %v4978, %v8324
        %v8326 = vpop.f32.mrb[0].mxu0
        %v8327 = vpop.f32.mrb[0].mxu0
        %v8328 = vadd.f32 %v4983, %v8327
        %v8329 = vpop.f32.mrb[0].mxu0
        %8330 = vdwg.mxu0
        %8331 = vst [vmem:[%s288 + $0x8] sm:$0xff] %v8269
        %8332 = vst [vmem:[%s288 + $0x18] sm:$0xff] %v8272
        %8333 = vst [vmem:[%s288 + $0x28] sm:$0xff] %v8277
        %8334 = vst [vmem:[%s288 + $0x38] sm:$0xff] %v8280
        %8335 = vst [vmem:[%s288 + $0x48] sm:$0xff] %v8285
        %8336 = vst [vmem:[%s288 + $0x58] sm:$0xff] %v8288
        %8337 = vst [vmem:[%s288 + $0x68] sm:$0xff] %v8293
        %8338 = vst [vmem:[%s288 + $0x78] sm:$0xff] %v8296
        %8339 = vst [vmem:[%s288 + $0x88] sm:$0xff] %v8301
        %8340 = vst [vmem:[%s288 + $0x98] sm:$0xff] %v8304
        %8341 = vst [vmem:[%s288 + $0xa8] sm:$0xff] %v8309
        %8342 = vst [vmem:[%s288 + $0xb8] sm:$0xff] %v8312
        %8343 = vst [vmem:[%s288 + $0xc8] sm:$0xff] %v8317
        %8344 = vst [vmem:[%s288 + $0xd8] sm:$0xff] %v8320
        %8345 = vst [vmem:[%s288 + $0xe8] sm:$0xff] %v8325
        %8346 = vst [vmem:[%s288 + $0xf8] sm:$0xff] %v8328
        %s8347 = sand.u32 %s161, 1
        %s8348 = scalar_lea.sflag [#allocation4], %s8347
        %s8349 = sand.u32 %s161, 1
        %s8350 = smul.addr %s8349, 256
        %s8351 = scalar_lea.vmem [#allocation8], %s8350
        // Predicated region
        $region57: #{tpu_custom_call.1} parent=43 // pred_check
          %p8352 = pneg %p171
        $region58: #{tpu_custom_call.1} parent=43 // pred_check_branch
          %8354 = sbr.rel (%p8352) target = $region60
        $region59: #{tpu_custom_call.1} parent=43 // pred_region
          %s8356 = ssub.s32 4096, 4096
          %8357 = vsyncadd %s8348, %s8356
          %s8358 = smul.addr %s22, 32
          %s8359 = smul.addr %s8358, 128
          %s8360 = scalar_lea.hbm %s6, %s8359
          %s8361 = sshll.u32 %s8351, 4
          %s8362 = int_to_ptr.vmem [resolvable:$true] %s8361
          %8367 = dma.vmem_to_hbm [thread:$0]  %s8362, 4096, %s8360, %s8348, 256, 256, 16
        $region60: #{tpu_custom_call.1} parent=43 // pred_fallthru
          _
      $region44: #{tpu_custom_call.1} parent=5 // pred_fallthru
        _
      %p8368 = scmp.le.s32.totalorder 2, %s17
      // Predicated region
      $region61: #{tpu_custom_call.1} parent=5 // pred_check
        %p8369 = pneg %p8368
      $region62: #{tpu_custom_call.1} parent=5 // pred_check_branch
        %8371 = sbr.rel (%p8369) target = $region64
      $region63: #{tpu_custom_call.1} parent=5 // pred_region
        %s8372 = ssub.s32 %s17, 2
        // Predicated region
        $region65: #{tpu_custom_call.1} parent=63 // pred_check
          %p8373 = pneg %p177
        $region66: #{tpu_custom_call.1} parent=63 // pred_check_branch
          %8375 = sbr.rel (%p8373) target = $region68
        $region67: #{tpu_custom_call.1} parent=63 // pred_region
          %s8376 = sand.u32 %s162, 1
          %s8377 = scalar_lea.sflag [#allocation4], %s8376
          %s8378 = sand.u32 %s162, 1
          %s8379 = smul.addr %s8378, 256
          %s8380 = scalar_lea.vmem [#allocation8], %s8379
          %8381 = dma.done %s8377, 4096
        $region68: #{tpu_custom_call.1} parent=63 // pred_fallthru
          _
      $region64: #{tpu_custom_call.1} parent=5 // pred_fallthru
        _
    $region6: #{tpu_custom_call.1} parent=1 // loop_footer
      %s21 = sadd.s32 1, %s17
    $region7: #{tpu_custom_call.1} parent=1 // loop_footer_branch
      %16 = sbr.rel target = $region3
    $region8: #{tpu_custom_call.1} parent=1 // loop_exit
      _
    %8382 = vsyncpa [#allocation3], 1
    %s8383 = scalar_lea.sflag [#allocation3], 1
    %8384 = vsyncpa %s8383, 1
    %8385 = vsyncpa [#allocation6], 1
    %8386 = vsyncpa [#allocation4], 1
    %s8387 = scalar_lea.sflag [#allocation4], 1
    %8388 = vsyncpa %s8387, 1

</llo_original>
